<compile_context>
chip_gen: v7x
topology: tpu7x:2x2x1
jax: 0.10.0
libtpu: 0.0.40
codegen_flags: <defaults>
</compile_context>

<pallas_src>
import functools

import jax
import jax.numpy as jnp
from jax.experimental import pallas as pl
from jax.experimental.pallas import tpu as pltpu


def _im2col(x, H, W, KH, KW):
    """x: (H+KH-1, W+KW-1, C) -> (H*W, KH*KW*C) patch matrix.

    Tap ordering is (kh, kw, ci), matching w.reshape(KH*KW*Cin, Cout) of an
    HWIO weight, so one MXU matmul computes the whole convolution.
    """
    C = x.shape[-1]
    taps = [x[kh:kh + H, kw:kw + W, :] for kh in range(KH) for kw in range(KW)]
    patches = jnp.concatenate(taps, axis=-1)              # (H, W, KH*KW*C)
    return patches.reshape(H * W, KH * KW * C)


def _fused_kernel(x_ref, w1_ref, b1_ref, w2_ref, b2_ref, w3_ref, b3_ref,
                  w4_ref, b4_ref, o_ref, pad_ref, *, H, W, KH1, Chid, Cout):
    # Zero the padded-activation scratch once per grid step; the halo ring
    # stays zero, each 3x3 layer only rewrites the interior.
    pad_ref[...] = jnp.zeros_like(pad_ref)

    # ---- layer 1: 7x7 conv + ReLU, one im2col matmul (K = 49 * bin_num) ----
    x = x_ref[0]                                           # (H+6, W+6, C1)
    p = _im2col(x, H, W, KH1, KH1)                         # (H*W, 49*C1)
    a = jnp.dot(p, w1_ref[...], preferred_element_type=jnp.float32)
    a = jnp.maximum(a + b1_ref[...], 0.0)                  # (H*W, Chid)

    # ---- layers 2..4: 3x3 conv + ReLU; padded input lives in VMEM scratch ----
    def conv3x3_relu(act, w_ref, b_ref):
        pad_ref[pl.ds(1, H), pl.ds(1, W), :] = act.reshape(H, W, Chid)
        pp = _im2col(pad_ref[...], H, W, 3, 3)             # (H*W, 9*Chid)
        y = jnp.dot(pp, w_ref[...], preferred_element_type=jnp.float32)
        return jnp.maximum(y + b_ref[...], 0.0)

    a = conv3x3_relu(a, w2_ref, b2_ref)                    # (H*W, Chid)
    a = conv3x3_relu(a, w3_ref, b3_ref)                    # (H*W, Chid)
    a = conv3x3_relu(a, w4_ref, b4_ref)                    # (H*W, Cout)

    # Only this (small) final tensor is written back to HBM.
    o_ref[0] = a.reshape(H, W, Cout).astype(o_ref.dtype)


def projection_input_depth_forward(params, depth_nchw):
    """Fused ProjectionInputDepth.forward. depth_nchw: (N, bin_num, H, W)."""
    w1, b1 = params["convd1"]
    w2, b2 = params["convd2"]
    w3, b3 = params["convd3"]
    w4, b4 = params["convd4"]

    N, C1, H, W = depth_nchw.shape
    KH1 = w1.shape[0]                   # 7
    Chid = w1.shape[-1]                 # hidden_dim
    Cout = w4.shape[-1]                 # out_chs
    pad1 = KH1 // 2

    # NCHW -> NHWC; pad ONCE (7x7 halo). 3x3 halos are handled in-kernel.
    x = jnp.transpose(depth_nchw, (0, 2, 3, 1))
    xp = jnp.pad(x, ((0, 0), (pad1, pad1), (pad1, pad1), (0, 0)))
    Hp, Wp = H + 2 * pad1, W + 2 * pad1

    # Flatten HWIO weights to (KH*KW*Cin, Cout): one matmul per layer.
    w1f = w1.reshape(-1, Chid)
    w2f = w2.reshape(-1, Chid)
    w3f = w3.reshape(-1, Chid)
    w4f = w4.reshape(-1, Cout)
    b1r = b1.reshape(1, -1)
    b2r = b2.reshape(1, -1)
    b3r = b3.reshape(1, -1)
    b4r = b4.reshape(1, -1)

    kernel = functools.partial(_fused_kernel, H=H, W=W, KH1=KH1,
                               Chid=Chid, Cout=Cout)
    const2 = lambda n: (0, 0)           # weights/biases: loaded once, stay in VMEM

    out = pl.pallas_call(
        kernel,
        out_shape=jax.ShapeDtypeStruct((N, H, W, Cout), jnp.float32),
        grid_spec=pltpu.PrefetchScalarGridSpec(
            num_scalar_prefetch=0,
            grid=(N,),
            in_specs=[
                pl.BlockSpec((1, Hp, Wp, C1), lambda n: (n, 0, 0, 0)),
                pl.BlockSpec(w1f.shape, const2), pl.BlockSpec(b1r.shape, const2),
                pl.BlockSpec(w2f.shape, const2), pl.BlockSpec(b2r.shape, const2),
                pl.BlockSpec(w3f.shape, const2), pl.BlockSpec(b3r.shape, const2),
                pl.BlockSpec(w4f.shape, const2), pl.BlockSpec(b4r.shape, const2),
            ],
            out_specs=pl.BlockSpec((1, H, W, Cout), lambda n: (n, 0, 0, 0)),
            scratch_shapes=[pltpu.VMEM((H + 2, W + 2, Chid), jnp.float32)],
        ),
        compiler_params=pltpu.CompilerParams(
            dimension_semantics=("parallel",)),
    )(xp, w1f, b1r, w2f, b2r, w3f, b3r, w4f, b4r)

    return jnp.transpose(out, (0, 3, 1, 2))  # NHWC -> NCHW


def init_projection_input_depth_params(key, hidden_dim, out_chs, bin_num):
    """Deterministic synthetic params. Weights in HWIO layout."""
    def init_conv(k, kh, kw, cin, cout):
        kw_key, kb_key = jax.random.split(k)
        fan_in = kh * kw * cin
        std = 1.0 / jnp.sqrt(jnp.float32(fan_in))
        w = jax.random.normal(kw_key, (kh, kw, cin, cout), jnp.float32) * std
        b = jax.random.normal(kb_key, (cout,), jnp.float32) * 0.01
        return w, b

    k1, k2, k3, k4 = jax.random.split(key, 4)
    return {
        "convd1": init_conv(k1, 7, 7, bin_num, hidden_dim),
        "convd2": init_conv(k2, 3, 3, hidden_dim, hidden_dim),
        "convd3": init_conv(k3, 3, 3, hidden_dim, hidden_dim),
        "convd4": init_conv(k4, 3, 3, hidden_dim, out_chs),
    }


def _reference_forward(params, depth_nchw):
    """Pure-JAX reference (lax conv) for correctness checking."""
    x = depth_nchw
    for name in ("convd1", "convd2", "convd3", "convd4"):
        w, b = params[name]  # HWIO
        y = jax.lax.conv_general_dilated(
            x, w, window_strides=(1, 1), padding="SAME",
            dimension_numbers=("NCHW", "HWIO", "NCHW"))
        x = jax.nn.relu(y + b.reshape(1, -1, 1, 1))
    return x


if __name__ == "__main__":
    # Shapes consistent with the module: bin_num=4, hidden_dim=32, out_chs=16.
    batch, bin_num, H, W = 2, 4, 16, 16
    hidden_dim, out_chs = 32, 16

    key = jax.random.PRNGKey(0)
    k_params, k_x = jax.random.split(key)
    params = init_projection_input_depth_params(k_params, hidden_dim, out_chs, bin_num)
    depth = jax.random.normal(k_x, (batch, bin_num, H, W), jnp.float32)

    fwd = jax.jit(projection_input_depth_forward)
    out = jax.block_until_ready(fwd(params, depth))
    assert out.shape == (batch, out_chs, H, W), out.shape

    ref = jax.block_until_ready(jax.jit(_reference_forward)(params, depth))
    assert jnp.allclose(out, ref, atol=5e-4, rtol=5e-4), \
        float(jnp.max(jnp.abs(out - ref)))

    print("KERNEL_OK")
</pallas_src>

<mosaic_0001>
module attributes {stable_mosaic.version = 11 : i64} {
  func.func @_fused_kernel(%arg0: i32, %arg1: memref<1x22x22x4xf32, #tpu.memory_space<vmem>>, %arg2: memref<196x32xf32, #tpu.memory_space<vmem>>, %arg3: memref<1x32xf32, #tpu.memory_space<vmem>>, %arg4: memref<288x32xf32, #tpu.memory_space<vmem>>, %arg5: memref<1x32xf32, #tpu.memory_space<vmem>>, %arg6: memref<288x32xf32, #tpu.memory_space<vmem>>, %arg7: memref<1x32xf32, #tpu.memory_space<vmem>>, %arg8: memref<288x16xf32, #tpu.memory_space<vmem>>, %arg9: memref<1x16xf32, #tpu.memory_space<vmem>>, %arg10: memref<1x16x16x16xf32, #tpu.memory_space<vmem>>, %arg11: memref<18x18x32xf32, #tpu.memory_space<vmem>>) attributes {dimension_semantics = [#tpu.dimension_semantics<parallel>], iteration_bounds = array<i64: 2>, scalar_prefetch = 0 : i64, scratch_operands = 1 : i64, tpu.core_type = #tpu.core_type<tc>, window_params = [{transform_indices = @transform_0, window_bounds = array<i64: 1, 22, 22, 4>}, {pipeline_mode = #tpu.pipeline_mode<synchronous>, transform_indices = @transform_1, window_bounds = array<i64: 196, 32>}, {pipeline_mode = #tpu.pipeline_mode<synchronous>, transform_indices = @transform_2, window_bounds = array<i64: 1, 32>}, {pipeline_mode = #tpu.pipeline_mode<synchronous>, transform_indices = @transform_3, window_bounds = array<i64: 288, 32>}, {pipeline_mode = #tpu.pipeline_mode<synchronous>, transform_indices = @transform_4, window_bounds = array<i64: 1, 32>}, {pipeline_mode = #tpu.pipeline_mode<synchronous>, transform_indices = @transform_5, window_bounds = array<i64: 288, 32>}, {pipeline_mode = #tpu.pipeline_mode<synchronous>, transform_indices = @transform_6, window_bounds = array<i64: 1, 32>}, {pipeline_mode = #tpu.pipeline_mode<synchronous>, transform_indices = @transform_7, window_bounds = array<i64: 288, 16>}, {pipeline_mode = #tpu.pipeline_mode<synchronous>, transform_indices = @transform_8, window_bounds = array<i64: 1, 16>}, {transform_indices = @transform_9, window_bounds = array<i64: 1, 16, 16, 16>}]} {
    %cst = arith.constant 0.000000e+00 : f32
    %0 = vector.broadcast %cst : f32 to vector<18x18x32xf32>
    %c0 = arith.constant 0 : index
    %c0_0 = arith.constant 0 : index
    %c0_1 = arith.constant 0 : index
    %1 = vector.load %arg11[%c0, %c0_0, %c0_1] : memref<18x18x32xf32, #tpu.memory_space<vmem>>, vector<18x18x32xf32>
    tpu.vector_store %arg11[%c0, %c0_0, %c0_1], %0 {strides = array<i32>} : memref<18x18x32xf32, #tpu.memory_space<vmem>>, vector<18x18x32xf32>,
    %c0_2 = arith.constant 0 : index
    %c0_3 = arith.constant 0 : index
    %c0_4 = arith.constant 0 : index
    %c0_5 = arith.constant 0 : index
    %2 = vector.load %arg1[%c0_2, %c0_3, %c0_4, %c0_5] : memref<1x22x22x4xf32, #tpu.memory_space<vmem>>, vector<1x22x22x4xf32>
    %3 = vector.shape_cast %2 : vector<1x22x22x4xf32> to vector<22x22x4xf32>
    %4 = vector.extract_strided_slice %3 {offsets = [0, 0, 0], sizes = [16, 16, 4], strides = [1, 1, 1]} : vector<22x22x4xf32> to vector<16x16x4xf32>
    %5 = vector.extract_strided_slice %3 {offsets = [0, 1, 0], sizes = [16, 16, 4], strides = [1, 1, 1]} : vector<22x22x4xf32> to vector<16x16x4xf32>
    %6 = vector.extract_strided_slice %3 {offsets = [0, 2, 0], sizes = [16, 16, 4], strides = [1, 1, 1]} : vector<22x22x4xf32> to vector<16x16x4xf32>
    %7 = vector.extract_strided_slice %3 {offsets = [0, 3, 0], sizes = [16, 16, 4], strides = [1, 1, 1]} : vector<22x22x4xf32> to vector<16x16x4xf32>
    %8 = vector.extract_strided_slice %3 {offsets = [0, 4, 0], sizes = [16, 16, 4], strides = [1, 1, 1]} : vector<22x22x4xf32> to vector<16x16x4xf32>
    %9 = vector.extract_strided_slice %3 {offsets = [0, 5, 0], sizes = [16, 16, 4], strides = [1, 1, 1]} : vector<22x22x4xf32> to vector<16x16x4xf32>
    %10 = vector.extract_strided_slice %3 {offsets = [0, 6, 0], sizes = [16, 16, 4], strides = [1, 1, 1]} : vector<22x22x4xf32> to vector<16x16x4xf32>
    %11 = vector.extract_strided_slice %3 {offsets = [1, 0, 0], sizes = [16, 16, 4], strides = [1, 1, 1]} : vector<22x22x4xf32> to vector<16x16x4xf32>
    %12 = vector.extract_strided_slice %3 {offsets = [1, 1, 0], sizes = [16, 16, 4], strides = [1, 1, 1]} : vector<22x22x4xf32> to vector<16x16x4xf32>
    %13 = vector.extract_strided_slice %3 {offsets = [1, 2, 0], sizes = [16, 16, 4], strides = [1, 1, 1]} : vector<22x22x4xf32> to vector<16x16x4xf32>
    %14 = vector.extract_strided_slice %3 {offsets = [1, 3, 0], sizes = [16, 16, 4], strides = [1, 1, 1]} : vector<22x22x4xf32> to vector<16x16x4xf32>
    %15 = vector.extract_strided_slice %3 {offsets = [1, 4, 0], sizes = [16, 16, 4], strides = [1, 1, 1]} : vector<22x22x4xf32> to vector<16x16x4xf32>
    %16 = vector.extract_strided_slice %3 {offsets = [1, 5, 0], sizes = [16, 16, 4], strides = [1, 1, 1]} : vector<22x22x4xf32> to vector<16x16x4xf32>
    %17 = vector.extract_strided_slice %3 {offsets = [1, 6, 0], sizes = [16, 16, 4], strides = [1, 1, 1]} : vector<22x22x4xf32> to vector<16x16x4xf32>
    %18 = vector.extract_strided_slice %3 {offsets = [2, 0, 0], sizes = [16, 16, 4], strides = [1, 1, 1]} : vector<22x22x4xf32> to vector<16x16x4xf32>
    %19 = vector.extract_strided_slice %3 {offsets = [2, 1, 0], sizes = [16, 16, 4], strides = [1, 1, 1]} : vector<22x22x4xf32> to vector<16x16x4xf32>
    %20 = vector.extract_strided_slice %3 {offsets = [2, 2, 0], sizes = [16, 16, 4], strides = [1, 1, 1]} : vector<22x22x4xf32> to vector<16x16x4xf32>
    %21 = vector.extract_strided_slice %3 {offsets = [2, 3, 0], sizes = [16, 16, 4], strides = [1, 1, 1]} : vector<22x22x4xf32> to vector<16x16x4xf32>
    %22 = vector.extract_strided_slice %3 {offsets = [2, 4, 0], sizes = [16, 16, 4], strides = [1, 1, 1]} : vector<22x22x4xf32> to vector<16x16x4xf32>
    %23 = vector.extract_strided_slice %3 {offsets = [2, 5, 0], sizes = [16, 16, 4], strides = [1, 1, 1]} : vector<22x22x4xf32> to vector<16x16x4xf32>
    %24 = vector.extract_strided_slice %3 {offsets = [2, 6, 0], sizes = [16, 16, 4], strides = [1, 1, 1]} : vector<22x22x4xf32> to vector<16x16x4xf32>
    %25 = vector.extract_strided_slice %3 {offsets = [3, 0, 0], sizes = [16, 16, 4], strides = [1, 1, 1]} : vector<22x22x4xf32> to vector<16x16x4xf32>
    %26 = vector.extract_strided_slice %3 {offsets = [3, 1, 0], sizes = [16, 16, 4], strides = [1, 1, 1]} : vector<22x22x4xf32> to vector<16x16x4xf32>
    %27 = vector.extract_strided_slice %3 {offsets = [3, 2, 0], sizes = [16, 16, 4], strides = [1, 1, 1]} : vector<22x22x4xf32> to vector<16x16x4xf32>
    %28 = vector.extract_strided_slice %3 {offsets = [3, 3, 0], sizes = [16, 16, 4], strides = [1, 1, 1]} : vector<22x22x4xf32> to vector<16x16x4xf32>
    %29 = vector.extract_strided_slice %3 {offsets = [3, 4, 0], sizes = [16, 16, 4], strides = [1, 1, 1]} : vector<22x22x4xf32> to vector<16x16x4xf32>
    %30 = vector.extract_strided_slice %3 {offsets = [3, 5, 0], sizes = [16, 16, 4], strides = [1, 1, 1]} : vector<22x22x4xf32> to vector<16x16x4xf32>
    %31 = vector.extract_strided_slice %3 {offsets = [3, 6, 0], sizes = [16, 16, 4], strides = [1, 1, 1]} : vector<22x22x4xf32> to vector<16x16x4xf32>
    %32 = vector.extract_strided_slice %3 {offsets = [4, 0, 0], sizes = [16, 16, 4], strides = [1, 1, 1]} : vector<22x22x4xf32> to vector<16x16x4xf32>
    %33 = vector.extract_strided_slice %3 {offsets = [4, 1, 0], sizes = [16, 16, 4], strides = [1, 1, 1]} : vector<22x22x4xf32> to vector<16x16x4xf32>
    %34 = vector.extract_strided_slice %3 {offsets = [4, 2, 0], sizes = [16, 16, 4], strides = [1, 1, 1]} : vector<22x22x4xf32> to vector<16x16x4xf32>
    %35 = vector.extract_strided_slice %3 {offsets = [4, 3, 0], sizes = [16, 16, 4], strides = [1, 1, 1]} : vector<22x22x4xf32> to vector<16x16x4xf32>
    %36 = vector.extract_strided_slice %3 {offsets = [4, 4, 0], sizes = [16, 16, 4], strides = [1, 1, 1]} : vector<22x22x4xf32> to vector<16x16x4xf32>
    %37 = vector.extract_strided_slice %3 {offsets = [4, 5, 0], sizes = [16, 16, 4], strides = [1, 1, 1]} : vector<22x22x4xf32> to vector<16x16x4xf32>
    %38 = vector.extract_strided_slice %3 {offsets = [4, 6, 0], sizes = [16, 16, 4], strides = [1, 1, 1]} : vector<22x22x4xf32> to vector<16x16x4xf32>
    %39 = vector.extract_strided_slice %3 {offsets = [5, 0, 0], sizes = [16, 16, 4], strides = [1, 1, 1]} : vector<22x22x4xf32> to vector<16x16x4xf32>
    %40 = vector.extract_strided_slice %3 {offsets = [5, 1, 0], sizes = [16, 16, 4], strides = [1, 1, 1]} : vector<22x22x4xf32> to vector<16x16x4xf32>
    %41 = vector.extract_strided_slice %3 {offsets = [5, 2, 0], sizes = [16, 16, 4], strides = [1, 1, 1]} : vector<22x22x4xf32> to vector<16x16x4xf32>
    %42 = vector.extract_strided_slice %3 {offsets = [5, 3, 0], sizes = [16, 16, 4], strides = [1, 1, 1]} : vector<22x22x4xf32> to vector<16x16x4xf32>
    %43 = vector.extract_strided_slice %3 {offsets = [5, 4, 0], sizes = [16, 16, 4], strides = [1, 1, 1]} : vector<22x22x4xf32> to vector<16x16x4xf32>
    %44 = vector.extract_strided_slice %3 {offsets = [5, 5, 0], sizes = [16, 16, 4], strides = [1, 1, 1]} : vector<22x22x4xf32> to vector<16x16x4xf32>
    %45 = vector.extract_strided_slice %3 {offsets = [5, 6, 0], sizes = [16, 16, 4], strides = [1, 1, 1]} : vector<22x22x4xf32> to vector<16x16x4xf32>
    %46 = vector.extract_strided_slice %3 {offsets = [6, 0, 0], sizes = [16, 16, 4], strides = [1, 1, 1]} : vector<22x22x4xf32> to vector<16x16x4xf32>
    %47 = vector.extract_strided_slice %3 {offsets = [6, 1, 0], sizes = [16, 16, 4], strides = [1, 1, 1]} : vector<22x22x4xf32> to vector<16x16x4xf32>
    %48 = vector.extract_strided_slice %3 {offsets = [6, 2, 0], sizes = [16, 16, 4], strides = [1, 1, 1]} : vector<22x22x4xf32> to vector<16x16x4xf32>
    %49 = vector.extract_strided_slice %3 {offsets = [6, 3, 0], sizes = [16, 16, 4], strides = [1, 1, 1]} : vector<22x22x4xf32> to vector<16x16x4xf32>
    %50 = vector.extract_strided_slice %3 {offsets = [6, 4, 0], sizes = [16, 16, 4], strides = [1, 1, 1]} : vector<22x22x4xf32> to vector<16x16x4xf32>
    %51 = vector.extract_strided_slice %3 {offsets = [6, 5, 0], sizes = [16, 16, 4], strides = [1, 1, 1]} : vector<22x22x4xf32> to vector<16x16x4xf32>
    %52 = vector.extract_strided_slice %3 {offsets = [6, 6, 0], sizes = [16, 16, 4], strides = [1, 1, 1]} : vector<22x22x4xf32> to vector<16x16x4xf32>
    %53 = tpu.concatenate %4, %5, %6, %7, %8, %9, %10, %11, %12, %13, %14, %15, %16, %17, %18, %19 in 2 : vector<16x16x4xf32>, vector<16x16x4xf32>, vector<16x16x4xf32>, vector<16x16x4xf32>, vector<16x16x4xf32>, vector<16x16x4xf32>, vector<16x16x4xf32>, vector<16x16x4xf32>, vector<16x16x4xf32>, vector<16x16x4xf32>, vector<16x16x4xf32>, vector<16x16x4xf32>, vector<16x16x4xf32>, vector<16x16x4xf32>, vector<16x16x4xf32>, vector<16x16x4xf32> -> vector<16x16x64xf32>
    %54 = tpu.concatenate %20, %21, %22, %23, %24, %25, %26, %27, %28, %29, %30, %31, %32, %33, %34, %35 in 2 : vector<16x16x4xf32>, vector<16x16x4xf32>, vector<16x16x4xf32>, vector<16x16x4xf32>, vector<16x16x4xf32>, vector<16x16x4xf32>, vector<16x16x4xf32>, vector<16x16x4xf32>, vector<16x16x4xf32>, vector<16x16x4xf32>, vector<16x16x4xf32>, vector<16x16x4xf32>, vector<16x16x4xf32>, vector<16x16x4xf32>, vector<16x16x4xf32>, vector<16x16x4xf32> -> vector<16x16x64xf32>
    %55 = tpu.concatenate %36, %37, %38, %39, %40, %41, %42, %43, %44, %45, %46, %47, %48, %49, %50, %51 in 2 : vector<16x16x4xf32>, vector<16x16x4xf32>, vector<16x16x4xf32>, vector<16x16x4xf32>, vector<16x16x4xf32>, vector<16x16x4xf32>, vector<16x16x4xf32>, vector<16x16x4xf32>, vector<16x16x4xf32>, vector<16x16x4xf32>, vector<16x16x4xf32>, vector<16x16x4xf32>, vector<16x16x4xf32>, vector<16x16x4xf32>, vector<16x16x4xf32>, vector<16x16x4xf32> -> vector<16x16x64xf32>
    %56 = tpu.concatenate %53, %54, %55, %52 in 2 : vector<16x16x64xf32>, vector<16x16x64xf32>, vector<16x16x64xf32>, vector<16x16x4xf32> -> vector<16x16x196xf32>
    %57 = vector.shape_cast %56 : vector<16x16x196xf32> to vector<256x196xf32>
    %c0_6 = arith.constant 0 : index
    %c0_7 = arith.constant 0 : index
    %58 = vector.load %arg2[%c0_6, %c0_7] : memref<196x32xf32, #tpu.memory_space<vmem>>, vector<196x32xf32>
    %cst_8 = arith.constant dense<0.000000e+00> : vector<256x32xf32>
    %59 = tpu.matmul %57, %58, %cst_8 {dimension_numbers = #tpu.dot_dimension_numbers<[1], [0], [0], [1], [0, 0, 1, 1], [], []>} : vector<256x196xf32>, vector<196x32xf32>, vector<256x32xf32> -> vector<256x32xf32>
    %c0_9 = arith.constant 0 : index
    %c0_10 = arith.constant 0 : index
    %60 = vector.load %arg3[%c0_9, %c0_10] : memref<1x32xf32, #tpu.memory_space<vmem>>, vector<1x32xf32>
    %61 = vector.broadcast %60 : vector<1x32xf32> to vector<256x32xf32>
    %62 = arith.addf %59, %61 : vector<256x32xf32>
    %cst_11 = arith.constant 0.000000e+00 : f32
    %63 = vector.broadcast %cst_11 : f32 to vector<256x32xf32>
    %64 = arith.maximumf %62, %63 : vector<256x32xf32>
    %65 = vector.shape_cast %64 : vector<256x32xf32> to vector<16x16x32xf32>
    %c1 = arith.constant 1 : index
    %c1_12 = arith.constant 1 : index
    %c0_13 = arith.constant 0 : index
    %66 = vector.load %arg11[%c1, %c1_12, %c0_13] : memref<18x18x32xf32, #tpu.memory_space<vmem>>, vector<16x16x32xf32>
    tpu.vector_store %arg11[%c1, %c1_12, %c0_13], %65 {strides = array<i32>} : memref<18x18x32xf32, #tpu.memory_space<vmem>>, vector<16x16x32xf32>,
    %c0_14 = arith.constant 0 : index
    %c0_15 = arith.constant 0 : index
    %c0_16 = arith.constant 0 : index
    %67 = vector.load %arg11[%c0_14, %c0_15, %c0_16] : memref<18x18x32xf32, #tpu.memory_space<vmem>>, vector<18x18x32xf32>
    %68 = vector.extract_strided_slice %67 {offsets = [0, 0, 0], sizes = [16, 16, 32], strides = [1, 1, 1]} : vector<18x18x32xf32> to vector<16x16x32xf32>
    %69 = vector.extract_strided_slice %67 {offsets = [0, 1, 0], sizes = [16, 16, 32], strides = [1, 1, 1]} : vector<18x18x32xf32> to vector<16x16x32xf32>
    %70 = vector.extract_strided_slice %67 {offsets = [0, 2, 0], sizes = [16, 16, 32], strides = [1, 1, 1]} : vector<18x18x32xf32> to vector<16x16x32xf32>
    %71 = vector.extract_strided_slice %67 {offsets = [1, 0, 0], sizes = [16, 16, 32], strides = [1, 1, 1]} : vector<18x18x32xf32> to vector<16x16x32xf32>
    %72 = vector.extract_strided_slice %67 {offsets = [1, 1, 0], sizes = [16, 16, 32], strides = [1, 1, 1]} : vector<18x18x32xf32> to vector<16x16x32xf32>
    %73 = vector.extract_strided_slice %67 {offsets = [1, 2, 0], sizes = [16, 16, 32], strides = [1, 1, 1]} : vector<18x18x32xf32> to vector<16x16x32xf32>
    %74 = vector.extract_strided_slice %67 {offsets = [2, 0, 0], sizes = [16, 16, 32], strides = [1, 1, 1]} : vector<18x18x32xf32> to vector<16x16x32xf32>
    %75 = vector.extract_strided_slice %67 {offsets = [2, 1, 0], sizes = [16, 16, 32], strides = [1, 1, 1]} : vector<18x18x32xf32> to vector<16x16x32xf32>
    %76 = vector.extract_strided_slice %67 {offsets = [2, 2, 0], sizes = [16, 16, 32], strides = [1, 1, 1]} : vector<18x18x32xf32> to vector<16x16x32xf32>
    %77 = tpu.concatenate %68, %69, %70, %71, %72, %73, %74, %75, %76 in 2 : vector<16x16x32xf32>, vector<16x16x32xf32>, vector<16x16x32xf32>, vector<16x16x32xf32>, vector<16x16x32xf32>, vector<16x16x32xf32>, vector<16x16x32xf32>, vector<16x16x32xf32>, vector<16x16x32xf32> -> vector<16x16x288xf32>
    %78 = vector.shape_cast %77 : vector<16x16x288xf32> to vector<256x288xf32>
    %c0_17 = arith.constant 0 : index
    %c0_18 = arith.constant 0 : index
    %79 = vector.load %arg4[%c0_17, %c0_18] : memref<288x32xf32, #tpu.memory_space<vmem>>, vector<288x32xf32>
    %cst_19 = arith.constant dense<0.000000e+00> : vector<256x32xf32>
    %80 = tpu.matmul %78, %79, %cst_19 {dimension_numbers = #tpu.dot_dimension_numbers<[1], [0], [0], [1], [0, 0, 1, 1], [], []>} : vector<256x288xf32>, vector<288x32xf32>, vector<256x32xf32> -> vector<256x32xf32>
    %c0_20 = arith.constant 0 : index
    %c0_21 = arith.constant 0 : index
    %81 = vector.load %arg5[%c0_20, %c0_21] : memref<1x32xf32, #tpu.memory_space<vmem>>, vector<1x32xf32>
    %82 = vector.broadcast %81 : vector<1x32xf32> to vector<256x32xf32>
    %83 = arith.addf %80, %82 : vector<256x32xf32>
    %cst_22 = arith.constant 0.000000e+00 : f32
    %84 = vector.broadcast %cst_22 : f32 to vector<256x32xf32>
    %85 = arith.maximumf %83, %84 : vector<256x32xf32>
    %86 = vector.shape_cast %85 : vector<256x32xf32> to vector<16x16x32xf32>
    %c1_23 = arith.constant 1 : index
    %c1_24 = arith.constant 1 : index
    %c0_25 = arith.constant 0 : index
    %87 = vector.load %arg11[%c1_23, %c1_24, %c0_25] : memref<18x18x32xf32, #tpu.memory_space<vmem>>, vector<16x16x32xf32>
    tpu.vector_store %arg11[%c1_23, %c1_24, %c0_25], %86 {strides = array<i32>} : memref<18x18x32xf32, #tpu.memory_space<vmem>>, vector<16x16x32xf32>,
    %c0_26 = arith.constant 0 : index
    %c0_27 = arith.constant 0 : index
    %c0_28 = arith.constant 0 : index
    %88 = vector.load %arg11[%c0_26, %c0_27, %c0_28] : memref<18x18x32xf32, #tpu.memory_space<vmem>>, vector<18x18x32xf32>
    %89 = vector.extract_strided_slice %88 {offsets = [0, 0, 0], sizes = [16, 16, 32], strides = [1, 1, 1]} : vector<18x18x32xf32> to vector<16x16x32xf32>
    %90 = vector.extract_strided_slice %88 {offsets = [0, 1, 0], sizes = [16, 16, 32], strides = [1, 1, 1]} : vector<18x18x32xf32> to vector<16x16x32xf32>
    %91 = vector.extract_strided_slice %88 {offsets = [0, 2, 0], sizes = [16, 16, 32], strides = [1, 1, 1]} : vector<18x18x32xf32> to vector<16x16x32xf32>
    %92 = vector.extract_strided_slice %88 {offsets = [1, 0, 0], sizes = [16, 16, 32], strides = [1, 1, 1]} : vector<18x18x32xf32> to vector<16x16x32xf32>
    %93 = vector.extract_strided_slice %88 {offsets = [1, 1, 0], sizes = [16, 16, 32], strides = [1, 1, 1]} : vector<18x18x32xf32> to vector<16x16x32xf32>
    %94 = vector.extract_strided_slice %88 {offsets = [1, 2, 0], sizes = [16, 16, 32], strides = [1, 1, 1]} : vector<18x18x32xf32> to vector<16x16x32xf32>
    %95 = vector.extract_strided_slice %88 {offsets = [2, 0, 0], sizes = [16, 16, 32], strides = [1, 1, 1]} : vector<18x18x32xf32> to vector<16x16x32xf32>
    %96 = vector.extract_strided_slice %88 {offsets = [2, 1, 0], sizes = [16, 16, 32], strides = [1, 1, 1]} : vector<18x18x32xf32> to vector<16x16x32xf32>
    %97 = vector.extract_strided_slice %88 {offsets = [2, 2, 0], sizes = [16, 16, 32], strides = [1, 1, 1]} : vector<18x18x32xf32> to vector<16x16x32xf32>
    %98 = tpu.concatenate %89, %90, %91, %92, %93, %94, %95, %96, %97 in 2 : vector<16x16x32xf32>, vector<16x16x32xf32>, vector<16x16x32xf32>, vector<16x16x32xf32>, vector<16x16x32xf32>, vector<16x16x32xf32>, vector<16x16x32xf32>, vector<16x16x32xf32>, vector<16x16x32xf32> -> vector<16x16x288xf32>
    %99 = vector.shape_cast %98 : vector<16x16x288xf32> to vector<256x288xf32>
    %c0_29 = arith.constant 0 : index
    %c0_30 = arith.constant 0 : index
    %100 = vector.load %arg6[%c0_29, %c0_30] : memref<288x32xf32, #tpu.memory_space<vmem>>, vector<288x32xf32>
    %cst_31 = arith.constant dense<0.000000e+00> : vector<256x32xf32>
    %101 = tpu.matmul %99, %100, %cst_31 {dimension_numbers = #tpu.dot_dimension_numbers<[1], [0], [0], [1], [0, 0, 1, 1], [], []>} : vector<256x288xf32>, vector<288x32xf32>, vector<256x32xf32> -> vector<256x32xf32>
    %c0_32 = arith.constant 0 : index
    %c0_33 = arith.constant 0 : index
    %102 = vector.load %arg7[%c0_32, %c0_33] : memref<1x32xf32, #tpu.memory_space<vmem>>, vector<1x32xf32>
    %103 = vector.broadcast %102 : vector<1x32xf32> to vector<256x32xf32>
    %104 = arith.addf %101, %103 : vector<256x32xf32>
    %cst_34 = arith.constant 0.000000e+00 : f32
    %105 = vector.broadcast %cst_34 : f32 to vector<256x32xf32>
    %106 = arith.maximumf %104, %105 : vector<256x32xf32>
    %107 = vector.shape_cast %106 : vector<256x32xf32> to vector<16x16x32xf32>
    %c1_35 = arith.constant 1 : index
    %c1_36 = arith.constant 1 : index
    %c0_37 = arith.constant 0 : index
    %108 = vector.load %arg11[%c1_35, %c1_36, %c0_37] : memref<18x18x32xf32, #tpu.memory_space<vmem>>, vector<16x16x32xf32>
    tpu.vector_store %arg11[%c1_35, %c1_36, %c0_37], %107 {strides = array<i32>} : memref<18x18x32xf32, #tpu.memory_space<vmem>>, vector<16x16x32xf32>,
    %c0_38 = arith.constant 0 : index
    %c0_39 = arith.constant 0 : index
    %c0_40 = arith.constant 0 : index
    %109 = vector.load %arg11[%c0_38, %c0_39, %c0_40] : memref<18x18x32xf32, #tpu.memory_space<vmem>>, vector<18x18x32xf32>
    %110 = vector.extract_strided_slice %109 {offsets = [0, 0, 0], sizes = [16, 16, 32], strides = [1, 1, 1]} : vector<18x18x32xf32> to vector<16x16x32xf32>
    %111 = vector.extract_strided_slice %109 {offsets = [0, 1, 0], sizes = [16, 16, 32], strides = [1, 1, 1]} : vector<18x18x32xf32> to vector<16x16x32xf32>
    %112 = vector.extract_strided_slice %109 {offsets = [0, 2, 0], sizes = [16, 16, 32], strides = [1, 1, 1]} : vector<18x18x32xf32> to vector<16x16x32xf32>
    %113 = vector.extract_strided_slice %109 {offsets = [1, 0, 0], sizes = [16, 16, 32], strides = [1, 1, 1]} : vector<18x18x32xf32> to vector<16x16x32xf32>
    %114 = vector.extract_strided_slice %109 {offsets = [1, 1, 0], sizes = [16, 16, 32], strides = [1, 1, 1]} : vector<18x18x32xf32> to vector<16x16x32xf32>
    %115 = vector.extract_strided_slice %109 {offsets = [1, 2, 0], sizes = [16, 16, 32], strides = [1, 1, 1]} : vector<18x18x32xf32> to vector<16x16x32xf32>
    %116 = vector.extract_strided_slice %109 {offsets = [2, 0, 0], sizes = [16, 16, 32], strides = [1, 1, 1]} : vector<18x18x32xf32> to vector<16x16x32xf32>
    %117 = vector.extract_strided_slice %109 {offsets = [2, 1, 0], sizes = [16, 16, 32], strides = [1, 1, 1]} : vector<18x18x32xf32> to vector<16x16x32xf32>
    %118 = vector.extract_strided_slice %109 {offsets = [2, 2, 0], sizes = [16, 16, 32], strides = [1, 1, 1]} : vector<18x18x32xf32> to vector<16x16x32xf32>
    %119 = tpu.concatenate %110, %111, %112, %113, %114, %115, %116, %117, %118 in 2 : vector<16x16x32xf32>, vector<16x16x32xf32>, vector<16x16x32xf32>, vector<16x16x32xf32>, vector<16x16x32xf32>, vector<16x16x32xf32>, vector<16x16x32xf32>, vector<16x16x32xf32>, vector<16x16x32xf32> -> vector<16x16x288xf32>
    %120 = vector.shape_cast %119 : vector<16x16x288xf32> to vector<256x288xf32>
    %c0_41 = arith.constant 0 : index
    %c0_42 = arith.constant 0 : index
    %121 = vector.load %arg8[%c0_41, %c0_42] : memref<288x16xf32, #tpu.memory_space<vmem>>, vector<288x16xf32>
    %cst_43 = arith.constant dense<0.000000e+00> : vector<256x16xf32>
    %122 = tpu.matmul %120, %121, %cst_43 {dimension_numbers = #tpu.dot_dimension_numbers<[1], [0], [0], [1], [0, 0, 1, 1], [], []>} : vector<256x288xf32>, vector<288x16xf32>, vector<256x16xf32> -> vector<256x16xf32>
    %c0_44 = arith.constant 0 : index
    %c0_45 = arith.constant 0 : index
    %123 = vector.load %arg9[%c0_44, %c0_45] : memref<1x16xf32, #tpu.memory_space<vmem>>, vector<1x16xf32>
    %124 = vector.broadcast %123 : vector<1x16xf32> to vector<256x16xf32>
    %125 = arith.addf %122, %124 : vector<256x16xf32>
    %cst_46 = arith.constant 0.000000e+00 : f32
    %126 = vector.broadcast %cst_46 : f32 to vector<256x16xf32>
    %127 = arith.maximumf %125, %126 : vector<256x16xf32>
    %128 = vector.shape_cast %127 : vector<256x16xf32> to vector<16x16x16xf32>
    %c0_47 = arith.constant 0 : index
    %c0_48 = arith.constant 0 : index
    %c0_49 = arith.constant 0 : index
    %c0_50 = arith.constant 0 : index
    %129 = vector.load %arg10[%c0_47, %c0_48, %c0_49, %c0_50] : memref<1x16x16x16xf32, #tpu.memory_space<vmem>>, vector<1x16x16x16xf32>
    %130 = vector.shape_cast %129 : vector<1x16x16x16xf32> to vector<16x16x16xf32>
    %131 = vector.shape_cast %128 : vector<16x16x16xf32> to vector<1x16x16x16xf32>
    tpu.vector_store %arg10[%c0_47, %c0_48, %c0_49, %c0_50], %131 {strides = array<i32>} : memref<1x16x16x16xf32, #tpu.memory_space<vmem>>, vector<1x16x16x16xf32>,
    return
  }
  func.func @transform_0(%arg0: i32) -> (i32, i32, i32, i32) {
    %c0_i32 = arith.constant 0 : i32
    %c0_i32_0 = arith.constant 0 : i32
    %c0_i32_1 = arith.constant 0 : i32
    %c0_i32_2 = arith.constant 0 : i32
    return %arg0, %c0_i32, %c0_i32_0, %c0_i32_1 : i32, i32, i32, i32
  }
  func.func @transform_1(%arg0: i32) -> (i32, i32) {
    %c0_i32 = arith.constant 0 : i32
    %c0_i32_0 = arith.constant 0 : i32
    %c0_i32_1 = arith.constant 0 : i32
    return %c0_i32, %c0_i32_0 : i32, i32
  }
  func.func @transform_2(%arg0: i32) -> (i32, i32) {
    %c0_i32 = arith.constant 0 : i32
    %c0_i32_0 = arith.constant 0 : i32
    %c0_i32_1 = arith.constant 0 : i32
    return %c0_i32, %c0_i32_0 : i32, i32
  }
  func.func @transform_3(%arg0: i32) -> (i32, i32) {
    %c0_i32 = arith.constant 0 : i32
    %c0_i32_0 = arith.constant 0 : i32
    %c0_i32_1 = arith.constant 0 : i32
    return %c0_i32, %c0_i32_0 : i32, i32
  }
  func.func @transform_4(%arg0: i32) -> (i32, i32) {
    %c0_i32 = arith.constant 0 : i32
    %c0_i32_0 = arith.constant 0 : i32
    %c0_i32_1 = arith.constant 0 : i32
    return %c0_i32, %c0_i32_0 : i32, i32
  }
  func.func @transform_5(%arg0: i32) -> (i32, i32) {
    %c0_i32 = arith.constant 0 : i32
    %c0_i32_0 = arith.constant 0 : i32
    %c0_i32_1 = arith.constant 0 : i32
    return %c0_i32, %c0_i32_0 : i32, i32
  }
  func.func @transform_6(%arg0: i32) -> (i32, i32) {
    %c0_i32 = arith.constant 0 : i32
    %c0_i32_0 = arith.constant 0 : i32
    %c0_i32_1 = arith.constant 0 : i32
    return %c0_i32, %c0_i32_0 : i32, i32
  }
  func.func @transform_7(%arg0: i32) -> (i32, i32) {
    %c0_i32 = arith.constant 0 : i32
    %c0_i32_0 = arith.constant 0 : i32
    %c0_i32_1 = arith.constant 0 : i32
    return %c0_i32, %c0_i32_0 : i32, i32
  }
  func.func @transform_8(%arg0: i32) -> (i32, i32) {
    %c0_i32 = arith.constant 0 : i32
    %c0_i32_0 = arith.constant 0 : i32
    %c0_i32_1 = arith.constant 0 : i32
    return %c0_i32, %c0_i32_0 : i32, i32
  }
  func.func @transform_9(%arg0: i32) -> (i32, i32, i32, i32) {
    %c0_i32 = arith.constant 0 : i32
    %c0_i32_0 = arith.constant 0 : i32
    %c0_i32_1 = arith.constant 0 : i32
    %c0_i32_2 = arith.constant 0 : i32
    return %arg0, %c0_i32, %c0_i32_0, %c0_i32_1 : i32, i32, i32, i32
  }
}

</mosaic_0001>

<llo_original>
// kernel: projection_input_depth_forward.1
$region0: #{projection_input_depth_forward.1}
  #allocation0 [shape = 'u32[]', space=smem, size = 0x4, offset = 0x4, fixed_abs, tag = 'smem constant byte address 0x4 - core index']
  #allocation1 [shape = 'u32[144,128]{1,0:T(1,128)}', space=vmem, size = 0x12000, scoped, tag = 'internal scratch']
  #allocation2 [shape = 'f32[18,18,32]{2,1,0:T(8,128)}', space=vmem, size = 0x36000, scoped, tag = 'scratch operand']
  %s0 = inlined_call_operand.vmem [shape: f32[2,22,22,4], index: 0, kind: input, shape index: {}]
  %s1 = inlined_call_operand.vmem [shape: f32[196,32], index: 1, kind: input, shape index: {}]
  %s2 = inlined_call_operand.vmem [shape: f32[1,32], index: 2, kind: input, shape index: {}]
  %s3 = inlined_call_operand.vmem [shape: f32[288,32], index: 3, kind: input, shape index: {}]
  %s4 = inlined_call_operand.vmem [shape: f32[1,32], index: 4, kind: input, shape index: {}]
  %s5 = inlined_call_operand.vmem [shape: f32[288,32], index: 5, kind: input, shape index: {}]
  %s6 = inlined_call_operand.vmem [shape: f32[1,32], index: 6, kind: input, shape index: {}]
  %s7 = inlined_call_operand.vmem [shape: f32[288,16], index: 7, kind: input, shape index: {}]
  %s8 = inlined_call_operand.vmem [shape: f32[1,16], index: 8, kind: input, shape index: {}]
  %s9 = inlined_call_operand.vmem [shape: f32[2,16,16,16], index: 9, kind: output, shape index: {}]
  %s10 = sld [smem:[#allocation0]]
  $region69: #{projection_input_depth_forward.1} parent=0
    _
  %s12 = ssub.s32 1, %s10
  %s13 = scalar_select 0, %s12, %s10
  loop: start=0, step=1, limit=4
  $region2: #{projection_input_depth_forward.1} parent=0 // loop_pre_header
    _
  $region3: #{projection_input_depth_forward.1} parent=0 // loop_header
    %s15 = sphi 0, %s19
    %p16 = scmp.ge.s32.totalorder %s15, 4
    %s25 = sphi 0, %s27
    %s28 = sphi 0, %s25
    %s29 = sphi 0, %s28
    %s45 = sphi 0, %s29
    %s49 = sphi 0, %s49
    %s51 = sphi 0, %s49
    %s52 = sphi 0, %s51
    %s66 = sphi 0, %s52
    %s70 = sphi 0, %s70
    %s72 = sphi 0, %s70
    %s73 = sphi 0, %s72
    %s87 = sphi 0, %s73
    %s91 = sphi 0, %s91
    %s93 = sphi 0, %s91
    %s94 = sphi 0, %s93
    %s108 = sphi 0, %s94
    %s112 = sphi 0, %s112
    %s114 = sphi 0, %s112
    %s115 = sphi 0, %s114
    %s129 = sphi 0, %s115
    %s133 = sphi 0, %s133
    %s135 = sphi 0, %s133
    %s136 = sphi 0, %s135
    %s150 = sphi 0, %s136
    %s154 = sphi 0, %s154
    %s156 = sphi 0, %s154
    %s157 = sphi 0, %s156
    %s171 = sphi 0, %s157
    %s175 = sphi 0, %s175
    %s177 = sphi 0, %s175
    %s178 = sphi 0, %s177
    %s192 = sphi 0, %s178
    %s196 = sphi 0, %s196
    %s198 = sphi 0, %s196
    %s199 = sphi 0, %s198
    %s213 = sphi 0, %s199
    %s219 = sphi 0, %s221
    %s222 = sphi 0, %s219
    %s223 = sphi 0, %s222
    %s239 = sphi 0, %s223
  $region4: #{projection_input_depth_forward.1} parent=0 // loop_header_branch
    %18 = sbr.rel (%p16) target = $region8
  $region5: #{projection_input_depth_forward.1} parent=0 // loop_body
    %s20 = ssub.s32 %s15, 1
    %s21 = ssub.s32 %s15, 2
    %s22 = sadd.s32 %s15, 1
    %s23 = ssub.s32 %s15, %s22
    %p24 = scmp.eq.s32.totalorder %s23, 0
    %s26 = sadd.s32 %s25, 1
    %s27 = scalar_select %p24, %s25, %s26
    %p30 = pneg %p24
    %p31 = scmp.eq.s32.totalorder %s15, 1
    %p32 = por %p30, %p31
    %p33 = scmp.ne.s32.totalorder %s25, %s28
    %p34 = scmp.eq.s32.totalorder %s15, 0
    %p35 = por %p33, %p34
    %p36 = scmp.ne.s32.totalorder %s25, %s28
    %p37 = scmp.eq.s32.totalorder %s20, 1
    %p38 = por %p36, %p37
    %p39 = scmp.ne.s32.totalorder %s28, %s29
    %p40 = scmp.eq.s32.totalorder %s20, 0
    %p41 = por %p39, %p40
    %p42 = scmp.ne.s32.totalorder %s28, %s29
    %p43 = scmp.eq.s32.totalorder %s21, 1
    %p44 = por %p42, %p43
    %p46 = scmp.ne.s32.totalorder %s29, %s45
    %p47 = scmp.eq.s32.totalorder %s21, 0
    %p48 = por %p46, %p47
    %s50 = sadd.s32 %s49, 1
    %p53 = scmp.eq.s32.totalorder %s15, 1
    %p54 = scmp.ne.s32.totalorder %s49, %s51
    %p55 = scmp.eq.s32.totalorder %s15, 0
    %p56 = por %p54, %p55
    %p57 = scmp.ne.s32.totalorder %s49, %s51
    %p58 = scmp.eq.s32.totalorder %s20, 1
    %p59 = por %p57, %p58
    %p60 = scmp.ne.s32.totalorder %s51, %s52
    %p61 = scmp.eq.s32.totalorder %s20, 0
    %p62 = por %p60, %p61
    %p63 = scmp.ne.s32.totalorder %s51, %s52
    %p64 = scmp.eq.s32.totalorder %s21, 1
    %p65 = por %p63, %p64
    %p67 = scmp.ne.s32.totalorder %s52, %s66
    %p68 = scmp.eq.s32.totalorder %s21, 0
    %p69 = por %p67, %p68
    %s71 = sadd.s32 %s70, 1
    %p74 = scmp.eq.s32.totalorder %s15, 1
    %p75 = scmp.ne.s32.totalorder %s70, %s72
    %p76 = scmp.eq.s32.totalorder %s15, 0
    %p77 = por %p75, %p76
    %p78 = scmp.ne.s32.totalorder %s70, %s72
    %p79 = scmp.eq.s32.totalorder %s20, 1
    %p80 = por %p78, %p79
    %p81 = scmp.ne.s32.totalorder %s72, %s73
    %p82 = scmp.eq.s32.totalorder %s20, 0
    %p83 = por %p81, %p82
    %p84 = scmp.ne.s32.totalorder %s72, %s73
    %p85 = scmp.eq.s32.totalorder %s21, 1
    %p86 = por %p84, %p85
    %p88 = scmp.ne.s32.totalorder %s73, %s87
    %p89 = scmp.eq.s32.totalorder %s21, 0
    %p90 = por %p88, %p89
    %s92 = sadd.s32 %s91, 1
    %p95 = scmp.eq.s32.totalorder %s15, 1
    %p96 = scmp.ne.s32.totalorder %s91, %s93
    %p97 = scmp.eq.s32.totalorder %s15, 0
    %p98 = por %p96, %p97
    %p99 = scmp.ne.s32.totalorder %s91, %s93
    %p100 = scmp.eq.s32.totalorder %s20, 1
    %p101 = por %p99, %p100
    %p102 = scmp.ne.s32.totalorder %s93, %s94
    %p103 = scmp.eq.s32.totalorder %s20, 0
    %p104 = por %p102, %p103
    %p105 = scmp.ne.s32.totalorder %s93, %s94
    %p106 = scmp.eq.s32.totalorder %s21, 1
    %p107 = por %p105, %p106
    %p109 = scmp.ne.s32.totalorder %s94, %s108
    %p110 = scmp.eq.s32.totalorder %s21, 0
    %p111 = por %p109, %p110
    %s113 = sadd.s32 %s112, 1
    %p116 = scmp.eq.s32.totalorder %s15, 1
    %p117 = scmp.ne.s32.totalorder %s112, %s114
    %p118 = scmp.eq.s32.totalorder %s15, 0
    %p119 = por %p117, %p118
    %p120 = scmp.ne.s32.totalorder %s112, %s114
    %p121 = scmp.eq.s32.totalorder %s20, 1
    %p122 = por %p120, %p121
    %p123 = scmp.ne.s32.totalorder %s114, %s115
    %p124 = scmp.eq.s32.totalorder %s20, 0
    %p125 = por %p123, %p124
    %p126 = scmp.ne.s32.totalorder %s114, %s115
    %p127 = scmp.eq.s32.totalorder %s21, 1
    %p128 = por %p126, %p127
    %p130 = scmp.ne.s32.totalorder %s115, %s129
    %p131 = scmp.eq.s32.totalorder %s21, 0
    %p132 = por %p130, %p131
    %s134 = sadd.s32 %s133, 1
    %p137 = scmp.eq.s32.totalorder %s15, 1
    %p138 = scmp.ne.s32.totalorder %s133, %s135
    %p139 = scmp.eq.s32.totalorder %s15, 0
    %p140 = por %p138, %p139
    %p141 = scmp.ne.s32.totalorder %s133, %s135
    %p142 = scmp.eq.s32.totalorder %s20, 1
    %p143 = por %p141, %p142
    %p144 = scmp.ne.s32.totalorder %s135, %s136
    %p145 = scmp.eq.s32.totalorder %s20, 0
    %p146 = por %p144, %p145
    %p147 = scmp.ne.s32.totalorder %s135, %s136
    %p148 = scmp.eq.s32.totalorder %s21, 1
    %p149 = por %p147, %p148
    %p151 = scmp.ne.s32.totalorder %s136, %s150
    %p152 = scmp.eq.s32.totalorder %s21, 0
    %p153 = por %p151, %p152
    %s155 = sadd.s32 %s154, 1
    %p158 = scmp.eq.s32.totalorder %s15, 1
    %p159 = scmp.ne.s32.totalorder %s154, %s156
    %p160 = scmp.eq.s32.totalorder %s15, 0
    %p161 = por %p159, %p160
    %p162 = scmp.ne.s32.totalorder %s154, %s156
    %p163 = scmp.eq.s32.totalorder %s20, 1
    %p164 = por %p162, %p163
    %p165 = scmp.ne.s32.totalorder %s156, %s157
    %p166 = scmp.eq.s32.totalorder %s20, 0
    %p167 = por %p165, %p166
    %p168 = scmp.ne.s32.totalorder %s156, %s157
    %p169 = scmp.eq.s32.totalorder %s21, 1
    %p170 = por %p168, %p169
    %p172 = scmp.ne.s32.totalorder %s157, %s171
    %p173 = scmp.eq.s32.totalorder %s21, 0
    %p174 = por %p172, %p173
    %s176 = sadd.s32 %s175, 1
    %p179 = scmp.eq.s32.totalorder %s15, 1
    %p180 = scmp.ne.s32.totalorder %s175, %s177
    %p181 = scmp.eq.s32.totalorder %s15, 0
    %p182 = por %p180, %p181
    %p183 = scmp.ne.s32.totalorder %s175, %s177
    %p184 = scmp.eq.s32.totalorder %s20, 1
    %p185 = por %p183, %p184
    %p186 = scmp.ne.s32.totalorder %s177, %s178
    %p187 = scmp.eq.s32.totalorder %s20, 0
    %p188 = por %p186, %p187
    %p189 = scmp.ne.s32.totalorder %s177, %s178
    %p190 = scmp.eq.s32.totalorder %s21, 1
    %p191 = por %p189, %p190
    %p193 = scmp.ne.s32.totalorder %s178, %s192
    %p194 = scmp.eq.s32.totalorder %s21, 0
    %p195 = por %p193, %p194
    %s197 = sadd.s32 %s196, 1
    %p200 = scmp.eq.s32.totalorder %s15, 1
    %p201 = scmp.ne.s32.totalorder %s196, %s198
    %p202 = scmp.eq.s32.totalorder %s15, 0
    %p203 = por %p201, %p202
    %p204 = scmp.ne.s32.totalorder %s196, %s198
    %p205 = scmp.eq.s32.totalorder %s20, 1
    %p206 = por %p204, %p205
    %p207 = scmp.ne.s32.totalorder %s198, %s199
    %p208 = scmp.eq.s32.totalorder %s20, 0
    %p209 = por %p207, %p208
    %p210 = scmp.ne.s32.totalorder %s198, %s199
    %p211 = scmp.eq.s32.totalorder %s21, 1
    %p212 = por %p210, %p211
    %p214 = scmp.ne.s32.totalorder %s199, %s213
    %p215 = scmp.eq.s32.totalorder %s21, 0
    %p216 = por %p214, %p215
    %s217 = ssub.s32 %s15, %s22
    %p218 = scmp.eq.s32.totalorder %s217, 0
    %s220 = sadd.s32 %s219, 1
    %s221 = scalar_select %p218, %s219, %s220
    %p224 = pneg %p218
    %p225 = scmp.eq.s32.totalorder %s15, 1
    %p226 = por %p224, %p225
    %p227 = scmp.ne.s32.totalorder %s219, %s222
    %p228 = scmp.eq.s32.totalorder %s15, 0
    %p229 = por %p227, %p228
    %p230 = scmp.ne.s32.totalorder %s219, %s222
    %p231 = scmp.eq.s32.totalorder %s20, 1
    %p232 = por %p230, %p231
    %p233 = scmp.ne.s32.totalorder %s222, %s223
    %p234 = scmp.eq.s32.totalorder %s20, 0
    %p235 = por %p233, %p234
    %p236 = scmp.ne.s32.totalorder %s222, %s223
    %p237 = scmp.eq.s32.totalorder %s21, 1
    %p238 = por %p236, %p237
    %p240 = scmp.ne.s32.totalorder %s223, %s239
    %p241 = scmp.eq.s32.totalorder %s21, 0
    %p242 = por %p240, %p241
    %p243 = scmp.le.s32.totalorder 1, %s15
    %p244 = scmp.lt.s32.totalorder %s15, 3
    %p245 = pnand %p243, %p244
    %p246 = pneg %p245
    // Predicated region
    $region9: #{projection_input_depth_forward.1} parent=5 // pred_check
      _
    $region10: #{projection_input_depth_forward.1} parent=5 // pred_check_branch
      %248 = sbr.rel (%p245) target = $region12
    $region11: #{projection_input_depth_forward.1} parent=5 // pred_region
      %s249 = ssub.s32 %s15, 1
      // Predicated region
      $region13: #{projection_input_depth_forward.1} parent=11 // pred_check
        %p250 = pneg %p62
      $region14: #{projection_input_depth_forward.1} parent=11 // pred_check_branch
        %252 = sbr.rel (%p250) target = $region16
      $region15: #{projection_input_depth_forward.1} parent=11 // pred_region
        _
      $region16: #{projection_input_depth_forward.1} parent=11 // pred_fallthru
        _
      // Predicated region
      $region17: #{projection_input_depth_forward.1} parent=11 // pred_check
        %p253 = pneg %p83
      $region18: #{projection_input_depth_forward.1} parent=11 // pred_check_branch
        %255 = sbr.rel (%p253) target = $region20
      $region19: #{projection_input_depth_forward.1} parent=11 // pred_region
        _
      $region20: #{projection_input_depth_forward.1} parent=11 // pred_fallthru
        _
      // Predicated region
      $region21: #{projection_input_depth_forward.1} parent=11 // pred_check
        %p256 = pneg %p104
      $region22: #{projection_input_depth_forward.1} parent=11 // pred_check_branch
        %258 = sbr.rel (%p256) target = $region24
      $region23: #{projection_input_depth_forward.1} parent=11 // pred_region
        _
      $region24: #{projection_input_depth_forward.1} parent=11 // pred_fallthru
        _
      // Predicated region
      $region25: #{projection_input_depth_forward.1} parent=11 // pred_check
        %p259 = pneg %p125
      $region26: #{projection_input_depth_forward.1} parent=11 // pred_check_branch
        %261 = sbr.rel (%p259) target = $region28
      $region27: #{projection_input_depth_forward.1} parent=11 // pred_region
        _
      $region28: #{projection_input_depth_forward.1} parent=11 // pred_fallthru
        _
      // Predicated region
      $region29: #{projection_input_depth_forward.1} parent=11 // pred_check
        %p262 = pneg %p146
      $region30: #{projection_input_depth_forward.1} parent=11 // pred_check_branch
        %264 = sbr.rel (%p262) target = $region32
      $region31: #{projection_input_depth_forward.1} parent=11 // pred_region
        _
      $region32: #{projection_input_depth_forward.1} parent=11 // pred_fallthru
        _
      // Predicated region
      $region33: #{projection_input_depth_forward.1} parent=11 // pred_check
        %p265 = pneg %p167
      $region34: #{projection_input_depth_forward.1} parent=11 // pred_check_branch
        %267 = sbr.rel (%p265) target = $region36
      $region35: #{projection_input_depth_forward.1} parent=11 // pred_region
        _
      $region36: #{projection_input_depth_forward.1} parent=11 // pred_fallthru
        _
      // Predicated region
      $region37: #{projection_input_depth_forward.1} parent=11 // pred_check
        %p268 = pneg %p188
      $region38: #{projection_input_depth_forward.1} parent=11 // pred_check_branch
        %270 = sbr.rel (%p268) target = $region40
      $region39: #{projection_input_depth_forward.1} parent=11 // pred_region
        _
      $region40: #{projection_input_depth_forward.1} parent=11 // pred_fallthru
        _
      // Predicated region
      $region41: #{projection_input_depth_forward.1} parent=11 // pred_check
        %p271 = pneg %p209
      $region42: #{projection_input_depth_forward.1} parent=11 // pred_check_branch
        %273 = sbr.rel (%p271) target = $region44
      $region43: #{projection_input_depth_forward.1} parent=11 // pred_region
        _
      $region44: #{projection_input_depth_forward.1} parent=11 // pred_fallthru
        _
    $region12: #{projection_input_depth_forward.1} parent=5 // pred_fallthru
      _
    %p274 = scmp.lt.s32.totalorder %s15, 2
    // Predicated region
    $region45: #{projection_input_depth_forward.1} parent=5 // pred_check
      %p275 = pneg %p274
    $region46: #{projection_input_depth_forward.1} parent=5 // pred_check_branch
      %277 = sbr.rel (%p275) target = $region48
    $region47: #{projection_input_depth_forward.1} parent=5 // pred_region
      // Predicated region
      $region49: #{projection_input_depth_forward.1} parent=47 // pred_check
        %p278 = pneg %p35
      $region50: #{projection_input_depth_forward.1} parent=47 // pred_check_branch
        %280 = sbr.rel (%p278) target = $region52
      $region51: #{projection_input_depth_forward.1} parent=47 // pred_region
        %p281 = scmp.lt.s32.totalorder %s15, 1
        %s282 = scalar_select %p281, %s15, 1
        %s283 = smul.addr %s282, 66
        %s284 = smul.addr %s283, 8
        %s285 = scalar_lea.vmem %s0, %s284
      $region52: #{projection_input_depth_forward.1} parent=47 // pred_fallthru
        _
    $region48: #{projection_input_depth_forward.1} parent=5 // pred_fallthru
      _
    %p286 = scmp.le.s32.totalorder 1, %s15
    %p287 = scmp.lt.s32.totalorder %s15, 3
    %p288 = pnand %p286, %p287
    %p289 = pneg %p288
    // Predicated region
    $region53: #{projection_input_depth_forward.1} parent=5 // pred_check
      _
    $region54: #{projection_input_depth_forward.1} parent=5 // pred_check_branch
      %291 = sbr.rel (%p288) target = $region56
    $region55: #{projection_input_depth_forward.1} parent=5 // pred_region
      %s292 = ssub.s32 %s15, 1
      %p293 = scmp.lt.s32.totalorder %s20, 1
      %s294 = scalar_select %p293, %s20, 1
      %s295 = smul.addr %s294, 66
      %s296 = smul.addr %s295, 8
      %s297 = scalar_lea.vmem %s0, %s296
      %p298 = pneg %p41
      %p299 = pneg %p38
      %p300 = pneg %p62
      %p301 = pneg %p59
      %p302 = pneg %p83
      %p303 = pneg %p80
      %p304 = pneg %p104
      %p305 = pneg %p101
      %p306 = pneg %p125
      %p307 = pneg %p122
      %p308 = pneg %p146
      %p309 = pneg %p143
      %p310 = pneg %p167
      %p311 = pneg %p164
      %p312 = pneg %p188
      %p313 = pneg %p185
      %p314 = pneg %p209
      %p315 = pneg %p206
      %p316 = pneg %p235
      %p317 = pneg %p232
      %p318 = scmp.lt.s32.totalorder %s20, 1
      %s319 = scalar_select %p318, %s20, 1
      %s320 = smul.addr %s319, 32
      %s321 = smul.addr %s320, 8
      %s322 = scalar_lea.vmem %s9, %s321
      %p323 = scmp.lt.s32.totalorder %s20, 1
      %s324 = scalar_select %p323, %s20, 1
      %s325 = smul.addr %s324, 66
      %s326 = smul.addr %s325, 8
      %s327 = scalar_lea.vmem %s0, %s326
      %p328 = scmp.lt.s32.totalorder %s20, 1
      %s329 = scalar_select %p328, %s20, 1
      %s330 = smul.addr %s329, 32
      %s331 = smul.addr %s330, 8
      %s332 = scalar_lea.vmem %s9, %s331
      %vm333 = vcmask 261120
      %334 = vst.msk [vmem:[#allocation2] sm:$0xff] %vm333, 0.0
      %335 = vst.msk [vmem:[#allocation2 + $0x8] sm:$0xff] %vm333, 0.0
      %vm336 = vcmask 254976
      %337 = vst.msk [vmem:[#allocation2 + $0x10] sm:$0x3] %vm336, 0.0
      %338 = vst.msk [vmem:[#allocation2 + $0x18] sm:$0xff] %vm333, 0.0
      %339 = vst.msk [vmem:[#allocation2 + $0x20] sm:$0xff] %vm333, 0.0
      %340 = vst.msk [vmem:[#allocation2 + $0x28] sm:$0x3] %vm336, 0.0
      %341 = vst.msk [vmem:[#allocation2 + $0x30] sm:$0xff] %vm333, 0.0
      %342 = vst.msk [vmem:[#allocation2 + $0x38] sm:$0xff] %vm333, 0.0
      %343 = vst.msk [vmem:[#allocation2 + $0x40] sm:$0x3] %vm336, 0.0
      %344 = vst.msk [vmem:[#allocation2 + $0x48] sm:$0xff] %vm333, 0.0
      %345 = vst.msk [vmem:[#allocation2 + $0x50] sm:$0xff] %vm333, 0.0
      %346 = vst.msk [vmem:[#allocation2 + $0x58] sm:$0x3] %vm336, 0.0
      %347 = vst.msk [vmem:[#allocation2 + $0x60] sm:$0xff] %vm333, 0.0
      %348 = vst.msk [vmem:[#allocation2 + $0x68] sm:$0xff] %vm333, 0.0
      %349 = vst.msk [vmem:[#allocation2 + $0x70] sm:$0x3] %vm336, 0.0
      %350 = vst.msk [vmem:[#allocation2 + $0x78] sm:$0xff] %vm333, 0.0
      %351 = vst.msk [vmem:[#allocation2 + $0x80] sm:$0xff] %vm333, 0.0
      %352 = vst.msk [vmem:[#allocation2 + $0x88] sm:$0x3] %vm336, 0.0
      %353 = vst.msk [vmem:[#allocation2 + $0x90] sm:$0xff] %vm333, 0.0
      %354 = vst.msk [vmem:[#allocation2 + $0x98] sm:$0xff] %vm333, 0.0
      %355 = vst.msk [vmem:[#allocation2 + $0xa0] sm:$0x3] %vm336, 0.0
      %356 = vst.msk [vmem:[#allocation2 + $0xa8] sm:$0xff] %vm333, 0.0
      %357 = vst.msk [vmem:[#allocation2 + $0xb0] sm:$0xff] %vm333, 0.0
      %358 = vst.msk [vmem:[#allocation2 + $0xb8] sm:$0x3] %vm336, 0.0
      %359 = vst.msk [vmem:[#allocation2 + $0xc0] sm:$0xff] %vm333, 0.0
      %360 = vst.msk [vmem:[#allocation2 + $0xc8] sm:$0xff] %vm333, 0.0
      %361 = vst.msk [vmem:[#allocation2 + $0xd0] sm:$0x3] %vm336, 0.0
      %362 = vst.msk [vmem:[#allocation2 + $0xd8] sm:$0xff] %vm333, 0.0
      %363 = vst.msk [vmem:[#allocation2 + $0xe0] sm:$0xff] %vm333, 0.0
      %364 = vst.msk [vmem:[#allocation2 + $0xe8] sm:$0x3] %vm336, 0.0
      %365 = vst.msk [vmem:[#allocation2 + $0xf0] sm:$0xff] %vm333, 0.0
      %366 = vst.msk [vmem:[#allocation2 + $0xf8] sm:$0xff] %vm333, 0.0
      %367 = vst.msk [vmem:[#allocation2 + $0x100] sm:$0x3] %vm336, 0.0
      %368 = vst.msk [vmem:[#allocation2 + $0x108] sm:$0xff] %vm333, 0.0
      %369 = vst.msk [vmem:[#allocation2 + $0x110] sm:$0xff] %vm333, 0.0
      %370 = vst.msk [vmem:[#allocation2 + $0x118] sm:$0x3] %vm336, 0.0
      %371 = vst.msk [vmem:[#allocation2 + $0x120] sm:$0xff] %vm333, 0.0
      %372 = vst.msk [vmem:[#allocation2 + $0x128] sm:$0xff] %vm333, 0.0
      %373 = vst.msk [vmem:[#allocation2 + $0x130] sm:$0x3] %vm336, 0.0
      %374 = vst.msk [vmem:[#allocation2 + $0x138] sm:$0xff] %vm333, 0.0
      %375 = vst.msk [vmem:[#allocation2 + $0x140] sm:$0xff] %vm333, 0.0
      %376 = vst.msk [vmem:[#allocation2 + $0x148] sm:$0x3] %vm336, 0.0
      %377 = vst.msk [vmem:[#allocation2 + $0x150] sm:$0xff] %vm333, 0.0
      %378 = vst.msk [vmem:[#allocation2 + $0x158] sm:$0xff] %vm333, 0.0
      %379 = vst.msk [vmem:[#allocation2 + $0x160] sm:$0x3] %vm336, 0.0
      %380 = vst.msk [vmem:[#allocation2 + $0x168] sm:$0xff] %vm333, 0.0
      %381 = vst.msk [vmem:[#allocation2 + $0x170] sm:$0xff] %vm333, 0.0
      %382 = vst.msk [vmem:[#allocation2 + $0x178] sm:$0x3] %vm336, 0.0
      %383 = vst.msk [vmem:[#allocation2 + $0x180] sm:$0xff] %vm333, 0.0
      %384 = vst.msk [vmem:[#allocation2 + $0x188] sm:$0xff] %vm333, 0.0
      %385 = vst.msk [vmem:[#allocation2 + $0x190] sm:$0x3] %vm336, 0.0
      %386 = vst.msk [vmem:[#allocation2 + $0x198] sm:$0xff] %vm333, 0.0
      %387 = vst.msk [vmem:[#allocation2 + $0x1a0] sm:$0xff] %vm333, 0.0
      %388 = vst.msk [vmem:[#allocation2 + $0x1a8] sm:$0x3] %vm336, 0.0
      %v389 = vld [vmem:[%s327] sm:$0xff]
      %v390 = vld [vmem:[%s327 + $0x8] sm:$0xff]
      %v391 = vld [vmem:[%s327 + $0x10] sm:$0x3f]
      %v392 = vld [vmem:[%s327 + $0x18] sm:$0xff]
      %v393 = vld [vmem:[%s327 + $0x20] sm:$0xff]
      %v394 = vld [vmem:[%s327 + $0x28] sm:$0x3f]
      %v395 = vld [vmem:[%s327 + $0x30] sm:$0xff]
      %v396 = vld [vmem:[%s327 + $0x38] sm:$0xff]
      %v397 = vld [vmem:[%s327 + $0x40] sm:$0x3f]
      %v398 = vld [vmem:[%s327 + $0x48] sm:$0xff]
      %v399 = vld [vmem:[%s327 + $0x50] sm:$0xff]
      %v400 = vld [vmem:[%s327 + $0x58] sm:$0x3f]
      %v401 = vld [vmem:[%s327 + $0x60] sm:$0xff]
      %v402 = vld [vmem:[%s327 + $0x68] sm:$0xff]
      %v403 = vld [vmem:[%s327 + $0x70] sm:$0x3f]
      %v404 = vld [vmem:[%s327 + $0x78] sm:$0xff]
      %v405 = vld [vmem:[%s327 + $0x80] sm:$0xff]
      %v406 = vld [vmem:[%s327 + $0x88] sm:$0x3f]
      %v407 = vld [vmem:[%s327 + $0x90] sm:$0xff]
      %v408 = vld [vmem:[%s327 + $0x98] sm:$0xff]
      %v409 = vld [vmem:[%s327 + $0xa0] sm:$0x3f]
      %v410 = vld [vmem:[%s327 + $0xa8] sm:$0xff]
      %v411 = vld [vmem:[%s327 + $0xb0] sm:$0xff]
      %v412 = vld [vmem:[%s327 + $0xb8] sm:$0x3f]
      %v413 = vld [vmem:[%s327 + $0xc0] sm:$0xff]
      %v414 = vld [vmem:[%s327 + $0xc8] sm:$0xff]
      %v415 = vld [vmem:[%s327 + $0xd0] sm:$0x3f]
      %v416 = vld [vmem:[%s327 + $0xd8] sm:$0xff]
      %v417 = vld [vmem:[%s327 + $0xe0] sm:$0xff]
      %v418 = vld [vmem:[%s327 + $0xe8] sm:$0x3f]
      %v419 = vld [vmem:[%s327 + $0xf0] sm:$0xff]
      %v420 = vld [vmem:[%s327 + $0xf8] sm:$0xff]
      %v421 = vld [vmem:[%s327 + $0x100] sm:$0x3f]
      %v422 = vld [vmem:[%s327 + $0x108] sm:$0xff]
      %v423 = vld [vmem:[%s327 + $0x110] sm:$0xff]
      %v424 = vld [vmem:[%s327 + $0x118] sm:$0x3f]
      %v425 = vld [vmem:[%s327 + $0x120] sm:$0xff]
      %v426 = vld [vmem:[%s327 + $0x128] sm:$0xff]
      %v427 = vld [vmem:[%s327 + $0x130] sm:$0x3f]
      %v428 = vld [vmem:[%s327 + $0x138] sm:$0xff]
      %v429 = vld [vmem:[%s327 + $0x140] sm:$0xff]
      %v430 = vld [vmem:[%s327 + $0x148] sm:$0x3f]
      %v431 = vld [vmem:[%s327 + $0x150] sm:$0xff]
      %v432 = vld [vmem:[%s327 + $0x158] sm:$0xff]
      %v433 = vld [vmem:[%s327 + $0x160] sm:$0x3f]
      %v434 = vld [vmem:[%s327 + $0x168] sm:$0xff]
      %v435 = vld [vmem:[%s327 + $0x170] sm:$0xff]
      %v436 = vld [vmem:[%s327 + $0x178] sm:$0x3f]
      %v437 = vld [vmem:[%s327 + $0x180] sm:$0xff]
      %v438 = vld [vmem:[%s327 + $0x188] sm:$0xff]
      %v439 = vld [vmem:[%s327 + $0x190] sm:$0x3f]
      %v440 = vld [vmem:[%s327 + $0x198] sm:$0xff]
      %v441 = vld [vmem:[%s327 + $0x1a0] sm:$0xff]
      %v442 = vld [vmem:[%s327 + $0x1a8] sm:$0x3f]
      %v443 = vld [vmem:[%s327 + $0x1b0] sm:$0xff]
      %v444 = vld [vmem:[%s327 + $0x1b8] sm:$0xff]
      %v445 = vld [vmem:[%s327 + $0x1c0] sm:$0x3f]
      %v446 = vld [vmem:[%s327 + $0x1c8] sm:$0xff]
      %v447 = vld [vmem:[%s327 + $0x1d0] sm:$0xff]
      %v448 = vld [vmem:[%s327 + $0x1d8] sm:$0x3f]
      %v449 = vld [vmem:[%s327 + $0x1e0] sm:$0xff]
      %v450 = vld [vmem:[%s327 + $0x1e8] sm:$0xff]
      %v451 = vld [vmem:[%s327 + $0x1f0] sm:$0x3f]
      %v452 = vld [vmem:[%s327 + $0x1f8] sm:$0xff]
      %v453 = vld [vmem:[%s327 + $0x200] sm:$0xff]
      %v454 = vld [vmem:[%s327 + $0x208] sm:$0x3f]
      %vm503 = vcmask 1046528
      %v504 = vrot.slane %v389, 1
      %v505 = vrot.slane %v390, 1
      %v506 = vsel %vm503, %v504, %v505
      %v507 = vrot.slane %v391, 1
      %v508 = vsel %vm503, %v505, %v507
      %v509 = vrot.slane %v392, 1
      %v510 = vrot.slane %v393, 1
      %v511 = vsel %vm503, %v509, %v510
      %v512 = vrot.slane %v394, 1
      %v513 = vsel %vm503, %v510, %v512
      %v514 = vrot.slane %v395, 1
      %v515 = vrot.slane %v396, 1
      %v516 = vsel %vm503, %v514, %v515
      %v517 = vrot.slane %v397, 1
      %v518 = vsel %vm503, %v515, %v517
      %v519 = vrot.slane %v398, 1
      %v520 = vrot.slane %v399, 1
      %v521 = vsel %vm503, %v519, %v520
      %v522 = vrot.slane %v400, 1
      %v523 = vsel %vm503, %v520, %v522
      %v524 = vrot.slane %v401, 1
      %v525 = vrot.slane %v402, 1
      %v526 = vsel %vm503, %v524, %v525
      %v527 = vrot.slane %v403, 1
      %v528 = vsel %vm503, %v525, %v527
      %v529 = vrot.slane %v404, 1
      %v530 = vrot.slane %v405, 1
      %v531 = vsel %vm503, %v529, %v530
      %v532 = vrot.slane %v406, 1
      %v533 = vsel %vm503, %v530, %v532
      %v534 = vrot.slane %v407, 1
      %v535 = vrot.slane %v408, 1
      %v536 = vsel %vm503, %v534, %v535
      %v537 = vrot.slane %v409, 1
      %v538 = vsel %vm503, %v535, %v537
      %v539 = vrot.slane %v410, 1
      %v540 = vrot.slane %v411, 1
      %v541 = vsel %vm503, %v539, %v540
      %v542 = vrot.slane %v412, 1
      %v543 = vsel %vm503, %v540, %v542
      %v544 = vrot.slane %v413, 1
      %v545 = vrot.slane %v414, 1
      %v546 = vsel %vm503, %v544, %v545
      %v547 = vrot.slane %v415, 1
      %v548 = vsel %vm503, %v545, %v547
      %v549 = vrot.slane %v416, 1
      %v550 = vrot.slane %v417, 1
      %v551 = vsel %vm503, %v549, %v550
      %v552 = vrot.slane %v418, 1
      %v553 = vsel %vm503, %v550, %v552
      %v554 = vrot.slane %v419, 1
      %v555 = vrot.slane %v420, 1
      %v556 = vsel %vm503, %v554, %v555
      %v557 = vrot.slane %v421, 1
      %v558 = vsel %vm503, %v555, %v557
      %v559 = vrot.slane %v422, 1
      %v560 = vrot.slane %v423, 1
      %v561 = vsel %vm503, %v559, %v560
      %v562 = vrot.slane %v424, 1
      %v563 = vsel %vm503, %v560, %v562
      %v564 = vrot.slane %v425, 1
      %v565 = vrot.slane %v426, 1
      %v566 = vsel %vm503, %v564, %v565
      %v567 = vrot.slane %v427, 1
      %v568 = vsel %vm503, %v565, %v567
      %v569 = vrot.slane %v428, 1
      %v570 = vrot.slane %v429, 1
      %v571 = vsel %vm503, %v569, %v570
      %v572 = vrot.slane %v430, 1
      %v573 = vsel %vm503, %v570, %v572
      %v574 = vrot.slane %v431, 1
      %v575 = vrot.slane %v432, 1
      %v576 = vsel %vm503, %v574, %v575
      %v577 = vrot.slane %v433, 1
      %v578 = vsel %vm503, %v575, %v577
      %v579 = vrot.slane %v434, 1
      %v580 = vrot.slane %v435, 1
      %v581 = vsel %vm503, %v579, %v580
      %v582 = vrot.slane %v436, 1
      %v583 = vsel %vm503, %v580, %v582
      %584 = vrot.lane.b32.xlu0 %v506, 4
      %v585 = vpop.permute.xlu0 %584
      %586 = vrot.lane.b32.xlu0 %v508, 4
      %v587 = vpop.permute.xlu0 %586
      %588 = vrot.lane.b32.xlu0 %v511, 4
      %v589 = vpop.permute.xlu0 %588
      %590 = vrot.lane.b32.xlu0 %v513, 4
      %v591 = vpop.permute.xlu0 %590
      %592 = vrot.lane.b32.xlu0 %v516, 4
      %v593 = vpop.permute.xlu0 %592
      %594 = vrot.lane.b32.xlu0 %v518, 4
      %v595 = vpop.permute.xlu0 %594
      %596 = vrot.lane.b32.xlu0 %v521, 4
      %v597 = vpop.permute.xlu0 %596
      %598 = vrot.lane.b32.xlu0 %v523, 4
      %v599 = vpop.permute.xlu0 %598
      %600 = vrot.lane.b32.xlu0 %v526, 4
      %v601 = vpop.permute.xlu0 %600
      %602 = vrot.lane.b32.xlu0 %v528, 4
      %v603 = vpop.permute.xlu0 %602
      %604 = vrot.lane.b32.xlu0 %v531, 4
      %v605 = vpop.permute.xlu0 %604
      %606 = vrot.lane.b32.xlu0 %v533, 4
      %v607 = vpop.permute.xlu0 %606
      %608 = vrot.lane.b32.xlu0 %v536, 4
      %v609 = vpop.permute.xlu0 %608
      %610 = vrot.lane.b32.xlu0 %v538, 4
      %v611 = vpop.permute.xlu0 %610
      %612 = vrot.lane.b32.xlu0 %v541, 4
      %v613 = vpop.permute.xlu0 %612
      %614 = vrot.lane.b32.xlu0 %v543, 4
      %v615 = vpop.permute.xlu0 %614
      %616 = vrot.lane.b32.xlu0 %v546, 4
      %v617 = vpop.permute.xlu0 %616
      %618 = vrot.lane.b32.xlu0 %v548, 4
      %v619 = vpop.permute.xlu0 %618
      %620 = vrot.lane.b32.xlu0 %v551, 4
      %v621 = vpop.permute.xlu0 %620
      %622 = vrot.lane.b32.xlu0 %v553, 4
      %v623 = vpop.permute.xlu0 %622
      %624 = vrot.lane.b32.xlu0 %v556, 4
      %v625 = vpop.permute.xlu0 %624
      %626 = vrot.lane.b32.xlu0 %v558, 4
      %v627 = vpop.permute.xlu0 %626
      %628 = vrot.lane.b32.xlu0 %v561, 4
      %v629 = vpop.permute.xlu0 %628
      %630 = vrot.lane.b32.xlu0 %v563, 4
      %v631 = vpop.permute.xlu0 %630
      %632 = vrot.lane.b32.xlu0 %v566, 4
      %v633 = vpop.permute.xlu0 %632
      %634 = vrot.lane.b32.xlu0 %v568, 4
      %v635 = vpop.permute.xlu0 %634
      %636 = vrot.lane.b32.xlu0 %v571, 4
      %v637 = vpop.permute.xlu0 %636
      %638 = vrot.lane.b32.xlu0 %v573, 4
      %v639 = vpop.permute.xlu0 %638
      %640 = vrot.lane.b32.xlu0 %v576, 4
      %v641 = vpop.permute.xlu0 %640
      %642 = vrot.lane.b32.xlu0 %v578, 4
      %v643 = vpop.permute.xlu0 %642
      %644 = vrot.lane.b32.xlu0 %v581, 4
      %v645 = vpop.permute.xlu0 %644
      %646 = vrot.lane.b32.xlu0 %v583, 4
      %v647 = vpop.permute.xlu0 %646
      %vm680 = vcmask 1045504
      %v681 = vrot.slane %v389, 2
      %v682 = vrot.slane %v390, 2
      %v683 = vsel %vm680, %v681, %v682
      %v684 = vrot.slane %v391, 2
      %v685 = vsel %vm680, %v682, %v684
      %v686 = vrot.slane %v392, 2
      %v687 = vrot.slane %v393, 2
      %v688 = vsel %vm680, %v686, %v687
      %v689 = vrot.slane %v394, 2
      %v690 = vsel %vm680, %v687, %v689
      %v691 = vrot.slane %v395, 2
      %v692 = vrot.slane %v396, 2
      %v693 = vsel %vm680, %v691, %v692
      %v694 = vrot.slane %v397, 2
      %v695 = vsel %vm680, %v692, %v694
      %v696 = vrot.slane %v398, 2
      %v697 = vrot.slane %v399, 2
      %v698 = vsel %vm680, %v696, %v697
      %v699 = vrot.slane %v400, 2
      %v700 = vsel %vm680, %v697, %v699
      %v701 = vrot.slane %v401, 2
      %v702 = vrot.slane %v402, 2
      %v703 = vsel %vm680, %v701, %v702
      %v704 = vrot.slane %v403, 2
      %v705 = vsel %vm680, %v702, %v704
      %v706 = vrot.slane %v404, 2
      %v707 = vrot.slane %v405, 2
      %v708 = vsel %vm680, %v706, %v707
      %v709 = vrot.slane %v406, 2
      %v710 = vsel %vm680, %v707, %v709
      %v711 = vrot.slane %v407, 2
      %v712 = vrot.slane %v408, 2
      %v713 = vsel %vm680, %v711, %v712
      %v714 = vrot.slane %v409, 2
      %v715 = vsel %vm680, %v712, %v714
      %v716 = vrot.slane %v410, 2
      %v717 = vrot.slane %v411, 2
      %v718 = vsel %vm680, %v716, %v717
      %v719 = vrot.slane %v412, 2
      %v720 = vsel %vm680, %v717, %v719
      %v721 = vrot.slane %v413, 2
      %v722 = vrot.slane %v414, 2
      %v723 = vsel %vm680, %v721, %v722
      %v724 = vrot.slane %v415, 2
      %v725 = vsel %vm680, %v722, %v724
      %v726 = vrot.slane %v416, 2
      %v727 = vrot.slane %v417, 2
      %v728 = vsel %vm680, %v726, %v727
      %v729 = vrot.slane %v418, 2
      %v730 = vsel %vm680, %v727, %v729
      %v731 = vrot.slane %v419, 2
      %v732 = vrot.slane %v420, 2
      %v733 = vsel %vm680, %v731, %v732
      %v734 = vrot.slane %v421, 2
      %v735 = vsel %vm680, %v732, %v734
      %v736 = vrot.slane %v422, 2
      %v737 = vrot.slane %v423, 2
      %v738 = vsel %vm680, %v736, %v737
      %v739 = vrot.slane %v424, 2
      %v740 = vsel %vm680, %v737, %v739
      %v741 = vrot.slane %v425, 2
      %v742 = vrot.slane %v426, 2
      %v743 = vsel %vm680, %v741, %v742
      %v744 = vrot.slane %v427, 2
      %v745 = vsel %vm680, %v742, %v744
      %v746 = vrot.slane %v428, 2
      %v747 = vrot.slane %v429, 2
      %v748 = vsel %vm680, %v746, %v747
      %v749 = vrot.slane %v430, 2
      %v750 = vsel %vm680, %v747, %v749
      %v751 = vrot.slane %v431, 2
      %v752 = vrot.slane %v432, 2
      %v753 = vsel %vm680, %v751, %v752
      %v754 = vrot.slane %v433, 2
      %v755 = vsel %vm680, %v752, %v754
      %v756 = vrot.slane %v434, 2
      %v757 = vrot.slane %v435, 2
      %v758 = vsel %vm680, %v756, %v757
      %v759 = vrot.slane %v436, 2
      %v760 = vsel %vm680, %v757, %v759
      %761 = vrot.lane.b32.xlu0 %v683, 8
      %v762 = vpop.permute.xlu0 %761
      %763 = vrot.lane.b32.xlu0 %v685, 8
      %v764 = vpop.permute.xlu0 %763
      %765 = vrot.lane.b32.xlu0 %v688, 8
      %v766 = vpop.permute.xlu0 %765
      %767 = vrot.lane.b32.xlu0 %v690, 8
      %v768 = vpop.permute.xlu0 %767
      %769 = vrot.lane.b32.xlu0 %v693, 8
      %v770 = vpop.permute.xlu0 %769
      %771 = vrot.lane.b32.xlu0 %v695, 8
      %v772 = vpop.permute.xlu0 %771
      %773 = vrot.lane.b32.xlu0 %v698, 8
      %v774 = vpop.permute.xlu0 %773
      %775 = vrot.lane.b32.xlu0 %v700, 8
      %v776 = vpop.permute.xlu0 %775
      %777 = vrot.lane.b32.xlu0 %v703, 8
      %v778 = vpop.permute.xlu0 %777
      %779 = vrot.lane.b32.xlu0 %v705, 8
      %v780 = vpop.permute.xlu0 %779
      %781 = vrot.lane.b32.xlu0 %v708, 8
      %v782 = vpop.permute.xlu0 %781
      %783 = vrot.lane.b32.xlu0 %v710, 8
      %v784 = vpop.permute.xlu0 %783
      %785 = vrot.lane.b32.xlu0 %v713, 8
      %v786 = vpop.permute.xlu0 %785
      %787 = vrot.lane.b32.xlu0 %v715, 8
      %v788 = vpop.permute.xlu0 %787
      %789 = vrot.lane.b32.xlu0 %v718, 8
      %v790 = vpop.permute.xlu0 %789
      %791 = vrot.lane.b32.xlu0 %v720, 8
      %v792 = vpop.permute.xlu0 %791
      %793 = vrot.lane.b32.xlu0 %v723, 8
      %v794 = vpop.permute.xlu0 %793
      %795 = vrot.lane.b32.xlu0 %v725, 8
      %v796 = vpop.permute.xlu0 %795
      %797 = vrot.lane.b32.xlu0 %v728, 8
      %v798 = vpop.permute.xlu0 %797
      %799 = vrot.lane.b32.xlu0 %v730, 8
      %v800 = vpop.permute.xlu0 %799
      %801 = vrot.lane.b32.xlu0 %v733, 8
      %v802 = vpop.permute.xlu0 %801
      %803 = vrot.lane.b32.xlu0 %v735, 8
      %v804 = vpop.permute.xlu0 %803
      %805 = vrot.lane.b32.xlu0 %v738, 8
      %v806 = vpop.permute.xlu0 %805
      %807 = vrot.lane.b32.xlu0 %v740, 8
      %v808 = vpop.permute.xlu0 %807
      %809 = vrot.lane.b32.xlu0 %v743, 8
      %v810 = vpop.permute.xlu0 %809
      %811 = vrot.lane.b32.xlu0 %v745, 8
      %v812 = vpop.permute.xlu0 %811
      %813 = vrot.lane.b32.xlu0 %v748, 8
      %v814 = vpop.permute.xlu0 %813
      %815 = vrot.lane.b32.xlu0 %v750, 8
      %v816 = vpop.permute.xlu0 %815
      %817 = vrot.lane.b32.xlu0 %v753, 8
      %v818 = vpop.permute.xlu0 %817
      %819 = vrot.lane.b32.xlu0 %v755, 8
      %v820 = vpop.permute.xlu0 %819
      %821 = vrot.lane.b32.xlu0 %v758, 8
      %v822 = vpop.permute.xlu0 %821
      %823 = vrot.lane.b32.xlu0 %v760, 8
      %v824 = vpop.permute.xlu0 %823
      %vm857 = vcmask 1044480
      %v858 = vrot.slane %v389, 3
      %v859 = vrot.slane %v390, 3
      %v860 = vsel %vm857, %v858, %v859
      %v861 = vrot.slane %v391, 3
      %v862 = vsel %vm857, %v859, %v861
      %v863 = vrot.slane %v392, 3
      %v864 = vrot.slane %v393, 3
      %v865 = vsel %vm857, %v863, %v864
      %v866 = vrot.slane %v394, 3
      %v867 = vsel %vm857, %v864, %v866
      %v868 = vrot.slane %v395, 3
      %v869 = vrot.slane %v396, 3
      %v870 = vsel %vm857, %v868, %v869
      %v871 = vrot.slane %v397, 3
      %v872 = vsel %vm857, %v869, %v871
      %v873 = vrot.slane %v398, 3
      %v874 = vrot.slane %v399, 3
      %v875 = vsel %vm857, %v873, %v874
      %v876 = vrot.slane %v400, 3
      %v877 = vsel %vm857, %v874, %v876
      %v878 = vrot.slane %v401, 3
      %v879 = vrot.slane %v402, 3
      %v880 = vsel %vm857, %v878, %v879
      %v881 = vrot.slane %v403, 3
      %v882 = vsel %vm857, %v879, %v881
      %v883 = vrot.slane %v404, 3
      %v884 = vrot.slane %v405, 3
      %v885 = vsel %vm857, %v883, %v884
      %v886 = vrot.slane %v406, 3
      %v887 = vsel %vm857, %v884, %v886
      %v888 = vrot.slane %v407, 3
      %v889 = vrot.slane %v408, 3
      %v890 = vsel %vm857, %v888, %v889
      %v891 = vrot.slane %v409, 3
      %v892 = vsel %vm857, %v889, %v891
      %v893 = vrot.slane %v410, 3
      %v894 = vrot.slane %v411, 3
      %v895 = vsel %vm857, %v893, %v894
      %v896 = vrot.slane %v412, 3
      %v897 = vsel %vm857, %v894, %v896
      %v898 = vrot.slane %v413, 3
      %v899 = vrot.slane %v414, 3
      %v900 = vsel %vm857, %v898, %v899
      %v901 = vrot.slane %v415, 3
      %v902 = vsel %vm857, %v899, %v901
      %v903 = vrot.slane %v416, 3
      %v904 = vrot.slane %v417, 3
      %v905 = vsel %vm857, %v903, %v904
      %v906 = vrot.slane %v418, 3
      %v907 = vsel %vm857, %v904, %v906
      %v908 = vrot.slane %v419, 3
      %v909 = vrot.slane %v420, 3
      %v910 = vsel %vm857, %v908, %v909
      %v911 = vrot.slane %v421, 3
      %v912 = vsel %vm857, %v909, %v911
      %v913 = vrot.slane %v422, 3
      %v914 = vrot.slane %v423, 3
      %v915 = vsel %vm857, %v913, %v914
      %v916 = vrot.slane %v424, 3
      %v917 = vsel %vm857, %v914, %v916
      %v918 = vrot.slane %v425, 3
      %v919 = vrot.slane %v426, 3
      %v920 = vsel %vm857, %v918, %v919
      %v921 = vrot.slane %v427, 3
      %v922 = vsel %vm857, %v919, %v921
      %v923 = vrot.slane %v428, 3
      %v924 = vrot.slane %v429, 3
      %v925 = vsel %vm857, %v923, %v924
      %v926 = vrot.slane %v430, 3
      %v927 = vsel %vm857, %v924, %v926
      %v928 = vrot.slane %v431, 3
      %v929 = vrot.slane %v432, 3
      %v930 = vsel %vm857, %v928, %v929
      %v931 = vrot.slane %v433, 3
      %v932 = vsel %vm857, %v929, %v931
      %v933 = vrot.slane %v434, 3
      %v934 = vrot.slane %v435, 3
      %v935 = vsel %vm857, %v933, %v934
      %v936 = vrot.slane %v436, 3
      %v937 = vsel %vm857, %v934, %v936
      %938 = vrot.lane.b32.xlu0 %v860, 12
      %v939 = vpop.permute.xlu0 %938
      %940 = vrot.lane.b32.xlu0 %v862, 12
      %v941 = vpop.permute.xlu0 %940
      %942 = vrot.lane.b32.xlu0 %v865, 12
      %v943 = vpop.permute.xlu0 %942
      %944 = vrot.lane.b32.xlu0 %v867, 12
      %v945 = vpop.permute.xlu0 %944
      %946 = vrot.lane.b32.xlu0 %v870, 12
      %v947 = vpop.permute.xlu0 %946
      %948 = vrot.lane.b32.xlu0 %v872, 12
      %v949 = vpop.permute.xlu0 %948
      %950 = vrot.lane.b32.xlu0 %v875, 12
      %v951 = vpop.permute.xlu0 %950
      %952 = vrot.lane.b32.xlu0 %v877, 12
      %v953 = vpop.permute.xlu0 %952
      %954 = vrot.lane.b32.xlu0 %v880, 12
      %v955 = vpop.permute.xlu0 %954
      %956 = vrot.lane.b32.xlu0 %v882, 12
      %v957 = vpop.permute.xlu0 %956
      %958 = vrot.lane.b32.xlu0 %v885, 12
      %v959 = vpop.permute.xlu0 %958
      %960 = vrot.lane.b32.xlu0 %v887, 12
      %v961 = vpop.permute.xlu0 %960
      %962 = vrot.lane.b32.xlu0 %v890, 12
      %v963 = vpop.permute.xlu0 %962
      %964 = vrot.lane.b32.xlu0 %v892, 12
      %v965 = vpop.permute.xlu0 %964
      %966 = vrot.lane.b32.xlu0 %v895, 12
      %v967 = vpop.permute.xlu0 %966
      %968 = vrot.lane.b32.xlu0 %v897, 12
      %v969 = vpop.permute.xlu0 %968
      %970 = vrot.lane.b32.xlu0 %v900, 12
      %v971 = vpop.permute.xlu0 %970
      %972 = vrot.lane.b32.xlu0 %v902, 12
      %v973 = vpop.permute.xlu0 %972
      %974 = vrot.lane.b32.xlu0 %v905, 12
      %v975 = vpop.permute.xlu0 %974
      %976 = vrot.lane.b32.xlu0 %v907, 12
      %v977 = vpop.permute.xlu0 %976
      %978 = vrot.lane.b32.xlu0 %v910, 12
      %v979 = vpop.permute.xlu0 %978
      %980 = vrot.lane.b32.xlu0 %v912, 12
      %v981 = vpop.permute.xlu0 %980
      %982 = vrot.lane.b32.xlu0 %v915, 12
      %v983 = vpop.permute.xlu0 %982
      %984 = vrot.lane.b32.xlu0 %v917, 12
      %v985 = vpop.permute.xlu0 %984
      %986 = vrot.lane.b32.xlu0 %v920, 12
      %v987 = vpop.permute.xlu0 %986
      %988 = vrot.lane.b32.xlu0 %v922, 12
      %v989 = vpop.permute.xlu0 %988
      %990 = vrot.lane.b32.xlu0 %v925, 12
      %v991 = vpop.permute.xlu0 %990
      %992 = vrot.lane.b32.xlu0 %v927, 12
      %v993 = vpop.permute.xlu0 %992
      %994 = vrot.lane.b32.xlu0 %v930, 12
      %v995 = vpop.permute.xlu0 %994
      %996 = vrot.lane.b32.xlu0 %v932, 12
      %v997 = vpop.permute.xlu0 %996
      %998 = vrot.lane.b32.xlu0 %v935, 12
      %v999 = vpop.permute.xlu0 %998
      %1000 = vrot.lane.b32.xlu0 %v937, 12
      %v1001 = vpop.permute.xlu0 %1000
      %vm1034 = vcmask 1043456
      %v1035 = vrot.slane %v389, 4
      %v1036 = vrot.slane %v390, 4
      %v1037 = vsel %vm1034, %v1035, %v1036
      %v1038 = vrot.slane %v391, 4
      %v1039 = vsel %vm1034, %v1036, %v1038
      %v1040 = vrot.slane %v392, 4
      %v1041 = vrot.slane %v393, 4
      %v1042 = vsel %vm1034, %v1040, %v1041
      %v1043 = vrot.slane %v394, 4
      %v1044 = vsel %vm1034, %v1041, %v1043
      %v1045 = vrot.slane %v395, 4
      %v1046 = vrot.slane %v396, 4
      %v1047 = vsel %vm1034, %v1045, %v1046
      %v1048 = vrot.slane %v397, 4
      %v1049 = vsel %vm1034, %v1046, %v1048
      %v1050 = vrot.slane %v398, 4
      %v1051 = vrot.slane %v399, 4
      %v1052 = vsel %vm1034, %v1050, %v1051
      %v1053 = vrot.slane %v400, 4
      %v1054 = vsel %vm1034, %v1051, %v1053
      %v1055 = vrot.slane %v401, 4
      %v1056 = vrot.slane %v402, 4
      %v1057 = vsel %vm1034, %v1055, %v1056
      %v1058 = vrot.slane %v403, 4
      %v1059 = vsel %vm1034, %v1056, %v1058
      %v1060 = vrot.slane %v404, 4
      %v1061 = vrot.slane %v405, 4
      %v1062 = vsel %vm1034, %v1060, %v1061
      %v1063 = vrot.slane %v406, 4
      %v1064 = vsel %vm1034, %v1061, %v1063
      %v1065 = vrot.slane %v407, 4
      %v1066 = vrot.slane %v408, 4
      %v1067 = vsel %vm1034, %v1065, %v1066
      %v1068 = vrot.slane %v409, 4
      %v1069 = vsel %vm1034, %v1066, %v1068
      %v1070 = vrot.slane %v410, 4
      %v1071 = vrot.slane %v411, 4
      %v1072 = vsel %vm1034, %v1070, %v1071
      %v1073 = vrot.slane %v412, 4
      %v1074 = vsel %vm1034, %v1071, %v1073
      %v1075 = vrot.slane %v413, 4
      %v1076 = vrot.slane %v414, 4
      %v1077 = vsel %vm1034, %v1075, %v1076
      %v1078 = vrot.slane %v415, 4
      %v1079 = vsel %vm1034, %v1076, %v1078
      %v1080 = vrot.slane %v416, 4
      %v1081 = vrot.slane %v417, 4
      %v1082 = vsel %vm1034, %v1080, %v1081
      %v1083 = vrot.slane %v418, 4
      %v1084 = vsel %vm1034, %v1081, %v1083
      %v1085 = vrot.slane %v419, 4
      %v1086 = vrot.slane %v420, 4
      %v1087 = vsel %vm1034, %v1085, %v1086
      %v1088 = vrot.slane %v421, 4
      %v1089 = vsel %vm1034, %v1086, %v1088
      %v1090 = vrot.slane %v422, 4
      %v1091 = vrot.slane %v423, 4
      %v1092 = vsel %vm1034, %v1090, %v1091
      %v1093 = vrot.slane %v424, 4
      %v1094 = vsel %vm1034, %v1091, %v1093
      %v1095 = vrot.slane %v425, 4
      %v1096 = vrot.slane %v426, 4
      %v1097 = vsel %vm1034, %v1095, %v1096
      %v1098 = vrot.slane %v427, 4
      %v1099 = vsel %vm1034, %v1096, %v1098
      %v1100 = vrot.slane %v428, 4
      %v1101 = vrot.slane %v429, 4
      %v1102 = vsel %vm1034, %v1100, %v1101
      %v1103 = vrot.slane %v430, 4
      %v1104 = vsel %vm1034, %v1101, %v1103
      %v1105 = vrot.slane %v431, 4
      %v1106 = vrot.slane %v432, 4
      %v1107 = vsel %vm1034, %v1105, %v1106
      %v1108 = vrot.slane %v433, 4
      %v1109 = vsel %vm1034, %v1106, %v1108
      %v1110 = vrot.slane %v434, 4
      %v1111 = vrot.slane %v435, 4
      %v1112 = vsel %vm1034, %v1110, %v1111
      %v1113 = vrot.slane %v436, 4
      %v1114 = vsel %vm1034, %v1111, %v1113
      %1115 = vrot.lane.b32.xlu0 %v1037, 16
      %v1116 = vpop.permute.xlu0 %1115
      %1117 = vrot.lane.b32.xlu0 %v1039, 16
      %v1118 = vpop.permute.xlu0 %1117
      %1119 = vrot.lane.b32.xlu0 %v1042, 16
      %v1120 = vpop.permute.xlu0 %1119
      %1121 = vrot.lane.b32.xlu0 %v1044, 16
      %v1122 = vpop.permute.xlu0 %1121
      %1123 = vrot.lane.b32.xlu0 %v1047, 16
      %v1124 = vpop.permute.xlu0 %1123
      %1125 = vrot.lane.b32.xlu0 %v1049, 16
      %v1126 = vpop.permute.xlu0 %1125
      %1127 = vrot.lane.b32.xlu0 %v1052, 16
      %v1128 = vpop.permute.xlu0 %1127
      %1129 = vrot.lane.b32.xlu0 %v1054, 16
      %v1130 = vpop.permute.xlu0 %1129
      %1131 = vrot.lane.b32.xlu0 %v1057, 16
      %v1132 = vpop.permute.xlu0 %1131
      %1133 = vrot.lane.b32.xlu0 %v1059, 16
      %v1134 = vpop.permute.xlu0 %1133
      %1135 = vrot.lane.b32.xlu0 %v1062, 16
      %v1136 = vpop.permute.xlu0 %1135
      %1137 = vrot.lane.b32.xlu0 %v1064, 16
      %v1138 = vpop.permute.xlu0 %1137
      %1139 = vrot.lane.b32.xlu0 %v1067, 16
      %v1140 = vpop.permute.xlu0 %1139
      %1141 = vrot.lane.b32.xlu0 %v1069, 16
      %v1142 = vpop.permute.xlu0 %1141
      %1143 = vrot.lane.b32.xlu0 %v1072, 16
      %v1144 = vpop.permute.xlu0 %1143
      %1145 = vrot.lane.b32.xlu0 %v1074, 16
      %v1146 = vpop.permute.xlu0 %1145
      %1147 = vrot.lane.b32.xlu0 %v1077, 16
      %v1148 = vpop.permute.xlu0 %1147
      %1149 = vrot.lane.b32.xlu0 %v1079, 16
      %v1150 = vpop.permute.xlu0 %1149
      %1151 = vrot.lane.b32.xlu0 %v1082, 16
      %v1152 = vpop.permute.xlu0 %1151
      %1153 = vrot.lane.b32.xlu0 %v1084, 16
      %v1154 = vpop.permute.xlu0 %1153
      %1155 = vrot.lane.b32.xlu0 %v1087, 16
      %v1156 = vpop.permute.xlu0 %1155
      %1157 = vrot.lane.b32.xlu0 %v1089, 16
      %v1158 = vpop.permute.xlu0 %1157
      %1159 = vrot.lane.b32.xlu0 %v1092, 16
      %v1160 = vpop.permute.xlu0 %1159
      %1161 = vrot.lane.b32.xlu0 %v1094, 16
      %v1162 = vpop.permute.xlu0 %1161
      %1163 = vrot.lane.b32.xlu0 %v1097, 16
      %v1164 = vpop.permute.xlu0 %1163
      %1165 = vrot.lane.b32.xlu0 %v1099, 16
      %v1166 = vpop.permute.xlu0 %1165
      %1167 = vrot.lane.b32.xlu0 %v1102, 16
      %v1168 = vpop.permute.xlu0 %1167
      %1169 = vrot.lane.b32.xlu0 %v1104, 16
      %v1170 = vpop.permute.xlu0 %1169
      %1171 = vrot.lane.b32.xlu0 %v1107, 16
      %v1172 = vpop.permute.xlu0 %1171
      %1173 = vrot.lane.b32.xlu0 %v1109, 16
      %v1174 = vpop.permute.xlu0 %1173
      %1175 = vrot.lane.b32.xlu0 %v1112, 16
      %v1176 = vpop.permute.xlu0 %1175
      %1177 = vrot.lane.b32.xlu0 %v1114, 16
      %v1178 = vpop.permute.xlu0 %1177
      %vm1211 = vcmask 1042432
      %v1212 = vrot.slane %v389, 5
      %v1213 = vrot.slane %v390, 5
      %v1214 = vsel %vm1211, %v1212, %v1213
      %v1215 = vrot.slane %v391, 5
      %v1216 = vsel %vm1211, %v1213, %v1215
      %v1217 = vrot.slane %v392, 5
      %v1218 = vrot.slane %v393, 5
      %v1219 = vsel %vm1211, %v1217, %v1218
      %v1220 = vrot.slane %v394, 5
      %v1221 = vsel %vm1211, %v1218, %v1220
      %v1222 = vrot.slane %v395, 5
      %v1223 = vrot.slane %v396, 5
      %v1224 = vsel %vm1211, %v1222, %v1223
      %v1225 = vrot.slane %v397, 5
      %v1226 = vsel %vm1211, %v1223, %v1225
      %v1227 = vrot.slane %v398, 5
      %v1228 = vrot.slane %v399, 5
      %v1229 = vsel %vm1211, %v1227, %v1228
      %v1230 = vrot.slane %v400, 5
      %v1231 = vsel %vm1211, %v1228, %v1230
      %v1232 = vrot.slane %v401, 5
      %v1233 = vrot.slane %v402, 5
      %v1234 = vsel %vm1211, %v1232, %v1233
      %v1235 = vrot.slane %v403, 5
      %v1236 = vsel %vm1211, %v1233, %v1235
      %v1237 = vrot.slane %v404, 5
      %v1238 = vrot.slane %v405, 5
      %v1239 = vsel %vm1211, %v1237, %v1238
      %v1240 = vrot.slane %v406, 5
      %v1241 = vsel %vm1211, %v1238, %v1240
      %v1242 = vrot.slane %v407, 5
      %v1243 = vrot.slane %v408, 5
      %v1244 = vsel %vm1211, %v1242, %v1243
      %v1245 = vrot.slane %v409, 5
      %v1246 = vsel %vm1211, %v1243, %v1245
      %v1247 = vrot.slane %v410, 5
      %v1248 = vrot.slane %v411, 5
      %v1249 = vsel %vm1211, %v1247, %v1248
      %v1250 = vrot.slane %v412, 5
      %v1251 = vsel %vm1211, %v1248, %v1250
      %v1252 = vrot.slane %v413, 5
      %v1253 = vrot.slane %v414, 5
      %v1254 = vsel %vm1211, %v1252, %v1253
      %v1255 = vrot.slane %v415, 5
      %v1256 = vsel %vm1211, %v1253, %v1255
      %v1257 = vrot.slane %v416, 5
      %v1258 = vrot.slane %v417, 5
      %v1259 = vsel %vm1211, %v1257, %v1258
      %v1260 = vrot.slane %v418, 5
      %v1261 = vsel %vm1211, %v1258, %v1260
      %v1262 = vrot.slane %v419, 5
      %v1263 = vrot.slane %v420, 5
      %v1264 = vsel %vm1211, %v1262, %v1263
      %v1265 = vrot.slane %v421, 5
      %v1266 = vsel %vm1211, %v1263, %v1265
      %v1267 = vrot.slane %v422, 5
      %v1268 = vrot.slane %v423, 5
      %v1269 = vsel %vm1211, %v1267, %v1268
      %v1270 = vrot.slane %v424, 5
      %v1271 = vsel %vm1211, %v1268, %v1270
      %v1272 = vrot.slane %v425, 5
      %v1273 = vrot.slane %v426, 5
      %v1274 = vsel %vm1211, %v1272, %v1273
      %v1275 = vrot.slane %v427, 5
      %v1276 = vsel %vm1211, %v1273, %v1275
      %v1277 = vrot.slane %v428, 5
      %v1278 = vrot.slane %v429, 5
      %v1279 = vsel %vm1211, %v1277, %v1278
      %v1280 = vrot.slane %v430, 5
      %v1281 = vsel %vm1211, %v1278, %v1280
      %v1282 = vrot.slane %v431, 5
      %v1283 = vrot.slane %v432, 5
      %v1284 = vsel %vm1211, %v1282, %v1283
      %v1285 = vrot.slane %v433, 5
      %v1286 = vsel %vm1211, %v1283, %v1285
      %v1287 = vrot.slane %v434, 5
      %v1288 = vrot.slane %v435, 5
      %v1289 = vsel %vm1211, %v1287, %v1288
      %v1290 = vrot.slane %v436, 5
      %v1291 = vsel %vm1211, %v1288, %v1290
      %1292 = vrot.lane.b32.xlu0 %v1214, 20
      %v1293 = vpop.permute.xlu0 %1292
      %1294 = vrot.lane.b32.xlu0 %v1216, 20
      %v1295 = vpop.permute.xlu0 %1294
      %1296 = vrot.lane.b32.xlu0 %v1219, 20
      %v1297 = vpop.permute.xlu0 %1296
      %1298 = vrot.lane.b32.xlu0 %v1221, 20
      %v1299 = vpop.permute.xlu0 %1298
      %1300 = vrot.lane.b32.xlu0 %v1224, 20
      %v1301 = vpop.permute.xlu0 %1300
      %1302 = vrot.lane.b32.xlu0 %v1226, 20
      %v1303 = vpop.permute.xlu0 %1302
      %1304 = vrot.lane.b32.xlu0 %v1229, 20
      %v1305 = vpop.permute.xlu0 %1304
      %1306 = vrot.lane.b32.xlu0 %v1231, 20
      %v1307 = vpop.permute.xlu0 %1306
      %1308 = vrot.lane.b32.xlu0 %v1234, 20
      %v1309 = vpop.permute.xlu0 %1308
      %1310 = vrot.lane.b32.xlu0 %v1236, 20
      %v1311 = vpop.permute.xlu0 %1310
      %1312 = vrot.lane.b32.xlu0 %v1239, 20
      %v1313 = vpop.permute.xlu0 %1312
      %1314 = vrot.lane.b32.xlu0 %v1241, 20
      %v1315 = vpop.permute.xlu0 %1314
      %1316 = vrot.lane.b32.xlu0 %v1244, 20
      %v1317 = vpop.permute.xlu0 %1316
      %1318 = vrot.lane.b32.xlu0 %v1246, 20
      %v1319 = vpop.permute.xlu0 %1318
      %1320 = vrot.lane.b32.xlu0 %v1249, 20
      %v1321 = vpop.permute.xlu0 %1320
      %1322 = vrot.lane.b32.xlu0 %v1251, 20
      %v1323 = vpop.permute.xlu0 %1322
      %1324 = vrot.lane.b32.xlu0 %v1254, 20
      %v1325 = vpop.permute.xlu0 %1324
      %1326 = vrot.lane.b32.xlu0 %v1256, 20
      %v1327 = vpop.permute.xlu0 %1326
      %1328 = vrot.lane.b32.xlu0 %v1259, 20
      %v1329 = vpop.permute.xlu0 %1328
      %1330 = vrot.lane.b32.xlu0 %v1261, 20
      %v1331 = vpop.permute.xlu0 %1330
      %1332 = vrot.lane.b32.xlu0 %v1264, 20
      %v1333 = vpop.permute.xlu0 %1332
      %1334 = vrot.lane.b32.xlu0 %v1266, 20
      %v1335 = vpop.permute.xlu0 %1334
      %1336 = vrot.lane.b32.xlu0 %v1269, 20
      %v1337 = vpop.permute.xlu0 %1336
      %1338 = vrot.lane.b32.xlu0 %v1271, 20
      %v1339 = vpop.permute.xlu0 %1338
      %1340 = vrot.lane.b32.xlu0 %v1274, 20
      %v1341 = vpop.permute.xlu0 %1340
      %1342 = vrot.lane.b32.xlu0 %v1276, 20
      %v1343 = vpop.permute.xlu0 %1342
      %1344 = vrot.lane.b32.xlu0 %v1279, 20
      %v1345 = vpop.permute.xlu0 %1344
      %1346 = vrot.lane.b32.xlu0 %v1281, 20
      %v1347 = vpop.permute.xlu0 %1346
      %1348 = vrot.lane.b32.xlu0 %v1284, 20
      %v1349 = vpop.permute.xlu0 %1348
      %1350 = vrot.lane.b32.xlu0 %v1286, 20
      %v1351 = vpop.permute.xlu0 %1350
      %1352 = vrot.lane.b32.xlu0 %v1289, 20
      %v1353 = vpop.permute.xlu0 %1352
      %1354 = vrot.lane.b32.xlu0 %v1291, 20
      %v1355 = vpop.permute.xlu0 %1354
      %vm1388 = vcmask 1041408
      %v1389 = vrot.slane %v389, 6
      %v1390 = vrot.slane %v390, 6
      %v1391 = vsel %vm1388, %v1389, %v1390
      %v1392 = vrot.slane %v391, 6
      %v1393 = vsel %vm1388, %v1390, %v1392
      %v1394 = vrot.slane %v392, 6
      %v1395 = vrot.slane %v393, 6
      %v1396 = vsel %vm1388, %v1394, %v1395
      %v1397 = vrot.slane %v394, 6
      %v1398 = vsel %vm1388, %v1395, %v1397
      %v1399 = vrot.slane %v395, 6
      %v1400 = vrot.slane %v396, 6
      %v1401 = vsel %vm1388, %v1399, %v1400
      %v1402 = vrot.slane %v397, 6
      %v1403 = vsel %vm1388, %v1400, %v1402
      %v1404 = vrot.slane %v398, 6
      %v1405 = vrot.slane %v399, 6
      %v1406 = vsel %vm1388, %v1404, %v1405
      %v1407 = vrot.slane %v400, 6
      %v1408 = vsel %vm1388, %v1405, %v1407
      %v1409 = vrot.slane %v401, 6
      %v1410 = vrot.slane %v402, 6
      %v1411 = vsel %vm1388, %v1409, %v1410
      %v1412 = vrot.slane %v403, 6
      %v1413 = vsel %vm1388, %v1410, %v1412
      %v1414 = vrot.slane %v404, 6
      %v1415 = vrot.slane %v405, 6
      %v1416 = vsel %vm1388, %v1414, %v1415
      %v1417 = vrot.slane %v406, 6
      %v1418 = vsel %vm1388, %v1415, %v1417
      %v1419 = vrot.slane %v407, 6
      %v1420 = vrot.slane %v408, 6
      %v1421 = vsel %vm1388, %v1419, %v1420
      %v1422 = vrot.slane %v409, 6
      %v1423 = vsel %vm1388, %v1420, %v1422
      %v1424 = vrot.slane %v410, 6
      %v1425 = vrot.slane %v411, 6
      %v1426 = vsel %vm1388, %v1424, %v1425
      %v1427 = vrot.slane %v412, 6
      %v1428 = vsel %vm1388, %v1425, %v1427
      %v1429 = vrot.slane %v413, 6
      %v1430 = vrot.slane %v414, 6
      %v1431 = vsel %vm1388, %v1429, %v1430
      %v1432 = vrot.slane %v415, 6
      %v1433 = vsel %vm1388, %v1430, %v1432
      %v1434 = vrot.slane %v416, 6
      %v1435 = vrot.slane %v417, 6
      %v1436 = vsel %vm1388, %v1434, %v1435
      %v1437 = vrot.slane %v418, 6
      %v1438 = vsel %vm1388, %v1435, %v1437
      %v1439 = vrot.slane %v419, 6
      %v1440 = vrot.slane %v420, 6
      %v1441 = vsel %vm1388, %v1439, %v1440
      %v1442 = vrot.slane %v421, 6
      %v1443 = vsel %vm1388, %v1440, %v1442
      %v1444 = vrot.slane %v422, 6
      %v1445 = vrot.slane %v423, 6
      %v1446 = vsel %vm1388, %v1444, %v1445
      %v1447 = vrot.slane %v424, 6
      %v1448 = vsel %vm1388, %v1445, %v1447
      %v1449 = vrot.slane %v425, 6
      %v1450 = vrot.slane %v426, 6
      %v1451 = vsel %vm1388, %v1449, %v1450
      %v1452 = vrot.slane %v427, 6
      %v1453 = vsel %vm1388, %v1450, %v1452
      %v1454 = vrot.slane %v428, 6
      %v1455 = vrot.slane %v429, 6
      %v1456 = vsel %vm1388, %v1454, %v1455
      %v1457 = vrot.slane %v430, 6
      %v1458 = vsel %vm1388, %v1455, %v1457
      %v1459 = vrot.slane %v431, 6
      %v1460 = vrot.slane %v432, 6
      %v1461 = vsel %vm1388, %v1459, %v1460
      %v1462 = vrot.slane %v433, 6
      %v1463 = vsel %vm1388, %v1460, %v1462
      %v1464 = vrot.slane %v434, 6
      %v1465 = vrot.slane %v435, 6
      %v1466 = vsel %vm1388, %v1464, %v1465
      %v1467 = vrot.slane %v436, 6
      %v1468 = vsel %vm1388, %v1465, %v1467
      %1469 = vrot.lane.b32.xlu0 %v1391, 24
      %v1470 = vpop.permute.xlu0 %1469
      %1471 = vrot.lane.b32.xlu0 %v1393, 24
      %v1472 = vpop.permute.xlu0 %1471
      %1473 = vrot.lane.b32.xlu0 %v1396, 24
      %v1474 = vpop.permute.xlu0 %1473
      %1475 = vrot.lane.b32.xlu0 %v1398, 24
      %v1476 = vpop.permute.xlu0 %1475
      %1477 = vrot.lane.b32.xlu0 %v1401, 24
      %v1478 = vpop.permute.xlu0 %1477
      %1479 = vrot.lane.b32.xlu0 %v1403, 24
      %v1480 = vpop.permute.xlu0 %1479
      %1481 = vrot.lane.b32.xlu0 %v1406, 24
      %v1482 = vpop.permute.xlu0 %1481
      %1483 = vrot.lane.b32.xlu0 %v1408, 24
      %v1484 = vpop.permute.xlu0 %1483
      %1485 = vrot.lane.b32.xlu0 %v1411, 24
      %v1486 = vpop.permute.xlu0 %1485
      %1487 = vrot.lane.b32.xlu0 %v1413, 24
      %v1488 = vpop.permute.xlu0 %1487
      %1489 = vrot.lane.b32.xlu0 %v1416, 24
      %v1490 = vpop.permute.xlu0 %1489
      %1491 = vrot.lane.b32.xlu0 %v1418, 24
      %v1492 = vpop.permute.xlu0 %1491
      %1493 = vrot.lane.b32.xlu0 %v1421, 24
      %v1494 = vpop.permute.xlu0 %1493
      %1495 = vrot.lane.b32.xlu0 %v1423, 24
      %v1496 = vpop.permute.xlu0 %1495
      %1497 = vrot.lane.b32.xlu0 %v1426, 24
      %v1498 = vpop.permute.xlu0 %1497
      %1499 = vrot.lane.b32.xlu0 %v1428, 24
      %v1500 = vpop.permute.xlu0 %1499
      %1501 = vrot.lane.b32.xlu0 %v1431, 24
      %v1502 = vpop.permute.xlu0 %1501
      %1503 = vrot.lane.b32.xlu0 %v1433, 24
      %v1504 = vpop.permute.xlu0 %1503
      %1505 = vrot.lane.b32.xlu0 %v1436, 24
      %v1506 = vpop.permute.xlu0 %1505
      %1507 = vrot.lane.b32.xlu0 %v1438, 24
      %v1508 = vpop.permute.xlu0 %1507
      %1509 = vrot.lane.b32.xlu0 %v1441, 24
      %v1510 = vpop.permute.xlu0 %1509
      %1511 = vrot.lane.b32.xlu0 %v1443, 24
      %v1512 = vpop.permute.xlu0 %1511
      %1513 = vrot.lane.b32.xlu0 %v1446, 24
      %v1514 = vpop.permute.xlu0 %1513
      %1515 = vrot.lane.b32.xlu0 %v1448, 24
      %v1516 = vpop.permute.xlu0 %1515
      %1517 = vrot.lane.b32.xlu0 %v1451, 24
      %v1518 = vpop.permute.xlu0 %1517
      %1519 = vrot.lane.b32.xlu0 %v1453, 24
      %v1520 = vpop.permute.xlu0 %1519
      %1521 = vrot.lane.b32.xlu0 %v1456, 24
      %v1522 = vpop.permute.xlu0 %1521
      %1523 = vrot.lane.b32.xlu0 %v1458, 24
      %v1524 = vpop.permute.xlu0 %1523
      %1525 = vrot.lane.b32.xlu0 %v1461, 24
      %v1526 = vpop.permute.xlu0 %1525
      %1527 = vrot.lane.b32.xlu0 %v1463, 24
      %v1528 = vpop.permute.xlu0 %1527
      %1529 = vrot.lane.b32.xlu0 %v1466, 24
      %v1530 = vpop.permute.xlu0 %1529
      %1531 = vrot.lane.b32.xlu0 %v1468, 24
      %v1532 = vpop.permute.xlu0 %1531
      %1567 = vrot.lane.b32.xlu0 %v392, 28
      %v1568 = vpop.permute.xlu0 %1567
      %1569 = vrot.lane.b32.xlu0 %v393, 28
      %v1570 = vpop.permute.xlu0 %1569
      %1571 = vrot.lane.b32.xlu0 %v395, 28
      %v1572 = vpop.permute.xlu0 %1571
      %1573 = vrot.lane.b32.xlu0 %v396, 28
      %v1574 = vpop.permute.xlu0 %1573
      %1575 = vrot.lane.b32.xlu0 %v398, 28
      %v1576 = vpop.permute.xlu0 %1575
      %1577 = vrot.lane.b32.xlu0 %v399, 28
      %v1578 = vpop.permute.xlu0 %1577
      %1579 = vrot.lane.b32.xlu0 %v401, 28
      %v1580 = vpop.permute.xlu0 %1579
      %1581 = vrot.lane.b32.xlu0 %v402, 28
      %v1582 = vpop.permute.xlu0 %1581
      %1583 = vrot.lane.b32.xlu0 %v404, 28
      %v1584 = vpop.permute.xlu0 %1583
      %1585 = vrot.lane.b32.xlu0 %v405, 28
      %v1586 = vpop.permute.xlu0 %1585
      %1587 = vrot.lane.b32.xlu0 %v407, 28
      %v1588 = vpop.permute.xlu0 %1587
      %1589 = vrot.lane.b32.xlu0 %v408, 28
      %v1590 = vpop.permute.xlu0 %1589
      %1591 = vrot.lane.b32.xlu0 %v410, 28
      %v1592 = vpop.permute.xlu0 %1591
      %1593 = vrot.lane.b32.xlu0 %v411, 28
      %v1594 = vpop.permute.xlu0 %1593
      %1595 = vrot.lane.b32.xlu0 %v413, 28
      %v1596 = vpop.permute.xlu0 %1595
      %1597 = vrot.lane.b32.xlu0 %v414, 28
      %v1598 = vpop.permute.xlu0 %1597
      %1599 = vrot.lane.b32.xlu0 %v416, 28
      %v1600 = vpop.permute.xlu0 %1599
      %1601 = vrot.lane.b32.xlu0 %v417, 28
      %v1602 = vpop.permute.xlu0 %1601
      %1603 = vrot.lane.b32.xlu0 %v419, 28
      %v1604 = vpop.permute.xlu0 %1603
      %1605 = vrot.lane.b32.xlu0 %v420, 28
      %v1606 = vpop.permute.xlu0 %1605
      %1607 = vrot.lane.b32.xlu0 %v422, 28
      %v1608 = vpop.permute.xlu0 %1607
      %1609 = vrot.lane.b32.xlu0 %v423, 28
      %v1610 = vpop.permute.xlu0 %1609
      %1611 = vrot.lane.b32.xlu0 %v425, 28
      %v1612 = vpop.permute.xlu0 %1611
      %1613 = vrot.lane.b32.xlu0 %v426, 28
      %v1614 = vpop.permute.xlu0 %1613
      %1615 = vrot.lane.b32.xlu0 %v428, 28
      %v1616 = vpop.permute.xlu0 %1615
      %1617 = vrot.lane.b32.xlu0 %v429, 28
      %v1618 = vpop.permute.xlu0 %1617
      %1619 = vrot.lane.b32.xlu0 %v431, 28
      %v1620 = vpop.permute.xlu0 %1619
      %1621 = vrot.lane.b32.xlu0 %v432, 28
      %v1622 = vpop.permute.xlu0 %1621
      %1623 = vrot.lane.b32.xlu0 %v434, 28
      %v1624 = vpop.permute.xlu0 %1623
      %1625 = vrot.lane.b32.xlu0 %v435, 28
      %v1626 = vpop.permute.xlu0 %1625
      %1627 = vrot.lane.b32.xlu0 %v437, 28
      %v1628 = vpop.permute.xlu0 %1627
      %1629 = vrot.lane.b32.xlu0 %v438, 28
      %v1630 = vpop.permute.xlu0 %1629
      %v1664 = vrot.slane %v437, 1
      %v1665 = vrot.slane %v438, 1
      %v1666 = vsel %vm503, %v1664, %v1665
      %v1667 = vrot.slane %v439, 1
      %v1668 = vsel %vm503, %v1665, %v1667
      %1669 = vrot.lane.b32.xlu0 %v511, 32
      %v1670 = vpop.permute.xlu0 %1669
      %1671 = vrot.lane.b32.xlu0 %v513, 32
      %v1672 = vpop.permute.xlu0 %1671
      %1673 = vrot.lane.b32.xlu0 %v516, 32
      %v1674 = vpop.permute.xlu0 %1673
      %1675 = vrot.lane.b32.xlu0 %v518, 32
      %v1676 = vpop.permute.xlu0 %1675
      %1677 = vrot.lane.b32.xlu0 %v521, 32
      %v1678 = vpop.permute.xlu0 %1677
      %1679 = vrot.lane.b32.xlu0 %v523, 32
      %v1680 = vpop.permute.xlu0 %1679
      %1681 = vrot.lane.b32.xlu0 %v526, 32
      %v1682 = vpop.permute.xlu0 %1681
      %1683 = vrot.lane.b32.xlu0 %v528, 32
      %v1684 = vpop.permute.xlu0 %1683
      %1685 = vrot.lane.b32.xlu0 %v531, 32
      %v1686 = vpop.permute.xlu0 %1685
      %1687 = vrot.lane.b32.xlu0 %v533, 32
      %v1688 = vpop.permute.xlu0 %1687
      %1689 = vrot.lane.b32.xlu0 %v536, 32
      %v1690 = vpop.permute.xlu0 %1689
      %1691 = vrot.lane.b32.xlu0 %v538, 32
      %v1692 = vpop.permute.xlu0 %1691
      %1693 = vrot.lane.b32.xlu0 %v541, 32
      %v1694 = vpop.permute.xlu0 %1693
      %1695 = vrot.lane.b32.xlu0 %v543, 32
      %v1696 = vpop.permute.xlu0 %1695
      %1697 = vrot.lane.b32.xlu0 %v546, 32
      %v1698 = vpop.permute.xlu0 %1697
      %1699 = vrot.lane.b32.xlu0 %v548, 32
      %v1700 = vpop.permute.xlu0 %1699
      %1701 = vrot.lane.b32.xlu0 %v551, 32
      %v1702 = vpop.permute.xlu0 %1701
      %1703 = vrot.lane.b32.xlu0 %v553, 32
      %v1704 = vpop.permute.xlu0 %1703
      %1705 = vrot.lane.b32.xlu0 %v556, 32
      %v1706 = vpop.permute.xlu0 %1705
      %1707 = vrot.lane.b32.xlu0 %v558, 32
      %v1708 = vpop.permute.xlu0 %1707
      %1709 = vrot.lane.b32.xlu0 %v561, 32
      %v1710 = vpop.permute.xlu0 %1709
      %1711 = vrot.lane.b32.xlu0 %v563, 32
      %v1712 = vpop.permute.xlu0 %1711
      %1713 = vrot.lane.b32.xlu0 %v566, 32
      %v1714 = vpop.permute.xlu0 %1713
      %1715 = vrot.lane.b32.xlu0 %v568, 32
      %v1716 = vpop.permute.xlu0 %1715
      %1717 = vrot.lane.b32.xlu0 %v571, 32
      %v1718 = vpop.permute.xlu0 %1717
      %1719 = vrot.lane.b32.xlu0 %v573, 32
      %v1720 = vpop.permute.xlu0 %1719
      %1721 = vrot.lane.b32.xlu0 %v576, 32
      %v1722 = vpop.permute.xlu0 %1721
      %1723 = vrot.lane.b32.xlu0 %v578, 32
      %v1724 = vpop.permute.xlu0 %1723
      %1725 = vrot.lane.b32.xlu0 %v581, 32
      %v1726 = vpop.permute.xlu0 %1725
      %1727 = vrot.lane.b32.xlu0 %v583, 32
      %v1728 = vpop.permute.xlu0 %1727
      %1729 = vrot.lane.b32.xlu0 %v1666, 32
      %v1730 = vpop.permute.xlu0 %1729
      %1731 = vrot.lane.b32.xlu0 %v1668, 32
      %v1732 = vpop.permute.xlu0 %1731
      %v1765 = vrot.slane %v437, 2
      %v1766 = vrot.slane %v438, 2
      %v1767 = vsel %vm680, %v1765, %v1766
      %v1768 = vrot.slane %v439, 2
      %v1769 = vsel %vm680, %v1766, %v1768
      %1770 = vrot.lane.b32.xlu0 %v688, 36
      %v1771 = vpop.permute.xlu0 %1770
      %1772 = vrot.lane.b32.xlu0 %v690, 36
      %v1773 = vpop.permute.xlu0 %1772
      %1774 = vrot.lane.b32.xlu0 %v693, 36
      %v1775 = vpop.permute.xlu0 %1774
      %1776 = vrot.lane.b32.xlu0 %v695, 36
      %v1777 = vpop.permute.xlu0 %1776
      %1778 = vrot.lane.b32.xlu0 %v698, 36
      %v1779 = vpop.permute.xlu0 %1778
      %1780 = vrot.lane.b32.xlu0 %v700, 36
      %v1781 = vpop.permute.xlu0 %1780
      %1782 = vrot.lane.b32.xlu0 %v703, 36
      %v1783 = vpop.permute.xlu0 %1782
      %1784 = vrot.lane.b32.xlu0 %v705, 36
      %v1785 = vpop.permute.xlu0 %1784
      %1786 = vrot.lane.b32.xlu0 %v708, 36
      %v1787 = vpop.permute.xlu0 %1786
      %1788 = vrot.lane.b32.xlu0 %v710, 36
      %v1789 = vpop.permute.xlu0 %1788
      %1790 = vrot.lane.b32.xlu0 %v713, 36
      %v1791 = vpop.permute.xlu0 %1790
      %1792 = vrot.lane.b32.xlu0 %v715, 36
      %v1793 = vpop.permute.xlu0 %1792
      %1794 = vrot.lane.b32.xlu0 %v718, 36
      %v1795 = vpop.permute.xlu0 %1794
      %1796 = vrot.lane.b32.xlu0 %v720, 36
      %v1797 = vpop.permute.xlu0 %1796
      %1798 = vrot.lane.b32.xlu0 %v723, 36
      %v1799 = vpop.permute.xlu0 %1798
      %1800 = vrot.lane.b32.xlu0 %v725, 36
      %v1801 = vpop.permute.xlu0 %1800
      %1802 = vrot.lane.b32.xlu0 %v728, 36
      %v1803 = vpop.permute.xlu0 %1802
      %1804 = vrot.lane.b32.xlu0 %v730, 36
      %v1805 = vpop.permute.xlu0 %1804
      %1806 = vrot.lane.b32.xlu0 %v733, 36
      %v1807 = vpop.permute.xlu0 %1806
      %1808 = vrot.lane.b32.xlu0 %v735, 36
      %v1809 = vpop.permute.xlu0 %1808
      %1810 = vrot.lane.b32.xlu0 %v738, 36
      %v1811 = vpop.permute.xlu0 %1810
      %1812 = vrot.lane.b32.xlu0 %v740, 36
      %v1813 = vpop.permute.xlu0 %1812
      %1814 = vrot.lane.b32.xlu0 %v743, 36
      %v1815 = vpop.permute.xlu0 %1814
      %1816 = vrot.lane.b32.xlu0 %v745, 36
      %v1817 = vpop.permute.xlu0 %1816
      %1818 = vrot.lane.b32.xlu0 %v748, 36
      %v1819 = vpop.permute.xlu0 %1818
      %1820 = vrot.lane.b32.xlu0 %v750, 36
      %v1821 = vpop.permute.xlu0 %1820
      %1822 = vrot.lane.b32.xlu0 %v753, 36
      %v1823 = vpop.permute.xlu0 %1822
      %1824 = vrot.lane.b32.xlu0 %v755, 36
      %v1825 = vpop.permute.xlu0 %1824
      %1826 = vrot.lane.b32.xlu0 %v758, 36
      %v1827 = vpop.permute.xlu0 %1826
      %1828 = vrot.lane.b32.xlu0 %v760, 36
      %v1829 = vpop.permute.xlu0 %1828
      %1830 = vrot.lane.b32.xlu0 %v1767, 36
      %v1831 = vpop.permute.xlu0 %1830
      %1832 = vrot.lane.b32.xlu0 %v1769, 36
      %v1833 = vpop.permute.xlu0 %1832
      %v1866 = vrot.slane %v437, 3
      %v1867 = vrot.slane %v438, 3
      %v1868 = vsel %vm857, %v1866, %v1867
      %v1869 = vrot.slane %v439, 3
      %v1870 = vsel %vm857, %v1867, %v1869
      %1871 = vrot.lane.b32.xlu0 %v865, 40
      %v1872 = vpop.permute.xlu0 %1871
      %1873 = vrot.lane.b32.xlu0 %v867, 40
      %v1874 = vpop.permute.xlu0 %1873
      %1875 = vrot.lane.b32.xlu0 %v870, 40
      %v1876 = vpop.permute.xlu0 %1875
      %1877 = vrot.lane.b32.xlu0 %v872, 40
      %v1878 = vpop.permute.xlu0 %1877
      %1879 = vrot.lane.b32.xlu0 %v875, 40
      %v1880 = vpop.permute.xlu0 %1879
      %1881 = vrot.lane.b32.xlu0 %v877, 40
      %v1882 = vpop.permute.xlu0 %1881
      %1883 = vrot.lane.b32.xlu0 %v880, 40
      %v1884 = vpop.permute.xlu0 %1883
      %1885 = vrot.lane.b32.xlu0 %v882, 40
      %v1886 = vpop.permute.xlu0 %1885
      %1887 = vrot.lane.b32.xlu0 %v885, 40
      %v1888 = vpop.permute.xlu0 %1887
      %1889 = vrot.lane.b32.xlu0 %v887, 40
      %v1890 = vpop.permute.xlu0 %1889
      %1891 = vrot.lane.b32.xlu0 %v890, 40
      %v1892 = vpop.permute.xlu0 %1891
      %1893 = vrot.lane.b32.xlu0 %v892, 40
      %v1894 = vpop.permute.xlu0 %1893
      %1895 = vrot.lane.b32.xlu0 %v895, 40
      %v1896 = vpop.permute.xlu0 %1895
      %1897 = vrot.lane.b32.xlu0 %v897, 40
      %v1898 = vpop.permute.xlu0 %1897
      %1899 = vrot.lane.b32.xlu0 %v900, 40
      %v1900 = vpop.permute.xlu0 %1899
      %1901 = vrot.lane.b32.xlu0 %v902, 40
      %v1902 = vpop.permute.xlu0 %1901
      %1903 = vrot.lane.b32.xlu0 %v905, 40
      %v1904 = vpop.permute.xlu0 %1903
      %1905 = vrot.lane.b32.xlu0 %v907, 40
      %v1906 = vpop.permute.xlu0 %1905
      %1907 = vrot.lane.b32.xlu0 %v910, 40
      %v1908 = vpop.permute.xlu0 %1907
      %1909 = vrot.lane.b32.xlu0 %v912, 40
      %v1910 = vpop.permute.xlu0 %1909
      %1911 = vrot.lane.b32.xlu0 %v915, 40
      %v1912 = vpop.permute.xlu0 %1911
      %1913 = vrot.lane.b32.xlu0 %v917, 40
      %v1914 = vpop.permute.xlu0 %1913
      %1915 = vrot.lane.b32.xlu0 %v920, 40
      %v1916 = vpop.permute.xlu0 %1915
      %1917 = vrot.lane.b32.xlu0 %v922, 40
      %v1918 = vpop.permute.xlu0 %1917
      %1919 = vrot.lane.b32.xlu0 %v925, 40
      %v1920 = vpop.permute.xlu0 %1919
      %1921 = vrot.lane.b32.xlu0 %v927, 40
      %v1922 = vpop.permute.xlu0 %1921
      %1923 = vrot.lane.b32.xlu0 %v930, 40
      %v1924 = vpop.permute.xlu0 %1923
      %1925 = vrot.lane.b32.xlu0 %v932, 40
      %v1926 = vpop.permute.xlu0 %1925
      %1927 = vrot.lane.b32.xlu0 %v935, 40
      %v1928 = vpop.permute.xlu0 %1927
      %1929 = vrot.lane.b32.xlu0 %v937, 40
      %v1930 = vpop.permute.xlu0 %1929
      %1931 = vrot.lane.b32.xlu0 %v1868, 40
      %v1932 = vpop.permute.xlu0 %1931
      %1933 = vrot.lane.b32.xlu0 %v1870, 40
      %v1934 = vpop.permute.xlu0 %1933
      %v1967 = vrot.slane %v437, 4
      %v1968 = vrot.slane %v438, 4
      %v1969 = vsel %vm1034, %v1967, %v1968
      %v1970 = vrot.slane %v439, 4
      %v1971 = vsel %vm1034, %v1968, %v1970
      %1972 = vrot.lane.b32.xlu0 %v1042, 44
      %v1973 = vpop.permute.xlu0 %1972
      %1974 = vrot.lane.b32.xlu0 %v1044, 44
      %v1975 = vpop.permute.xlu0 %1974
      %1976 = vrot.lane.b32.xlu0 %v1047, 44
      %v1977 = vpop.permute.xlu0 %1976
      %1978 = vrot.lane.b32.xlu0 %v1049, 44
      %v1979 = vpop.permute.xlu0 %1978
      %1980 = vrot.lane.b32.xlu0 %v1052, 44
      %v1981 = vpop.permute.xlu0 %1980
      %1982 = vrot.lane.b32.xlu0 %v1054, 44
      %v1983 = vpop.permute.xlu0 %1982
      %1984 = vrot.lane.b32.xlu0 %v1057, 44
      %v1985 = vpop.permute.xlu0 %1984
      %1986 = vrot.lane.b32.xlu0 %v1059, 44
      %v1987 = vpop.permute.xlu0 %1986
      %1988 = vrot.lane.b32.xlu0 %v1062, 44
      %v1989 = vpop.permute.xlu0 %1988
      %1990 = vrot.lane.b32.xlu0 %v1064, 44
      %v1991 = vpop.permute.xlu0 %1990
      %1992 = vrot.lane.b32.xlu0 %v1067, 44
      %v1993 = vpop.permute.xlu0 %1992
      %1994 = vrot.lane.b32.xlu0 %v1069, 44
      %v1995 = vpop.permute.xlu0 %1994
      %1996 = vrot.lane.b32.xlu0 %v1072, 44
      %v1997 = vpop.permute.xlu0 %1996
      %1998 = vrot.lane.b32.xlu0 %v1074, 44
      %v1999 = vpop.permute.xlu0 %1998
      %2000 = vrot.lane.b32.xlu0 %v1077, 44
      %v2001 = vpop.permute.xlu0 %2000
      %2002 = vrot.lane.b32.xlu0 %v1079, 44
      %v2003 = vpop.permute.xlu0 %2002
      %2004 = vrot.lane.b32.xlu0 %v1082, 44
      %v2005 = vpop.permute.xlu0 %2004
      %2006 = vrot.lane.b32.xlu0 %v1084, 44
      %v2007 = vpop.permute.xlu0 %2006
      %2008 = vrot.lane.b32.xlu0 %v1087, 44
      %v2009 = vpop.permute.xlu0 %2008
      %2010 = vrot.lane.b32.xlu0 %v1089, 44
      %v2011 = vpop.permute.xlu0 %2010
      %2012 = vrot.lane.b32.xlu0 %v1092, 44
      %v2013 = vpop.permute.xlu0 %2012
      %2014 = vrot.lane.b32.xlu0 %v1094, 44
      %v2015 = vpop.permute.xlu0 %2014
      %2016 = vrot.lane.b32.xlu0 %v1097, 44
      %v2017 = vpop.permute.xlu0 %2016
      %2018 = vrot.lane.b32.xlu0 %v1099, 44
      %v2019 = vpop.permute.xlu0 %2018
      %2020 = vrot.lane.b32.xlu0 %v1102, 44
      %v2021 = vpop.permute.xlu0 %2020
      %2022 = vrot.lane.b32.xlu0 %v1104, 44
      %v2023 = vpop.permute.xlu0 %2022
      %2024 = vrot.lane.b32.xlu0 %v1107, 44
      %v2025 = vpop.permute.xlu0 %2024
      %2026 = vrot.lane.b32.xlu0 %v1109, 44
      %v2027 = vpop.permute.xlu0 %2026
      %2028 = vrot.lane.b32.xlu0 %v1112, 44
      %v2029 = vpop.permute.xlu0 %2028
      %2030 = vrot.lane.b32.xlu0 %v1114, 44
      %v2031 = vpop.permute.xlu0 %2030
      %2032 = vrot.lane.b32.xlu0 %v1969, 44
      %v2033 = vpop.permute.xlu0 %2032
      %2034 = vrot.lane.b32.xlu0 %v1971, 44
      %v2035 = vpop.permute.xlu0 %2034
      %v2068 = vrot.slane %v437, 5
      %v2069 = vrot.slane %v438, 5
      %v2070 = vsel %vm1211, %v2068, %v2069
      %v2071 = vrot.slane %v439, 5
      %v2072 = vsel %vm1211, %v2069, %v2071
      %2073 = vrot.lane.b32.xlu0 %v1219, 48
      %v2074 = vpop.permute.xlu0 %2073
      %2075 = vrot.lane.b32.xlu0 %v1221, 48
      %v2076 = vpop.permute.xlu0 %2075
      %2077 = vrot.lane.b32.xlu0 %v1224, 48
      %v2078 = vpop.permute.xlu0 %2077
      %2079 = vrot.lane.b32.xlu0 %v1226, 48
      %v2080 = vpop.permute.xlu0 %2079
      %2081 = vrot.lane.b32.xlu0 %v1229, 48
      %v2082 = vpop.permute.xlu0 %2081
      %2083 = vrot.lane.b32.xlu0 %v1231, 48
      %v2084 = vpop.permute.xlu0 %2083
      %2085 = vrot.lane.b32.xlu0 %v1234, 48
      %v2086 = vpop.permute.xlu0 %2085
      %2087 = vrot.lane.b32.xlu0 %v1236, 48
      %v2088 = vpop.permute.xlu0 %2087
      %2089 = vrot.lane.b32.xlu0 %v1239, 48
      %v2090 = vpop.permute.xlu0 %2089
      %2091 = vrot.lane.b32.xlu0 %v1241, 48
      %v2092 = vpop.permute.xlu0 %2091
      %2093 = vrot.lane.b32.xlu0 %v1244, 48
      %v2094 = vpop.permute.xlu0 %2093
      %2095 = vrot.lane.b32.xlu0 %v1246, 48
      %v2096 = vpop.permute.xlu0 %2095
      %2097 = vrot.lane.b32.xlu0 %v1249, 48
      %v2098 = vpop.permute.xlu0 %2097
      %2099 = vrot.lane.b32.xlu0 %v1251, 48
      %v2100 = vpop.permute.xlu0 %2099
      %2101 = vrot.lane.b32.xlu0 %v1254, 48
      %v2102 = vpop.permute.xlu0 %2101
      %2103 = vrot.lane.b32.xlu0 %v1256, 48
      %v2104 = vpop.permute.xlu0 %2103
      %2105 = vrot.lane.b32.xlu0 %v1259, 48
      %v2106 = vpop.permute.xlu0 %2105
      %2107 = vrot.lane.b32.xlu0 %v1261, 48
      %v2108 = vpop.permute.xlu0 %2107
      %2109 = vrot.lane.b32.xlu0 %v1264, 48
      %v2110 = vpop.permute.xlu0 %2109
      %2111 = vrot.lane.b32.xlu0 %v1266, 48
      %v2112 = vpop.permute.xlu0 %2111
      %2113 = vrot.lane.b32.xlu0 %v1269, 48
      %v2114 = vpop.permute.xlu0 %2113
      %2115 = vrot.lane.b32.xlu0 %v1271, 48
      %v2116 = vpop.permute.xlu0 %2115
      %2117 = vrot.lane.b32.xlu0 %v1274, 48
      %v2118 = vpop.permute.xlu0 %2117
      %2119 = vrot.lane.b32.xlu0 %v1276, 48
      %v2120 = vpop.permute.xlu0 %2119
      %2121 = vrot.lane.b32.xlu0 %v1279, 48
      %v2122 = vpop.permute.xlu0 %2121
      %2123 = vrot.lane.b32.xlu0 %v1281, 48
      %v2124 = vpop.permute.xlu0 %2123
      %2125 = vrot.lane.b32.xlu0 %v1284, 48
      %v2126 = vpop.permute.xlu0 %2125
      %2127 = vrot.lane.b32.xlu0 %v1286, 48
      %v2128 = vpop.permute.xlu0 %2127
      %2129 = vrot.lane.b32.xlu0 %v1289, 48
      %v2130 = vpop.permute.xlu0 %2129
      %2131 = vrot.lane.b32.xlu0 %v1291, 48
      %v2132 = vpop.permute.xlu0 %2131
      %2133 = vrot.lane.b32.xlu0 %v2070, 48
      %v2134 = vpop.permute.xlu0 %2133
      %2135 = vrot.lane.b32.xlu0 %v2072, 48
      %v2136 = vpop.permute.xlu0 %2135
      %v2169 = vrot.slane %v437, 6
      %v2170 = vrot.slane %v438, 6
      %v2171 = vsel %vm1388, %v2169, %v2170
      %v2172 = vrot.slane %v439, 6
      %v2173 = vsel %vm1388, %v2170, %v2172
      %2174 = vrot.lane.b32.xlu0 %v1396, 52
      %v2175 = vpop.permute.xlu0 %2174
      %2176 = vrot.lane.b32.xlu0 %v1398, 52
      %v2177 = vpop.permute.xlu0 %2176
      %2178 = vrot.lane.b32.xlu0 %v1401, 52
      %v2179 = vpop.permute.xlu0 %2178
      %2180 = vrot.lane.b32.xlu0 %v1403, 52
      %v2181 = vpop.permute.xlu0 %2180
      %2182 = vrot.lane.b32.xlu0 %v1406, 52
      %v2183 = vpop.permute.xlu0 %2182
      %2184 = vrot.lane.b32.xlu0 %v1408, 52
      %v2185 = vpop.permute.xlu0 %2184
      %2186 = vrot.lane.b32.xlu0 %v1411, 52
      %v2187 = vpop.permute.xlu0 %2186
      %2188 = vrot.lane.b32.xlu0 %v1413, 52
      %v2189 = vpop.permute.xlu0 %2188
      %2190 = vrot.lane.b32.xlu0 %v1416, 52
      %v2191 = vpop.permute.xlu0 %2190
      %2192 = vrot.lane.b32.xlu0 %v1418, 52
      %v2193 = vpop.permute.xlu0 %2192
      %2194 = vrot.lane.b32.xlu0 %v1421, 52
      %v2195 = vpop.permute.xlu0 %2194
      %2196 = vrot.lane.b32.xlu0 %v1423, 52
      %v2197 = vpop.permute.xlu0 %2196
      %2198 = vrot.lane.b32.xlu0 %v1426, 52
      %v2199 = vpop.permute.xlu0 %2198
      %2200 = vrot.lane.b32.xlu0 %v1428, 52
      %v2201 = vpop.permute.xlu0 %2200
      %2202 = vrot.lane.b32.xlu0 %v1431, 52
      %v2203 = vpop.permute.xlu0 %2202
      %2204 = vrot.lane.b32.xlu0 %v1433, 52
      %v2205 = vpop.permute.xlu0 %2204
      %2206 = vrot.lane.b32.xlu0 %v1436, 52
      %v2207 = vpop.permute.xlu0 %2206
      %2208 = vrot.lane.b32.xlu0 %v1438, 52
      %v2209 = vpop.permute.xlu0 %2208
      %2210 = vrot.lane.b32.xlu0 %v1441, 52
      %v2211 = vpop.permute.xlu0 %2210
      %2212 = vrot.lane.b32.xlu0 %v1443, 52
      %v2213 = vpop.permute.xlu0 %2212
      %2214 = vrot.lane.b32.xlu0 %v1446, 52
      %v2215 = vpop.permute.xlu0 %2214
      %2216 = vrot.lane.b32.xlu0 %v1448, 52
      %v2217 = vpop.permute.xlu0 %2216
      %2218 = vrot.lane.b32.xlu0 %v1451, 52
      %v2219 = vpop.permute.xlu0 %2218
      %2220 = vrot.lane.b32.xlu0 %v1453, 52
      %v2221 = vpop.permute.xlu0 %2220
      %2222 = vrot.lane.b32.xlu0 %v1456, 52
      %v2223 = vpop.permute.xlu0 %2222
      %2224 = vrot.lane.b32.xlu0 %v1458, 52
      %v2225 = vpop.permute.xlu0 %2224
      %2226 = vrot.lane.b32.xlu0 %v1461, 52
      %v2227 = vpop.permute.xlu0 %2226
      %2228 = vrot.lane.b32.xlu0 %v1463, 52
      %v2229 = vpop.permute.xlu0 %2228
      %2230 = vrot.lane.b32.xlu0 %v1466, 52
      %v2231 = vpop.permute.xlu0 %2230
      %2232 = vrot.lane.b32.xlu0 %v1468, 52
      %v2233 = vpop.permute.xlu0 %2232
      %2234 = vrot.lane.b32.xlu0 %v2171, 52
      %v2235 = vpop.permute.xlu0 %2234
      %2236 = vrot.lane.b32.xlu0 %v2173, 52
      %v2237 = vpop.permute.xlu0 %2236
      %2272 = vrot.lane.b32.xlu0 %v395, 56
      %v2273 = vpop.permute.xlu0 %2272
      %2274 = vrot.lane.b32.xlu0 %v396, 56
      %v2275 = vpop.permute.xlu0 %2274
      %2276 = vrot.lane.b32.xlu0 %v398, 56
      %v2277 = vpop.permute.xlu0 %2276
      %2278 = vrot.lane.b32.xlu0 %v399, 56
      %v2279 = vpop.permute.xlu0 %2278
      %2280 = vrot.lane.b32.xlu0 %v401, 56
      %v2281 = vpop.permute.xlu0 %2280
      %2282 = vrot.lane.b32.xlu0 %v402, 56
      %v2283 = vpop.permute.xlu0 %2282
      %2284 = vrot.lane.b32.xlu0 %v404, 56
      %v2285 = vpop.permute.xlu0 %2284
      %2286 = vrot.lane.b32.xlu0 %v405, 56
      %v2287 = vpop.permute.xlu0 %2286
      %2288 = vrot.lane.b32.xlu0 %v407, 56
      %v2289 = vpop.permute.xlu0 %2288
      %2290 = vrot.lane.b32.xlu0 %v408, 56
      %v2291 = vpop.permute.xlu0 %2290
      %2292 = vrot.lane.b32.xlu0 %v410, 56
      %v2293 = vpop.permute.xlu0 %2292
      %2294 = vrot.lane.b32.xlu0 %v411, 56
      %v2295 = vpop.permute.xlu0 %2294
      %2296 = vrot.lane.b32.xlu0 %v413, 56
      %v2297 = vpop.permute.xlu0 %2296
      %2298 = vrot.lane.b32.xlu0 %v414, 56
      %v2299 = vpop.permute.xlu0 %2298
      %2300 = vrot.lane.b32.xlu0 %v416, 56
      %v2301 = vpop.permute.xlu0 %2300
      %2302 = vrot.lane.b32.xlu0 %v417, 56
      %v2303 = vpop.permute.xlu0 %2302
      %2304 = vrot.lane.b32.xlu0 %v419, 56
      %v2305 = vpop.permute.xlu0 %2304
      %2306 = vrot.lane.b32.xlu0 %v420, 56
      %v2307 = vpop.permute.xlu0 %2306
      %2308 = vrot.lane.b32.xlu0 %v422, 56
      %v2309 = vpop.permute.xlu0 %2308
      %2310 = vrot.lane.b32.xlu0 %v423, 56
      %v2311 = vpop.permute.xlu0 %2310
      %2312 = vrot.lane.b32.xlu0 %v425, 56
      %v2313 = vpop.permute.xlu0 %2312
      %2314 = vrot.lane.b32.xlu0 %v426, 56
      %v2315 = vpop.permute.xlu0 %2314
      %2316 = vrot.lane.b32.xlu0 %v428, 56
      %v2317 = vpop.permute.xlu0 %2316
      %2318 = vrot.lane.b32.xlu0 %v429, 56
      %v2319 = vpop.permute.xlu0 %2318
      %2320 = vrot.lane.b32.xlu0 %v431, 56
      %v2321 = vpop.permute.xlu0 %2320
      %2322 = vrot.lane.b32.xlu0 %v432, 56
      %v2323 = vpop.permute.xlu0 %2322
      %2324 = vrot.lane.b32.xlu0 %v434, 56
      %v2325 = vpop.permute.xlu0 %2324
      %2326 = vrot.lane.b32.xlu0 %v435, 56
      %v2327 = vpop.permute.xlu0 %2326
      %2328 = vrot.lane.b32.xlu0 %v437, 56
      %v2329 = vpop.permute.xlu0 %2328
      %2330 = vrot.lane.b32.xlu0 %v438, 56
      %v2331 = vpop.permute.xlu0 %2330
      %2332 = vrot.lane.b32.xlu0 %v440, 56
      %v2333 = vpop.permute.xlu0 %2332
      %2334 = vrot.lane.b32.xlu0 %v441, 56
      %v2335 = vpop.permute.xlu0 %2334
      %v2369 = vrot.slane %v440, 1
      %v2370 = vrot.slane %v441, 1
      %v2371 = vsel %vm503, %v2369, %v2370
      %v2372 = vrot.slane %v442, 1
      %v2373 = vsel %vm503, %v2370, %v2372
      %2374 = vrot.lane.b32.xlu0 %v516, 60
      %v2375 = vpop.permute.xlu0 %2374
      %2376 = vrot.lane.b32.xlu0 %v518, 60
      %v2377 = vpop.permute.xlu0 %2376
      %2378 = vrot.lane.b32.xlu0 %v521, 60
      %v2379 = vpop.permute.xlu0 %2378
      %2380 = vrot.lane.b32.xlu0 %v523, 60
      %v2381 = vpop.permute.xlu0 %2380
      %2382 = vrot.lane.b32.xlu0 %v526, 60
      %v2383 = vpop.permute.xlu0 %2382
      %2384 = vrot.lane.b32.xlu0 %v528, 60
      %v2385 = vpop.permute.xlu0 %2384
      %2386 = vrot.lane.b32.xlu0 %v531, 60
      %v2387 = vpop.permute.xlu0 %2386
      %2388 = vrot.lane.b32.xlu0 %v533, 60
      %v2389 = vpop.permute.xlu0 %2388
      %2390 = vrot.lane.b32.xlu0 %v536, 60
      %v2391 = vpop.permute.xlu0 %2390
      %2392 = vrot.lane.b32.xlu0 %v538, 60
      %v2393 = vpop.permute.xlu0 %2392
      %2394 = vrot.lane.b32.xlu0 %v541, 60
      %v2395 = vpop.permute.xlu0 %2394
      %2396 = vrot.lane.b32.xlu0 %v543, 60
      %v2397 = vpop.permute.xlu0 %2396
      %2398 = vrot.lane.b32.xlu0 %v546, 60
      %v2399 = vpop.permute.xlu0 %2398
      %2400 = vrot.lane.b32.xlu0 %v548, 60
      %v2401 = vpop.permute.xlu0 %2400
      %2402 = vrot.lane.b32.xlu0 %v551, 60
      %v2403 = vpop.permute.xlu0 %2402
      %2404 = vrot.lane.b32.xlu0 %v553, 60
      %v2405 = vpop.permute.xlu0 %2404
      %2406 = vrot.lane.b32.xlu0 %v556, 60
      %v2407 = vpop.permute.xlu0 %2406
      %2408 = vrot.lane.b32.xlu0 %v558, 60
      %v2409 = vpop.permute.xlu0 %2408
      %2410 = vrot.lane.b32.xlu0 %v561, 60
      %v2411 = vpop.permute.xlu0 %2410
      %2412 = vrot.lane.b32.xlu0 %v563, 60
      %v2413 = vpop.permute.xlu0 %2412
      %2414 = vrot.lane.b32.xlu0 %v566, 60
      %v2415 = vpop.permute.xlu0 %2414
      %2416 = vrot.lane.b32.xlu0 %v568, 60
      %v2417 = vpop.permute.xlu0 %2416
      %2418 = vrot.lane.b32.xlu0 %v571, 60
      %v2419 = vpop.permute.xlu0 %2418
      %2420 = vrot.lane.b32.xlu0 %v573, 60
      %v2421 = vpop.permute.xlu0 %2420
      %2422 = vrot.lane.b32.xlu0 %v576, 60
      %v2423 = vpop.permute.xlu0 %2422
      %2424 = vrot.lane.b32.xlu0 %v578, 60
      %v2425 = vpop.permute.xlu0 %2424
      %2426 = vrot.lane.b32.xlu0 %v581, 60
      %v2427 = vpop.permute.xlu0 %2426
      %2428 = vrot.lane.b32.xlu0 %v583, 60
      %v2429 = vpop.permute.xlu0 %2428
      %2430 = vrot.lane.b32.xlu0 %v1666, 60
      %v2431 = vpop.permute.xlu0 %2430
      %2432 = vrot.lane.b32.xlu0 %v1668, 60
      %v2433 = vpop.permute.xlu0 %2432
      %2434 = vrot.lane.b32.xlu0 %v2371, 60
      %v2435 = vpop.permute.xlu0 %2434
      %2436 = vrot.lane.b32.xlu0 %v2373, 60
      %v2437 = vpop.permute.xlu0 %2436
      %vm2470 = vcmask 31744
      %v2471 = vsel %vm2470, %v389, %v585
      %v2472 = vsel %vm2470, %v390, %v587
      %v2473 = vsel %vm2470, %v392, %v589
      %v2474 = vsel %vm2470, %v393, %v591
      %v2475 = vsel %vm2470, %v395, %v593
      %v2476 = vsel %vm2470, %v396, %v595
      %v2477 = vsel %vm2470, %v398, %v597
      %v2478 = vsel %vm2470, %v399, %v599
      %v2479 = vsel %vm2470, %v401, %v601
      %v2480 = vsel %vm2470, %v402, %v603
      %v2481 = vsel %vm2470, %v404, %v605
      %v2482 = vsel %vm2470, %v405, %v607
      %v2483 = vsel %vm2470, %v407, %v609
      %v2484 = vsel %vm2470, %v408, %v611
      %v2485 = vsel %vm2470, %v410, %v613
      %v2486 = vsel %vm2470, %v411, %v615
      %v2487 = vsel %vm2470, %v413, %v617
      %v2488 = vsel %vm2470, %v414, %v619
      %v2489 = vsel %vm2470, %v416, %v621
      %v2490 = vsel %vm2470, %v417, %v623
      %v2491 = vsel %vm2470, %v419, %v625
      %v2492 = vsel %vm2470, %v420, %v627
      %v2493 = vsel %vm2470, %v422, %v629
      %v2494 = vsel %vm2470, %v423, %v631
      %v2495 = vsel %vm2470, %v425, %v633
      %v2496 = vsel %vm2470, %v426, %v635
      %v2497 = vsel %vm2470, %v428, %v637
      %v2498 = vsel %vm2470, %v429, %v639
      %v2499 = vsel %vm2470, %v431, %v641
      %v2500 = vsel %vm2470, %v432, %v643
      %v2501 = vsel %vm2470, %v434, %v645
      %v2502 = vsel %vm2470, %v435, %v647
      %vm2503 = vcmask 64512
      %v2504 = vsel %vm2503, %v2471, %v762
      %v2505 = vsel %vm2503, %v2472, %v764
      %v2506 = vsel %vm2503, %v2473, %v766
      %v2507 = vsel %vm2503, %v2474, %v768
      %v2508 = vsel %vm2503, %v2475, %v770
      %v2509 = vsel %vm2503, %v2476, %v772
      %v2510 = vsel %vm2503, %v2477, %v774
      %v2511 = vsel %vm2503, %v2478, %v776
      %v2512 = vsel %vm2503, %v2479, %v778
      %v2513 = vsel %vm2503, %v2480, %v780
      %v2514 = vsel %vm2503, %v2481, %v782
      %v2515 = vsel %vm2503, %v2482, %v784
      %v2516 = vsel %vm2503, %v2483, %v786
      %v2517 = vsel %vm2503, %v2484, %v788
      %v2518 = vsel %vm2503, %v2485, %v790
      %v2519 = vsel %vm2503, %v2486, %v792
      %v2520 = vsel %vm2503, %v2487, %v794
      %v2521 = vsel %vm2503, %v2488, %v796
      %v2522 = vsel %vm2503, %v2489, %v798
      %v2523 = vsel %vm2503, %v2490, %v800
      %v2524 = vsel %vm2503, %v2491, %v802
      %v2525 = vsel %vm2503, %v2492, %v804
      %v2526 = vsel %vm2503, %v2493, %v806
      %v2527 = vsel %vm2503, %v2494, %v808
      %v2528 = vsel %vm2503, %v2495, %v810
      %v2529 = vsel %vm2503, %v2496, %v812
      %v2530 = vsel %vm2503, %v2497, %v814
      %v2531 = vsel %vm2503, %v2498, %v816
      %v2532 = vsel %vm2503, %v2499, %v818
      %v2533 = vsel %vm2503, %v2500, %v820
      %v2534 = vsel %vm2503, %v2501, %v822
      %v2535 = vsel %vm2503, %v2502, %v824
      %vm2536 = vcmask 97280
      %v2537 = vsel %vm2536, %v2504, %v939
      %v2538 = vsel %vm2536, %v2505, %v941
      %v2539 = vsel %vm2536, %v2506, %v943
      %v2540 = vsel %vm2536, %v2507, %v945
      %v2541 = vsel %vm2536, %v2508, %v947
      %v2542 = vsel %vm2536, %v2509, %v949
      %v2543 = vsel %vm2536, %v2510, %v951
      %v2544 = vsel %vm2536, %v2511, %v953
      %v2545 = vsel %vm2536, %v2512, %v955
      %v2546 = vsel %vm2536, %v2513, %v957
      %v2547 = vsel %vm2536, %v2514, %v959
      %v2548 = vsel %vm2536, %v2515, %v961
      %v2549 = vsel %vm2536, %v2516, %v963
      %v2550 = vsel %vm2536, %v2517, %v965
      %v2551 = vsel %vm2536, %v2518, %v967
      %v2552 = vsel %vm2536, %v2519, %v969
      %v2553 = vsel %vm2536, %v2520, %v971
      %v2554 = vsel %vm2536, %v2521, %v973
      %v2555 = vsel %vm2536, %v2522, %v975
      %v2556 = vsel %vm2536, %v2523, %v977
      %v2557 = vsel %vm2536, %v2524, %v979
      %v2558 = vsel %vm2536, %v2525, %v981
      %v2559 = vsel %vm2536, %v2526, %v983
      %v2560 = vsel %vm2536, %v2527, %v985
      %v2561 = vsel %vm2536, %v2528, %v987
      %v2562 = vsel %vm2536, %v2529, %v989
      %v2563 = vsel %vm2536, %v2530, %v991
      %v2564 = vsel %vm2536, %v2531, %v993
      %v2565 = vsel %vm2536, %v2532, %v995
      %v2566 = vsel %vm2536, %v2533, %v997
      %v2567 = vsel %vm2536, %v2534, %v999
      %v2568 = vsel %vm2536, %v2535, %v1001
      %vm2569 = vcmask 130048
      %v2570 = vsel %vm2569, %v2537, %v1116
      %v2571 = vsel %vm2569, %v2538, %v1118
      %v2572 = vsel %vm2569, %v2539, %v1120
      %v2573 = vsel %vm2569, %v2540, %v1122
      %v2574 = vsel %vm2569, %v2541, %v1124
      %v2575 = vsel %vm2569, %v2542, %v1126
      %v2576 = vsel %vm2569, %v2543, %v1128
      %v2577 = vsel %vm2569, %v2544, %v1130
      %v2578 = vsel %vm2569, %v2545, %v1132
      %v2579 = vsel %vm2569, %v2546, %v1134
      %v2580 = vsel %vm2569, %v2547, %v1136
      %v2581 = vsel %vm2569, %v2548, %v1138
      %v2582 = vsel %vm2569, %v2549, %v1140
      %v2583 = vsel %vm2569, %v2550, %v1142
      %v2584 = vsel %vm2569, %v2551, %v1144
      %v2585 = vsel %vm2569, %v2552, %v1146
      %v2586 = vsel %vm2569, %v2553, %v1148
      %v2587 = vsel %vm2569, %v2554, %v1150
      %v2588 = vsel %vm2569, %v2555, %v1152
      %v2589 = vsel %vm2569, %v2556, %v1154
      %v2590 = vsel %vm2569, %v2557, %v1156
      %v2591 = vsel %vm2569, %v2558, %v1158
      %v2592 = vsel %vm2569, %v2559, %v1160
      %v2593 = vsel %vm2569, %v2560, %v1162
      %v2594 = vsel %vm2569, %v2561, %v1164
      %v2595 = vsel %vm2569, %v2562, %v1166
      %v2596 = vsel %vm2569, %v2563, %v1168
      %v2597 = vsel %vm2569, %v2564, %v1170
      %v2598 = vsel %vm2569, %v2565, %v1172
      %v2599 = vsel %vm2569, %v2566, %v1174
      %v2600 = vsel %vm2569, %v2567, %v1176
      %v2601 = vsel %vm2569, %v2568, %v1178
      %vm2602 = vcmask 162816
      %v2603 = vsel %vm2602, %v2570, %v1293
      %v2604 = vsel %vm2602, %v2571, %v1295
      %v2605 = vsel %vm2602, %v2572, %v1297
      %v2606 = vsel %vm2602, %v2573, %v1299
      %v2607 = vsel %vm2602, %v2574, %v1301
      %v2608 = vsel %vm2602, %v2575, %v1303
      %v2609 = vsel %vm2602, %v2576, %v1305
      %v2610 = vsel %vm2602, %v2577, %v1307
      %v2611 = vsel %vm2602, %v2578, %v1309
      %v2612 = vsel %vm2602, %v2579, %v1311
      %v2613 = vsel %vm2602, %v2580, %v1313
      %v2614 = vsel %vm2602, %v2581, %v1315
      %v2615 = vsel %vm2602, %v2582, %v1317
      %v2616 = vsel %vm2602, %v2583, %v1319
      %v2617 = vsel %vm2602, %v2584, %v1321
      %v2618 = vsel %vm2602, %v2585, %v1323
      %v2619 = vsel %vm2602, %v2586, %v1325
      %v2620 = vsel %vm2602, %v2587, %v1327
      %v2621 = vsel %vm2602, %v2588, %v1329
      %v2622 = vsel %vm2602, %v2589, %v1331
      %v2623 = vsel %vm2602, %v2590, %v1333
      %v2624 = vsel %vm2602, %v2591, %v1335
      %v2625 = vsel %vm2602, %v2592, %v1337
      %v2626 = vsel %vm2602, %v2593, %v1339
      %v2627 = vsel %vm2602, %v2594, %v1341
      %v2628 = vsel %vm2602, %v2595, %v1343
      %v2629 = vsel %vm2602, %v2596, %v1345
      %v2630 = vsel %vm2602, %v2597, %v1347
      %v2631 = vsel %vm2602, %v2598, %v1349
      %v2632 = vsel %vm2602, %v2599, %v1351
      %v2633 = vsel %vm2602, %v2600, %v1353
      %v2634 = vsel %vm2602, %v2601, %v1355
      %vm2635 = vcmask 195584
      %v2636 = vsel %vm2635, %v2603, %v1470
      %v2637 = vsel %vm2635, %v2604, %v1472
      %v2638 = vsel %vm2635, %v2605, %v1474
      %v2639 = vsel %vm2635, %v2606, %v1476
      %v2640 = vsel %vm2635, %v2607, %v1478
      %v2641 = vsel %vm2635, %v2608, %v1480
      %v2642 = vsel %vm2635, %v2609, %v1482
      %v2643 = vsel %vm2635, %v2610, %v1484
      %v2644 = vsel %vm2635, %v2611, %v1486
      %v2645 = vsel %vm2635, %v2612, %v1488
      %v2646 = vsel %vm2635, %v2613, %v1490
      %v2647 = vsel %vm2635, %v2614, %v1492
      %v2648 = vsel %vm2635, %v2615, %v1494
      %v2649 = vsel %vm2635, %v2616, %v1496
      %v2650 = vsel %vm2635, %v2617, %v1498
      %v2651 = vsel %vm2635, %v2618, %v1500
      %v2652 = vsel %vm2635, %v2619, %v1502
      %v2653 = vsel %vm2635, %v2620, %v1504
      %v2654 = vsel %vm2635, %v2621, %v1506
      %v2655 = vsel %vm2635, %v2622, %v1508
      %v2656 = vsel %vm2635, %v2623, %v1510
      %v2657 = vsel %vm2635, %v2624, %v1512
      %v2658 = vsel %vm2635, %v2625, %v1514
      %v2659 = vsel %vm2635, %v2626, %v1516
      %v2660 = vsel %vm2635, %v2627, %v1518
      %v2661 = vsel %vm2635, %v2628, %v1520
      %v2662 = vsel %vm2635, %v2629, %v1522
      %v2663 = vsel %vm2635, %v2630, %v1524
      %v2664 = vsel %vm2635, %v2631, %v1526
      %v2665 = vsel %vm2635, %v2632, %v1528
      %v2666 = vsel %vm2635, %v2633, %v1530
      %v2667 = vsel %vm2635, %v2634, %v1532
      %vm2668 = vcmask 228352
      %v2669 = vsel %vm2668, %v2636, %v1568
      %v2670 = vsel %vm2668, %v2637, %v1570
      %v2671 = vsel %vm2668, %v2638, %v1572
      %v2672 = vsel %vm2668, %v2639, %v1574
      %v2673 = vsel %vm2668, %v2640, %v1576
      %v2674 = vsel %vm2668, %v2641, %v1578
      %v2675 = vsel %vm2668, %v2642, %v1580
      %v2676 = vsel %vm2668, %v2643, %v1582
      %v2677 = vsel %vm2668, %v2644, %v1584
      %v2678 = vsel %vm2668, %v2645, %v1586
      %v2679 = vsel %vm2668, %v2646, %v1588
      %v2680 = vsel %vm2668, %v2647, %v1590
      %v2681 = vsel %vm2668, %v2648, %v1592
      %v2682 = vsel %vm2668, %v2649, %v1594
      %v2683 = vsel %vm2668, %v2650, %v1596
      %v2684 = vsel %vm2668, %v2651, %v1598
      %v2685 = vsel %vm2668, %v2652, %v1600
      %v2686 = vsel %vm2668, %v2653, %v1602
      %v2687 = vsel %vm2668, %v2654, %v1604
      %v2688 = vsel %vm2668, %v2655, %v1606
      %v2689 = vsel %vm2668, %v2656, %v1608
      %v2690 = vsel %vm2668, %v2657, %v1610
      %v2691 = vsel %vm2668, %v2658, %v1612
      %v2692 = vsel %vm2668, %v2659, %v1614
      %v2693 = vsel %vm2668, %v2660, %v1616
      %v2694 = vsel %vm2668, %v2661, %v1618
      %v2695 = vsel %vm2668, %v2662, %v1620
      %v2696 = vsel %vm2668, %v2663, %v1622
      %v2697 = vsel %vm2668, %v2664, %v1624
      %v2698 = vsel %vm2668, %v2665, %v1626
      %v2699 = vsel %vm2668, %v2666, %v1628
      %v2700 = vsel %vm2668, %v2667, %v1630
      %v2701 = vsel %vm333, %v2669, %v1670
      %v2702 = vsel %vm333, %v2670, %v1672
      %v2703 = vsel %vm333, %v2671, %v1674
      %v2704 = vsel %vm333, %v2672, %v1676
      %v2705 = vsel %vm333, %v2673, %v1678
      %v2706 = vsel %vm333, %v2674, %v1680
      %v2707 = vsel %vm333, %v2675, %v1682
      %v2708 = vsel %vm333, %v2676, %v1684
      %v2709 = vsel %vm333, %v2677, %v1686
      %v2710 = vsel %vm333, %v2678, %v1688
      %v2711 = vsel %vm333, %v2679, %v1690
      %v2712 = vsel %vm333, %v2680, %v1692
      %v2713 = vsel %vm333, %v2681, %v1694
      %v2714 = vsel %vm333, %v2682, %v1696
      %v2715 = vsel %vm333, %v2683, %v1698
      %v2716 = vsel %vm333, %v2684, %v1700
      %v2717 = vsel %vm333, %v2685, %v1702
      %v2718 = vsel %vm333, %v2686, %v1704
      %v2719 = vsel %vm333, %v2687, %v1706
      %v2720 = vsel %vm333, %v2688, %v1708
      %v2721 = vsel %vm333, %v2689, %v1710
      %v2722 = vsel %vm333, %v2690, %v1712
      %v2723 = vsel %vm333, %v2691, %v1714
      %v2724 = vsel %vm333, %v2692, %v1716
      %v2725 = vsel %vm333, %v2693, %v1718
      %v2726 = vsel %vm333, %v2694, %v1720
      %v2727 = vsel %vm333, %v2695, %v1722
      %v2728 = vsel %vm333, %v2696, %v1724
      %v2729 = vsel %vm333, %v2697, %v1726
      %v2730 = vsel %vm333, %v2698, %v1728
      %v2731 = vsel %vm333, %v2699, %v1730
      %v2732 = vsel %vm333, %v2700, %v1732
      %vm2733 = vcmask 293888
      %v2734 = vsel %vm2733, %v2701, %v1771
      %v2735 = vsel %vm2733, %v2702, %v1773
      %v2736 = vsel %vm2733, %v2703, %v1775
      %v2737 = vsel %vm2733, %v2704, %v1777
      %v2738 = vsel %vm2733, %v2705, %v1779
      %v2739 = vsel %vm2733, %v2706, %v1781
      %v2740 = vsel %vm2733, %v2707, %v1783
      %v2741 = vsel %vm2733, %v2708, %v1785
      %v2742 = vsel %vm2733, %v2709, %v1787
      %v2743 = vsel %vm2733, %v2710, %v1789
      %v2744 = vsel %vm2733, %v2711, %v1791
      %v2745 = vsel %vm2733, %v2712, %v1793
      %v2746 = vsel %vm2733, %v2713, %v1795
      %v2747 = vsel %vm2733, %v2714, %v1797
      %v2748 = vsel %vm2733, %v2715, %v1799
      %v2749 = vsel %vm2733, %v2716, %v1801
      %v2750 = vsel %vm2733, %v2717, %v1803
      %v2751 = vsel %vm2733, %v2718, %v1805
      %v2752 = vsel %vm2733, %v2719, %v1807
      %v2753 = vsel %vm2733, %v2720, %v1809
      %v2754 = vsel %vm2733, %v2721, %v1811
      %v2755 = vsel %vm2733, %v2722, %v1813
      %v2756 = vsel %vm2733, %v2723, %v1815
      %v2757 = vsel %vm2733, %v2724, %v1817
      %v2758 = vsel %vm2733, %v2725, %v1819
      %v2759 = vsel %vm2733, %v2726, %v1821
      %v2760 = vsel %vm2733, %v2727, %v1823
      %v2761 = vsel %vm2733, %v2728, %v1825
      %v2762 = vsel %vm2733, %v2729, %v1827
      %v2763 = vsel %vm2733, %v2730, %v1829
      %v2764 = vsel %vm2733, %v2731, %v1831
      %v2765 = vsel %vm2733, %v2732, %v1833
      %vm2766 = vcmask 326656
      %v2767 = vsel %vm2766, %v2734, %v1872
      %v2768 = vsel %vm2766, %v2735, %v1874
      %v2769 = vsel %vm2766, %v2736, %v1876
      %v2770 = vsel %vm2766, %v2737, %v1878
      %v2771 = vsel %vm2766, %v2738, %v1880
      %v2772 = vsel %vm2766, %v2739, %v1882
      %v2773 = vsel %vm2766, %v2740, %v1884
      %v2774 = vsel %vm2766, %v2741, %v1886
      %v2775 = vsel %vm2766, %v2742, %v1888
      %v2776 = vsel %vm2766, %v2743, %v1890
      %v2777 = vsel %vm2766, %v2744, %v1892
      %v2778 = vsel %vm2766, %v2745, %v1894
      %v2779 = vsel %vm2766, %v2746, %v1896
      %v2780 = vsel %vm2766, %v2747, %v1898
      %v2781 = vsel %vm2766, %v2748, %v1900
      %v2782 = vsel %vm2766, %v2749, %v1902
      %v2783 = vsel %vm2766, %v2750, %v1904
      %v2784 = vsel %vm2766, %v2751, %v1906
      %v2785 = vsel %vm2766, %v2752, %v1908
      %v2786 = vsel %vm2766, %v2753, %v1910
      %v2787 = vsel %vm2766, %v2754, %v1912
      %v2788 = vsel %vm2766, %v2755, %v1914
      %v2789 = vsel %vm2766, %v2756, %v1916
      %v2790 = vsel %vm2766, %v2757, %v1918
      %v2791 = vsel %vm2766, %v2758, %v1920
      %v2792 = vsel %vm2766, %v2759, %v1922
      %v2793 = vsel %vm2766, %v2760, %v1924
      %v2794 = vsel %vm2766, %v2761, %v1926
      %v2795 = vsel %vm2766, %v2762, %v1928
      %v2796 = vsel %vm2766, %v2763, %v1930
      %v2797 = vsel %vm2766, %v2764, %v1932
      %v2798 = vsel %vm2766, %v2765, %v1934
      %vm2799 = vcmask 359424
      %v2800 = vsel %vm2799, %v2767, %v1973
      %v2801 = vsel %vm2799, %v2768, %v1975
      %v2802 = vsel %vm2799, %v2769, %v1977
      %v2803 = vsel %vm2799, %v2770, %v1979
      %v2804 = vsel %vm2799, %v2771, %v1981
      %v2805 = vsel %vm2799, %v2772, %v1983
      %v2806 = vsel %vm2799, %v2773, %v1985
      %v2807 = vsel %vm2799, %v2774, %v1987
      %v2808 = vsel %vm2799, %v2775, %v1989
      %v2809 = vsel %vm2799, %v2776, %v1991
      %v2810 = vsel %vm2799, %v2777, %v1993
      %v2811 = vsel %vm2799, %v2778, %v1995
      %v2812 = vsel %vm2799, %v2779, %v1997
      %v2813 = vsel %vm2799, %v2780, %v1999
      %v2814 = vsel %vm2799, %v2781, %v2001
      %v2815 = vsel %vm2799, %v2782, %v2003
      %v2816 = vsel %vm2799, %v2783, %v2005
      %v2817 = vsel %vm2799, %v2784, %v2007
      %v2818 = vsel %vm2799, %v2785, %v2009
      %v2819 = vsel %vm2799, %v2786, %v2011
      %v2820 = vsel %vm2799, %v2787, %v2013
      %v2821 = vsel %vm2799, %v2788, %v2015
      %v2822 = vsel %vm2799, %v2789, %v2017
      %v2823 = vsel %vm2799, %v2790, %v2019
      %v2824 = vsel %vm2799, %v2791, %v2021
      %v2825 = vsel %vm2799, %v2792, %v2023
      %v2826 = vsel %vm2799, %v2793, %v2025
      %v2827 = vsel %vm2799, %v2794, %v2027
      %v2828 = vsel %vm2799, %v2795, %v2029
      %v2829 = vsel %vm2799, %v2796, %v2031
      %v2830 = vsel %vm2799, %v2797, %v2033
      %v2831 = vsel %vm2799, %v2798, %v2035
      %vm2832 = vcmask 392192
      %v2833 = vsel %vm2832, %v2800, %v2074
      %v2834 = vsel %vm2832, %v2801, %v2076
      %v2835 = vsel %vm2832, %v2802, %v2078
      %v2836 = vsel %vm2832, %v2803, %v2080
      %v2837 = vsel %vm2832, %v2804, %v2082
      %v2838 = vsel %vm2832, %v2805, %v2084
      %v2839 = vsel %vm2832, %v2806, %v2086
      %v2840 = vsel %vm2832, %v2807, %v2088
      %v2841 = vsel %vm2832, %v2808, %v2090
      %v2842 = vsel %vm2832, %v2809, %v2092
      %v2843 = vsel %vm2832, %v2810, %v2094
      %v2844 = vsel %vm2832, %v2811, %v2096
      %v2845 = vsel %vm2832, %v2812, %v2098
      %v2846 = vsel %vm2832, %v2813, %v2100
      %v2847 = vsel %vm2832, %v2814, %v2102
      %v2848 = vsel %vm2832, %v2815, %v2104
      %v2849 = vsel %vm2832, %v2816, %v2106
      %v2850 = vsel %vm2832, %v2817, %v2108
      %v2851 = vsel %vm2832, %v2818, %v2110
      %v2852 = vsel %vm2832, %v2819, %v2112
      %v2853 = vsel %vm2832, %v2820, %v2114
      %v2854 = vsel %vm2832, %v2821, %v2116
      %v2855 = vsel %vm2832, %v2822, %v2118
      %v2856 = vsel %vm2832, %v2823, %v2120
      %v2857 = vsel %vm2832, %v2824, %v2122
      %v2858 = vsel %vm2832, %v2825, %v2124
      %v2859 = vsel %vm2832, %v2826, %v2126
      %v2860 = vsel %vm2832, %v2827, %v2128
      %v2861 = vsel %vm2832, %v2828, %v2130
      %v2862 = vsel %vm2832, %v2829, %v2132
      %v2863 = vsel %vm2832, %v2830, %v2134
      %v2864 = vsel %vm2832, %v2831, %v2136
      %vm2865 = vcmask 424960
      %v2866 = vsel %vm2865, %v2833, %v2175
      %v2867 = vsel %vm2865, %v2834, %v2177
      %v2868 = vsel %vm2865, %v2835, %v2179
      %v2869 = vsel %vm2865, %v2836, %v2181
      %v2870 = vsel %vm2865, %v2837, %v2183
      %v2871 = vsel %vm2865, %v2838, %v2185
      %v2872 = vsel %vm2865, %v2839, %v2187
      %v2873 = vsel %vm2865, %v2840, %v2189
      %v2874 = vsel %vm2865, %v2841, %v2191
      %v2875 = vsel %vm2865, %v2842, %v2193
      %v2876 = vsel %vm2865, %v2843, %v2195
      %v2877 = vsel %vm2865, %v2844, %v2197
      %v2878 = vsel %vm2865, %v2845, %v2199
      %v2879 = vsel %vm2865, %v2846, %v2201
      %v2880 = vsel %vm2865, %v2847, %v2203
      %v2881 = vsel %vm2865, %v2848, %v2205
      %v2882 = vsel %vm2865, %v2849, %v2207
      %v2883 = vsel %vm2865, %v2850, %v2209
      %v2884 = vsel %vm2865, %v2851, %v2211
      %v2885 = vsel %vm2865, %v2852, %v2213
      %v2886 = vsel %vm2865, %v2853, %v2215
      %v2887 = vsel %vm2865, %v2854, %v2217
      %v2888 = vsel %vm2865, %v2855, %v2219
      %v2889 = vsel %vm2865, %v2856, %v2221
      %v2890 = vsel %vm2865, %v2857, %v2223
      %v2891 = vsel %vm2865, %v2858, %v2225
      %v2892 = vsel %vm2865, %v2859, %v2227
      %v2893 = vsel %vm2865, %v2860, %v2229
      %v2894 = vsel %vm2865, %v2861, %v2231
      %v2895 = vsel %vm2865, %v2862, %v2233
      %v2896 = vsel %vm2865, %v2863, %v2235
      %v2897 = vsel %vm2865, %v2864, %v2237
      %vm2898 = vcmask 457728
      %v2899 = vsel %vm2898, %v2866, %v2273
      %v2900 = vsel %vm2898, %v2867, %v2275
      %v2901 = vsel %vm2898, %v2868, %v2277
      %v2902 = vsel %vm2898, %v2869, %v2279
      %v2903 = vsel %vm2898, %v2870, %v2281
      %v2904 = vsel %vm2898, %v2871, %v2283
      %v2905 = vsel %vm2898, %v2872, %v2285
      %v2906 = vsel %vm2898, %v2873, %v2287
      %v2907 = vsel %vm2898, %v2874, %v2289
      %v2908 = vsel %vm2898, %v2875, %v2291
      %v2909 = vsel %vm2898, %v2876, %v2293
      %v2910 = vsel %vm2898, %v2877, %v2295
      %v2911 = vsel %vm2898, %v2878, %v2297
      %v2912 = vsel %vm2898, %v2879, %v2299
      %v2913 = vsel %vm2898, %v2880, %v2301
      %v2914 = vsel %vm2898, %v2881, %v2303
      %v2915 = vsel %vm2898, %v2882, %v2305
      %v2916 = vsel %vm2898, %v2883, %v2307
      %v2917 = vsel %vm2898, %v2884, %v2309
      %v2918 = vsel %vm2898, %v2885, %v2311
      %v2919 = vsel %vm2898, %v2886, %v2313
      %v2920 = vsel %vm2898, %v2887, %v2315
      %v2921 = vsel %vm2898, %v2888, %v2317
      %v2922 = vsel %vm2898, %v2889, %v2319
      %v2923 = vsel %vm2898, %v2890, %v2321
      %v2924 = vsel %vm2898, %v2891, %v2323
      %v2925 = vsel %vm2898, %v2892, %v2325
      %v2926 = vsel %vm2898, %v2893, %v2327
      %v2927 = vsel %vm2898, %v2894, %v2329
      %v2928 = vsel %vm2898, %v2895, %v2331
      %v2929 = vsel %vm2898, %v2896, %v2333
      %v2930 = vsel %vm2898, %v2897, %v2335
      %vm2931 = vcmask 490496
      %v2932 = vsel %vm2931, %v2899, %v2375
      %v2933 = vsel %vm2931, %v2900, %v2377
      %v2934 = vsel %vm2931, %v2901, %v2379
      %v2935 = vsel %vm2931, %v2902, %v2381
      %v2936 = vsel %vm2931, %v2903, %v2383
      %v2937 = vsel %vm2931, %v2904, %v2385
      %v2938 = vsel %vm2931, %v2905, %v2387
      %v2939 = vsel %vm2931, %v2906, %v2389
      %v2940 = vsel %vm2931, %v2907, %v2391
      %v2941 = vsel %vm2931, %v2908, %v2393
      %v2942 = vsel %vm2931, %v2909, %v2395
      %v2943 = vsel %vm2931, %v2910, %v2397
      %v2944 = vsel %vm2931, %v2911, %v2399
      %v2945 = vsel %vm2931, %v2912, %v2401
      %v2946 = vsel %vm2931, %v2913, %v2403
      %v2947 = vsel %vm2931, %v2914, %v2405
      %v2948 = vsel %vm2931, %v2915, %v2407
      %v2949 = vsel %vm2931, %v2916, %v2409
      %v2950 = vsel %vm2931, %v2917, %v2411
      %v2951 = vsel %vm2931, %v2918, %v2413
      %v2952 = vsel %vm2931, %v2919, %v2415
      %v2953 = vsel %vm2931, %v2920, %v2417
      %v2954 = vsel %vm2931, %v2921, %v2419
      %v2955 = vsel %vm2931, %v2922, %v2421
      %v2956 = vsel %vm2931, %v2923, %v2423
      %v2957 = vsel %vm2931, %v2924, %v2425
      %v2958 = vsel %vm2931, %v2925, %v2427
      %v2959 = vsel %vm2931, %v2926, %v2429
      %v2960 = vsel %vm2931, %v2927, %v2431
      %v2961 = vsel %vm2931, %v2928, %v2433
      %v2962 = vsel %vm2931, %v2929, %v2435
      %v2963 = vsel %vm2931, %v2930, %v2437
      %2964 = vrot.lane.b32.xlu0 %v517, 4
      %v2965 = vpop.permute.xlu0 %2964
      %2966 = vrot.lane.b32.xlu0 %v522, 4
      %v2967 = vpop.permute.xlu0 %2966
      %2968 = vrot.lane.b32.xlu0 %v527, 4
      %v2969 = vpop.permute.xlu0 %2968
      %2970 = vrot.lane.b32.xlu0 %v532, 4
      %v2971 = vpop.permute.xlu0 %2970
      %2972 = vrot.lane.b32.xlu0 %v537, 4
      %v2973 = vpop.permute.xlu0 %2972
      %2974 = vrot.lane.b32.xlu0 %v542, 4
      %v2975 = vpop.permute.xlu0 %2974
      %2976 = vrot.lane.b32.xlu0 %v547, 4
      %v2977 = vpop.permute.xlu0 %2976
      %2978 = vrot.lane.b32.xlu0 %v552, 4
      %v2979 = vpop.permute.xlu0 %2978
      %2980 = vrot.lane.b32.xlu0 %v557, 4
      %v2981 = vpop.permute.xlu0 %2980
      %2982 = vrot.lane.b32.xlu0 %v562, 4
      %v2983 = vpop.permute.xlu0 %2982
      %2984 = vrot.lane.b32.xlu0 %v567, 4
      %v2985 = vpop.permute.xlu0 %2984
      %2986 = vrot.lane.b32.xlu0 %v572, 4
      %v2987 = vpop.permute.xlu0 %2986
      %2988 = vrot.lane.b32.xlu0 %v577, 4
      %v2989 = vpop.permute.xlu0 %2988
      %2990 = vrot.lane.b32.xlu0 %v582, 4
      %v2991 = vpop.permute.xlu0 %2990
      %2992 = vrot.lane.b32.xlu0 %v1666, 4
      %v2993 = vpop.permute.xlu0 %2992
      %2994 = vrot.lane.b32.xlu0 %v1668, 4
      %v2995 = vpop.permute.xlu0 %2994
      %2996 = vrot.lane.b32.xlu0 %v1667, 4
      %v2997 = vpop.permute.xlu0 %2996
      %2998 = vrot.lane.b32.xlu0 %v2371, 4
      %v2999 = vpop.permute.xlu0 %2998
      %3000 = vrot.lane.b32.xlu0 %v2373, 4
      %v3001 = vpop.permute.xlu0 %3000
      %3002 = vrot.lane.b32.xlu0 %v2372, 4
      %v3003 = vpop.permute.xlu0 %3002
      %v3024 = vrot.slane %v440, 2
      %v3025 = vrot.slane %v441, 2
      %v3026 = vsel %vm680, %v3024, %v3025
      %v3027 = vrot.slane %v442, 2
      %v3028 = vsel %vm680, %v3025, %v3027
      %3029 = vrot.lane.b32.xlu0 %v694, 8
      %v3030 = vpop.permute.xlu0 %3029
      %3031 = vrot.lane.b32.xlu0 %v699, 8
      %v3032 = vpop.permute.xlu0 %3031
      %3033 = vrot.lane.b32.xlu0 %v704, 8
      %v3034 = vpop.permute.xlu0 %3033
      %3035 = vrot.lane.b32.xlu0 %v709, 8
      %v3036 = vpop.permute.xlu0 %3035
      %3037 = vrot.lane.b32.xlu0 %v714, 8
      %v3038 = vpop.permute.xlu0 %3037
      %3039 = vrot.lane.b32.xlu0 %v719, 8
      %v3040 = vpop.permute.xlu0 %3039
      %3041 = vrot.lane.b32.xlu0 %v724, 8
      %v3042 = vpop.permute.xlu0 %3041
      %3043 = vrot.lane.b32.xlu0 %v729, 8
      %v3044 = vpop.permute.xlu0 %3043
      %3045 = vrot.lane.b32.xlu0 %v734, 8
      %v3046 = vpop.permute.xlu0 %3045
      %3047 = vrot.lane.b32.xlu0 %v739, 8
      %v3048 = vpop.permute.xlu0 %3047
      %3049 = vrot.lane.b32.xlu0 %v744, 8
      %v3050 = vpop.permute.xlu0 %3049
      %3051 = vrot.lane.b32.xlu0 %v749, 8
      %v3052 = vpop.permute.xlu0 %3051
      %3053 = vrot.lane.b32.xlu0 %v754, 8
      %v3054 = vpop.permute.xlu0 %3053
      %3055 = vrot.lane.b32.xlu0 %v759, 8
      %v3056 = vpop.permute.xlu0 %3055
      %3057 = vrot.lane.b32.xlu0 %v1767, 8
      %v3058 = vpop.permute.xlu0 %3057
      %3059 = vrot.lane.b32.xlu0 %v1769, 8
      %v3060 = vpop.permute.xlu0 %3059
      %3061 = vrot.lane.b32.xlu0 %v1768, 8
      %v3062 = vpop.permute.xlu0 %3061
      %3063 = vrot.lane.b32.xlu0 %v3026, 8
      %v3064 = vpop.permute.xlu0 %3063
      %3065 = vrot.lane.b32.xlu0 %v3028, 8
      %v3066 = vpop.permute.xlu0 %3065
      %3067 = vrot.lane.b32.xlu0 %v3027, 8
      %v3068 = vpop.permute.xlu0 %3067
      %v3089 = vrot.slane %v440, 3
      %v3090 = vrot.slane %v441, 3
      %v3091 = vsel %vm857, %v3089, %v3090
      %v3092 = vrot.slane %v442, 3
      %v3093 = vsel %vm857, %v3090, %v3092
      %3094 = vrot.lane.b32.xlu0 %v871, 12
      %v3095 = vpop.permute.xlu0 %3094
      %3096 = vrot.lane.b32.xlu0 %v876, 12
      %v3097 = vpop.permute.xlu0 %3096
      %3098 = vrot.lane.b32.xlu0 %v881, 12
      %v3099 = vpop.permute.xlu0 %3098
      %3100 = vrot.lane.b32.xlu0 %v886, 12
      %v3101 = vpop.permute.xlu0 %3100
      %3102 = vrot.lane.b32.xlu0 %v891, 12
      %v3103 = vpop.permute.xlu0 %3102
      %3104 = vrot.lane.b32.xlu0 %v896, 12
      %v3105 = vpop.permute.xlu0 %3104
      %3106 = vrot.lane.b32.xlu0 %v901, 12
      %v3107 = vpop.permute.xlu0 %3106
      %3108 = vrot.lane.b32.xlu0 %v906, 12
      %v3109 = vpop.permute.xlu0 %3108
      %3110 = vrot.lane.b32.xlu0 %v911, 12
      %v3111 = vpop.permute.xlu0 %3110
      %3112 = vrot.lane.b32.xlu0 %v916, 12
      %v3113 = vpop.permute.xlu0 %3112
      %3114 = vrot.lane.b32.xlu0 %v921, 12
      %v3115 = vpop.permute.xlu0 %3114
      %3116 = vrot.lane.b32.xlu0 %v926, 12
      %v3117 = vpop.permute.xlu0 %3116
      %3118 = vrot.lane.b32.xlu0 %v931, 12
      %v3119 = vpop.permute.xlu0 %3118
      %3120 = vrot.lane.b32.xlu0 %v936, 12
      %v3121 = vpop.permute.xlu0 %3120
      %3122 = vrot.lane.b32.xlu0 %v1868, 12
      %v3123 = vpop.permute.xlu0 %3122
      %3124 = vrot.lane.b32.xlu0 %v1870, 12
      %v3125 = vpop.permute.xlu0 %3124
      %3126 = vrot.lane.b32.xlu0 %v1869, 12
      %v3127 = vpop.permute.xlu0 %3126
      %3128 = vrot.lane.b32.xlu0 %v3091, 12
      %v3129 = vpop.permute.xlu0 %3128
      %3130 = vrot.lane.b32.xlu0 %v3093, 12
      %v3131 = vpop.permute.xlu0 %3130
      %3132 = vrot.lane.b32.xlu0 %v3092, 12
      %v3133 = vpop.permute.xlu0 %3132
      %v3154 = vrot.slane %v440, 4
      %v3155 = vrot.slane %v441, 4
      %v3156 = vsel %vm1034, %v3154, %v3155
      %v3157 = vrot.slane %v442, 4
      %v3158 = vsel %vm1034, %v3155, %v3157
      %3159 = vrot.lane.b32.xlu0 %v1048, 16
      %v3160 = vpop.permute.xlu0 %3159
      %3161 = vrot.lane.b32.xlu0 %v1053, 16
      %v3162 = vpop.permute.xlu0 %3161
      %3163 = vrot.lane.b32.xlu0 %v1058, 16
      %v3164 = vpop.permute.xlu0 %3163
      %3165 = vrot.lane.b32.xlu0 %v1063, 16
      %v3166 = vpop.permute.xlu0 %3165
      %3167 = vrot.lane.b32.xlu0 %v1068, 16
      %v3168 = vpop.permute.xlu0 %3167
      %3169 = vrot.lane.b32.xlu0 %v1073, 16
      %v3170 = vpop.permute.xlu0 %3169
      %3171 = vrot.lane.b32.xlu0 %v1078, 16
      %v3172 = vpop.permute.xlu0 %3171
      %3173 = vrot.lane.b32.xlu0 %v1083, 16
      %v3174 = vpop.permute.xlu0 %3173
      %3175 = vrot.lane.b32.xlu0 %v1088, 16
      %v3176 = vpop.permute.xlu0 %3175
      %3177 = vrot.lane.b32.xlu0 %v1093, 16
      %v3178 = vpop.permute.xlu0 %3177
      %3179 = vrot.lane.b32.xlu0 %v1098, 16
      %v3180 = vpop.permute.xlu0 %3179
      %3181 = vrot.lane.b32.xlu0 %v1103, 16
      %v3182 = vpop.permute.xlu0 %3181
      %3183 = vrot.lane.b32.xlu0 %v1108, 16
      %v3184 = vpop.permute.xlu0 %3183
      %3185 = vrot.lane.b32.xlu0 %v1113, 16
      %v3186 = vpop.permute.xlu0 %3185
      %3187 = vrot.lane.b32.xlu0 %v1969, 16
      %v3188 = vpop.permute.xlu0 %3187
      %3189 = vrot.lane.b32.xlu0 %v1971, 16
      %v3190 = vpop.permute.xlu0 %3189
      %3191 = vrot.lane.b32.xlu0 %v1970, 16
      %v3192 = vpop.permute.xlu0 %3191
      %3193 = vrot.lane.b32.xlu0 %v3156, 16
      %v3194 = vpop.permute.xlu0 %3193
      %3195 = vrot.lane.b32.xlu0 %v3158, 16
      %v3196 = vpop.permute.xlu0 %3195
      %3197 = vrot.lane.b32.xlu0 %v3157, 16
      %v3198 = vpop.permute.xlu0 %3197
      %v3221 = vrot.slane %v440, 6
      %v3222 = vrot.slane %v441, 6
      %v3223 = vsel %vm1388, %v3221, %v3222
      %v3224 = vrot.slane %v443, 6
      %v3225 = vrot.slane %v444, 6
      %v3226 = vsel %vm1388, %v3224, %v3225
      %3227 = vrot.lane.b32.xlu0 %v1404, 20
      %v3228 = vpop.permute.xlu0 %3227
      %3229 = vrot.lane.b32.xlu0 %v1406, 20
      %v3230 = vpop.permute.xlu0 %3229
      %3231 = vrot.lane.b32.xlu0 %v1405, 20
      %v3232 = vpop.permute.xlu0 %3231
      %3233 = vrot.lane.b32.xlu0 %v1409, 20
      %v3234 = vpop.permute.xlu0 %3233
      %3235 = vrot.lane.b32.xlu0 %v1411, 20
      %v3236 = vpop.permute.xlu0 %3235
      %3237 = vrot.lane.b32.xlu0 %v1410, 20
      %v3238 = vpop.permute.xlu0 %3237
      %3239 = vrot.lane.b32.xlu0 %v1414, 20
      %v3240 = vpop.permute.xlu0 %3239
      %3241 = vrot.lane.b32.xlu0 %v1416, 20
      %v3242 = vpop.permute.xlu0 %3241
      %3243 = vrot.lane.b32.xlu0 %v1415, 20
      %v3244 = vpop.permute.xlu0 %3243
      %3245 = vrot.lane.b32.xlu0 %v1419, 20
      %v3246 = vpop.permute.xlu0 %3245
      %3247 = vrot.lane.b32.xlu0 %v1421, 20
      %v3248 = vpop.permute.xlu0 %3247
      %3249 = vrot.lane.b32.xlu0 %v1420, 20
      %v3250 = vpop.permute.xlu0 %3249
      %3251 = vrot.lane.b32.xlu0 %v1424, 20
      %v3252 = vpop.permute.xlu0 %3251
      %3253 = vrot.lane.b32.xlu0 %v1426, 20
      %v3254 = vpop.permute.xlu0 %3253
      %3255 = vrot.lane.b32.xlu0 %v1425, 20
      %v3256 = vpop.permute.xlu0 %3255
      %3257 = vrot.lane.b32.xlu0 %v1429, 20
      %v3258 = vpop.permute.xlu0 %3257
      %3259 = vrot.lane.b32.xlu0 %v1431, 20
      %v3260 = vpop.permute.xlu0 %3259
      %3261 = vrot.lane.b32.xlu0 %v1430, 20
      %v3262 = vpop.permute.xlu0 %3261
      %3263 = vrot.lane.b32.xlu0 %v1434, 20
      %v3264 = vpop.permute.xlu0 %3263
      %3265 = vrot.lane.b32.xlu0 %v1436, 20
      %v3266 = vpop.permute.xlu0 %3265
      %3267 = vrot.lane.b32.xlu0 %v1435, 20
      %v3268 = vpop.permute.xlu0 %3267
      %3269 = vrot.lane.b32.xlu0 %v1439, 20
      %v3270 = vpop.permute.xlu0 %3269
      %3271 = vrot.lane.b32.xlu0 %v1441, 20
      %v3272 = vpop.permute.xlu0 %3271
      %3273 = vrot.lane.b32.xlu0 %v1440, 20
      %v3274 = vpop.permute.xlu0 %3273
      %3275 = vrot.lane.b32.xlu0 %v1444, 20
      %v3276 = vpop.permute.xlu0 %3275
      %3277 = vrot.lane.b32.xlu0 %v1446, 20
      %v3278 = vpop.permute.xlu0 %3277
      %3279 = vrot.lane.b32.xlu0 %v1445, 20
      %v3280 = vpop.permute.xlu0 %3279
      %3281 = vrot.lane.b32.xlu0 %v1449, 20
      %v3282 = vpop.permute.xlu0 %3281
      %3283 = vrot.lane.b32.xlu0 %v1451, 20
      %v3284 = vpop.permute.xlu0 %3283
      %3285 = vrot.lane.b32.xlu0 %v1450, 20
      %v3286 = vpop.permute.xlu0 %3285
      %3287 = vrot.lane.b32.xlu0 %v1454, 20
      %v3288 = vpop.permute.xlu0 %3287
      %3289 = vrot.lane.b32.xlu0 %v1456, 20
      %v3290 = vpop.permute.xlu0 %3289
      %3291 = vrot.lane.b32.xlu0 %v1455, 20
      %v3292 = vpop.permute.xlu0 %3291
      %3293 = vrot.lane.b32.xlu0 %v1459, 20
      %v3294 = vpop.permute.xlu0 %3293
      %3295 = vrot.lane.b32.xlu0 %v1461, 20
      %v3296 = vpop.permute.xlu0 %3295
      %3297 = vrot.lane.b32.xlu0 %v1460, 20
      %v3298 = vpop.permute.xlu0 %3297
      %3299 = vrot.lane.b32.xlu0 %v1464, 20
      %v3300 = vpop.permute.xlu0 %3299
      %3301 = vrot.lane.b32.xlu0 %v1466, 20
      %v3302 = vpop.permute.xlu0 %3301
      %3303 = vrot.lane.b32.xlu0 %v1465, 20
      %v3304 = vpop.permute.xlu0 %3303
      %3305 = vrot.lane.b32.xlu0 %v2169, 20
      %v3306 = vpop.permute.xlu0 %3305
      %3307 = vrot.lane.b32.xlu0 %v2171, 20
      %v3308 = vpop.permute.xlu0 %3307
      %3309 = vrot.lane.b32.xlu0 %v2170, 20
      %v3310 = vpop.permute.xlu0 %3309
      %3311 = vrot.lane.b32.xlu0 %v3221, 20
      %v3312 = vpop.permute.xlu0 %3311
      %3313 = vrot.lane.b32.xlu0 %v3223, 20
      %v3314 = vpop.permute.xlu0 %3313
      %3315 = vrot.lane.b32.xlu0 %v3222, 20
      %v3316 = vpop.permute.xlu0 %3315
      %3317 = vrot.lane.b32.xlu0 %v3224, 20
      %v3318 = vpop.permute.xlu0 %3317
      %3319 = vrot.lane.b32.xlu0 %v3226, 20
      %v3320 = vpop.permute.xlu0 %3319
      %3321 = vrot.lane.b32.xlu0 %v3225, 20
      %v3322 = vpop.permute.xlu0 %3321
      %vm3372 = vcmask 1040384
      %v3373 = vrot.slane %v398, 7
      %v3374 = vrot.slane %v399, 7
      %v3375 = vsel %vm3372, %v3373, %v3374
      %v3376 = vrot.slane %v400, 7
      %v3377 = vsel %vm3372, %v3374, %v3376
      %v3378 = vrot.slane %v401, 7
      %v3379 = vrot.slane %v402, 7
      %v3380 = vsel %vm3372, %v3378, %v3379
      %v3381 = vrot.slane %v403, 7
      %v3382 = vsel %vm3372, %v3379, %v3381
      %v3383 = vrot.slane %v404, 7
      %v3384 = vrot.slane %v405, 7
      %v3385 = vsel %vm3372, %v3383, %v3384
      %v3386 = vrot.slane %v406, 7
      %v3387 = vsel %vm3372, %v3384, %v3386
      %v3388 = vrot.slane %v407, 7
      %v3389 = vrot.slane %v408, 7
      %v3390 = vsel %vm3372, %v3388, %v3389
      %v3391 = vrot.slane %v409, 7
      %v3392 = vsel %vm3372, %v3389, %v3391
      %v3393 = vrot.slane %v410, 7
      %v3394 = vrot.slane %v411, 7
      %v3395 = vsel %vm3372, %v3393, %v3394
      %v3396 = vrot.slane %v412, 7
      %v3397 = vsel %vm3372, %v3394, %v3396
      %v3398 = vrot.slane %v413, 7
      %v3399 = vrot.slane %v414, 7
      %v3400 = vsel %vm3372, %v3398, %v3399
      %v3401 = vrot.slane %v415, 7
      %v3402 = vsel %vm3372, %v3399, %v3401
      %v3403 = vrot.slane %v416, 7
      %v3404 = vrot.slane %v417, 7
      %v3405 = vsel %vm3372, %v3403, %v3404
      %v3406 = vrot.slane %v418, 7
      %v3407 = vsel %vm3372, %v3404, %v3406
      %v3408 = vrot.slane %v419, 7
      %v3409 = vrot.slane %v420, 7
      %v3410 = vsel %vm3372, %v3408, %v3409
      %v3411 = vrot.slane %v421, 7
      %v3412 = vsel %vm3372, %v3409, %v3411
      %v3413 = vrot.slane %v422, 7
      %v3414 = vrot.slane %v423, 7
      %v3415 = vsel %vm3372, %v3413, %v3414
      %v3416 = vrot.slane %v424, 7
      %v3417 = vsel %vm3372, %v3414, %v3416
      %v3418 = vrot.slane %v425, 7
      %v3419 = vrot.slane %v426, 7
      %v3420 = vsel %vm3372, %v3418, %v3419
      %v3421 = vrot.slane %v427, 7
      %v3422 = vsel %vm3372, %v3419, %v3421
      %v3423 = vrot.slane %v428, 7
      %v3424 = vrot.slane %v429, 7
      %v3425 = vsel %vm3372, %v3423, %v3424
      %v3426 = vrot.slane %v430, 7
      %v3427 = vsel %vm3372, %v3424, %v3426
      %v3428 = vrot.slane %v431, 7
      %v3429 = vrot.slane %v432, 7
      %v3430 = vsel %vm3372, %v3428, %v3429
      %v3431 = vrot.slane %v433, 7
      %v3432 = vsel %vm3372, %v3429, %v3431
      %v3433 = vrot.slane %v434, 7
      %v3434 = vrot.slane %v435, 7
      %v3435 = vsel %vm3372, %v3433, %v3434
      %v3436 = vrot.slane %v436, 7
      %v3437 = vsel %vm3372, %v3434, %v3436
      %v3438 = vrot.slane %v437, 7
      %v3439 = vrot.slane %v438, 7
      %v3440 = vsel %vm3372, %v3438, %v3439
      %v3441 = vrot.slane %v439, 7
      %v3442 = vsel %vm3372, %v3439, %v3441
      %v3443 = vrot.slane %v440, 7
      %v3444 = vrot.slane %v441, 7
      %v3445 = vsel %vm3372, %v3443, %v3444
      %v3446 = vrot.slane %v442, 7
      %v3447 = vsel %vm3372, %v3444, %v3446
      %v3448 = vrot.slane %v443, 7
      %v3449 = vrot.slane %v444, 7
      %v3450 = vsel %vm3372, %v3448, %v3449
      %v3451 = vrot.slane %v445, 7
      %v3452 = vsel %vm3372, %v3449, %v3451
      %3453 = vrot.lane.b32.xlu0 %v3373, 24
      %v3454 = vpop.permute.xlu0 %3453
      %3455 = vrot.lane.b32.xlu0 %v3375, 24
      %v3456 = vpop.permute.xlu0 %3455
      %3457 = vrot.lane.b32.xlu0 %v3377, 24
      %v3458 = vpop.permute.xlu0 %3457
      %3459 = vrot.lane.b32.xlu0 %v3378, 24
      %v3460 = vpop.permute.xlu0 %3459
      %3461 = vrot.lane.b32.xlu0 %v3380, 24
      %v3462 = vpop.permute.xlu0 %3461
      %3463 = vrot.lane.b32.xlu0 %v3382, 24
      %v3464 = vpop.permute.xlu0 %3463
      %3465 = vrot.lane.b32.xlu0 %v3383, 24
      %v3466 = vpop.permute.xlu0 %3465
      %3467 = vrot.lane.b32.xlu0 %v3385, 24
      %v3468 = vpop.permute.xlu0 %3467
      %3469 = vrot.lane.b32.xlu0 %v3387, 24
      %v3470 = vpop.permute.xlu0 %3469
      %3471 = vrot.lane.b32.xlu0 %v3388, 24
      %v3472 = vpop.permute.xlu0 %3471
      %3473 = vrot.lane.b32.xlu0 %v3390, 24
      %v3474 = vpop.permute.xlu0 %3473
      %3475 = vrot.lane.b32.xlu0 %v3392, 24
      %v3476 = vpop.permute.xlu0 %3475
      %3477 = vrot.lane.b32.xlu0 %v3393, 24
      %v3478 = vpop.permute.xlu0 %3477
      %3479 = vrot.lane.b32.xlu0 %v3395, 24
      %v3480 = vpop.permute.xlu0 %3479
      %3481 = vrot.lane.b32.xlu0 %v3397, 24
      %v3482 = vpop.permute.xlu0 %3481
      %3483 = vrot.lane.b32.xlu0 %v3398, 24
      %v3484 = vpop.permute.xlu0 %3483
      %3485 = vrot.lane.b32.xlu0 %v3400, 24
      %v3486 = vpop.permute.xlu0 %3485
      %3487 = vrot.lane.b32.xlu0 %v3402, 24
      %v3488 = vpop.permute.xlu0 %3487
      %3489 = vrot.lane.b32.xlu0 %v3403, 24
      %v3490 = vpop.permute.xlu0 %3489
      %3491 = vrot.lane.b32.xlu0 %v3405, 24
      %v3492 = vpop.permute.xlu0 %3491
      %3493 = vrot.lane.b32.xlu0 %v3407, 24
      %v3494 = vpop.permute.xlu0 %3493
      %3495 = vrot.lane.b32.xlu0 %v3408, 24
      %v3496 = vpop.permute.xlu0 %3495
      %3497 = vrot.lane.b32.xlu0 %v3410, 24
      %v3498 = vpop.permute.xlu0 %3497
      %3499 = vrot.lane.b32.xlu0 %v3412, 24
      %v3500 = vpop.permute.xlu0 %3499
      %3501 = vrot.lane.b32.xlu0 %v3413, 24
      %v3502 = vpop.permute.xlu0 %3501
      %3503 = vrot.lane.b32.xlu0 %v3415, 24
      %v3504 = vpop.permute.xlu0 %3503
      %3505 = vrot.lane.b32.xlu0 %v3417, 24
      %v3506 = vpop.permute.xlu0 %3505
      %3507 = vrot.lane.b32.xlu0 %v3418, 24
      %v3508 = vpop.permute.xlu0 %3507
      %3509 = vrot.lane.b32.xlu0 %v3420, 24
      %v3510 = vpop.permute.xlu0 %3509
      %3511 = vrot.lane.b32.xlu0 %v3422, 24
      %v3512 = vpop.permute.xlu0 %3511
      %3513 = vrot.lane.b32.xlu0 %v3423, 24
      %v3514 = vpop.permute.xlu0 %3513
      %3515 = vrot.lane.b32.xlu0 %v3425, 24
      %v3516 = vpop.permute.xlu0 %3515
      %3517 = vrot.lane.b32.xlu0 %v3427, 24
      %v3518 = vpop.permute.xlu0 %3517
      %3519 = vrot.lane.b32.xlu0 %v3428, 24
      %v3520 = vpop.permute.xlu0 %3519
      %3521 = vrot.lane.b32.xlu0 %v3430, 24
      %v3522 = vpop.permute.xlu0 %3521
      %3523 = vrot.lane.b32.xlu0 %v3432, 24
      %v3524 = vpop.permute.xlu0 %3523
      %3525 = vrot.lane.b32.xlu0 %v3433, 24
      %v3526 = vpop.permute.xlu0 %3525
      %3527 = vrot.lane.b32.xlu0 %v3435, 24
      %v3528 = vpop.permute.xlu0 %3527
      %3529 = vrot.lane.b32.xlu0 %v3437, 24
      %v3530 = vpop.permute.xlu0 %3529
      %3531 = vrot.lane.b32.xlu0 %v3438, 24
      %v3532 = vpop.permute.xlu0 %3531
      %3533 = vrot.lane.b32.xlu0 %v3440, 24
      %v3534 = vpop.permute.xlu0 %3533
      %3535 = vrot.lane.b32.xlu0 %v3442, 24
      %v3536 = vpop.permute.xlu0 %3535
      %3537 = vrot.lane.b32.xlu0 %v3443, 24
      %v3538 = vpop.permute.xlu0 %3537
      %3539 = vrot.lane.b32.xlu0 %v3445, 24
      %v3540 = vpop.permute.xlu0 %3539
      %3541 = vrot.lane.b32.xlu0 %v3447, 24
      %v3542 = vpop.permute.xlu0 %3541
      %3543 = vrot.lane.b32.xlu0 %v3448, 24
      %v3544 = vpop.permute.xlu0 %3543
      %3545 = vrot.lane.b32.xlu0 %v3450, 24
      %v3546 = vpop.permute.xlu0 %3545
      %3547 = vrot.lane.b32.xlu0 %v3452, 24
      %v3548 = vpop.permute.xlu0 %3547
      %3597 = vrot.lane.b32.xlu0 %v400, 28
      %v3598 = vpop.permute.xlu0 %3597
      %3599 = vrot.lane.b32.xlu0 %v403, 28
      %v3600 = vpop.permute.xlu0 %3599
      %3601 = vrot.lane.b32.xlu0 %v406, 28
      %v3602 = vpop.permute.xlu0 %3601
      %3603 = vrot.lane.b32.xlu0 %v409, 28
      %v3604 = vpop.permute.xlu0 %3603
      %3605 = vrot.lane.b32.xlu0 %v412, 28
      %v3606 = vpop.permute.xlu0 %3605
      %3607 = vrot.lane.b32.xlu0 %v415, 28
      %v3608 = vpop.permute.xlu0 %3607
      %3609 = vrot.lane.b32.xlu0 %v418, 28
      %v3610 = vpop.permute.xlu0 %3609
      %3611 = vrot.lane.b32.xlu0 %v421, 28
      %v3612 = vpop.permute.xlu0 %3611
      %3613 = vrot.lane.b32.xlu0 %v424, 28
      %v3614 = vpop.permute.xlu0 %3613
      %3615 = vrot.lane.b32.xlu0 %v427, 28
      %v3616 = vpop.permute.xlu0 %3615
      %3617 = vrot.lane.b32.xlu0 %v430, 28
      %v3618 = vpop.permute.xlu0 %3617
      %3619 = vrot.lane.b32.xlu0 %v433, 28
      %v3620 = vpop.permute.xlu0 %3619
      %3621 = vrot.lane.b32.xlu0 %v436, 28
      %v3622 = vpop.permute.xlu0 %3621
      %3623 = vrot.lane.b32.xlu0 %v439, 28
      %v3624 = vpop.permute.xlu0 %3623
      %3625 = vrot.lane.b32.xlu0 %v440, 28
      %v3626 = vpop.permute.xlu0 %3625
      %3627 = vrot.lane.b32.xlu0 %v441, 28
      %v3628 = vpop.permute.xlu0 %3627
      %3629 = vrot.lane.b32.xlu0 %v442, 28
      %v3630 = vpop.permute.xlu0 %3629
      %3631 = vrot.lane.b32.xlu0 %v443, 28
      %v3632 = vpop.permute.xlu0 %3631
      %3633 = vrot.lane.b32.xlu0 %v444, 28
      %v3634 = vpop.permute.xlu0 %3633
      %3635 = vrot.lane.b32.xlu0 %v445, 28
      %v3636 = vpop.permute.xlu0 %3635
      %v3657 = vrot.slane %v443, 1
      %v3658 = vrot.slane %v444, 1
      %v3659 = vsel %vm503, %v3657, %v3658
      %v3660 = vrot.slane %v445, 1
      %v3661 = vsel %vm503, %v3658, %v3660
      %3662 = vrot.lane.b32.xlu0 %v522, 32
      %v3663 = vpop.permute.xlu0 %3662
      %3664 = vrot.lane.b32.xlu0 %v527, 32
      %v3665 = vpop.permute.xlu0 %3664
      %3666 = vrot.lane.b32.xlu0 %v532, 32
      %v3667 = vpop.permute.xlu0 %3666
      %3668 = vrot.lane.b32.xlu0 %v537, 32
      %v3669 = vpop.permute.xlu0 %3668
      %3670 = vrot.lane.b32.xlu0 %v542, 32
      %v3671 = vpop.permute.xlu0 %3670
      %3672 = vrot.lane.b32.xlu0 %v547, 32
      %v3673 = vpop.permute.xlu0 %3672
      %3674 = vrot.lane.b32.xlu0 %v552, 32
      %v3675 = vpop.permute.xlu0 %3674
      %3676 = vrot.lane.b32.xlu0 %v557, 32
      %v3677 = vpop.permute.xlu0 %3676
      %3678 = vrot.lane.b32.xlu0 %v562, 32
      %v3679 = vpop.permute.xlu0 %3678
      %3680 = vrot.lane.b32.xlu0 %v567, 32
      %v3681 = vpop.permute.xlu0 %3680
      %3682 = vrot.lane.b32.xlu0 %v572, 32
      %v3683 = vpop.permute.xlu0 %3682
      %3684 = vrot.lane.b32.xlu0 %v577, 32
      %v3685 = vpop.permute.xlu0 %3684
      %3686 = vrot.lane.b32.xlu0 %v582, 32
      %v3687 = vpop.permute.xlu0 %3686
      %3688 = vrot.lane.b32.xlu0 %v1667, 32
      %v3689 = vpop.permute.xlu0 %3688
      %3690 = vrot.lane.b32.xlu0 %v2371, 32
      %v3691 = vpop.permute.xlu0 %3690
      %3692 = vrot.lane.b32.xlu0 %v2373, 32
      %v3693 = vpop.permute.xlu0 %3692
      %3694 = vrot.lane.b32.xlu0 %v2372, 32
      %v3695 = vpop.permute.xlu0 %3694
      %3696 = vrot.lane.b32.xlu0 %v3659, 32
      %v3697 = vpop.permute.xlu0 %3696
      %3698 = vrot.lane.b32.xlu0 %v3661, 32
      %v3699 = vpop.permute.xlu0 %3698
      %3700 = vrot.lane.b32.xlu0 %v3660, 32
      %v3701 = vpop.permute.xlu0 %3700
      %v3722 = vrot.slane %v443, 2
      %v3723 = vrot.slane %v444, 2
      %v3724 = vsel %vm680, %v3722, %v3723
      %v3725 = vrot.slane %v445, 2
      %v3726 = vsel %vm680, %v3723, %v3725
      %3727 = vrot.lane.b32.xlu0 %v699, 36
      %v3728 = vpop.permute.xlu0 %3727
      %3729 = vrot.lane.b32.xlu0 %v704, 36
      %v3730 = vpop.permute.xlu0 %3729
      %3731 = vrot.lane.b32.xlu0 %v709, 36
      %v3732 = vpop.permute.xlu0 %3731
      %3733 = vrot.lane.b32.xlu0 %v714, 36
      %v3734 = vpop.permute.xlu0 %3733
      %3735 = vrot.lane.b32.xlu0 %v719, 36
      %v3736 = vpop.permute.xlu0 %3735
      %3737 = vrot.lane.b32.xlu0 %v724, 36
      %v3738 = vpop.permute.xlu0 %3737
      %3739 = vrot.lane.b32.xlu0 %v729, 36
      %v3740 = vpop.permute.xlu0 %3739
      %3741 = vrot.lane.b32.xlu0 %v734, 36
      %v3742 = vpop.permute.xlu0 %3741
      %3743 = vrot.lane.b32.xlu0 %v739, 36
      %v3744 = vpop.permute.xlu0 %3743
      %3745 = vrot.lane.b32.xlu0 %v744, 36
      %v3746 = vpop.permute.xlu0 %3745
      %3747 = vrot.lane.b32.xlu0 %v749, 36
      %v3748 = vpop.permute.xlu0 %3747
      %3749 = vrot.lane.b32.xlu0 %v754, 36
      %v3750 = vpop.permute.xlu0 %3749
      %3751 = vrot.lane.b32.xlu0 %v759, 36
      %v3752 = vpop.permute.xlu0 %3751
      %3753 = vrot.lane.b32.xlu0 %v1768, 36
      %v3754 = vpop.permute.xlu0 %3753
      %3755 = vrot.lane.b32.xlu0 %v3026, 36
      %v3756 = vpop.permute.xlu0 %3755
      %3757 = vrot.lane.b32.xlu0 %v3028, 36
      %v3758 = vpop.permute.xlu0 %3757
      %3759 = vrot.lane.b32.xlu0 %v3027, 36
      %v3760 = vpop.permute.xlu0 %3759
      %3761 = vrot.lane.b32.xlu0 %v3724, 36
      %v3762 = vpop.permute.xlu0 %3761
      %3763 = vrot.lane.b32.xlu0 %v3726, 36
      %v3764 = vpop.permute.xlu0 %3763
      %3765 = vrot.lane.b32.xlu0 %v3725, 36
      %v3766 = vpop.permute.xlu0 %3765
      %v3787 = vrot.slane %v443, 3
      %v3788 = vrot.slane %v444, 3
      %v3789 = vsel %vm857, %v3787, %v3788
      %v3790 = vrot.slane %v445, 3
      %v3791 = vsel %vm857, %v3788, %v3790
      %3792 = vrot.lane.b32.xlu0 %v876, 40
      %v3793 = vpop.permute.xlu0 %3792
      %3794 = vrot.lane.b32.xlu0 %v881, 40
      %v3795 = vpop.permute.xlu0 %3794
      %3796 = vrot.lane.b32.xlu0 %v886, 40
      %v3797 = vpop.permute.xlu0 %3796
      %3798 = vrot.lane.b32.xlu0 %v891, 40
      %v3799 = vpop.permute.xlu0 %3798
      %3800 = vrot.lane.b32.xlu0 %v896, 40
      %v3801 = vpop.permute.xlu0 %3800
      %3802 = vrot.lane.b32.xlu0 %v901, 40
      %v3803 = vpop.permute.xlu0 %3802
      %3804 = vrot.lane.b32.xlu0 %v906, 40
      %v3805 = vpop.permute.xlu0 %3804
      %3806 = vrot.lane.b32.xlu0 %v911, 40
      %v3807 = vpop.permute.xlu0 %3806
      %3808 = vrot.lane.b32.xlu0 %v916, 40
      %v3809 = vpop.permute.xlu0 %3808
      %3810 = vrot.lane.b32.xlu0 %v921, 40
      %v3811 = vpop.permute.xlu0 %3810
      %3812 = vrot.lane.b32.xlu0 %v926, 40
      %v3813 = vpop.permute.xlu0 %3812
      %3814 = vrot.lane.b32.xlu0 %v931, 40
      %v3815 = vpop.permute.xlu0 %3814
      %3816 = vrot.lane.b32.xlu0 %v936, 40
      %v3817 = vpop.permute.xlu0 %3816
      %3818 = vrot.lane.b32.xlu0 %v1869, 40
      %v3819 = vpop.permute.xlu0 %3818
      %3820 = vrot.lane.b32.xlu0 %v3091, 40
      %v3821 = vpop.permute.xlu0 %3820
      %3822 = vrot.lane.b32.xlu0 %v3093, 40
      %v3823 = vpop.permute.xlu0 %3822
      %3824 = vrot.lane.b32.xlu0 %v3092, 40
      %v3825 = vpop.permute.xlu0 %3824
      %3826 = vrot.lane.b32.xlu0 %v3789, 40
      %v3827 = vpop.permute.xlu0 %3826
      %3828 = vrot.lane.b32.xlu0 %v3791, 40
      %v3829 = vpop.permute.xlu0 %3828
      %3830 = vrot.lane.b32.xlu0 %v3790, 40
      %v3831 = vpop.permute.xlu0 %3830
      %v3852 = vrot.slane %v443, 4
      %v3853 = vrot.slane %v444, 4
      %v3854 = vsel %vm1034, %v3852, %v3853
      %v3855 = vrot.slane %v445, 4
      %v3856 = vsel %vm1034, %v3853, %v3855
      %3857 = vrot.lane.b32.xlu0 %v1053, 44
      %v3858 = vpop.permute.xlu0 %3857
      %3859 = vrot.lane.b32.xlu0 %v1058, 44
      %v3860 = vpop.permute.xlu0 %3859
      %3861 = vrot.lane.b32.xlu0 %v1063, 44
      %v3862 = vpop.permute.xlu0 %3861
      %3863 = vrot.lane.b32.xlu0 %v1068, 44
      %v3864 = vpop.permute.xlu0 %3863
      %3865 = vrot.lane.b32.xlu0 %v1073, 44
      %v3866 = vpop.permute.xlu0 %3865
      %3867 = vrot.lane.b32.xlu0 %v1078, 44
      %v3868 = vpop.permute.xlu0 %3867
      %3869 = vrot.lane.b32.xlu0 %v1083, 44
      %v3870 = vpop.permute.xlu0 %3869
      %3871 = vrot.lane.b32.xlu0 %v1088, 44
      %v3872 = vpop.permute.xlu0 %3871
      %3873 = vrot.lane.b32.xlu0 %v1093, 44
      %v3874 = vpop.permute.xlu0 %3873
      %3875 = vrot.lane.b32.xlu0 %v1098, 44
      %v3876 = vpop.permute.xlu0 %3875
      %3877 = vrot.lane.b32.xlu0 %v1103, 44
      %v3878 = vpop.permute.xlu0 %3877
      %3879 = vrot.lane.b32.xlu0 %v1108, 44
      %v3880 = vpop.permute.xlu0 %3879
      %3881 = vrot.lane.b32.xlu0 %v1113, 44
      %v3882 = vpop.permute.xlu0 %3881
      %3883 = vrot.lane.b32.xlu0 %v1970, 44
      %v3884 = vpop.permute.xlu0 %3883
      %3885 = vrot.lane.b32.xlu0 %v3156, 44
      %v3886 = vpop.permute.xlu0 %3885
      %3887 = vrot.lane.b32.xlu0 %v3158, 44
      %v3888 = vpop.permute.xlu0 %3887
      %3889 = vrot.lane.b32.xlu0 %v3157, 44
      %v3890 = vpop.permute.xlu0 %3889
      %3891 = vrot.lane.b32.xlu0 %v3854, 44
      %v3892 = vpop.permute.xlu0 %3891
      %3893 = vrot.lane.b32.xlu0 %v3856, 44
      %v3894 = vpop.permute.xlu0 %3893
      %3895 = vrot.lane.b32.xlu0 %v3855, 44
      %v3896 = vpop.permute.xlu0 %3895
      %v3919 = vrot.slane %v446, 6
      %v3920 = vrot.slane %v447, 6
      %v3921 = vsel %vm1388, %v3919, %v3920
      %3922 = vrot.lane.b32.xlu0 %v1409, 48
      %v3923 = vpop.permute.xlu0 %3922
      %3924 = vrot.lane.b32.xlu0 %v1411, 48
      %v3925 = vpop.permute.xlu0 %3924
      %3926 = vrot.lane.b32.xlu0 %v1410, 48
      %v3927 = vpop.permute.xlu0 %3926
      %3928 = vrot.lane.b32.xlu0 %v1414, 48
      %v3929 = vpop.permute.xlu0 %3928
      %3930 = vrot.lane.b32.xlu0 %v1416, 48
      %v3931 = vpop.permute.xlu0 %3930
      %3932 = vrot.lane.b32.xlu0 %v1415, 48
      %v3933 = vpop.permute.xlu0 %3932
      %3934 = vrot.lane.b32.xlu0 %v1419, 48
      %v3935 = vpop.permute.xlu0 %3934
      %3936 = vrot.lane.b32.xlu0 %v1421, 48
      %v3937 = vpop.permute.xlu0 %3936
      %3938 = vrot.lane.b32.xlu0 %v1420, 48
      %v3939 = vpop.permute.xlu0 %3938
      %3940 = vrot.lane.b32.xlu0 %v1424, 48
      %v3941 = vpop.permute.xlu0 %3940
      %3942 = vrot.lane.b32.xlu0 %v1426, 48
      %v3943 = vpop.permute.xlu0 %3942
      %3944 = vrot.lane.b32.xlu0 %v1425, 48
      %v3945 = vpop.permute.xlu0 %3944
      %3946 = vrot.lane.b32.xlu0 %v1429, 48
      %v3947 = vpop.permute.xlu0 %3946
      %3948 = vrot.lane.b32.xlu0 %v1431, 48
      %v3949 = vpop.permute.xlu0 %3948
      %3950 = vrot.lane.b32.xlu0 %v1430, 48
      %v3951 = vpop.permute.xlu0 %3950
      %3952 = vrot.lane.b32.xlu0 %v1434, 48
      %v3953 = vpop.permute.xlu0 %3952
      %3954 = vrot.lane.b32.xlu0 %v1436, 48
      %v3955 = vpop.permute.xlu0 %3954
      %3956 = vrot.lane.b32.xlu0 %v1435, 48
      %v3957 = vpop.permute.xlu0 %3956
      %3958 = vrot.lane.b32.xlu0 %v1439, 48
      %v3959 = vpop.permute.xlu0 %3958
      %3960 = vrot.lane.b32.xlu0 %v1441, 48
      %v3961 = vpop.permute.xlu0 %3960
      %3962 = vrot.lane.b32.xlu0 %v1440, 48
      %v3963 = vpop.permute.xlu0 %3962
      %3964 = vrot.lane.b32.xlu0 %v1444, 48
      %v3965 = vpop.permute.xlu0 %3964
      %3966 = vrot.lane.b32.xlu0 %v1446, 48
      %v3967 = vpop.permute.xlu0 %3966
      %3968 = vrot.lane.b32.xlu0 %v1445, 48
      %v3969 = vpop.permute.xlu0 %3968
      %3970 = vrot.lane.b32.xlu0 %v1449, 48
      %v3971 = vpop.permute.xlu0 %3970
      %3972 = vrot.lane.b32.xlu0 %v1451, 48
      %v3973 = vpop.permute.xlu0 %3972
      %3974 = vrot.lane.b32.xlu0 %v1450, 48
      %v3975 = vpop.permute.xlu0 %3974
      %3976 = vrot.lane.b32.xlu0 %v1454, 48
      %v3977 = vpop.permute.xlu0 %3976
      %3978 = vrot.lane.b32.xlu0 %v1456, 48
      %v3979 = vpop.permute.xlu0 %3978
      %3980 = vrot.lane.b32.xlu0 %v1455, 48
      %v3981 = vpop.permute.xlu0 %3980
      %3982 = vrot.lane.b32.xlu0 %v1459, 48
      %v3983 = vpop.permute.xlu0 %3982
      %3984 = vrot.lane.b32.xlu0 %v1461, 48
      %v3985 = vpop.permute.xlu0 %3984
      %3986 = vrot.lane.b32.xlu0 %v1460, 48
      %v3987 = vpop.permute.xlu0 %3986
      %3988 = vrot.lane.b32.xlu0 %v1464, 48
      %v3989 = vpop.permute.xlu0 %3988
      %3990 = vrot.lane.b32.xlu0 %v1466, 48
      %v3991 = vpop.permute.xlu0 %3990
      %3992 = vrot.lane.b32.xlu0 %v1465, 48
      %v3993 = vpop.permute.xlu0 %3992
      %3994 = vrot.lane.b32.xlu0 %v2169, 48
      %v3995 = vpop.permute.xlu0 %3994
      %3996 = vrot.lane.b32.xlu0 %v2171, 48
      %v3997 = vpop.permute.xlu0 %3996
      %3998 = vrot.lane.b32.xlu0 %v2170, 48
      %v3999 = vpop.permute.xlu0 %3998
      %4000 = vrot.lane.b32.xlu0 %v3221, 48
      %v4001 = vpop.permute.xlu0 %4000
      %4002 = vrot.lane.b32.xlu0 %v3223, 48
      %v4003 = vpop.permute.xlu0 %4002
      %4004 = vrot.lane.b32.xlu0 %v3222, 48
      %v4005 = vpop.permute.xlu0 %4004
      %4006 = vrot.lane.b32.xlu0 %v3224, 48
      %v4007 = vpop.permute.xlu0 %4006
      %4008 = vrot.lane.b32.xlu0 %v3226, 48
      %v4009 = vpop.permute.xlu0 %4008
      %4010 = vrot.lane.b32.xlu0 %v3225, 48
      %v4011 = vpop.permute.xlu0 %4010
      %4012 = vrot.lane.b32.xlu0 %v3919, 48
      %v4013 = vpop.permute.xlu0 %4012
      %4014 = vrot.lane.b32.xlu0 %v3921, 48
      %v4015 = vpop.permute.xlu0 %4014
      %4016 = vrot.lane.b32.xlu0 %v3920, 48
      %v4017 = vpop.permute.xlu0 %4016
      %v4067 = vrot.slane %v446, 7
      %v4068 = vrot.slane %v447, 7
      %v4069 = vsel %vm3372, %v4067, %v4068
      %v4070 = vrot.slane %v448, 7
      %v4071 = vsel %vm3372, %v4068, %v4070
      %4072 = vrot.lane.b32.xlu0 %v3378, 52
      %v4073 = vpop.permute.xlu0 %4072
      %4074 = vrot.lane.b32.xlu0 %v3380, 52
      %v4075 = vpop.permute.xlu0 %4074
      %4076 = vrot.lane.b32.xlu0 %v3382, 52
      %v4077 = vpop.permute.xlu0 %4076
      %4078 = vrot.lane.b32.xlu0 %v3383, 52
      %v4079 = vpop.permute.xlu0 %4078
      %4080 = vrot.lane.b32.xlu0 %v3385, 52
      %v4081 = vpop.permute.xlu0 %4080
      %4082 = vrot.lane.b32.xlu0 %v3387, 52
      %v4083 = vpop.permute.xlu0 %4082
      %4084 = vrot.lane.b32.xlu0 %v3388, 52
      %v4085 = vpop.permute.xlu0 %4084
      %4086 = vrot.lane.b32.xlu0 %v3390, 52
      %v4087 = vpop.permute.xlu0 %4086
      %4088 = vrot.lane.b32.xlu0 %v3392, 52
      %v4089 = vpop.permute.xlu0 %4088
      %4090 = vrot.lane.b32.xlu0 %v3393, 52
      %v4091 = vpop.permute.xlu0 %4090
      %4092 = vrot.lane.b32.xlu0 %v3395, 52
      %v4093 = vpop.permute.xlu0 %4092
      %4094 = vrot.lane.b32.xlu0 %v3397, 52
      %v4095 = vpop.permute.xlu0 %4094
      %4096 = vrot.lane.b32.xlu0 %v3398, 52
      %v4097 = vpop.permute.xlu0 %4096
      %4098 = vrot.lane.b32.xlu0 %v3400, 52
      %v4099 = vpop.permute.xlu0 %4098
      %4100 = vrot.lane.b32.xlu0 %v3402, 52
      %v4101 = vpop.permute.xlu0 %4100
      %4102 = vrot.lane.b32.xlu0 %v3403, 52
      %v4103 = vpop.permute.xlu0 %4102
      %4104 = vrot.lane.b32.xlu0 %v3405, 52
      %v4105 = vpop.permute.xlu0 %4104
      %4106 = vrot.lane.b32.xlu0 %v3407, 52
      %v4107 = vpop.permute.xlu0 %4106
      %4108 = vrot.lane.b32.xlu0 %v3408, 52
      %v4109 = vpop.permute.xlu0 %4108
      %4110 = vrot.lane.b32.xlu0 %v3410, 52
      %v4111 = vpop.permute.xlu0 %4110
      %4112 = vrot.lane.b32.xlu0 %v3412, 52
      %v4113 = vpop.permute.xlu0 %4112
      %4114 = vrot.lane.b32.xlu0 %v3413, 52
      %v4115 = vpop.permute.xlu0 %4114
      %4116 = vrot.lane.b32.xlu0 %v3415, 52
      %v4117 = vpop.permute.xlu0 %4116
      %4118 = vrot.lane.b32.xlu0 %v3417, 52
      %v4119 = vpop.permute.xlu0 %4118
      %4120 = vrot.lane.b32.xlu0 %v3418, 52
      %v4121 = vpop.permute.xlu0 %4120
      %4122 = vrot.lane.b32.xlu0 %v3420, 52
      %v4123 = vpop.permute.xlu0 %4122
      %4124 = vrot.lane.b32.xlu0 %v3422, 52
      %v4125 = vpop.permute.xlu0 %4124
      %4126 = vrot.lane.b32.xlu0 %v3423, 52
      %v4127 = vpop.permute.xlu0 %4126
      %4128 = vrot.lane.b32.xlu0 %v3425, 52
      %v4129 = vpop.permute.xlu0 %4128
      %4130 = vrot.lane.b32.xlu0 %v3427, 52
      %v4131 = vpop.permute.xlu0 %4130
      %4132 = vrot.lane.b32.xlu0 %v3428, 52
      %v4133 = vpop.permute.xlu0 %4132
      %4134 = vrot.lane.b32.xlu0 %v3430, 52
      %v4135 = vpop.permute.xlu0 %4134
      %4136 = vrot.lane.b32.xlu0 %v3432, 52
      %v4137 = vpop.permute.xlu0 %4136
      %4138 = vrot.lane.b32.xlu0 %v3433, 52
      %v4139 = vpop.permute.xlu0 %4138
      %4140 = vrot.lane.b32.xlu0 %v3435, 52
      %v4141 = vpop.permute.xlu0 %4140
      %4142 = vrot.lane.b32.xlu0 %v3437, 52
      %v4143 = vpop.permute.xlu0 %4142
      %4144 = vrot.lane.b32.xlu0 %v3438, 52
      %v4145 = vpop.permute.xlu0 %4144
      %4146 = vrot.lane.b32.xlu0 %v3440, 52
      %v4147 = vpop.permute.xlu0 %4146
      %4148 = vrot.lane.b32.xlu0 %v3442, 52
      %v4149 = vpop.permute.xlu0 %4148
      %4150 = vrot.lane.b32.xlu0 %v3443, 52
      %v4151 = vpop.permute.xlu0 %4150
      %4152 = vrot.lane.b32.xlu0 %v3445, 52
      %v4153 = vpop.permute.xlu0 %4152
      %4154 = vrot.lane.b32.xlu0 %v3447, 52
      %v4155 = vpop.permute.xlu0 %4154
      %4156 = vrot.lane.b32.xlu0 %v3448, 52
      %v4157 = vpop.permute.xlu0 %4156
      %4158 = vrot.lane.b32.xlu0 %v3450, 52
      %v4159 = vpop.permute.xlu0 %4158
      %4160 = vrot.lane.b32.xlu0 %v3452, 52
      %v4161 = vpop.permute.xlu0 %4160
      %4162 = vrot.lane.b32.xlu0 %v4067, 52
      %v4163 = vpop.permute.xlu0 %4162
      %4164 = vrot.lane.b32.xlu0 %v4069, 52
      %v4165 = vpop.permute.xlu0 %4164
      %4166 = vrot.lane.b32.xlu0 %v4071, 52
      %v4167 = vpop.permute.xlu0 %4166
      %4216 = vrot.lane.b32.xlu0 %v403, 56
      %v4217 = vpop.permute.xlu0 %4216
      %4218 = vrot.lane.b32.xlu0 %v406, 56
      %v4219 = vpop.permute.xlu0 %4218
      %4220 = vrot.lane.b32.xlu0 %v409, 56
      %v4221 = vpop.permute.xlu0 %4220
      %4222 = vrot.lane.b32.xlu0 %v412, 56
      %v4223 = vpop.permute.xlu0 %4222
      %4224 = vrot.lane.b32.xlu0 %v415, 56
      %v4225 = vpop.permute.xlu0 %4224
      %4226 = vrot.lane.b32.xlu0 %v418, 56
      %v4227 = vpop.permute.xlu0 %4226
      %4228 = vrot.lane.b32.xlu0 %v421, 56
      %v4229 = vpop.permute.xlu0 %4228
      %4230 = vrot.lane.b32.xlu0 %v424, 56
      %v4231 = vpop.permute.xlu0 %4230
      %4232 = vrot.lane.b32.xlu0 %v427, 56
      %v4233 = vpop.permute.xlu0 %4232
      %4234 = vrot.lane.b32.xlu0 %v430, 56
      %v4235 = vpop.permute.xlu0 %4234
      %4236 = vrot.lane.b32.xlu0 %v433, 56
      %v4237 = vpop.permute.xlu0 %4236
      %4238 = vrot.lane.b32.xlu0 %v436, 56
      %v4239 = vpop.permute.xlu0 %4238
      %4240 = vrot.lane.b32.xlu0 %v439, 56
      %v4241 = vpop.permute.xlu0 %4240
      %4242 = vrot.lane.b32.xlu0 %v442, 56
      %v4243 = vpop.permute.xlu0 %4242
      %4244 = vrot.lane.b32.xlu0 %v443, 56
      %v4245 = vpop.permute.xlu0 %4244
      %4246 = vrot.lane.b32.xlu0 %v444, 56
      %v4247 = vpop.permute.xlu0 %4246
      %4248 = vrot.lane.b32.xlu0 %v445, 56
      %v4249 = vpop.permute.xlu0 %4248
      %4250 = vrot.lane.b32.xlu0 %v446, 56
      %v4251 = vpop.permute.xlu0 %4250
      %4252 = vrot.lane.b32.xlu0 %v447, 56
      %v4253 = vpop.permute.xlu0 %4252
      %4254 = vrot.lane.b32.xlu0 %v448, 56
      %v4255 = vpop.permute.xlu0 %4254
      %v4276 = vrot.slane %v446, 1
      %v4277 = vrot.slane %v447, 1
      %v4278 = vsel %vm503, %v4276, %v4277
      %v4279 = vrot.slane %v448, 1
      %v4280 = vsel %vm503, %v4277, %v4279
      %4281 = vrot.lane.b32.xlu0 %v527, 60
      %v4282 = vpop.permute.xlu0 %4281
      %4283 = vrot.lane.b32.xlu0 %v532, 60
      %v4284 = vpop.permute.xlu0 %4283
      %4285 = vrot.lane.b32.xlu0 %v537, 60
      %v4286 = vpop.permute.xlu0 %4285
      %4287 = vrot.lane.b32.xlu0 %v542, 60
      %v4288 = vpop.permute.xlu0 %4287
      %4289 = vrot.lane.b32.xlu0 %v547, 60
      %v4290 = vpop.permute.xlu0 %4289
      %4291 = vrot.lane.b32.xlu0 %v552, 60
      %v4292 = vpop.permute.xlu0 %4291
      %4293 = vrot.lane.b32.xlu0 %v557, 60
      %v4294 = vpop.permute.xlu0 %4293
      %4295 = vrot.lane.b32.xlu0 %v562, 60
      %v4296 = vpop.permute.xlu0 %4295
      %4297 = vrot.lane.b32.xlu0 %v567, 60
      %v4298 = vpop.permute.xlu0 %4297
      %4299 = vrot.lane.b32.xlu0 %v572, 60
      %v4300 = vpop.permute.xlu0 %4299
      %4301 = vrot.lane.b32.xlu0 %v577, 60
      %v4302 = vpop.permute.xlu0 %4301
      %4303 = vrot.lane.b32.xlu0 %v582, 60
      %v4304 = vpop.permute.xlu0 %4303
      %4305 = vrot.lane.b32.xlu0 %v1667, 60
      %v4306 = vpop.permute.xlu0 %4305
      %4307 = vrot.lane.b32.xlu0 %v2372, 60
      %v4308 = vpop.permute.xlu0 %4307
      %4309 = vrot.lane.b32.xlu0 %v3659, 60
      %v4310 = vpop.permute.xlu0 %4309
      %4311 = vrot.lane.b32.xlu0 %v3661, 60
      %v4312 = vpop.permute.xlu0 %4311
      %4313 = vrot.lane.b32.xlu0 %v3660, 60
      %v4314 = vpop.permute.xlu0 %4313
      %4315 = vrot.lane.b32.xlu0 %v4278, 60
      %v4316 = vpop.permute.xlu0 %4315
      %4317 = vrot.lane.b32.xlu0 %v4280, 60
      %v4318 = vpop.permute.xlu0 %4317
      %4319 = vrot.lane.b32.xlu0 %v4279, 60
      %v4320 = vpop.permute.xlu0 %4319
      %v4341 = vsel %vm2470, %v397, %v2965
      %v4342 = vsel %vm2470, %v400, %v2967
      %v4343 = vsel %vm2470, %v403, %v2969
      %v4344 = vsel %vm2470, %v406, %v2971
      %v4345 = vsel %vm2470, %v409, %v2973
      %v4346 = vsel %vm2470, %v412, %v2975
      %v4347 = vsel %vm2470, %v415, %v2977
      %v4348 = vsel %vm2470, %v418, %v2979
      %v4349 = vsel %vm2470, %v421, %v2981
      %v4350 = vsel %vm2470, %v424, %v2983
      %v4351 = vsel %vm2470, %v427, %v2985
      %v4352 = vsel %vm2470, %v430, %v2987
      %v4353 = vsel %vm2470, %v433, %v2989
      %v4354 = vsel %vm2470, %v436, %v2991
      %v4355 = vsel %vm2470, %v437, %v2993
      %v4356 = vsel %vm2470, %v438, %v2995
      %v4357 = vsel %vm2470, %v439, %v2997
      %v4358 = vsel %vm2470, %v440, %v2999
      %v4359 = vsel %vm2470, %v441, %v3001
      %v4360 = vsel %vm2470, %v442, %v3003
      %v4361 = vsel %vm2503, %v4341, %v3030
      %v4362 = vsel %vm2503, %v4342, %v3032
      %v4363 = vsel %vm2503, %v4343, %v3034
      %v4364 = vsel %vm2503, %v4344, %v3036
      %v4365 = vsel %vm2503, %v4345, %v3038
      %v4366 = vsel %vm2503, %v4346, %v3040
      %v4367 = vsel %vm2503, %v4347, %v3042
      %v4368 = vsel %vm2503, %v4348, %v3044
      %v4369 = vsel %vm2503, %v4349, %v3046
      %v4370 = vsel %vm2503, %v4350, %v3048
      %v4371 = vsel %vm2503, %v4351, %v3050
      %v4372 = vsel %vm2503, %v4352, %v3052
      %v4373 = vsel %vm2503, %v4353, %v3054
      %v4374 = vsel %vm2503, %v4354, %v3056
      %v4375 = vsel %vm2503, %v4355, %v3058
      %v4376 = vsel %vm2503, %v4356, %v3060
      %v4377 = vsel %vm2503, %v4357, %v3062
      %v4378 = vsel %vm2503, %v4358, %v3064
      %v4379 = vsel %vm2503, %v4359, %v3066
      %v4380 = vsel %vm2503, %v4360, %v3068
      %v4381 = vsel %vm2536, %v4361, %v3095
      %v4382 = vsel %vm2536, %v4362, %v3097
      %v4383 = vsel %vm2536, %v4363, %v3099
      %v4384 = vsel %vm2536, %v4364, %v3101
      %v4385 = vsel %vm2536, %v4365, %v3103
      %v4386 = vsel %vm2536, %v4366, %v3105
      %v4387 = vsel %vm2536, %v4367, %v3107
      %v4388 = vsel %vm2536, %v4368, %v3109
      %v4389 = vsel %vm2536, %v4369, %v3111
      %v4390 = vsel %vm2536, %v4370, %v3113
      %v4391 = vsel %vm2536, %v4371, %v3115
      %v4392 = vsel %vm2536, %v4372, %v3117
      %v4393 = vsel %vm2536, %v4373, %v3119
      %v4394 = vsel %vm2536, %v4374, %v3121
      %v4395 = vsel %vm2536, %v4375, %v3123
      %v4396 = vsel %vm2536, %v4376, %v3125
      %v4397 = vsel %vm2536, %v4377, %v3127
      %v4398 = vsel %vm2536, %v4378, %v3129
      %v4399 = vsel %vm2536, %v4379, %v3131
      %v4400 = vsel %vm2536, %v4380, %v3133
      %v4401 = vsel %vm2569, %v4381, %v3160
      %v4402 = vsel %vm2569, %v4382, %v3162
      %v4403 = vsel %vm2569, %v4383, %v3164
      %v4404 = vsel %vm2569, %v4384, %v3166
      %v4405 = vsel %vm2569, %v4385, %v3168
      %v4406 = vsel %vm2569, %v4386, %v3170
      %v4407 = vsel %vm2569, %v4387, %v3172
      %v4408 = vsel %vm2569, %v4388, %v3174
      %v4409 = vsel %vm2569, %v4389, %v3176
      %v4410 = vsel %vm2569, %v4390, %v3178
      %v4411 = vsel %vm2569, %v4391, %v3180
      %v4412 = vsel %vm2569, %v4392, %v3182
      %v4413 = vsel %vm2569, %v4393, %v3184
      %v4414 = vsel %vm2569, %v4394, %v3186
      %v4415 = vsel %vm2569, %v4395, %v3188
      %v4416 = vsel %vm2569, %v4396, %v3190
      %v4417 = vsel %vm2569, %v4397, %v3192
      %v4418 = vsel %vm2569, %v4398, %v3194
      %v4419 = vsel %vm2569, %v4399, %v3196
      %v4420 = vsel %vm2569, %v4400, %v3198
      %v4421 = vsel %vm2602, %v2574, %v3228
      %v4422 = vsel %vm2602, %v2575, %v3230
      %v4423 = vsel %vm2602, %v4401, %v3232
      %v4424 = vsel %vm2602, %v2576, %v3234
      %v4425 = vsel %vm2602, %v2577, %v3236
      %v4426 = vsel %vm2602, %v4402, %v3238
      %v4427 = vsel %vm2602, %v2578, %v3240
      %v4428 = vsel %vm2602, %v2579, %v3242
      %v4429 = vsel %vm2602, %v4403, %v3244
      %v4430 = vsel %vm2602, %v2580, %v3246
      %v4431 = vsel %vm2602, %v2581, %v3248
      %v4432 = vsel %vm2602, %v4404, %v3250
      %v4433 = vsel %vm2602, %v2582, %v3252
      %v4434 = vsel %vm2602, %v2583, %v3254
      %v4435 = vsel %vm2602, %v4405, %v3256
      %v4436 = vsel %vm2602, %v2584, %v3258
      %v4437 = vsel %vm2602, %v2585, %v3260
      %v4438 = vsel %vm2602, %v4406, %v3262
      %v4439 = vsel %vm2602, %v2586, %v3264
      %v4440 = vsel %vm2602, %v2587, %v3266
      %v4441 = vsel %vm2602, %v4407, %v3268
      %v4442 = vsel %vm2602, %v2588, %v3270
      %v4443 = vsel %vm2602, %v2589, %v3272
      %v4444 = vsel %vm2602, %v4408, %v3274
      %v4445 = vsel %vm2602, %v2590, %v3276
      %v4446 = vsel %vm2602, %v2591, %v3278
      %v4447 = vsel %vm2602, %v4409, %v3280
      %v4448 = vsel %vm2602, %v2592, %v3282
      %v4449 = vsel %vm2602, %v2593, %v3284
      %v4450 = vsel %vm2602, %v4410, %v3286
      %v4451 = vsel %vm2602, %v2594, %v3288
      %v4452 = vsel %vm2602, %v2595, %v3290
      %v4453 = vsel %vm2602, %v4411, %v3292
      %v4454 = vsel %vm2602, %v2596, %v3294
      %v4455 = vsel %vm2602, %v2597, %v3296
      %v4456 = vsel %vm2602, %v4412, %v3298
      %v4457 = vsel %vm2602, %v2598, %v3300
      %v4458 = vsel %vm2602, %v2599, %v3302
      %v4459 = vsel %vm2602, %v4413, %v3304
      %v4460 = vsel %vm2602, %v2600, %v3306
      %v4461 = vsel %vm2602, %v2601, %v3308
      %v4462 = vsel %vm2602, %v4414, %v3310
      %v4463 = vsel %vm2602, %v4415, %v3312
      %v4464 = vsel %vm2602, %v4416, %v3314
      %v4465 = vsel %vm2602, %v4417, %v3316
      %v4466 = vsel %vm2602, %v4418, %v3318
      %v4467 = vsel %vm2602, %v4419, %v3320
      %v4468 = vsel %vm2602, %v4420, %v3322
      %v4469 = vsel %vm2635, %v4421, %v3454
      %v4470 = vsel %vm2635, %v4422, %v3456
      %v4471 = vsel %vm2635, %v4423, %v3458
      %v4472 = vsel %vm2635, %v4424, %v3460
      %v4473 = vsel %vm2635, %v4425, %v3462
      %v4474 = vsel %vm2635, %v4426, %v3464
      %v4475 = vsel %vm2635, %v4427, %v3466
      %v4476 = vsel %vm2635, %v4428, %v3468
      %v4477 = vsel %vm2635, %v4429, %v3470
      %v4478 = vsel %vm2635, %v4430, %v3472
      %v4479 = vsel %vm2635, %v4431, %v3474
      %v4480 = vsel %vm2635, %v4432, %v3476
      %v4481 = vsel %vm2635, %v4433, %v3478
      %v4482 = vsel %vm2635, %v4434, %v3480
      %v4483 = vsel %vm2635, %v4435, %v3482
      %v4484 = vsel %vm2635, %v4436, %v3484
      %v4485 = vsel %vm2635, %v4437, %v3486
      %v4486 = vsel %vm2635, %v4438, %v3488
      %v4487 = vsel %vm2635, %v4439, %v3490
      %v4488 = vsel %vm2635, %v4440, %v3492
      %v4489 = vsel %vm2635, %v4441, %v3494
      %v4490 = vsel %vm2635, %v4442, %v3496
      %v4491 = vsel %vm2635, %v4443, %v3498
      %v4492 = vsel %vm2635, %v4444, %v3500
      %v4493 = vsel %vm2635, %v4445, %v3502
      %v4494 = vsel %vm2635, %v4446, %v3504
      %v4495 = vsel %vm2635, %v4447, %v3506
      %v4496 = vsel %vm2635, %v4448, %v3508
      %v4497 = vsel %vm2635, %v4449, %v3510
      %v4498 = vsel %vm2635, %v4450, %v3512
      %v4499 = vsel %vm2635, %v4451, %v3514
      %v4500 = vsel %vm2635, %v4452, %v3516
      %v4501 = vsel %vm2635, %v4453, %v3518
      %v4502 = vsel %vm2635, %v4454, %v3520
      %v4503 = vsel %vm2635, %v4455, %v3522
      %v4504 = vsel %vm2635, %v4456, %v3524
      %v4505 = vsel %vm2635, %v4457, %v3526
      %v4506 = vsel %vm2635, %v4458, %v3528
      %v4507 = vsel %vm2635, %v4459, %v3530
      %v4508 = vsel %vm2635, %v4460, %v3532
      %v4509 = vsel %vm2635, %v4461, %v3534
      %v4510 = vsel %vm2635, %v4462, %v3536
      %v4511 = vsel %vm2635, %v4463, %v3538
      %v4512 = vsel %vm2635, %v4464, %v3540
      %v4513 = vsel %vm2635, %v4465, %v3542
      %v4514 = vsel %vm2635, %v4466, %v3544
      %v4515 = vsel %vm2635, %v4467, %v3546
      %v4516 = vsel %vm2635, %v4468, %v3548
      %v4517 = vsel %vm2668, %v4469, %v1576
      %v4518 = vsel %vm2668, %v4470, %v1578
      %v4519 = vsel %vm2668, %v4471, %v3598
      %v4520 = vsel %vm2668, %v4472, %v1580
      %v4521 = vsel %vm2668, %v4473, %v1582
      %v4522 = vsel %vm2668, %v4474, %v3600
      %v4523 = vsel %vm2668, %v4475, %v1584
      %v4524 = vsel %vm2668, %v4476, %v1586
      %v4525 = vsel %vm2668, %v4477, %v3602
      %v4526 = vsel %vm2668, %v4478, %v1588
      %v4527 = vsel %vm2668, %v4479, %v1590
      %v4528 = vsel %vm2668, %v4480, %v3604
      %v4529 = vsel %vm2668, %v4481, %v1592
      %v4530 = vsel %vm2668, %v4482, %v1594
      %v4531 = vsel %vm2668, %v4483, %v3606
      %v4532 = vsel %vm2668, %v4484, %v1596
      %v4533 = vsel %vm2668, %v4485, %v1598
      %v4534 = vsel %vm2668, %v4486, %v3608
      %v4535 = vsel %vm2668, %v4487, %v1600
      %v4536 = vsel %vm2668, %v4488, %v1602
      %v4537 = vsel %vm2668, %v4489, %v3610
      %v4538 = vsel %vm2668, %v4490, %v1604
      %v4539 = vsel %vm2668, %v4491, %v1606
      %v4540 = vsel %vm2668, %v4492, %v3612
      %v4541 = vsel %vm2668, %v4493, %v1608
      %v4542 = vsel %vm2668, %v4494, %v1610
      %v4543 = vsel %vm2668, %v4495, %v3614
      %v4544 = vsel %vm2668, %v4496, %v1612
      %v4545 = vsel %vm2668, %v4497, %v1614
      %v4546 = vsel %vm2668, %v4498, %v3616
      %v4547 = vsel %vm2668, %v4499, %v1616
      %v4548 = vsel %vm2668, %v4500, %v1618
      %v4549 = vsel %vm2668, %v4501, %v3618
      %v4550 = vsel %vm2668, %v4502, %v1620
      %v4551 = vsel %vm2668, %v4503, %v1622
      %v4552 = vsel %vm2668, %v4504, %v3620
      %v4553 = vsel %vm2668, %v4505, %v1624
      %v4554 = vsel %vm2668, %v4506, %v1626
      %v4555 = vsel %vm2668, %v4507, %v3622
      %v4556 = vsel %vm2668, %v4508, %v1628
      %v4557 = vsel %vm2668, %v4509, %v1630
      %v4558 = vsel %vm2668, %v4510, %v3624
      %v4559 = vsel %vm2668, %v4511, %v3626
      %v4560 = vsel %vm2668, %v4512, %v3628
      %v4561 = vsel %vm2668, %v4513, %v3630
      %v4562 = vsel %vm2668, %v4514, %v3632
      %v4563 = vsel %vm2668, %v4515, %v3634
      %v4564 = vsel %vm2668, %v4516, %v3636
      %v4565 = vsel %vm333, %v4517, %v1678
      %v4566 = vsel %vm333, %v4518, %v1680
      %v4567 = vsel %vm333, %v4519, %v3663
      %v4568 = vsel %vm333, %v4520, %v1682
      %v4569 = vsel %vm333, %v4521, %v1684
      %v4570 = vsel %vm333, %v4522, %v3665
      %v4571 = vsel %vm333, %v4523, %v1686
      %v4572 = vsel %vm333, %v4524, %v1688
      %v4573 = vsel %vm333, %v4525, %v3667
      %v4574 = vsel %vm333, %v4526, %v1690
      %v4575 = vsel %vm333, %v4527, %v1692
      %v4576 = vsel %vm333, %v4528, %v3669
      %v4577 = vsel %vm333, %v4529, %v1694
      %v4578 = vsel %vm333, %v4530, %v1696
      %v4579 = vsel %vm333, %v4531, %v3671
      %v4580 = vsel %vm333, %v4532, %v1698
      %v4581 = vsel %vm333, %v4533, %v1700
      %v4582 = vsel %vm333, %v4534, %v3673
      %v4583 = vsel %vm333, %v4535, %v1702
      %v4584 = vsel %vm333, %v4536, %v1704
      %v4585 = vsel %vm333, %v4537, %v3675
      %v4586 = vsel %vm333, %v4538, %v1706
      %v4587 = vsel %vm333, %v4539, %v1708
      %v4588 = vsel %vm333, %v4540, %v3677
      %v4589 = vsel %vm333, %v4541, %v1710
      %v4590 = vsel %vm333, %v4542, %v1712
      %v4591 = vsel %vm333, %v4543, %v3679
      %v4592 = vsel %vm333, %v4544, %v1714
      %v4593 = vsel %vm333, %v4545, %v1716
      %v4594 = vsel %vm333, %v4546, %v3681
      %v4595 = vsel %vm333, %v4547, %v1718
      %v4596 = vsel %vm333, %v4548, %v1720
      %v4597 = vsel %vm333, %v4549, %v3683
      %v4598 = vsel %vm333, %v4550, %v1722
      %v4599 = vsel %vm333, %v4551, %v1724
      %v4600 = vsel %vm333, %v4552, %v3685
      %v4601 = vsel %vm333, %v4553, %v1726
      %v4602 = vsel %vm333, %v4554, %v1728
      %v4603 = vsel %vm333, %v4555, %v3687
      %v4604 = vsel %vm333, %v4556, %v1730
      %v4605 = vsel %vm333, %v4557, %v1732
      %v4606 = vsel %vm333, %v4558, %v3689
      %v4607 = vsel %vm333, %v4559, %v3691
      %v4608 = vsel %vm333, %v4560, %v3693
      %v4609 = vsel %vm333, %v4561, %v3695
      %v4610 = vsel %vm333, %v4562, %v3697
      %v4611 = vsel %vm333, %v4563, %v3699
      %v4612 = vsel %vm333, %v4564, %v3701
      %v4613 = vsel %vm2733, %v4565, %v1779
      %v4614 = vsel %vm2733, %v4566, %v1781
      %v4615 = vsel %vm2733, %v4567, %v3728
      %v4616 = vsel %vm2733, %v4568, %v1783
      %v4617 = vsel %vm2733, %v4569, %v1785
      %v4618 = vsel %vm2733, %v4570, %v3730
      %v4619 = vsel %vm2733, %v4571, %v1787
      %v4620 = vsel %vm2733, %v4572, %v1789
      %v4621 = vsel %vm2733, %v4573, %v3732
      %v4622 = vsel %vm2733, %v4574, %v1791
      %v4623 = vsel %vm2733, %v4575, %v1793
      %v4624 = vsel %vm2733, %v4576, %v3734
      %v4625 = vsel %vm2733, %v4577, %v1795
      %v4626 = vsel %vm2733, %v4578, %v1797
      %v4627 = vsel %vm2733, %v4579, %v3736
      %v4628 = vsel %vm2733, %v4580, %v1799
      %v4629 = vsel %vm2733, %v4581, %v1801
      %v4630 = vsel %vm2733, %v4582, %v3738
      %v4631 = vsel %vm2733, %v4583, %v1803
      %v4632 = vsel %vm2733, %v4584, %v1805
      %v4633 = vsel %vm2733, %v4585, %v3740
      %v4634 = vsel %vm2733, %v4586, %v1807
      %v4635 = vsel %vm2733, %v4587, %v1809
      %v4636 = vsel %vm2733, %v4588, %v3742
      %v4637 = vsel %vm2733, %v4589, %v1811
      %v4638 = vsel %vm2733, %v4590, %v1813
      %v4639 = vsel %vm2733, %v4591, %v3744
      %v4640 = vsel %vm2733, %v4592, %v1815
      %v4641 = vsel %vm2733, %v4593, %v1817
      %v4642 = vsel %vm2733, %v4594, %v3746
      %v4643 = vsel %vm2733, %v4595, %v1819
      %v4644 = vsel %vm2733, %v4596, %v1821
      %v4645 = vsel %vm2733, %v4597, %v3748
      %v4646 = vsel %vm2733, %v4598, %v1823
      %v4647 = vsel %vm2733, %v4599, %v1825
      %v4648 = vsel %vm2733, %v4600, %v3750
      %v4649 = vsel %vm2733, %v4601, %v1827
      %v4650 = vsel %vm2733, %v4602, %v1829
      %v4651 = vsel %vm2733, %v4603, %v3752
      %v4652 = vsel %vm2733, %v4604, %v1831
      %v4653 = vsel %vm2733, %v4605, %v1833
      %v4654 = vsel %vm2733, %v4606, %v3754
      %v4655 = vsel %vm2733, %v4607, %v3756
      %v4656 = vsel %vm2733, %v4608, %v3758
      %v4657 = vsel %vm2733, %v4609, %v3760
      %v4658 = vsel %vm2733, %v4610, %v3762
      %v4659 = vsel %vm2733, %v4611, %v3764
      %v4660 = vsel %vm2733, %v4612, %v3766
      %v4661 = vsel %vm2766, %v4613, %v1880
      %v4662 = vsel %vm2766, %v4614, %v1882
      %v4663 = vsel %vm2766, %v4615, %v3793
      %v4664 = vsel %vm2766, %v4616, %v1884
      %v4665 = vsel %vm2766, %v4617, %v1886
      %v4666 = vsel %vm2766, %v4618, %v3795
      %v4667 = vsel %vm2766, %v4619, %v1888
      %v4668 = vsel %vm2766, %v4620, %v1890
      %v4669 = vsel %vm2766, %v4621, %v3797
      %v4670 = vsel %vm2766, %v4622, %v1892
      %v4671 = vsel %vm2766, %v4623, %v1894
      %v4672 = vsel %vm2766, %v4624, %v3799
      %v4673 = vsel %vm2766, %v4625, %v1896
      %v4674 = vsel %vm2766, %v4626, %v1898
      %v4675 = vsel %vm2766, %v4627, %v3801
      %v4676 = vsel %vm2766, %v4628, %v1900
      %v4677 = vsel %vm2766, %v4629, %v1902
      %v4678 = vsel %vm2766, %v4630, %v3803
      %v4679 = vsel %vm2766, %v4631, %v1904
      %v4680 = vsel %vm2766, %v4632, %v1906
      %v4681 = vsel %vm2766, %v4633, %v3805
      %v4682 = vsel %vm2766, %v4634, %v1908
      %v4683 = vsel %vm2766, %v4635, %v1910
      %v4684 = vsel %vm2766, %v4636, %v3807
      %v4685 = vsel %vm2766, %v4637, %v1912
      %v4686 = vsel %vm2766, %v4638, %v1914
      %v4687 = vsel %vm2766, %v4639, %v3809
      %v4688 = vsel %vm2766, %v4640, %v1916
      %v4689 = vsel %vm2766, %v4641, %v1918
      %v4690 = vsel %vm2766, %v4642, %v3811
      %v4691 = vsel %vm2766, %v4643, %v1920
      %v4692 = vsel %vm2766, %v4644, %v1922
      %v4693 = vsel %vm2766, %v4645, %v3813
      %v4694 = vsel %vm2766, %v4646, %v1924
      %v4695 = vsel %vm2766, %v4647, %v1926
      %v4696 = vsel %vm2766, %v4648, %v3815
      %v4697 = vsel %vm2766, %v4649, %v1928
      %v4698 = vsel %vm2766, %v4650, %v1930
      %v4699 = vsel %vm2766, %v4651, %v3817
      %v4700 = vsel %vm2766, %v4652, %v1932
      %v4701 = vsel %vm2766, %v4653, %v1934
      %v4702 = vsel %vm2766, %v4654, %v3819
      %v4703 = vsel %vm2766, %v4655, %v3821
      %v4704 = vsel %vm2766, %v4656, %v3823
      %v4705 = vsel %vm2766, %v4657, %v3825
      %v4706 = vsel %vm2766, %v4658, %v3827
      %v4707 = vsel %vm2766, %v4659, %v3829
      %v4708 = vsel %vm2766, %v4660, %v3831
      %v4709 = vsel %vm2799, %v4661, %v1981
      %v4710 = vsel %vm2799, %v4662, %v1983
      %v4711 = vsel %vm2799, %v4663, %v3858
      %v4712 = vsel %vm2799, %v4664, %v1985
      %v4713 = vsel %vm2799, %v4665, %v1987
      %v4714 = vsel %vm2799, %v4666, %v3860
      %v4715 = vsel %vm2799, %v4667, %v1989
      %v4716 = vsel %vm2799, %v4668, %v1991
      %v4717 = vsel %vm2799, %v4669, %v3862
      %v4718 = vsel %vm2799, %v4670, %v1993
      %v4719 = vsel %vm2799, %v4671, %v1995
      %v4720 = vsel %vm2799, %v4672, %v3864
      %v4721 = vsel %vm2799, %v4673, %v1997
      %v4722 = vsel %vm2799, %v4674, %v1999
      %v4723 = vsel %vm2799, %v4675, %v3866
      %v4724 = vsel %vm2799, %v4676, %v2001
      %v4725 = vsel %vm2799, %v4677, %v2003
      %v4726 = vsel %vm2799, %v4678, %v3868
      %v4727 = vsel %vm2799, %v4679, %v2005
      %v4728 = vsel %vm2799, %v4680, %v2007
      %v4729 = vsel %vm2799, %v4681, %v3870
      %v4730 = vsel %vm2799, %v4682, %v2009
      %v4731 = vsel %vm2799, %v4683, %v2011
      %v4732 = vsel %vm2799, %v4684, %v3872
      %v4733 = vsel %vm2799, %v4685, %v2013
      %v4734 = vsel %vm2799, %v4686, %v2015
      %v4735 = vsel %vm2799, %v4687, %v3874
      %v4736 = vsel %vm2799, %v4688, %v2017
      %v4737 = vsel %vm2799, %v4689, %v2019
      %v4738 = vsel %vm2799, %v4690, %v3876
      %v4739 = vsel %vm2799, %v4691, %v2021
      %v4740 = vsel %vm2799, %v4692, %v2023
      %v4741 = vsel %vm2799, %v4693, %v3878
      %v4742 = vsel %vm2799, %v4694, %v2025
      %v4743 = vsel %vm2799, %v4695, %v2027
      %v4744 = vsel %vm2799, %v4696, %v3880
      %v4745 = vsel %vm2799, %v4697, %v2029
      %v4746 = vsel %vm2799, %v4698, %v2031
      %v4747 = vsel %vm2799, %v4699, %v3882
      %v4748 = vsel %vm2799, %v4700, %v2033
      %v4749 = vsel %vm2799, %v4701, %v2035
      %v4750 = vsel %vm2799, %v4702, %v3884
      %v4751 = vsel %vm2799, %v4703, %v3886
      %v4752 = vsel %vm2799, %v4704, %v3888
      %v4753 = vsel %vm2799, %v4705, %v3890
      %v4754 = vsel %vm2799, %v4706, %v3892
      %v4755 = vsel %vm2799, %v4707, %v3894
      %v4756 = vsel %vm2799, %v4708, %v3896
      %v4757 = vsel %vm2832, %v4709, %v3923
      %v4758 = vsel %vm2832, %v4710, %v3925
      %v4759 = vsel %vm2832, %v4711, %v3927
      %v4760 = vsel %vm2832, %v4712, %v3929
      %v4761 = vsel %vm2832, %v4713, %v3931
      %v4762 = vsel %vm2832, %v4714, %v3933
      %v4763 = vsel %vm2832, %v4715, %v3935
      %v4764 = vsel %vm2832, %v4716, %v3937
      %v4765 = vsel %vm2832, %v4717, %v3939
      %v4766 = vsel %vm2832, %v4718, %v3941
      %v4767 = vsel %vm2832, %v4719, %v3943
      %v4768 = vsel %vm2832, %v4720, %v3945
      %v4769 = vsel %vm2832, %v4721, %v3947
      %v4770 = vsel %vm2832, %v4722, %v3949
      %v4771 = vsel %vm2832, %v4723, %v3951
      %v4772 = vsel %vm2832, %v4724, %v3953
      %v4773 = vsel %vm2832, %v4725, %v3955
      %v4774 = vsel %vm2832, %v4726, %v3957
      %v4775 = vsel %vm2832, %v4727, %v3959
      %v4776 = vsel %vm2832, %v4728, %v3961
      %v4777 = vsel %vm2832, %v4729, %v3963
      %v4778 = vsel %vm2832, %v4730, %v3965
      %v4779 = vsel %vm2832, %v4731, %v3967
      %v4780 = vsel %vm2832, %v4732, %v3969
      %v4781 = vsel %vm2832, %v4733, %v3971
      %v4782 = vsel %vm2832, %v4734, %v3973
      %v4783 = vsel %vm2832, %v4735, %v3975
      %v4784 = vsel %vm2832, %v4736, %v3977
      %v4785 = vsel %vm2832, %v4737, %v3979
      %v4786 = vsel %vm2832, %v4738, %v3981
      %v4787 = vsel %vm2832, %v4739, %v3983
      %v4788 = vsel %vm2832, %v4740, %v3985
      %v4789 = vsel %vm2832, %v4741, %v3987
      %v4790 = vsel %vm2832, %v4742, %v3989
      %v4791 = vsel %vm2832, %v4743, %v3991
      %v4792 = vsel %vm2832, %v4744, %v3993
      %v4793 = vsel %vm2832, %v4745, %v3995
      %v4794 = vsel %vm2832, %v4746, %v3997
      %v4795 = vsel %vm2832, %v4747, %v3999
      %v4796 = vsel %vm2832, %v4748, %v4001
      %v4797 = vsel %vm2832, %v4749, %v4003
      %v4798 = vsel %vm2832, %v4750, %v4005
      %v4799 = vsel %vm2832, %v4751, %v4007
      %v4800 = vsel %vm2832, %v4752, %v4009
      %v4801 = vsel %vm2832, %v4753, %v4011
      %v4802 = vsel %vm2832, %v4754, %v4013
      %v4803 = vsel %vm2832, %v4755, %v4015
      %v4804 = vsel %vm2832, %v4756, %v4017
      %v4805 = vsel %vm2865, %v4757, %v4073
      %v4806 = vsel %vm2865, %v4758, %v4075
      %v4807 = vsel %vm2865, %v4759, %v4077
      %v4808 = vsel %vm2865, %v4760, %v4079
      %v4809 = vsel %vm2865, %v4761, %v4081
      %v4810 = vsel %vm2865, %v4762, %v4083
      %v4811 = vsel %vm2865, %v4763, %v4085
      %v4812 = vsel %vm2865, %v4764, %v4087
      %v4813 = vsel %vm2865, %v4765, %v4089
      %v4814 = vsel %vm2865, %v4766, %v4091
      %v4815 = vsel %vm2865, %v4767, %v4093
      %v4816 = vsel %vm2865, %v4768, %v4095
      %v4817 = vsel %vm2865, %v4769, %v4097
      %v4818 = vsel %vm2865, %v4770, %v4099
      %v4819 = vsel %vm2865, %v4771, %v4101
      %v4820 = vsel %vm2865, %v4772, %v4103
      %v4821 = vsel %vm2865, %v4773, %v4105
      %v4822 = vsel %vm2865, %v4774, %v4107
      %v4823 = vsel %vm2865, %v4775, %v4109
      %v4824 = vsel %vm2865, %v4776, %v4111
      %v4825 = vsel %vm2865, %v4777, %v4113
      %v4826 = vsel %vm2865, %v4778, %v4115
      %v4827 = vsel %vm2865, %v4779, %v4117
      %v4828 = vsel %vm2865, %v4780, %v4119
      %v4829 = vsel %vm2865, %v4781, %v4121
      %v4830 = vsel %vm2865, %v4782, %v4123
      %v4831 = vsel %vm2865, %v4783, %v4125
      %v4832 = vsel %vm2865, %v4784, %v4127
      %v4833 = vsel %vm2865, %v4785, %v4129
      %v4834 = vsel %vm2865, %v4786, %v4131
      %v4835 = vsel %vm2865, %v4787, %v4133
      %v4836 = vsel %vm2865, %v4788, %v4135
      %v4837 = vsel %vm2865, %v4789, %v4137
      %v4838 = vsel %vm2865, %v4790, %v4139
      %v4839 = vsel %vm2865, %v4791, %v4141
      %v4840 = vsel %vm2865, %v4792, %v4143
      %v4841 = vsel %vm2865, %v4793, %v4145
      %v4842 = vsel %vm2865, %v4794, %v4147
      %v4843 = vsel %vm2865, %v4795, %v4149
      %v4844 = vsel %vm2865, %v4796, %v4151
      %v4845 = vsel %vm2865, %v4797, %v4153
      %v4846 = vsel %vm2865, %v4798, %v4155
      %v4847 = vsel %vm2865, %v4799, %v4157
      %v4848 = vsel %vm2865, %v4800, %v4159
      %v4849 = vsel %vm2865, %v4801, %v4161
      %v4850 = vsel %vm2865, %v4802, %v4163
      %v4851 = vsel %vm2865, %v4803, %v4165
      %v4852 = vsel %vm2865, %v4804, %v4167
      %v4853 = vsel %vm2898, %v4805, %v2281
      %v4854 = vsel %vm2898, %v4806, %v2283
      %v4855 = vsel %vm2898, %v4807, %v4217
      %v4856 = vsel %vm2898, %v4808, %v2285
      %v4857 = vsel %vm2898, %v4809, %v2287
      %v4858 = vsel %vm2898, %v4810, %v4219
      %v4859 = vsel %vm2898, %v4811, %v2289
      %v4860 = vsel %vm2898, %v4812, %v2291
      %v4861 = vsel %vm2898, %v4813, %v4221
      %v4862 = vsel %vm2898, %v4814, %v2293
      %v4863 = vsel %vm2898, %v4815, %v2295
      %v4864 = vsel %vm2898, %v4816, %v4223
      %v4865 = vsel %vm2898, %v4817, %v2297
      %v4866 = vsel %vm2898, %v4818, %v2299
      %v4867 = vsel %vm2898, %v4819, %v4225
      %v4868 = vsel %vm2898, %v4820, %v2301
      %v4869 = vsel %vm2898, %v4821, %v2303
      %v4870 = vsel %vm2898, %v4822, %v4227
      %v4871 = vsel %vm2898, %v4823, %v2305
      %v4872 = vsel %vm2898, %v4824, %v2307
      %v4873 = vsel %vm2898, %v4825, %v4229
      %v4874 = vsel %vm2898, %v4826, %v2309
      %v4875 = vsel %vm2898, %v4827, %v2311
      %v4876 = vsel %vm2898, %v4828, %v4231
      %v4877 = vsel %vm2898, %v4829, %v2313
      %v4878 = vsel %vm2898, %v4830, %v2315
      %v4879 = vsel %vm2898, %v4831, %v4233
      %v4880 = vsel %vm2898, %v4832, %v2317
      %v4881 = vsel %vm2898, %v4833, %v2319
      %v4882 = vsel %vm2898, %v4834, %v4235
      %v4883 = vsel %vm2898, %v4835, %v2321
      %v4884 = vsel %vm2898, %v4836, %v2323
      %v4885 = vsel %vm2898, %v4837, %v4237
      %v4886 = vsel %vm2898, %v4838, %v2325
      %v4887 = vsel %vm2898, %v4839, %v2327
      %v4888 = vsel %vm2898, %v4840, %v4239
      %v4889 = vsel %vm2898, %v4841, %v2329
      %v4890 = vsel %vm2898, %v4842, %v2331
      %v4891 = vsel %vm2898, %v4843, %v4241
      %v4892 = vsel %vm2898, %v4844, %v2333
      %v4893 = vsel %vm2898, %v4845, %v2335
      %v4894 = vsel %vm2898, %v4846, %v4243
      %v4895 = vsel %vm2898, %v4847, %v4245
      %v4896 = vsel %vm2898, %v4848, %v4247
      %v4897 = vsel %vm2898, %v4849, %v4249
      %v4898 = vsel %vm2898, %v4850, %v4251
      %v4899 = vsel %vm2898, %v4851, %v4253
      %v4900 = vsel %vm2898, %v4852, %v4255
      %v4901 = vsel %vm2931, %v4853, %v2383
      %v4902 = vsel %vm2931, %v4854, %v2385
      %v4903 = vsel %vm2931, %v4855, %v4282
      %v4904 = vsel %vm2931, %v4856, %v2387
      %v4905 = vsel %vm2931, %v4857, %v2389
      %v4906 = vsel %vm2931, %v4858, %v4284
      %v4907 = vsel %vm2931, %v4859, %v2391
      %v4908 = vsel %vm2931, %v4860, %v2393
      %v4909 = vsel %vm2931, %v4861, %v4286
      %v4910 = vsel %vm2931, %v4862, %v2395
      %v4911 = vsel %vm2931, %v4863, %v2397
      %v4912 = vsel %vm2931, %v4864, %v4288
      %v4913 = vsel %vm2931, %v4865, %v2399
      %v4914 = vsel %vm2931, %v4866, %v2401
      %v4915 = vsel %vm2931, %v4867, %v4290
      %v4916 = vsel %vm2931, %v4868, %v2403
      %v4917 = vsel %vm2931, %v4869, %v2405
      %v4918 = vsel %vm2931, %v4870, %v4292
      %v4919 = vsel %vm2931, %v4871, %v2407
      %v4920 = vsel %vm2931, %v4872, %v2409
      %v4921 = vsel %vm2931, %v4873, %v4294
      %v4922 = vsel %vm2931, %v4874, %v2411
      %v4923 = vsel %vm2931, %v4875, %v2413
      %v4924 = vsel %vm2931, %v4876, %v4296
      %v4925 = vsel %vm2931, %v4877, %v2415
      %v4926 = vsel %vm2931, %v4878, %v2417
      %v4927 = vsel %vm2931, %v4879, %v4298
      %v4928 = vsel %vm2931, %v4880, %v2419
      %v4929 = vsel %vm2931, %v4881, %v2421
      %v4930 = vsel %vm2931, %v4882, %v4300
      %v4931 = vsel %vm2931, %v4883, %v2423
      %v4932 = vsel %vm2931, %v4884, %v2425
      %v4933 = vsel %vm2931, %v4885, %v4302
      %v4934 = vsel %vm2931, %v4886, %v2427
      %v4935 = vsel %vm2931, %v4887, %v2429
      %v4936 = vsel %vm2931, %v4888, %v4304
      %v4937 = vsel %vm2931, %v4889, %v2431
      %v4938 = vsel %vm2931, %v4890, %v2433
      %v4939 = vsel %vm2931, %v4891, %v4306
      %v4940 = vsel %vm2931, %v4892, %v2435
      %v4941 = vsel %vm2931, %v4893, %v2437
      %v4942 = vsel %vm2931, %v4894, %v4308
      %v4943 = vsel %vm2931, %v4895, %v4310
      %v4944 = vsel %vm2931, %v4896, %v4312
      %v4945 = vsel %vm2931, %v4897, %v4314
      %v4946 = vsel %vm2931, %v4898, %v4316
      %v4947 = vsel %vm2931, %v4899, %v4318
      %v4948 = vsel %vm2931, %v4900, %v4320
      %4949 = vrot.lane.b32.xlu0 %v3659, 4
      %v4950 = vpop.permute.xlu0 %4949
      %4951 = vrot.lane.b32.xlu0 %v3661, 4
      %v4952 = vpop.permute.xlu0 %4951
      %4953 = vrot.lane.b32.xlu0 %v3660, 4
      %v4954 = vpop.permute.xlu0 %4953
      %4955 = vrot.lane.b32.xlu0 %v4278, 4
      %v4956 = vpop.permute.xlu0 %4955
      %4957 = vrot.lane.b32.xlu0 %v4280, 4
      %v4958 = vpop.permute.xlu0 %4957
      %4959 = vrot.lane.b32.xlu0 %v4279, 4
      %v4960 = vpop.permute.xlu0 %4959
      %v4967 = vrot.slane %v446, 2
      %v4968 = vrot.slane %v447, 2
      %v4969 = vsel %vm680, %v4967, %v4968
      %v4970 = vrot.slane %v448, 2
      %v4971 = vsel %vm680, %v4968, %v4970
      %4972 = vrot.lane.b32.xlu0 %v3724, 8
      %v4973 = vpop.permute.xlu0 %4972
      %4974 = vrot.lane.b32.xlu0 %v3726, 8
      %v4975 = vpop.permute.xlu0 %4974
      %4976 = vrot.lane.b32.xlu0 %v3725, 8
      %v4977 = vpop.permute.xlu0 %4976
      %4978 = vrot.lane.b32.xlu0 %v4969, 8
      %v4979 = vpop.permute.xlu0 %4978
      %4980 = vrot.lane.b32.xlu0 %v4971, 8
      %v4981 = vpop.permute.xlu0 %4980
      %4982 = vrot.lane.b32.xlu0 %v4970, 8
      %v4983 = vpop.permute.xlu0 %4982
      %v4992 = vrot.slane %v446, 4
      %v4993 = vrot.slane %v447, 4
      %v4994 = vsel %vm1034, %v4992, %v4993
      %v4995 = vrot.slane %v449, 4
      %v4996 = vrot.slane %v450, 4
      %v4997 = vsel %vm1034, %v4995, %v4996
      %4998 = vrot.lane.b32.xlu0 %v1060, 12
      %v4999 = vpop.permute.xlu0 %4998
      %5000 = vrot.lane.b32.xlu0 %v1062, 12
      %v5001 = vpop.permute.xlu0 %5000
      %5002 = vrot.lane.b32.xlu0 %v1061, 12
      %v5003 = vpop.permute.xlu0 %5002
      %5004 = vrot.lane.b32.xlu0 %v1065, 12
      %v5005 = vpop.permute.xlu0 %5004
      %5006 = vrot.lane.b32.xlu0 %v1067, 12
      %v5007 = vpop.permute.xlu0 %5006
      %5008 = vrot.lane.b32.xlu0 %v1066, 12
      %v5009 = vpop.permute.xlu0 %5008
      %5010 = vrot.lane.b32.xlu0 %v1070, 12
      %v5011 = vpop.permute.xlu0 %5010
      %5012 = vrot.lane.b32.xlu0 %v1072, 12
      %v5013 = vpop.permute.xlu0 %5012
      %5014 = vrot.lane.b32.xlu0 %v1071, 12
      %v5015 = vpop.permute.xlu0 %5014
      %5016 = vrot.lane.b32.xlu0 %v1075, 12
      %v5017 = vpop.permute.xlu0 %5016
      %5018 = vrot.lane.b32.xlu0 %v1077, 12
      %v5019 = vpop.permute.xlu0 %5018
      %5020 = vrot.lane.b32.xlu0 %v1076, 12
      %v5021 = vpop.permute.xlu0 %5020
      %5022 = vrot.lane.b32.xlu0 %v1080, 12
      %v5023 = vpop.permute.xlu0 %5022
      %5024 = vrot.lane.b32.xlu0 %v1082, 12
      %v5025 = vpop.permute.xlu0 %5024
      %5026 = vrot.lane.b32.xlu0 %v1081, 12
      %v5027 = vpop.permute.xlu0 %5026
      %5028 = vrot.lane.b32.xlu0 %v1085, 12
      %v5029 = vpop.permute.xlu0 %5028
      %5030 = vrot.lane.b32.xlu0 %v1087, 12
      %v5031 = vpop.permute.xlu0 %5030
      %5032 = vrot.lane.b32.xlu0 %v1086, 12
      %v5033 = vpop.permute.xlu0 %5032
      %5034 = vrot.lane.b32.xlu0 %v1090, 12
      %v5035 = vpop.permute.xlu0 %5034
      %5036 = vrot.lane.b32.xlu0 %v1092, 12
      %v5037 = vpop.permute.xlu0 %5036
      %5038 = vrot.lane.b32.xlu0 %v1091, 12
      %v5039 = vpop.permute.xlu0 %5038
      %5040 = vrot.lane.b32.xlu0 %v1095, 12
      %v5041 = vpop.permute.xlu0 %5040
      %5042 = vrot.lane.b32.xlu0 %v1097, 12
      %v5043 = vpop.permute.xlu0 %5042
      %5044 = vrot.lane.b32.xlu0 %v1096, 12
      %v5045 = vpop.permute.xlu0 %5044
      %5046 = vrot.lane.b32.xlu0 %v1100, 12
      %v5047 = vpop.permute.xlu0 %5046
      %5048 = vrot.lane.b32.xlu0 %v1102, 12
      %v5049 = vpop.permute.xlu0 %5048
      %5050 = vrot.lane.b32.xlu0 %v1101, 12
      %v5051 = vpop.permute.xlu0 %5050
      %5052 = vrot.lane.b32.xlu0 %v1105, 12
      %v5053 = vpop.permute.xlu0 %5052
      %5054 = vrot.lane.b32.xlu0 %v1107, 12
      %v5055 = vpop.permute.xlu0 %5054
      %5056 = vrot.lane.b32.xlu0 %v1106, 12
      %v5057 = vpop.permute.xlu0 %5056
      %5058 = vrot.lane.b32.xlu0 %v1110, 12
      %v5059 = vpop.permute.xlu0 %5058
      %5060 = vrot.lane.b32.xlu0 %v1112, 12
      %v5061 = vpop.permute.xlu0 %5060
      %5062 = vrot.lane.b32.xlu0 %v1111, 12
      %v5063 = vpop.permute.xlu0 %5062
      %5064 = vrot.lane.b32.xlu0 %v1967, 12
      %v5065 = vpop.permute.xlu0 %5064
      %5066 = vrot.lane.b32.xlu0 %v1969, 12
      %v5067 = vpop.permute.xlu0 %5066
      %5068 = vrot.lane.b32.xlu0 %v1968, 12
      %v5069 = vpop.permute.xlu0 %5068
      %5070 = vrot.lane.b32.xlu0 %v3154, 12
      %v5071 = vpop.permute.xlu0 %5070
      %5072 = vrot.lane.b32.xlu0 %v3156, 12
      %v5073 = vpop.permute.xlu0 %5072
      %5074 = vrot.lane.b32.xlu0 %v3155, 12
      %v5075 = vpop.permute.xlu0 %5074
      %5076 = vrot.lane.b32.xlu0 %v3852, 12
      %v5077 = vpop.permute.xlu0 %5076
      %5078 = vrot.lane.b32.xlu0 %v3854, 12
      %v5079 = vpop.permute.xlu0 %5078
      %5080 = vrot.lane.b32.xlu0 %v3853, 12
      %v5081 = vpop.permute.xlu0 %5080
      %5082 = vrot.lane.b32.xlu0 %v4992, 12
      %v5083 = vpop.permute.xlu0 %5082
      %5084 = vrot.lane.b32.xlu0 %v4994, 12
      %v5085 = vpop.permute.xlu0 %5084
      %5086 = vrot.lane.b32.xlu0 %v4993, 12
      %v5087 = vpop.permute.xlu0 %5086
      %5088 = vrot.lane.b32.xlu0 %v4995, 12
      %v5089 = vpop.permute.xlu0 %5088
      %5090 = vrot.lane.b32.xlu0 %v4997, 12
      %v5091 = vpop.permute.xlu0 %5090
      %5092 = vrot.lane.b32.xlu0 %v4996, 12
      %v5093 = vpop.permute.xlu0 %5092
      %v5143 = vrot.slane %v440, 5
      %v5144 = vrot.slane %v441, 5
      %v5145 = vsel %vm1211, %v5143, %v5144
      %v5146 = vrot.slane %v442, 5
      %v5147 = vsel %vm1211, %v5144, %v5146
      %v5148 = vrot.slane %v443, 5
      %v5149 = vrot.slane %v444, 5
      %v5150 = vsel %vm1211, %v5148, %v5149
      %v5151 = vrot.slane %v445, 5
      %v5152 = vsel %vm1211, %v5149, %v5151
      %v5153 = vrot.slane %v446, 5
      %v5154 = vrot.slane %v447, 5
      %v5155 = vsel %vm1211, %v5153, %v5154
      %v5156 = vrot.slane %v448, 5
      %v5157 = vsel %vm1211, %v5154, %v5156
      %v5158 = vrot.slane %v449, 5
      %v5159 = vrot.slane %v450, 5
      %v5160 = vsel %vm1211, %v5158, %v5159
      %v5161 = vrot.slane %v451, 5
      %v5162 = vsel %vm1211, %v5159, %v5161
      %5163 = vrot.lane.b32.xlu0 %v1237, 16
      %v5164 = vpop.permute.xlu0 %5163
      %5165 = vrot.lane.b32.xlu0 %v1239, 16
      %v5166 = vpop.permute.xlu0 %5165
      %5167 = vrot.lane.b32.xlu0 %v1241, 16
      %v5168 = vpop.permute.xlu0 %5167
      %5169 = vrot.lane.b32.xlu0 %v1242, 16
      %v5170 = vpop.permute.xlu0 %5169
      %5171 = vrot.lane.b32.xlu0 %v1244, 16
      %v5172 = vpop.permute.xlu0 %5171
      %5173 = vrot.lane.b32.xlu0 %v1246, 16
      %v5174 = vpop.permute.xlu0 %5173
      %5175 = vrot.lane.b32.xlu0 %v1247, 16
      %v5176 = vpop.permute.xlu0 %5175
      %5177 = vrot.lane.b32.xlu0 %v1249, 16
      %v5178 = vpop.permute.xlu0 %5177
      %5179 = vrot.lane.b32.xlu0 %v1251, 16
      %v5180 = vpop.permute.xlu0 %5179
      %5181 = vrot.lane.b32.xlu0 %v1252, 16
      %v5182 = vpop.permute.xlu0 %5181
      %5183 = vrot.lane.b32.xlu0 %v1254, 16
      %v5184 = vpop.permute.xlu0 %5183
      %5185 = vrot.lane.b32.xlu0 %v1256, 16
      %v5186 = vpop.permute.xlu0 %5185
      %5187 = vrot.lane.b32.xlu0 %v1257, 16
      %v5188 = vpop.permute.xlu0 %5187
      %5189 = vrot.lane.b32.xlu0 %v1259, 16
      %v5190 = vpop.permute.xlu0 %5189
      %5191 = vrot.lane.b32.xlu0 %v1261, 16
      %v5192 = vpop.permute.xlu0 %5191
      %5193 = vrot.lane.b32.xlu0 %v1262, 16
      %v5194 = vpop.permute.xlu0 %5193
      %5195 = vrot.lane.b32.xlu0 %v1264, 16
      %v5196 = vpop.permute.xlu0 %5195
      %5197 = vrot.lane.b32.xlu0 %v1266, 16
      %v5198 = vpop.permute.xlu0 %5197
      %5199 = vrot.lane.b32.xlu0 %v1267, 16
      %v5200 = vpop.permute.xlu0 %5199
      %5201 = vrot.lane.b32.xlu0 %v1269, 16
      %v5202 = vpop.permute.xlu0 %5201
      %5203 = vrot.lane.b32.xlu0 %v1271, 16
      %v5204 = vpop.permute.xlu0 %5203
      %5205 = vrot.lane.b32.xlu0 %v1272, 16
      %v5206 = vpop.permute.xlu0 %5205
      %5207 = vrot.lane.b32.xlu0 %v1274, 16
      %v5208 = vpop.permute.xlu0 %5207
      %5209 = vrot.lane.b32.xlu0 %v1276, 16
      %v5210 = vpop.permute.xlu0 %5209
      %5211 = vrot.lane.b32.xlu0 %v1277, 16
      %v5212 = vpop.permute.xlu0 %5211
      %5213 = vrot.lane.b32.xlu0 %v1279, 16
      %v5214 = vpop.permute.xlu0 %5213
      %5215 = vrot.lane.b32.xlu0 %v1281, 16
      %v5216 = vpop.permute.xlu0 %5215
      %5217 = vrot.lane.b32.xlu0 %v1282, 16
      %v5218 = vpop.permute.xlu0 %5217
      %5219 = vrot.lane.b32.xlu0 %v1284, 16
      %v5220 = vpop.permute.xlu0 %5219
      %5221 = vrot.lane.b32.xlu0 %v1286, 16
      %v5222 = vpop.permute.xlu0 %5221
      %5223 = vrot.lane.b32.xlu0 %v1287, 16
      %v5224 = vpop.permute.xlu0 %5223
      %5225 = vrot.lane.b32.xlu0 %v1289, 16
      %v5226 = vpop.permute.xlu0 %5225
      %5227 = vrot.lane.b32.xlu0 %v1291, 16
      %v5228 = vpop.permute.xlu0 %5227
      %5229 = vrot.lane.b32.xlu0 %v2068, 16
      %v5230 = vpop.permute.xlu0 %5229
      %5231 = vrot.lane.b32.xlu0 %v2070, 16
      %v5232 = vpop.permute.xlu0 %5231
      %5233 = vrot.lane.b32.xlu0 %v2072, 16
      %v5234 = vpop.permute.xlu0 %5233
      %5235 = vrot.lane.b32.xlu0 %v5143, 16
      %v5236 = vpop.permute.xlu0 %5235
      %5237 = vrot.lane.b32.xlu0 %v5145, 16
      %v5238 = vpop.permute.xlu0 %5237
      %5239 = vrot.lane.b32.xlu0 %v5147, 16
      %v5240 = vpop.permute.xlu0 %5239
      %5241 = vrot.lane.b32.xlu0 %v5148, 16
      %v5242 = vpop.permute.xlu0 %5241
      %5243 = vrot.lane.b32.xlu0 %v5150, 16
      %v5244 = vpop.permute.xlu0 %5243
      %5245 = vrot.lane.b32.xlu0 %v5152, 16
      %v5246 = vpop.permute.xlu0 %5245
      %5247 = vrot.lane.b32.xlu0 %v5153, 16
      %v5248 = vpop.permute.xlu0 %5247
      %5249 = vrot.lane.b32.xlu0 %v5155, 16
      %v5250 = vpop.permute.xlu0 %5249
      %5251 = vrot.lane.b32.xlu0 %v5157, 16
      %v5252 = vpop.permute.xlu0 %5251
      %5253 = vrot.lane.b32.xlu0 %v5158, 16
      %v5254 = vpop.permute.xlu0 %5253
      %5255 = vrot.lane.b32.xlu0 %v5160, 16
      %v5256 = vpop.permute.xlu0 %5255
      %5257 = vrot.lane.b32.xlu0 %v5162, 16
      %v5258 = vpop.permute.xlu0 %5257
      %v5307 = vrot.slane %v442, 6
      %v5308 = vsel %vm1388, %v3222, %v5307
      %v5309 = vrot.slane %v445, 6
      %v5310 = vsel %vm1388, %v3225, %v5309
      %v5311 = vrot.slane %v448, 6
      %v5312 = vsel %vm1388, %v3920, %v5311
      %v5313 = vrot.slane %v449, 6
      %v5314 = vrot.slane %v450, 6
      %v5315 = vsel %vm1388, %v5313, %v5314
      %v5316 = vrot.slane %v451, 6
      %v5317 = vsel %vm1388, %v5314, %v5316
      %5318 = vrot.lane.b32.xlu0 %v1418, 20
      %v5319 = vpop.permute.xlu0 %5318
      %5320 = vrot.lane.b32.xlu0 %v1423, 20
      %v5321 = vpop.permute.xlu0 %5320
      %5322 = vrot.lane.b32.xlu0 %v1428, 20
      %v5323 = vpop.permute.xlu0 %5322
      %5324 = vrot.lane.b32.xlu0 %v1433, 20
      %v5325 = vpop.permute.xlu0 %5324
      %5326 = vrot.lane.b32.xlu0 %v1438, 20
      %v5327 = vpop.permute.xlu0 %5326
      %5328 = vrot.lane.b32.xlu0 %v1443, 20
      %v5329 = vpop.permute.xlu0 %5328
      %5330 = vrot.lane.b32.xlu0 %v1448, 20
      %v5331 = vpop.permute.xlu0 %5330
      %5332 = vrot.lane.b32.xlu0 %v1453, 20
      %v5333 = vpop.permute.xlu0 %5332
      %5334 = vrot.lane.b32.xlu0 %v1458, 20
      %v5335 = vpop.permute.xlu0 %5334
      %5336 = vrot.lane.b32.xlu0 %v1463, 20
      %v5337 = vpop.permute.xlu0 %5336
      %5338 = vrot.lane.b32.xlu0 %v1468, 20
      %v5339 = vpop.permute.xlu0 %5338
      %5340 = vrot.lane.b32.xlu0 %v2173, 20
      %v5341 = vpop.permute.xlu0 %5340
      %5342 = vrot.lane.b32.xlu0 %v5308, 20
      %v5343 = vpop.permute.xlu0 %5342
      %5344 = vrot.lane.b32.xlu0 %v5310, 20
      %v5345 = vpop.permute.xlu0 %5344
      %5346 = vrot.lane.b32.xlu0 %v3919, 20
      %v5347 = vpop.permute.xlu0 %5346
      %5348 = vrot.lane.b32.xlu0 %v3921, 20
      %v5349 = vpop.permute.xlu0 %5348
      %5350 = vrot.lane.b32.xlu0 %v5312, 20
      %v5351 = vpop.permute.xlu0 %5350
      %5352 = vrot.lane.b32.xlu0 %v5313, 20
      %v5353 = vpop.permute.xlu0 %5352
      %5354 = vrot.lane.b32.xlu0 %v5315, 20
      %v5355 = vpop.permute.xlu0 %5354
      %5356 = vrot.lane.b32.xlu0 %v5317, 20
      %v5357 = vpop.permute.xlu0 %5356
      %v5378 = vrot.slane %v449, 7
      %v5379 = vrot.slane %v450, 7
      %v5380 = vsel %vm3372, %v5378, %v5379
      %v5381 = vrot.slane %v451, 7
      %v5382 = vsel %vm3372, %v5379, %v5381
      %5383 = vrot.lane.b32.xlu0 %v4067, 24
      %v5384 = vpop.permute.xlu0 %5383
      %5385 = vrot.lane.b32.xlu0 %v4069, 24
      %v5386 = vpop.permute.xlu0 %5385
      %5387 = vrot.lane.b32.xlu0 %v4071, 24
      %v5388 = vpop.permute.xlu0 %5387
      %5389 = vrot.lane.b32.xlu0 %v5378, 24
      %v5390 = vpop.permute.xlu0 %5389
      %5391 = vrot.lane.b32.xlu0 %v5380, 24
      %v5392 = vpop.permute.xlu0 %5391
      %5393 = vrot.lane.b32.xlu0 %v5382, 24
      %v5394 = vpop.permute.xlu0 %5393
      %5401 = vrot.lane.b32.xlu0 %v446, 28
      %v5402 = vpop.permute.xlu0 %5401
      %5403 = vrot.lane.b32.xlu0 %v447, 28
      %v5404 = vpop.permute.xlu0 %5403
      %5405 = vrot.lane.b32.xlu0 %v448, 28
      %v5406 = vpop.permute.xlu0 %5405
      %5407 = vrot.lane.b32.xlu0 %v449, 28
      %v5408 = vpop.permute.xlu0 %5407
      %5409 = vrot.lane.b32.xlu0 %v450, 28
      %v5410 = vpop.permute.xlu0 %5409
      %5411 = vrot.lane.b32.xlu0 %v451, 28
      %v5412 = vpop.permute.xlu0 %5411
      %v5419 = vrot.slane %v449, 1
      %v5420 = vrot.slane %v450, 1
      %v5421 = vsel %vm503, %v5419, %v5420
      %v5422 = vrot.slane %v451, 1
      %v5423 = vsel %vm503, %v5420, %v5422
      %5424 = vrot.lane.b32.xlu0 %v4278, 32
      %v5425 = vpop.permute.xlu0 %5424
      %5426 = vrot.lane.b32.xlu0 %v4280, 32
      %v5427 = vpop.permute.xlu0 %5426
      %5428 = vrot.lane.b32.xlu0 %v4279, 32
      %v5429 = vpop.permute.xlu0 %5428
      %5430 = vrot.lane.b32.xlu0 %v5421, 32
      %v5431 = vpop.permute.xlu0 %5430
      %5432 = vrot.lane.b32.xlu0 %v5423, 32
      %v5433 = vpop.permute.xlu0 %5432
      %5434 = vrot.lane.b32.xlu0 %v5422, 32
      %v5435 = vpop.permute.xlu0 %5434
      %v5442 = vrot.slane %v449, 2
      %v5443 = vrot.slane %v450, 2
      %v5444 = vsel %vm680, %v5442, %v5443
      %v5445 = vrot.slane %v451, 2
      %v5446 = vsel %vm680, %v5443, %v5445
      %5447 = vrot.lane.b32.xlu0 %v4969, 36
      %v5448 = vpop.permute.xlu0 %5447
      %5449 = vrot.lane.b32.xlu0 %v4971, 36
      %v5450 = vpop.permute.xlu0 %5449
      %5451 = vrot.lane.b32.xlu0 %v4970, 36
      %v5452 = vpop.permute.xlu0 %5451
      %5453 = vrot.lane.b32.xlu0 %v5444, 36
      %v5454 = vpop.permute.xlu0 %5453
      %5455 = vrot.lane.b32.xlu0 %v5446, 36
      %v5456 = vpop.permute.xlu0 %5455
      %5457 = vrot.lane.b32.xlu0 %v5445, 36
      %v5458 = vpop.permute.xlu0 %5457
      %v5467 = vrot.slane %v452, 4
      %v5468 = vrot.slane %v453, 4
      %v5469 = vsel %vm1034, %v5467, %v5468
      %5470 = vrot.lane.b32.xlu0 %v1065, 40
      %v5471 = vpop.permute.xlu0 %5470
      %5472 = vrot.lane.b32.xlu0 %v1067, 40
      %v5473 = vpop.permute.xlu0 %5472
      %5474 = vrot.lane.b32.xlu0 %v1066, 40
      %v5475 = vpop.permute.xlu0 %5474
      %5476 = vrot.lane.b32.xlu0 %v1070, 40
      %v5477 = vpop.permute.xlu0 %5476
      %5478 = vrot.lane.b32.xlu0 %v1072, 40
      %v5479 = vpop.permute.xlu0 %5478
      %5480 = vrot.lane.b32.xlu0 %v1071, 40
      %v5481 = vpop.permute.xlu0 %5480
      %5482 = vrot.lane.b32.xlu0 %v1075, 40
      %v5483 = vpop.permute.xlu0 %5482
      %5484 = vrot.lane.b32.xlu0 %v1077, 40
      %v5485 = vpop.permute.xlu0 %5484
      %5486 = vrot.lane.b32.xlu0 %v1076, 40
      %v5487 = vpop.permute.xlu0 %5486
      %5488 = vrot.lane.b32.xlu0 %v1080, 40
      %v5489 = vpop.permute.xlu0 %5488
      %5490 = vrot.lane.b32.xlu0 %v1082, 40
      %v5491 = vpop.permute.xlu0 %5490
      %5492 = vrot.lane.b32.xlu0 %v1081, 40
      %v5493 = vpop.permute.xlu0 %5492
      %5494 = vrot.lane.b32.xlu0 %v1085, 40
      %v5495 = vpop.permute.xlu0 %5494
      %5496 = vrot.lane.b32.xlu0 %v1087, 40
      %v5497 = vpop.permute.xlu0 %5496
      %5498 = vrot.lane.b32.xlu0 %v1086, 40
      %v5499 = vpop.permute.xlu0 %5498
      %5500 = vrot.lane.b32.xlu0 %v1090, 40
      %v5501 = vpop.permute.xlu0 %5500
      %5502 = vrot.lane.b32.xlu0 %v1092, 40
      %v5503 = vpop.permute.xlu0 %5502
      %5504 = vrot.lane.b32.xlu0 %v1091, 40
      %v5505 = vpop.permute.xlu0 %5504
      %5506 = vrot.lane.b32.xlu0 %v1095, 40
      %v5507 = vpop.permute.xlu0 %5506
      %5508 = vrot.lane.b32.xlu0 %v1097, 40
      %v5509 = vpop.permute.xlu0 %5508
      %5510 = vrot.lane.b32.xlu0 %v1096, 40
      %v5511 = vpop.permute.xlu0 %5510
      %5512 = vrot.lane.b32.xlu0 %v1100, 40
      %v5513 = vpop.permute.xlu0 %5512
      %5514 = vrot.lane.b32.xlu0 %v1102, 40
      %v5515 = vpop.permute.xlu0 %5514
      %5516 = vrot.lane.b32.xlu0 %v1101, 40
      %v5517 = vpop.permute.xlu0 %5516
      %5518 = vrot.lane.b32.xlu0 %v1105, 40
      %v5519 = vpop.permute.xlu0 %5518
      %5520 = vrot.lane.b32.xlu0 %v1107, 40
      %v5521 = vpop.permute.xlu0 %5520
      %5522 = vrot.lane.b32.xlu0 %v1106, 40
      %v5523 = vpop.permute.xlu0 %5522
      %5524 = vrot.lane.b32.xlu0 %v1110, 40
      %v5525 = vpop.permute.xlu0 %5524
      %5526 = vrot.lane.b32.xlu0 %v1112, 40
      %v5527 = vpop.permute.xlu0 %5526
      %5528 = vrot.lane.b32.xlu0 %v1111, 40
      %v5529 = vpop.permute.xlu0 %5528
      %5530 = vrot.lane.b32.xlu0 %v1967, 40
      %v5531 = vpop.permute.xlu0 %5530
      %5532 = vrot.lane.b32.xlu0 %v1969, 40
      %v5533 = vpop.permute.xlu0 %5532
      %5534 = vrot.lane.b32.xlu0 %v1968, 40
      %v5535 = vpop.permute.xlu0 %5534
      %5536 = vrot.lane.b32.xlu0 %v3154, 40
      %v5537 = vpop.permute.xlu0 %5536
      %5538 = vrot.lane.b32.xlu0 %v3156, 40
      %v5539 = vpop.permute.xlu0 %5538
      %5540 = vrot.lane.b32.xlu0 %v3155, 40
      %v5541 = vpop.permute.xlu0 %5540
      %5542 = vrot.lane.b32.xlu0 %v3852, 40
      %v5543 = vpop.permute.xlu0 %5542
      %5544 = vrot.lane.b32.xlu0 %v3854, 40
      %v5545 = vpop.permute.xlu0 %5544
      %5546 = vrot.lane.b32.xlu0 %v3853, 40
      %v5547 = vpop.permute.xlu0 %5546
      %5548 = vrot.lane.b32.xlu0 %v4992, 40
      %v5549 = vpop.permute.xlu0 %5548
      %5550 = vrot.lane.b32.xlu0 %v4994, 40
      %v5551 = vpop.permute.xlu0 %5550
      %5552 = vrot.lane.b32.xlu0 %v4993, 40
      %v5553 = vpop.permute.xlu0 %5552
      %5554 = vrot.lane.b32.xlu0 %v4995, 40
      %v5555 = vpop.permute.xlu0 %5554
      %5556 = vrot.lane.b32.xlu0 %v4997, 40
      %v5557 = vpop.permute.xlu0 %5556
      %5558 = vrot.lane.b32.xlu0 %v4996, 40
      %v5559 = vpop.permute.xlu0 %5558
      %5560 = vrot.lane.b32.xlu0 %v5467, 40
      %v5561 = vpop.permute.xlu0 %5560
      %5562 = vrot.lane.b32.xlu0 %v5469, 40
      %v5563 = vpop.permute.xlu0 %5562
      %5564 = vrot.lane.b32.xlu0 %v5468, 40
      %v5565 = vpop.permute.xlu0 %5564
      %v5615 = vrot.slane %v452, 5
      %v5616 = vrot.slane %v453, 5
      %v5617 = vsel %vm1211, %v5615, %v5616
      %v5618 = vrot.slane %v454, 5
      %v5619 = vsel %vm1211, %v5616, %v5618
      %5620 = vrot.lane.b32.xlu0 %v1242, 44
      %v5621 = vpop.permute.xlu0 %5620
      %5622 = vrot.lane.b32.xlu0 %v1244, 44
      %v5623 = vpop.permute.xlu0 %5622
      %5624 = vrot.lane.b32.xlu0 %v1246, 44
      %v5625 = vpop.permute.xlu0 %5624
      %5626 = vrot.lane.b32.xlu0 %v1247, 44
      %v5627 = vpop.permute.xlu0 %5626
      %5628 = vrot.lane.b32.xlu0 %v1249, 44
      %v5629 = vpop.permute.xlu0 %5628
      %5630 = vrot.lane.b32.xlu0 %v1251, 44
      %v5631 = vpop.permute.xlu0 %5630
      %5632 = vrot.lane.b32.xlu0 %v1252, 44
      %v5633 = vpop.permute.xlu0 %5632
      %5634 = vrot.lane.b32.xlu0 %v1254, 44
      %v5635 = vpop.permute.xlu0 %5634
      %5636 = vrot.lane.b32.xlu0 %v1256, 44
      %v5637 = vpop.permute.xlu0 %5636
      %5638 = vrot.lane.b32.xlu0 %v1257, 44
      %v5639 = vpop.permute.xlu0 %5638
      %5640 = vrot.lane.b32.xlu0 %v1259, 44
      %v5641 = vpop.permute.xlu0 %5640
      %5642 = vrot.lane.b32.xlu0 %v1261, 44
      %v5643 = vpop.permute.xlu0 %5642
      %5644 = vrot.lane.b32.xlu0 %v1262, 44
      %v5645 = vpop.permute.xlu0 %5644
      %5646 = vrot.lane.b32.xlu0 %v1264, 44
      %v5647 = vpop.permute.xlu0 %5646
      %5648 = vrot.lane.b32.xlu0 %v1266, 44
      %v5649 = vpop.permute.xlu0 %5648
      %5650 = vrot.lane.b32.xlu0 %v1267, 44
      %v5651 = vpop.permute.xlu0 %5650
      %5652 = vrot.lane.b32.xlu0 %v1269, 44
      %v5653 = vpop.permute.xlu0 %5652
      %5654 = vrot.lane.b32.xlu0 %v1271, 44
      %v5655 = vpop.permute.xlu0 %5654
      %5656 = vrot.lane.b32.xlu0 %v1272, 44
      %v5657 = vpop.permute.xlu0 %5656
      %5658 = vrot.lane.b32.xlu0 %v1274, 44
      %v5659 = vpop.permute.xlu0 %5658
      %5660 = vrot.lane.b32.xlu0 %v1276, 44
      %v5661 = vpop.permute.xlu0 %5660
      %5662 = vrot.lane.b32.xlu0 %v1277, 44
      %v5663 = vpop.permute.xlu0 %5662
      %5664 = vrot.lane.b32.xlu0 %v1279, 44
      %v5665 = vpop.permute.xlu0 %5664
      %5666 = vrot.lane.b32.xlu0 %v1281, 44
      %v5667 = vpop.permute.xlu0 %5666
      %5668 = vrot.lane.b32.xlu0 %v1282, 44
      %v5669 = vpop.permute.xlu0 %5668
      %5670 = vrot.lane.b32.xlu0 %v1284, 44
      %v5671 = vpop.permute.xlu0 %5670
      %5672 = vrot.lane.b32.xlu0 %v1286, 44
      %v5673 = vpop.permute.xlu0 %5672
      %5674 = vrot.lane.b32.xlu0 %v1287, 44
      %v5675 = vpop.permute.xlu0 %5674
      %5676 = vrot.lane.b32.xlu0 %v1289, 44
      %v5677 = vpop.permute.xlu0 %5676
      %5678 = vrot.lane.b32.xlu0 %v1291, 44
      %v5679 = vpop.permute.xlu0 %5678
      %5680 = vrot.lane.b32.xlu0 %v2068, 44
      %v5681 = vpop.permute.xlu0 %5680
      %5682 = vrot.lane.b32.xlu0 %v2070, 44
      %v5683 = vpop.permute.xlu0 %5682
      %5684 = vrot.lane.b32.xlu0 %v2072, 44
      %v5685 = vpop.permute.xlu0 %5684
      %5686 = vrot.lane.b32.xlu0 %v5143, 44
      %v5687 = vpop.permute.xlu0 %5686
      %5688 = vrot.lane.b32.xlu0 %v5145, 44
      %v5689 = vpop.permute.xlu0 %5688
      %5690 = vrot.lane.b32.xlu0 %v5147, 44
      %v5691 = vpop.permute.xlu0 %5690
      %5692 = vrot.lane.b32.xlu0 %v5148, 44
      %v5693 = vpop.permute.xlu0 %5692
      %5694 = vrot.lane.b32.xlu0 %v5150, 44
      %v5695 = vpop.permute.xlu0 %5694
      %5696 = vrot.lane.b32.xlu0 %v5152, 44
      %v5697 = vpop.permute.xlu0 %5696
      %5698 = vrot.lane.b32.xlu0 %v5153, 44
      %v5699 = vpop.permute.xlu0 %5698
      %5700 = vrot.lane.b32.xlu0 %v5155, 44
      %v5701 = vpop.permute.xlu0 %5700
      %5702 = vrot.lane.b32.xlu0 %v5157, 44
      %v5703 = vpop.permute.xlu0 %5702
      %5704 = vrot.lane.b32.xlu0 %v5158, 44
      %v5705 = vpop.permute.xlu0 %5704
      %5706 = vrot.lane.b32.xlu0 %v5160, 44
      %v5707 = vpop.permute.xlu0 %5706
      %5708 = vrot.lane.b32.xlu0 %v5162, 44
      %v5709 = vpop.permute.xlu0 %5708
      %5710 = vrot.lane.b32.xlu0 %v5615, 44
      %v5711 = vpop.permute.xlu0 %5710
      %5712 = vrot.lane.b32.xlu0 %v5617, 44
      %v5713 = vpop.permute.xlu0 %5712
      %5714 = vrot.lane.b32.xlu0 %v5619, 44
      %v5715 = vpop.permute.xlu0 %5714
      %v5764 = vrot.slane %v452, 6
      %v5765 = vrot.slane %v453, 6
      %v5766 = vsel %vm1388, %v5764, %v5765
      %v5767 = vrot.slane %v454, 6
      %v5768 = vsel %vm1388, %v5765, %v5767
      %5769 = vrot.lane.b32.xlu0 %v1423, 48
      %v5770 = vpop.permute.xlu0 %5769
      %5771 = vrot.lane.b32.xlu0 %v1428, 48
      %v5772 = vpop.permute.xlu0 %5771
      %5773 = vrot.lane.b32.xlu0 %v1433, 48
      %v5774 = vpop.permute.xlu0 %5773
      %5775 = vrot.lane.b32.xlu0 %v1438, 48
      %v5776 = vpop.permute.xlu0 %5775
      %5777 = vrot.lane.b32.xlu0 %v1443, 48
      %v5778 = vpop.permute.xlu0 %5777
      %5779 = vrot.lane.b32.xlu0 %v1448, 48
      %v5780 = vpop.permute.xlu0 %5779
      %5781 = vrot.lane.b32.xlu0 %v1453, 48
      %v5782 = vpop.permute.xlu0 %5781
      %5783 = vrot.lane.b32.xlu0 %v1458, 48
      %v5784 = vpop.permute.xlu0 %5783
      %5785 = vrot.lane.b32.xlu0 %v1463, 48
      %v5786 = vpop.permute.xlu0 %5785
      %5787 = vrot.lane.b32.xlu0 %v1468, 48
      %v5788 = vpop.permute.xlu0 %5787
      %5789 = vrot.lane.b32.xlu0 %v2173, 48
      %v5790 = vpop.permute.xlu0 %5789
      %5791 = vrot.lane.b32.xlu0 %v5308, 48
      %v5792 = vpop.permute.xlu0 %5791
      %5793 = vrot.lane.b32.xlu0 %v5310, 48
      %v5794 = vpop.permute.xlu0 %5793
      %5795 = vrot.lane.b32.xlu0 %v5312, 48
      %v5796 = vpop.permute.xlu0 %5795
      %5797 = vrot.lane.b32.xlu0 %v5313, 48
      %v5798 = vpop.permute.xlu0 %5797
      %5799 = vrot.lane.b32.xlu0 %v5315, 48
      %v5800 = vpop.permute.xlu0 %5799
      %5801 = vrot.lane.b32.xlu0 %v5317, 48
      %v5802 = vpop.permute.xlu0 %5801
      %5803 = vrot.lane.b32.xlu0 %v5764, 48
      %v5804 = vpop.permute.xlu0 %5803
      %5805 = vrot.lane.b32.xlu0 %v5766, 48
      %v5806 = vpop.permute.xlu0 %5805
      %5807 = vrot.lane.b32.xlu0 %v5768, 48
      %v5808 = vpop.permute.xlu0 %5807
      %v5829 = vrot.slane %v452, 7
      %v5830 = vrot.slane %v453, 7
      %v5831 = vsel %vm3372, %v5829, %v5830
      %v5832 = vrot.slane %v454, 7
      %v5833 = vsel %vm3372, %v5830, %v5832
      %5834 = vrot.lane.b32.xlu0 %v5378, 52
      %v5835 = vpop.permute.xlu0 %5834
      %5836 = vrot.lane.b32.xlu0 %v5380, 52
      %v5837 = vpop.permute.xlu0 %5836
      %5838 = vrot.lane.b32.xlu0 %v5382, 52
      %v5839 = vpop.permute.xlu0 %5838
      %5840 = vrot.lane.b32.xlu0 %v5829, 52
      %v5841 = vpop.permute.xlu0 %5840
      %5842 = vrot.lane.b32.xlu0 %v5831, 52
      %v5843 = vpop.permute.xlu0 %5842
      %5844 = vrot.lane.b32.xlu0 %v5833, 52
      %v5845 = vpop.permute.xlu0 %5844
      %5852 = vrot.lane.b32.xlu0 %v449, 56
      %v5853 = vpop.permute.xlu0 %5852
      %5854 = vrot.lane.b32.xlu0 %v450, 56
      %v5855 = vpop.permute.xlu0 %5854
      %5856 = vrot.lane.b32.xlu0 %v451, 56
      %v5857 = vpop.permute.xlu0 %5856
      %5858 = vrot.lane.b32.xlu0 %v452, 56
      %v5859 = vpop.permute.xlu0 %5858
      %5860 = vrot.lane.b32.xlu0 %v453, 56
      %v5861 = vpop.permute.xlu0 %5860
      %5862 = vrot.lane.b32.xlu0 %v454, 56
      %v5863 = vpop.permute.xlu0 %5862
      %v5870 = vrot.slane %v452, 1
      %v5871 = vrot.slane %v453, 1
      %v5872 = vsel %vm503, %v5870, %v5871
      %v5873 = vrot.slane %v454, 1
      %v5874 = vsel %vm503, %v5871, %v5873
      %5875 = vrot.lane.b32.xlu0 %v5421, 60
      %v5876 = vpop.permute.xlu0 %5875
      %5877 = vrot.lane.b32.xlu0 %v5423, 60
      %v5878 = vpop.permute.xlu0 %5877
      %5879 = vrot.lane.b32.xlu0 %v5422, 60
      %v5880 = vpop.permute.xlu0 %5879
      %5881 = vrot.lane.b32.xlu0 %v5872, 60
      %v5882 = vpop.permute.xlu0 %5881
      %5883 = vrot.lane.b32.xlu0 %v5874, 60
      %v5884 = vpop.permute.xlu0 %5883
      %5885 = vrot.lane.b32.xlu0 %v5873, 60
      %v5886 = vpop.permute.xlu0 %5885
      %v5893 = vsel %vm2470, %v443, %v4950
      %v5894 = vsel %vm2470, %v444, %v4952
      %v5895 = vsel %vm2470, %v445, %v4954
      %v5896 = vsel %vm2470, %v446, %v4956
      %v5897 = vsel %vm2470, %v447, %v4958
      %v5898 = vsel %vm2470, %v448, %v4960
      %v5899 = vsel %vm2503, %v5893, %v4973
      %v5900 = vsel %vm2503, %v5894, %v4975
      %v5901 = vsel %vm2503, %v5895, %v4977
      %v5902 = vsel %vm2503, %v5896, %v4979
      %v5903 = vsel %vm2503, %v5897, %v4981
      %v5904 = vsel %vm2503, %v5898, %v4983
      %v5905 = vsel %vm2536, %v2512, %v4999
      %v5906 = vsel %vm2536, %v2513, %v5001
      %v5907 = vsel %vm2536, %v4363, %v5003
      %v5908 = vsel %vm2536, %v2514, %v5005
      %v5909 = vsel %vm2536, %v2515, %v5007
      %v5910 = vsel %vm2536, %v4364, %v5009
      %v5911 = vsel %vm2536, %v2516, %v5011
      %v5912 = vsel %vm2536, %v2517, %v5013
      %v5913 = vsel %vm2536, %v4365, %v5015
      %v5914 = vsel %vm2536, %v2518, %v5017
      %v5915 = vsel %vm2536, %v2519, %v5019
      %v5916 = vsel %vm2536, %v4366, %v5021
      %v5917 = vsel %vm2536, %v2520, %v5023
      %v5918 = vsel %vm2536, %v2521, %v5025
      %v5919 = vsel %vm2536, %v4367, %v5027
      %v5920 = vsel %vm2536, %v2522, %v5029
      %v5921 = vsel %vm2536, %v2523, %v5031
      %v5922 = vsel %vm2536, %v4368, %v5033
      %v5923 = vsel %vm2536, %v2524, %v5035
      %v5924 = vsel %vm2536, %v2525, %v5037
      %v5925 = vsel %vm2536, %v4369, %v5039
      %v5926 = vsel %vm2536, %v2526, %v5041
      %v5927 = vsel %vm2536, %v2527, %v5043
      %v5928 = vsel %vm2536, %v4370, %v5045
      %v5929 = vsel %vm2536, %v2528, %v5047
      %v5930 = vsel %vm2536, %v2529, %v5049
      %v5931 = vsel %vm2536, %v4371, %v5051
      %v5932 = vsel %vm2536, %v2530, %v5053
      %v5933 = vsel %vm2536, %v2531, %v5055
      %v5934 = vsel %vm2536, %v4372, %v5057
      %v5935 = vsel %vm2536, %v2532, %v5059
      %v5936 = vsel %vm2536, %v2533, %v5061
      %v5937 = vsel %vm2536, %v4373, %v5063
      %v5938 = vsel %vm2536, %v2534, %v5065
      %v5939 = vsel %vm2536, %v2535, %v5067
      %v5940 = vsel %vm2536, %v4374, %v5069
      %v5941 = vsel %vm2536, %v4375, %v5071
      %v5942 = vsel %vm2536, %v4376, %v5073
      %v5943 = vsel %vm2536, %v4377, %v5075
      %v5944 = vsel %vm2536, %v4378, %v5077
      %v5945 = vsel %vm2536, %v4379, %v5079
      %v5946 = vsel %vm2536, %v4380, %v5081
      %v5947 = vsel %vm2536, %v5899, %v5083
      %v5948 = vsel %vm2536, %v5900, %v5085
      %v5949 = vsel %vm2536, %v5901, %v5087
      %v5950 = vsel %vm2536, %v5902, %v5089
      %v5951 = vsel %vm2536, %v5903, %v5091
      %v5952 = vsel %vm2536, %v5904, %v5093
      %v5953 = vsel %vm2569, %v5905, %v5164
      %v5954 = vsel %vm2569, %v5906, %v5166
      %v5955 = vsel %vm2569, %v5907, %v5168
      %v5956 = vsel %vm2569, %v5908, %v5170
      %v5957 = vsel %vm2569, %v5909, %v5172
      %v5958 = vsel %vm2569, %v5910, %v5174
      %v5959 = vsel %vm2569, %v5911, %v5176
      %v5960 = vsel %vm2569, %v5912, %v5178
      %v5961 = vsel %vm2569, %v5913, %v5180
      %v5962 = vsel %vm2569, %v5914, %v5182
      %v5963 = vsel %vm2569, %v5915, %v5184
      %v5964 = vsel %vm2569, %v5916, %v5186
      %v5965 = vsel %vm2569, %v5917, %v5188
      %v5966 = vsel %vm2569, %v5918, %v5190
      %v5967 = vsel %vm2569, %v5919, %v5192
      %v5968 = vsel %vm2569, %v5920, %v5194
      %v5969 = vsel %vm2569, %v5921, %v5196
      %v5970 = vsel %vm2569, %v5922, %v5198
      %v5971 = vsel %vm2569, %v5923, %v5200
      %v5972 = vsel %vm2569, %v5924, %v5202
      %v5973 = vsel %vm2569, %v5925, %v5204
      %v5974 = vsel %vm2569, %v5926, %v5206
      %v5975 = vsel %vm2569, %v5927, %v5208
      %v5976 = vsel %vm2569, %v5928, %v5210
      %v5977 = vsel %vm2569, %v5929, %v5212
      %v5978 = vsel %vm2569, %v5930, %v5214
      %v5979 = vsel %vm2569, %v5931, %v5216
      %v5980 = vsel %vm2569, %v5932, %v5218
      %v5981 = vsel %vm2569, %v5933, %v5220
      %v5982 = vsel %vm2569, %v5934, %v5222
      %v5983 = vsel %vm2569, %v5935, %v5224
      %v5984 = vsel %vm2569, %v5936, %v5226
      %v5985 = vsel %vm2569, %v5937, %v5228
      %v5986 = vsel %vm2569, %v5938, %v5230
      %v5987 = vsel %vm2569, %v5939, %v5232
      %v5988 = vsel %vm2569, %v5940, %v5234
      %v5989 = vsel %vm2569, %v5941, %v5236
      %v5990 = vsel %vm2569, %v5942, %v5238
      %v5991 = vsel %vm2569, %v5943, %v5240
      %v5992 = vsel %vm2569, %v5944, %v5242
      %v5993 = vsel %vm2569, %v5945, %v5244
      %v5994 = vsel %vm2569, %v5946, %v5246
      %v5995 = vsel %vm2569, %v5947, %v5248
      %v5996 = vsel %vm2569, %v5948, %v5250
      %v5997 = vsel %vm2569, %v5949, %v5252
      %v5998 = vsel %vm2569, %v5950, %v5254
      %v5999 = vsel %vm2569, %v5951, %v5256
      %v6000 = vsel %vm2569, %v5952, %v5258
      %v6001 = vsel %vm2602, %v5953, %v3240
      %v6002 = vsel %vm2602, %v5954, %v3242
      %v6003 = vsel %vm2602, %v5955, %v5319
      %v6004 = vsel %vm2602, %v5956, %v3246
      %v6005 = vsel %vm2602, %v5957, %v3248
      %v6006 = vsel %vm2602, %v5958, %v5321
      %v6007 = vsel %vm2602, %v5959, %v3252
      %v6008 = vsel %vm2602, %v5960, %v3254
      %v6009 = vsel %vm2602, %v5961, %v5323
      %v6010 = vsel %vm2602, %v5962, %v3258
      %v6011 = vsel %vm2602, %v5963, %v3260
      %v6012 = vsel %vm2602, %v5964, %v5325
      %v6013 = vsel %vm2602, %v5965, %v3264
      %v6014 = vsel %vm2602, %v5966, %v3266
      %v6015 = vsel %vm2602, %v5967, %v5327
      %v6016 = vsel %vm2602, %v5968, %v3270
      %v6017 = vsel %vm2602, %v5969, %v3272
      %v6018 = vsel %vm2602, %v5970, %v5329
      %v6019 = vsel %vm2602, %v5971, %v3276
      %v6020 = vsel %vm2602, %v5972, %v3278
      %v6021 = vsel %vm2602, %v5973, %v5331
      %v6022 = vsel %vm2602, %v5974, %v3282
      %v6023 = vsel %vm2602, %v5975, %v3284
      %v6024 = vsel %vm2602, %v5976, %v5333
      %v6025 = vsel %vm2602, %v5977, %v3288
      %v6026 = vsel %vm2602, %v5978, %v3290
      %v6027 = vsel %vm2602, %v5979, %v5335
      %v6028 = vsel %vm2602, %v5980, %v3294
      %v6029 = vsel %vm2602, %v5981, %v3296
      %v6030 = vsel %vm2602, %v5982, %v5337
      %v6031 = vsel %vm2602, %v5983, %v3300
      %v6032 = vsel %vm2602, %v5984, %v3302
      %v6033 = vsel %vm2602, %v5985, %v5339
      %v6034 = vsel %vm2602, %v5986, %v3306
      %v6035 = vsel %vm2602, %v5987, %v3308
      %v6036 = vsel %vm2602, %v5988, %v5341
      %v6037 = vsel %vm2602, %v5989, %v3312
      %v6038 = vsel %vm2602, %v5990, %v3314
      %v6039 = vsel %vm2602, %v5991, %v5343
      %v6040 = vsel %vm2602, %v5992, %v3318
      %v6041 = vsel %vm2602, %v5993, %v3320
      %v6042 = vsel %vm2602, %v5994, %v5345
      %v6043 = vsel %vm2602, %v5995, %v5347
      %v6044 = vsel %vm2602, %v5996, %v5349
      %v6045 = vsel %vm2602, %v5997, %v5351
      %v6046 = vsel %vm2602, %v5998, %v5353
      %v6047 = vsel %vm2602, %v5999, %v5355
      %v6048 = vsel %vm2602, %v6000, %v5357
      %v6049 = vsel %vm2635, %v6001, %v3466
      %v6050 = vsel %vm2635, %v6002, %v3468
      %v6051 = vsel %vm2635, %v6003, %v3470
      %v6052 = vsel %vm2635, %v6004, %v3472
      %v6053 = vsel %vm2635, %v6005, %v3474
      %v6054 = vsel %vm2635, %v6006, %v3476
      %v6055 = vsel %vm2635, %v6007, %v3478
      %v6056 = vsel %vm2635, %v6008, %v3480
      %v6057 = vsel %vm2635, %v6009, %v3482
      %v6058 = vsel %vm2635, %v6010, %v3484
      %v6059 = vsel %vm2635, %v6011, %v3486
      %v6060 = vsel %vm2635, %v6012, %v3488
      %v6061 = vsel %vm2635, %v6013, %v3490
      %v6062 = vsel %vm2635, %v6014, %v3492
      %v6063 = vsel %vm2635, %v6015, %v3494
      %v6064 = vsel %vm2635, %v6016, %v3496
      %v6065 = vsel %vm2635, %v6017, %v3498
      %v6066 = vsel %vm2635, %v6018, %v3500
      %v6067 = vsel %vm2635, %v6019, %v3502
      %v6068 = vsel %vm2635, %v6020, %v3504
      %v6069 = vsel %vm2635, %v6021, %v3506
      %v6070 = vsel %vm2635, %v6022, %v3508
      %v6071 = vsel %vm2635, %v6023, %v3510
      %v6072 = vsel %vm2635, %v6024, %v3512
      %v6073 = vsel %vm2635, %v6025, %v3514
      %v6074 = vsel %vm2635, %v6026, %v3516
      %v6075 = vsel %vm2635, %v6027, %v3518
      %v6076 = vsel %vm2635, %v6028, %v3520
      %v6077 = vsel %vm2635, %v6029, %v3522
      %v6078 = vsel %vm2635, %v6030, %v3524
      %v6079 = vsel %vm2635, %v6031, %v3526
      %v6080 = vsel %vm2635, %v6032, %v3528
      %v6081 = vsel %vm2635, %v6033, %v3530
      %v6082 = vsel %vm2635, %v6034, %v3532
      %v6083 = vsel %vm2635, %v6035, %v3534
      %v6084 = vsel %vm2635, %v6036, %v3536
      %v6085 = vsel %vm2635, %v6037, %v3538
      %v6086 = vsel %vm2635, %v6038, %v3540
      %v6087 = vsel %vm2635, %v6039, %v3542
      %v6088 = vsel %vm2635, %v6040, %v3544
      %v6089 = vsel %vm2635, %v6041, %v3546
      %v6090 = vsel %vm2635, %v6042, %v3548
      %v6091 = vsel %vm2635, %v6043, %v5384
      %v6092 = vsel %vm2635, %v6044, %v5386
      %v6093 = vsel %vm2635, %v6045, %v5388
      %v6094 = vsel %vm2635, %v6046, %v5390
      %v6095 = vsel %vm2635, %v6047, %v5392
      %v6096 = vsel %vm2635, %v6048, %v5394
      %v6097 = vsel %vm2668, %v6049, %v1584
      %v6098 = vsel %vm2668, %v6050, %v1586
      %v6099 = vsel %vm2668, %v6051, %v3602
      %v6100 = vsel %vm2668, %v6052, %v1588
      %v6101 = vsel %vm2668, %v6053, %v1590
      %v6102 = vsel %vm2668, %v6054, %v3604
      %v6103 = vsel %vm2668, %v6055, %v1592
      %v6104 = vsel %vm2668, %v6056, %v1594
      %v6105 = vsel %vm2668, %v6057, %v3606
      %v6106 = vsel %vm2668, %v6058, %v1596
      %v6107 = vsel %vm2668, %v6059, %v1598
      %v6108 = vsel %vm2668, %v6060, %v3608
      %v6109 = vsel %vm2668, %v6061, %v1600
      %v6110 = vsel %vm2668, %v6062, %v1602
      %v6111 = vsel %vm2668, %v6063, %v3610
      %v6112 = vsel %vm2668, %v6064, %v1604
      %v6113 = vsel %vm2668, %v6065, %v1606
      %v6114 = vsel %vm2668, %v6066, %v3612
      %v6115 = vsel %vm2668, %v6067, %v1608
      %v6116 = vsel %vm2668, %v6068, %v1610
      %v6117 = vsel %vm2668, %v6069, %v3614
      %v6118 = vsel %vm2668, %v6070, %v1612
      %v6119 = vsel %vm2668, %v6071, %v1614
      %v6120 = vsel %vm2668, %v6072, %v3616
      %v6121 = vsel %vm2668, %v6073, %v1616
      %v6122 = vsel %vm2668, %v6074, %v1618
      %v6123 = vsel %vm2668, %v6075, %v3618
      %v6124 = vsel %vm2668, %v6076, %v1620
      %v6125 = vsel %vm2668, %v6077, %v1622
      %v6126 = vsel %vm2668, %v6078, %v3620
      %v6127 = vsel %vm2668, %v6079, %v1624
      %v6128 = vsel %vm2668, %v6080, %v1626
      %v6129 = vsel %vm2668, %v6081, %v3622
      %v6130 = vsel %vm2668, %v6082, %v1628
      %v6131 = vsel %vm2668, %v6083, %v1630
      %v6132 = vsel %vm2668, %v6084, %v3624
      %v6133 = vsel %vm2668, %v6085, %v3626
      %v6134 = vsel %vm2668, %v6086, %v3628
      %v6135 = vsel %vm2668, %v6087, %v3630
      %v6136 = vsel %vm2668, %v6088, %v3632
      %v6137 = vsel %vm2668, %v6089, %v3634
      %v6138 = vsel %vm2668, %v6090, %v3636
      %v6139 = vsel %vm2668, %v6091, %v5402
      %v6140 = vsel %vm2668, %v6092, %v5404
      %v6141 = vsel %vm2668, %v6093, %v5406
      %v6142 = vsel %vm2668, %v6094, %v5408
      %v6143 = vsel %vm2668, %v6095, %v5410
      %v6144 = vsel %vm2668, %v6096, %v5412
      %v6145 = vsel %vm333, %v6097, %v1686
      %v6146 = vsel %vm333, %v6098, %v1688
      %v6147 = vsel %vm333, %v6099, %v3667
      %v6148 = vsel %vm333, %v6100, %v1690
      %v6149 = vsel %vm333, %v6101, %v1692
      %v6150 = vsel %vm333, %v6102, %v3669
      %v6151 = vsel %vm333, %v6103, %v1694
      %v6152 = vsel %vm333, %v6104, %v1696
      %v6153 = vsel %vm333, %v6105, %v3671
      %v6154 = vsel %vm333, %v6106, %v1698
      %v6155 = vsel %vm333, %v6107, %v1700
      %v6156 = vsel %vm333, %v6108, %v3673
      %v6157 = vsel %vm333, %v6109, %v1702
      %v6158 = vsel %vm333, %v6110, %v1704
      %v6159 = vsel %vm333, %v6111, %v3675
      %v6160 = vsel %vm333, %v6112, %v1706
      %v6161 = vsel %vm333, %v6113, %v1708
      %v6162 = vsel %vm333, %v6114, %v3677
      %v6163 = vsel %vm333, %v6115, %v1710
      %v6164 = vsel %vm333, %v6116, %v1712
      %v6165 = vsel %vm333, %v6117, %v3679
      %v6166 = vsel %vm333, %v6118, %v1714
      %v6167 = vsel %vm333, %v6119, %v1716
      %v6168 = vsel %vm333, %v6120, %v3681
      %v6169 = vsel %vm333, %v6121, %v1718
      %v6170 = vsel %vm333, %v6122, %v1720
      %v6171 = vsel %vm333, %v6123, %v3683
      %v6172 = vsel %vm333, %v6124, %v1722
      %v6173 = vsel %vm333, %v6125, %v1724
      %v6174 = vsel %vm333, %v6126, %v3685
      %v6175 = vsel %vm333, %v6127, %v1726
      %v6176 = vsel %vm333, %v6128, %v1728
      %v6177 = vsel %vm333, %v6129, %v3687
      %v6178 = vsel %vm333, %v6130, %v1730
      %v6179 = vsel %vm333, %v6131, %v1732
      %v6180 = vsel %vm333, %v6132, %v3689
      %v6181 = vsel %vm333, %v6133, %v3691
      %v6182 = vsel %vm333, %v6134, %v3693
      %v6183 = vsel %vm333, %v6135, %v3695
      %v6184 = vsel %vm333, %v6136, %v3697
      %v6185 = vsel %vm333, %v6137, %v3699
      %v6186 = vsel %vm333, %v6138, %v3701
      %v6187 = vsel %vm333, %v6139, %v5425
      %v6188 = vsel %vm333, %v6140, %v5427
      %v6189 = vsel %vm333, %v6141, %v5429
      %v6190 = vsel %vm333, %v6142, %v5431
      %v6191 = vsel %vm333, %v6143, %v5433
      %v6192 = vsel %vm333, %v6144, %v5435
      %v6193 = vsel %vm2733, %v6145, %v1787
      %v6194 = vsel %vm2733, %v6146, %v1789
      %v6195 = vsel %vm2733, %v6147, %v3732
      %v6196 = vsel %vm2733, %v6148, %v1791
      %v6197 = vsel %vm2733, %v6149, %v1793
      %v6198 = vsel %vm2733, %v6150, %v3734
      %v6199 = vsel %vm2733, %v6151, %v1795
      %v6200 = vsel %vm2733, %v6152, %v1797
      %v6201 = vsel %vm2733, %v6153, %v3736
      %v6202 = vsel %vm2733, %v6154, %v1799
      %v6203 = vsel %vm2733, %v6155, %v1801
      %v6204 = vsel %vm2733, %v6156, %v3738
      %v6205 = vsel %vm2733, %v6157, %v1803
      %v6206 = vsel %vm2733, %v6158, %v1805
      %v6207 = vsel %vm2733, %v6159, %v3740
      %v6208 = vsel %vm2733, %v6160, %v1807
      %v6209 = vsel %vm2733, %v6161, %v1809
      %v6210 = vsel %vm2733, %v6162, %v3742
      %v6211 = vsel %vm2733, %v6163, %v1811
      %v6212 = vsel %vm2733, %v6164, %v1813
      %v6213 = vsel %vm2733, %v6165, %v3744
      %v6214 = vsel %vm2733, %v6166, %v1815
      %v6215 = vsel %vm2733, %v6167, %v1817
      %v6216 = vsel %vm2733, %v6168, %v3746
      %v6217 = vsel %vm2733, %v6169, %v1819
      %v6218 = vsel %vm2733, %v6170, %v1821
      %v6219 = vsel %vm2733, %v6171, %v3748
      %v6220 = vsel %vm2733, %v6172, %v1823
      %v6221 = vsel %vm2733, %v6173, %v1825
      %v6222 = vsel %vm2733, %v6174, %v3750
      %v6223 = vsel %vm2733, %v6175, %v1827
      %v6224 = vsel %vm2733, %v6176, %v1829
      %v6225 = vsel %vm2733, %v6177, %v3752
      %v6226 = vsel %vm2733, %v6178, %v1831
      %v6227 = vsel %vm2733, %v6179, %v1833
      %v6228 = vsel %vm2733, %v6180, %v3754
      %v6229 = vsel %vm2733, %v6181, %v3756
      %v6230 = vsel %vm2733, %v6182, %v3758
      %v6231 = vsel %vm2733, %v6183, %v3760
      %v6232 = vsel %vm2733, %v6184, %v3762
      %v6233 = vsel %vm2733, %v6185, %v3764
      %v6234 = vsel %vm2733, %v6186, %v3766
      %v6235 = vsel %vm2733, %v6187, %v5448
      %v6236 = vsel %vm2733, %v6188, %v5450
      %v6237 = vsel %vm2733, %v6189, %v5452
      %v6238 = vsel %vm2733, %v6190, %v5454
      %v6239 = vsel %vm2733, %v6191, %v5456
      %v6240 = vsel %vm2733, %v6192, %v5458
      %v6241 = vsel %vm2766, %v6193, %v5471
      %v6242 = vsel %vm2766, %v6194, %v5473
      %v6243 = vsel %vm2766, %v6195, %v5475
      %v6244 = vsel %vm2766, %v6196, %v5477
      %v6245 = vsel %vm2766, %v6197, %v5479
      %v6246 = vsel %vm2766, %v6198, %v5481
      %v6247 = vsel %vm2766, %v6199, %v5483
      %v6248 = vsel %vm2766, %v6200, %v5485
      %v6249 = vsel %vm2766, %v6201, %v5487
      %v6250 = vsel %vm2766, %v6202, %v5489
      %v6251 = vsel %vm2766, %v6203, %v5491
      %v6252 = vsel %vm2766, %v6204, %v5493
      %v6253 = vsel %vm2766, %v6205, %v5495
      %v6254 = vsel %vm2766, %v6206, %v5497
      %v6255 = vsel %vm2766, %v6207, %v5499
      %v6256 = vsel %vm2766, %v6208, %v5501
      %v6257 = vsel %vm2766, %v6209, %v5503
      %v6258 = vsel %vm2766, %v6210, %v5505
      %v6259 = vsel %vm2766, %v6211, %v5507
      %v6260 = vsel %vm2766, %v6212, %v5509
      %v6261 = vsel %vm2766, %v6213, %v5511
      %v6262 = vsel %vm2766, %v6214, %v5513
      %v6263 = vsel %vm2766, %v6215, %v5515
      %v6264 = vsel %vm2766, %v6216, %v5517
      %v6265 = vsel %vm2766, %v6217, %v5519
      %v6266 = vsel %vm2766, %v6218, %v5521
      %v6267 = vsel %vm2766, %v6219, %v5523
      %v6268 = vsel %vm2766, %v6220, %v5525
      %v6269 = vsel %vm2766, %v6221, %v5527
      %v6270 = vsel %vm2766, %v6222, %v5529
      %v6271 = vsel %vm2766, %v6223, %v5531
      %v6272 = vsel %vm2766, %v6224, %v5533
      %v6273 = vsel %vm2766, %v6225, %v5535
      %v6274 = vsel %vm2766, %v6226, %v5537
      %v6275 = vsel %vm2766, %v6227, %v5539
      %v6276 = vsel %vm2766, %v6228, %v5541
      %v6277 = vsel %vm2766, %v6229, %v5543
      %v6278 = vsel %vm2766, %v6230, %v5545
      %v6279 = vsel %vm2766, %v6231, %v5547
      %v6280 = vsel %vm2766, %v6232, %v5549
      %v6281 = vsel %vm2766, %v6233, %v5551
      %v6282 = vsel %vm2766, %v6234, %v5553
      %v6283 = vsel %vm2766, %v6235, %v5555
      %v6284 = vsel %vm2766, %v6236, %v5557
      %v6285 = vsel %vm2766, %v6237, %v5559
      %v6286 = vsel %vm2766, %v6238, %v5561
      %v6287 = vsel %vm2766, %v6239, %v5563
      %v6288 = vsel %vm2766, %v6240, %v5565
      %v6289 = vsel %vm2799, %v6241, %v5621
      %v6290 = vsel %vm2799, %v6242, %v5623
      %v6291 = vsel %vm2799, %v6243, %v5625
      %v6292 = vsel %vm2799, %v6244, %v5627
      %v6293 = vsel %vm2799, %v6245, %v5629
      %v6294 = vsel %vm2799, %v6246, %v5631
      %v6295 = vsel %vm2799, %v6247, %v5633
      %v6296 = vsel %vm2799, %v6248, %v5635
      %v6297 = vsel %vm2799, %v6249, %v5637
      %v6298 = vsel %vm2799, %v6250, %v5639
      %v6299 = vsel %vm2799, %v6251, %v5641
      %v6300 = vsel %vm2799, %v6252, %v5643
      %v6301 = vsel %vm2799, %v6253, %v5645
      %v6302 = vsel %vm2799, %v6254, %v5647
      %v6303 = vsel %vm2799, %v6255, %v5649
      %v6304 = vsel %vm2799, %v6256, %v5651
      %v6305 = vsel %vm2799, %v6257, %v5653
      %v6306 = vsel %vm2799, %v6258, %v5655
      %v6307 = vsel %vm2799, %v6259, %v5657
      %v6308 = vsel %vm2799, %v6260, %v5659
      %v6309 = vsel %vm2799, %v6261, %v5661
      %v6310 = vsel %vm2799, %v6262, %v5663
      %v6311 = vsel %vm2799, %v6263, %v5665
      %v6312 = vsel %vm2799, %v6264, %v5667
      %v6313 = vsel %vm2799, %v6265, %v5669
      %v6314 = vsel %vm2799, %v6266, %v5671
      %v6315 = vsel %vm2799, %v6267, %v5673
      %v6316 = vsel %vm2799, %v6268, %v5675
      %v6317 = vsel %vm2799, %v6269, %v5677
      %v6318 = vsel %vm2799, %v6270, %v5679
      %v6319 = vsel %vm2799, %v6271, %v5681
      %v6320 = vsel %vm2799, %v6272, %v5683
      %v6321 = vsel %vm2799, %v6273, %v5685
      %v6322 = vsel %vm2799, %v6274, %v5687
      %v6323 = vsel %vm2799, %v6275, %v5689
      %v6324 = vsel %vm2799, %v6276, %v5691
      %v6325 = vsel %vm2799, %v6277, %v5693
      %v6326 = vsel %vm2799, %v6278, %v5695
      %v6327 = vsel %vm2799, %v6279, %v5697
      %v6328 = vsel %vm2799, %v6280, %v5699
      %v6329 = vsel %vm2799, %v6281, %v5701
      %v6330 = vsel %vm2799, %v6282, %v5703
      %v6331 = vsel %vm2799, %v6283, %v5705
      %v6332 = vsel %vm2799, %v6284, %v5707
      %v6333 = vsel %vm2799, %v6285, %v5709
      %v6334 = vsel %vm2799, %v6286, %v5711
      %v6335 = vsel %vm2799, %v6287, %v5713
      %v6336 = vsel %vm2799, %v6288, %v5715
      %v6337 = vsel %vm2832, %v6289, %v3935
      %v6338 = vsel %vm2832, %v6290, %v3937
      %v6339 = vsel %vm2832, %v6291, %v5770
      %v6340 = vsel %vm2832, %v6292, %v3941
      %v6341 = vsel %vm2832, %v6293, %v3943
      %v6342 = vsel %vm2832, %v6294, %v5772
      %v6343 = vsel %vm2832, %v6295, %v3947
      %v6344 = vsel %vm2832, %v6296, %v3949
      %v6345 = vsel %vm2832, %v6297, %v5774
      %v6346 = vsel %vm2832, %v6298, %v3953
      %v6347 = vsel %vm2832, %v6299, %v3955
      %v6348 = vsel %vm2832, %v6300, %v5776
      %v6349 = vsel %vm2832, %v6301, %v3959
      %v6350 = vsel %vm2832, %v6302, %v3961
      %v6351 = vsel %vm2832, %v6303, %v5778
      %v6352 = vsel %vm2832, %v6304, %v3965
      %v6353 = vsel %vm2832, %v6305, %v3967
      %v6354 = vsel %vm2832, %v6306, %v5780
      %v6355 = vsel %vm2832, %v6307, %v3971
      %v6356 = vsel %vm2832, %v6308, %v3973
      %v6357 = vsel %vm2832, %v6309, %v5782
      %v6358 = vsel %vm2832, %v6310, %v3977
      %v6359 = vsel %vm2832, %v6311, %v3979
      %v6360 = vsel %vm2832, %v6312, %v5784
      %v6361 = vsel %vm2832, %v6313, %v3983
      %v6362 = vsel %vm2832, %v6314, %v3985
      %v6363 = vsel %vm2832, %v6315, %v5786
      %v6364 = vsel %vm2832, %v6316, %v3989
      %v6365 = vsel %vm2832, %v6317, %v3991
      %v6366 = vsel %vm2832, %v6318, %v5788
      %v6367 = vsel %vm2832, %v6319, %v3995
      %v6368 = vsel %vm2832, %v6320, %v3997
      %v6369 = vsel %vm2832, %v6321, %v5790
      %v6370 = vsel %vm2832, %v6322, %v4001
      %v6371 = vsel %vm2832, %v6323, %v4003
      %v6372 = vsel %vm2832, %v6324, %v5792
      %v6373 = vsel %vm2832, %v6325, %v4007
      %v6374 = vsel %vm2832, %v6326, %v4009
      %v6375 = vsel %vm2832, %v6327, %v5794
      %v6376 = vsel %vm2832, %v6328, %v4013
      %v6377 = vsel %vm2832, %v6329, %v4015
      %v6378 = vsel %vm2832, %v6330, %v5796
      %v6379 = vsel %vm2832, %v6331, %v5798
      %v6380 = vsel %vm2832, %v6332, %v5800
      %v6381 = vsel %vm2832, %v6333, %v5802
      %v6382 = vsel %vm2832, %v6334, %v5804
      %v6383 = vsel %vm2832, %v6335, %v5806
      %v6384 = vsel %vm2832, %v6336, %v5808
      %v6385 = vsel %vm2865, %v6337, %v4085
      %v6386 = vsel %vm2865, %v6338, %v4087
      %v6387 = vsel %vm2865, %v6339, %v4089
      %v6388 = vsel %vm2865, %v6340, %v4091
      %v6389 = vsel %vm2865, %v6341, %v4093
      %v6390 = vsel %vm2865, %v6342, %v4095
      %v6391 = vsel %vm2865, %v6343, %v4097
      %v6392 = vsel %vm2865, %v6344, %v4099
      %v6393 = vsel %vm2865, %v6345, %v4101
      %v6394 = vsel %vm2865, %v6346, %v4103
      %v6395 = vsel %vm2865, %v6347, %v4105
      %v6396 = vsel %vm2865, %v6348, %v4107
      %v6397 = vsel %vm2865, %v6349, %v4109
      %v6398 = vsel %vm2865, %v6350, %v4111
      %v6399 = vsel %vm2865, %v6351, %v4113
      %v6400 = vsel %vm2865, %v6352, %v4115
      %v6401 = vsel %vm2865, %v6353, %v4117
      %v6402 = vsel %vm2865, %v6354, %v4119
      %v6403 = vsel %vm2865, %v6355, %v4121
      %v6404 = vsel %vm2865, %v6356, %v4123
      %v6405 = vsel %vm2865, %v6357, %v4125
      %v6406 = vsel %vm2865, %v6358, %v4127
      %v6407 = vsel %vm2865, %v6359, %v4129
      %v6408 = vsel %vm2865, %v6360, %v4131
      %v6409 = vsel %vm2865, %v6361, %v4133
      %v6410 = vsel %vm2865, %v6362, %v4135
      %v6411 = vsel %vm2865, %v6363, %v4137
      %v6412 = vsel %vm2865, %v6364, %v4139
      %v6413 = vsel %vm2865, %v6365, %v4141
      %v6414 = vsel %vm2865, %v6366, %v4143
      %v6415 = vsel %vm2865, %v6367, %v4145
      %v6416 = vsel %vm2865, %v6368, %v4147
      %v6417 = vsel %vm2865, %v6369, %v4149
      %v6418 = vsel %vm2865, %v6370, %v4151
      %v6419 = vsel %vm2865, %v6371, %v4153
      %v6420 = vsel %vm2865, %v6372, %v4155
      %v6421 = vsel %vm2865, %v6373, %v4157
      %v6422 = vsel %vm2865, %v6374, %v4159
      %v6423 = vsel %vm2865, %v6375, %v4161
      %v6424 = vsel %vm2865, %v6376, %v4163
      %v6425 = vsel %vm2865, %v6377, %v4165
      %v6426 = vsel %vm2865, %v6378, %v4167
      %v6427 = vsel %vm2865, %v6379, %v5835
      %v6428 = vsel %vm2865, %v6380, %v5837
      %v6429 = vsel %vm2865, %v6381, %v5839
      %v6430 = vsel %vm2865, %v6382, %v5841
      %v6431 = vsel %vm2865, %v6383, %v5843
      %v6432 = vsel %vm2865, %v6384, %v5845
      %v6433 = vsel %vm2898, %v6385, %v2289
      %v6434 = vsel %vm2898, %v6386, %v2291
      %v6435 = vsel %vm2898, %v6387, %v4221
      %v6436 = vsel %vm2898, %v6388, %v2293
      %v6437 = vsel %vm2898, %v6389, %v2295
      %v6438 = vsel %vm2898, %v6390, %v4223
      %v6439 = vsel %vm2898, %v6391, %v2297
      %v6440 = vsel %vm2898, %v6392, %v2299
      %v6441 = vsel %vm2898, %v6393, %v4225
      %v6442 = vsel %vm2898, %v6394, %v2301
      %v6443 = vsel %vm2898, %v6395, %v2303
      %v6444 = vsel %vm2898, %v6396, %v4227
      %v6445 = vsel %vm2898, %v6397, %v2305
      %v6446 = vsel %vm2898, %v6398, %v2307
      %v6447 = vsel %vm2898, %v6399, %v4229
      %v6448 = vsel %vm2898, %v6400, %v2309
      %v6449 = vsel %vm2898, %v6401, %v2311
      %v6450 = vsel %vm2898, %v6402, %v4231
      %v6451 = vsel %vm2898, %v6403, %v2313
      %v6452 = vsel %vm2898, %v6404, %v2315
      %v6453 = vsel %vm2898, %v6405, %v4233
      %v6454 = vsel %vm2898, %v6406, %v2317
      %v6455 = vsel %vm2898, %v6407, %v2319
      %v6456 = vsel %vm2898, %v6408, %v4235
      %v6457 = vsel %vm2898, %v6409, %v2321
      %v6458 = vsel %vm2898, %v6410, %v2323
      %v6459 = vsel %vm2898, %v6411, %v4237
      %v6460 = vsel %vm2898, %v6412, %v2325
      %v6461 = vsel %vm2898, %v6413, %v2327
      %v6462 = vsel %vm2898, %v6414, %v4239
      %v6463 = vsel %vm2898, %v6415, %v2329
      %v6464 = vsel %vm2898, %v6416, %v2331
      %v6465 = vsel %vm2898, %v6417, %v4241
      %v6466 = vsel %vm2898, %v6418, %v2333
      %v6467 = vsel %vm2898, %v6419, %v2335
      %v6468 = vsel %vm2898, %v6420, %v4243
      %v6469 = vsel %vm2898, %v6421, %v4245
      %v6470 = vsel %vm2898, %v6422, %v4247
      %v6471 = vsel %vm2898, %v6423, %v4249
      %v6472 = vsel %vm2898, %v6424, %v4251
      %v6473 = vsel %vm2898, %v6425, %v4253
      %v6474 = vsel %vm2898, %v6426, %v4255
      %v6475 = vsel %vm2898, %v6427, %v5853
      %v6476 = vsel %vm2898, %v6428, %v5855
      %v6477 = vsel %vm2898, %v6429, %v5857
      %v6478 = vsel %vm2898, %v6430, %v5859
      %v6479 = vsel %vm2898, %v6431, %v5861
      %v6480 = vsel %vm2898, %v6432, %v5863
      %v6481 = vsel %vm2931, %v6433, %v2391
      %v6482 = vsel %vm2931, %v6434, %v2393
      %v6483 = vsel %vm2931, %v6435, %v4286
      %v6484 = vsel %vm2931, %v6436, %v2395
      %v6485 = vsel %vm2931, %v6437, %v2397
      %v6486 = vsel %vm2931, %v6438, %v4288
      %v6487 = vsel %vm2931, %v6439, %v2399
      %v6488 = vsel %vm2931, %v6440, %v2401
      %v6489 = vsel %vm2931, %v6441, %v4290
      %v6490 = vsel %vm2931, %v6442, %v2403
      %v6491 = vsel %vm2931, %v6443, %v2405
      %v6492 = vsel %vm2931, %v6444, %v4292
      %v6493 = vsel %vm2931, %v6445, %v2407
      %v6494 = vsel %vm2931, %v6446, %v2409
      %v6495 = vsel %vm2931, %v6447, %v4294
      %v6496 = vsel %vm2931, %v6448, %v2411
      %v6497 = vsel %vm2931, %v6449, %v2413
      %v6498 = vsel %vm2931, %v6450, %v4296
      %v6499 = vsel %vm2931, %v6451, %v2415
      %v6500 = vsel %vm2931, %v6452, %v2417
      %v6501 = vsel %vm2931, %v6453, %v4298
      %v6502 = vsel %vm2931, %v6454, %v2419
      %v6503 = vsel %vm2931, %v6455, %v2421
      %v6504 = vsel %vm2931, %v6456, %v4300
      %v6505 = vsel %vm2931, %v6457, %v2423
      %v6506 = vsel %vm2931, %v6458, %v2425
      %v6507 = vsel %vm2931, %v6459, %v4302
      %v6508 = vsel %vm2931, %v6460, %v2427
      %v6509 = vsel %vm2931, %v6461, %v2429
      %v6510 = vsel %vm2931, %v6462, %v4304
      %v6511 = vsel %vm2931, %v6463, %v2431
      %v6512 = vsel %vm2931, %v6464, %v2433
      %v6513 = vsel %vm2931, %v6465, %v4306
      %v6514 = vsel %vm2931, %v6466, %v2435
      %v6515 = vsel %vm2931, %v6467, %v2437
      %v6516 = vsel %vm2931, %v6468, %v4308
      %v6517 = vsel %vm2931, %v6469, %v4310
      %v6518 = vsel %vm2931, %v6470, %v4312
      %v6519 = vsel %vm2931, %v6471, %v4314
      %v6520 = vsel %vm2931, %v6472, %v4316
      %v6521 = vsel %vm2931, %v6473, %v4318
      %v6522 = vsel %vm2931, %v6474, %v4320
      %v6523 = vsel %vm2931, %v6475, %v5876
      %v6524 = vsel %vm2931, %v6476, %v5878
      %v6525 = vsel %vm2931, %v6477, %v5880
      %v6526 = vsel %vm2931, %v6478, %v5882
      %v6527 = vsel %vm2931, %v6479, %v5884
      %v6528 = vsel %vm2931, %v6480, %v5886
      %v6577 = vrot.slane %v4901, 2
      %v6578 = vrot.slane %v4902, 2
      %v6579 = vsel %vm680, %v6577, %v6578
      %v6580 = vrot.slane %v4903, 2
      %v6581 = vsel %vm680, %v6578, %v6580
      %v6582 = vrot.slane %v4904, 2
      %v6583 = vrot.slane %v4905, 2
      %v6584 = vsel %vm680, %v6582, %v6583
      %v6585 = vrot.slane %v4906, 2
      %v6586 = vsel %vm680, %v6583, %v6585
      %v6587 = vrot.slane %v4907, 2
      %v6588 = vrot.slane %v4908, 2
      %v6589 = vsel %vm680, %v6587, %v6588
      %v6590 = vrot.slane %v4909, 2
      %v6591 = vsel %vm680, %v6588, %v6590
      %v6592 = vrot.slane %v4910, 2
      %v6593 = vrot.slane %v4911, 2
      %v6594 = vsel %vm680, %v6592, %v6593
      %v6595 = vrot.slane %v4912, 2
      %v6596 = vsel %vm680, %v6593, %v6595
      %v6597 = vrot.slane %v4913, 2
      %v6598 = vrot.slane %v4914, 2
      %v6599 = vsel %vm680, %v6597, %v6598
      %v6600 = vrot.slane %v4915, 2
      %v6601 = vsel %vm680, %v6598, %v6600
      %v6602 = vrot.slane %v4916, 2
      %v6603 = vrot.slane %v4917, 2
      %v6604 = vsel %vm680, %v6602, %v6603
      %v6605 = vrot.slane %v4918, 2
      %v6606 = vsel %vm680, %v6603, %v6605
      %v6607 = vrot.slane %v4919, 2
      %v6608 = vrot.slane %v4920, 2
      %v6609 = vsel %vm680, %v6607, %v6608
      %v6610 = vrot.slane %v4921, 2
      %v6611 = vsel %vm680, %v6608, %v6610
      %v6612 = vrot.slane %v4922, 2
      %v6613 = vrot.slane %v4923, 2
      %v6614 = vsel %vm680, %v6612, %v6613
      %v6615 = vrot.slane %v4924, 2
      %v6616 = vsel %vm680, %v6613, %v6615
      %v6617 = vrot.slane %v4925, 2
      %v6618 = vrot.slane %v4926, 2
      %v6619 = vsel %vm680, %v6617, %v6618
      %v6620 = vrot.slane %v4927, 2
      %v6621 = vsel %vm680, %v6618, %v6620
      %v6622 = vrot.slane %v4928, 2
      %v6623 = vrot.slane %v4929, 2
      %v6624 = vsel %vm680, %v6622, %v6623
      %v6625 = vrot.slane %v4930, 2
      %v6626 = vsel %vm680, %v6623, %v6625
      %v6627 = vrot.slane %v4931, 2
      %v6628 = vrot.slane %v4932, 2
      %v6629 = vsel %vm680, %v6627, %v6628
      %v6630 = vrot.slane %v4933, 2
      %v6631 = vsel %vm680, %v6628, %v6630
      %v6632 = vrot.slane %v4934, 2
      %v6633 = vrot.slane %v4935, 2
      %v6634 = vsel %vm680, %v6632, %v6633
      %v6635 = vrot.slane %v4936, 2
      %v6636 = vsel %vm680, %v6633, %v6635
      %v6637 = vrot.slane %v4937, 2
      %v6638 = vrot.slane %v4938, 2
      %v6639 = vsel %vm680, %v6637, %v6638
      %v6640 = vrot.slane %v4939, 2
      %v6641 = vsel %vm680, %v6638, %v6640
      %v6642 = vrot.slane %v4940, 2
      %v6643 = vrot.slane %v4941, 2
      %v6644 = vsel %vm680, %v6642, %v6643
      %v6645 = vrot.slane %v4942, 2
      %v6646 = vsel %vm680, %v6643, %v6645
      %v6647 = vrot.slane %v4943, 2
      %v6648 = vrot.slane %v4944, 2
      %v6649 = vsel %vm680, %v6647, %v6648
      %v6650 = vrot.slane %v4945, 2
      %v6651 = vsel %vm680, %v6648, %v6650
      %v6652 = vrot.slane %v4946, 2
      %v6653 = vrot.slane %v4947, 2
      %v6654 = vsel %vm680, %v6652, %v6653
      %v6655 = vrot.slane %v4948, 2
      %v6656 = vsel %vm680, %v6653, %v6655
      %6657 = vrot.lane.b32.xlu0 %v6579, 64
      %v6658 = vpop.permute.xlu0 %6657
      %6659 = vrot.lane.b32.xlu0 %v6581, 64
      %v6660 = vpop.permute.xlu0 %6659
      %6661 = vrot.lane.b32.xlu0 %v6584, 64
      %v6662 = vpop.permute.xlu0 %6661
      %6663 = vrot.lane.b32.xlu0 %v6586, 64
      %v6664 = vpop.permute.xlu0 %6663
      %6665 = vrot.lane.b32.xlu0 %v6589, 64
      %v6666 = vpop.permute.xlu0 %6665
      %6667 = vrot.lane.b32.xlu0 %v6591, 64
      %v6668 = vpop.permute.xlu0 %6667
      %6669 = vrot.lane.b32.xlu0 %v6594, 64
      %v6670 = vpop.permute.xlu0 %6669
      %6671 = vrot.lane.b32.xlu0 %v6596, 64
      %v6672 = vpop.permute.xlu0 %6671
      %6673 = vrot.lane.b32.xlu0 %v6599, 64
      %v6674 = vpop.permute.xlu0 %6673
      %6675 = vrot.lane.b32.xlu0 %v6601, 64
      %v6676 = vpop.permute.xlu0 %6675
      %6677 = vrot.lane.b32.xlu0 %v6604, 64
      %v6678 = vpop.permute.xlu0 %6677
      %6679 = vrot.lane.b32.xlu0 %v6606, 64
      %v6680 = vpop.permute.xlu0 %6679
      %6681 = vrot.lane.b32.xlu0 %v6609, 64
      %v6682 = vpop.permute.xlu0 %6681
      %6683 = vrot.lane.b32.xlu0 %v6611, 64
      %v6684 = vpop.permute.xlu0 %6683
      %6685 = vrot.lane.b32.xlu0 %v6614, 64
      %v6686 = vpop.permute.xlu0 %6685
      %6687 = vrot.lane.b32.xlu0 %v6616, 64
      %v6688 = vpop.permute.xlu0 %6687
      %6689 = vrot.lane.b32.xlu0 %v6619, 64
      %v6690 = vpop.permute.xlu0 %6689
      %6691 = vrot.lane.b32.xlu0 %v6621, 64
      %v6692 = vpop.permute.xlu0 %6691
      %6693 = vrot.lane.b32.xlu0 %v6624, 64
      %v6694 = vpop.permute.xlu0 %6693
      %6695 = vrot.lane.b32.xlu0 %v6626, 64
      %v6696 = vpop.permute.xlu0 %6695
      %6697 = vrot.lane.b32.xlu0 %v6629, 64
      %v6698 = vpop.permute.xlu0 %6697
      %6699 = vrot.lane.b32.xlu0 %v6631, 64
      %v6700 = vpop.permute.xlu0 %6699
      %6701 = vrot.lane.b32.xlu0 %v6634, 64
      %v6702 = vpop.permute.xlu0 %6701
      %6703 = vrot.lane.b32.xlu0 %v6636, 64
      %v6704 = vpop.permute.xlu0 %6703
      %6705 = vrot.lane.b32.xlu0 %v6639, 64
      %v6706 = vpop.permute.xlu0 %6705
      %6707 = vrot.lane.b32.xlu0 %v6641, 64
      %v6708 = vpop.permute.xlu0 %6707
      %6709 = vrot.lane.b32.xlu0 %v6644, 64
      %v6710 = vpop.permute.xlu0 %6709
      %6711 = vrot.lane.b32.xlu0 %v6646, 64
      %v6712 = vpop.permute.xlu0 %6711
      %6713 = vrot.lane.b32.xlu0 %v6649, 64
      %v6714 = vpop.permute.xlu0 %6713
      %6715 = vrot.lane.b32.xlu0 %v6651, 64
      %v6716 = vpop.permute.xlu0 %6715
      %6717 = vrot.lane.b32.xlu0 %v6654, 64
      %v6718 = vpop.permute.xlu0 %6717
      %6719 = vrot.lane.b32.xlu0 %v6656, 64
      %v6720 = vpop.permute.xlu0 %6719
      %v6801 = vrot.slane %v6481, 4
      %v6802 = vrot.slane %v6482, 4
      %v6803 = vsel %vm1034, %v6801, %v6802
      %v6804 = vrot.slane %v6483, 4
      %v6805 = vsel %vm1034, %v6802, %v6804
      %v6806 = vrot.slane %v6484, 4
      %v6807 = vrot.slane %v6485, 4
      %v6808 = vsel %vm1034, %v6806, %v6807
      %v6809 = vrot.slane %v6486, 4
      %v6810 = vsel %vm1034, %v6807, %v6809
      %v6811 = vrot.slane %v6487, 4
      %v6812 = vrot.slane %v6488, 4
      %v6813 = vsel %vm1034, %v6811, %v6812
      %v6814 = vrot.slane %v6489, 4
      %v6815 = vsel %vm1034, %v6812, %v6814
      %v6816 = vrot.slane %v6490, 4
      %v6817 = vrot.slane %v6491, 4
      %v6818 = vsel %vm1034, %v6816, %v6817
      %v6819 = vrot.slane %v6492, 4
      %v6820 = vsel %vm1034, %v6817, %v6819
      %v6821 = vrot.slane %v6493, 4
      %v6822 = vrot.slane %v6494, 4
      %v6823 = vsel %vm1034, %v6821, %v6822
      %v6824 = vrot.slane %v6495, 4
      %v6825 = vsel %vm1034, %v6822, %v6824
      %v6826 = vrot.slane %v6496, 4
      %v6827 = vrot.slane %v6497, 4
      %v6828 = vsel %vm1034, %v6826, %v6827
      %v6829 = vrot.slane %v6498, 4
      %v6830 = vsel %vm1034, %v6827, %v6829
      %v6831 = vrot.slane %v6499, 4
      %v6832 = vrot.slane %v6500, 4
      %v6833 = vsel %vm1034, %v6831, %v6832
      %v6834 = vrot.slane %v6501, 4
      %v6835 = vsel %vm1034, %v6832, %v6834
      %v6836 = vrot.slane %v6502, 4
      %v6837 = vrot.slane %v6503, 4
      %v6838 = vsel %vm1034, %v6836, %v6837
      %v6839 = vrot.slane %v6504, 4
      %v6840 = vsel %vm1034, %v6837, %v6839
      %v6841 = vrot.slane %v6505, 4
      %v6842 = vrot.slane %v6506, 4
      %v6843 = vsel %vm1034, %v6841, %v6842
      %v6844 = vrot.slane %v6507, 4
      %v6845 = vsel %vm1034, %v6842, %v6844
      %v6846 = vrot.slane %v6508, 4
      %v6847 = vrot.slane %v6509, 4
      %v6848 = vsel %vm1034, %v6846, %v6847
      %v6849 = vrot.slane %v6510, 4
      %v6850 = vsel %vm1034, %v6847, %v6849
      %v6851 = vrot.slane %v6511, 4
      %v6852 = vrot.slane %v6512, 4
      %v6853 = vsel %vm1034, %v6851, %v6852
      %v6854 = vrot.slane %v6513, 4
      %v6855 = vsel %vm1034, %v6852, %v6854
      %v6856 = vrot.slane %v6514, 4
      %v6857 = vrot.slane %v6515, 4
      %v6858 = vsel %vm1034, %v6856, %v6857
      %v6859 = vrot.slane %v6516, 4
      %v6860 = vsel %vm1034, %v6857, %v6859
      %v6861 = vrot.slane %v6517, 4
      %v6862 = vrot.slane %v6518, 4
      %v6863 = vsel %vm1034, %v6861, %v6862
      %v6864 = vrot.slane %v6519, 4
      %v6865 = vsel %vm1034, %v6862, %v6864
      %v6866 = vrot.slane %v6520, 4
      %v6867 = vrot.slane %v6521, 4
      %v6868 = vsel %vm1034, %v6866, %v6867
      %v6869 = vrot.slane %v6522, 4
      %v6870 = vsel %vm1034, %v6867, %v6869
      %v6871 = vrot.slane %v6523, 4
      %v6872 = vrot.slane %v6524, 4
      %v6873 = vsel %vm1034, %v6871, %v6872
      %v6874 = vrot.slane %v6525, 4
      %v6875 = vsel %vm1034, %v6872, %v6874
      %v6876 = vrot.slane %v6526, 4
      %v6877 = vrot.slane %v6527, 4
      %v6878 = vsel %vm1034, %v6876, %v6877
      %v6879 = vrot.slane %v6528, 4
      %v6880 = vsel %vm1034, %v6877, %v6879
      %6913 = vrot.lane.b32.xlu0 %v1421, 64
      %v6914 = vpop.permute.xlu0 %6913
      %6915 = vrot.lane.b32.xlu0 %v1423, 64
      %v6916 = vpop.permute.xlu0 %6915
      %6917 = vrot.lane.b32.xlu0 %v1426, 64
      %v6918 = vpop.permute.xlu0 %6917
      %6919 = vrot.lane.b32.xlu0 %v1428, 64
      %v6920 = vpop.permute.xlu0 %6919
      %6921 = vrot.lane.b32.xlu0 %v1431, 64
      %v6922 = vpop.permute.xlu0 %6921
      %6923 = vrot.lane.b32.xlu0 %v1433, 64
      %v6924 = vpop.permute.xlu0 %6923
      %6925 = vrot.lane.b32.xlu0 %v1436, 64
      %v6926 = vpop.permute.xlu0 %6925
      %6927 = vrot.lane.b32.xlu0 %v1438, 64
      %v6928 = vpop.permute.xlu0 %6927
      %6929 = vrot.lane.b32.xlu0 %v1441, 64
      %v6930 = vpop.permute.xlu0 %6929
      %6931 = vrot.lane.b32.xlu0 %v1443, 64
      %v6932 = vpop.permute.xlu0 %6931
      %6933 = vrot.lane.b32.xlu0 %v1446, 64
      %v6934 = vpop.permute.xlu0 %6933
      %6935 = vrot.lane.b32.xlu0 %v1448, 64
      %v6936 = vpop.permute.xlu0 %6935
      %6937 = vrot.lane.b32.xlu0 %v1451, 64
      %v6938 = vpop.permute.xlu0 %6937
      %6939 = vrot.lane.b32.xlu0 %v1453, 64
      %v6940 = vpop.permute.xlu0 %6939
      %6941 = vrot.lane.b32.xlu0 %v1456, 64
      %v6942 = vpop.permute.xlu0 %6941
      %6943 = vrot.lane.b32.xlu0 %v1458, 64
      %v6944 = vpop.permute.xlu0 %6943
      %6945 = vrot.lane.b32.xlu0 %v1461, 64
      %v6946 = vpop.permute.xlu0 %6945
      %6947 = vrot.lane.b32.xlu0 %v1463, 64
      %v6948 = vpop.permute.xlu0 %6947
      %6949 = vrot.lane.b32.xlu0 %v1466, 64
      %v6950 = vpop.permute.xlu0 %6949
      %6951 = vrot.lane.b32.xlu0 %v1468, 64
      %v6952 = vpop.permute.xlu0 %6951
      %6953 = vrot.lane.b32.xlu0 %v2171, 64
      %v6954 = vpop.permute.xlu0 %6953
      %6955 = vrot.lane.b32.xlu0 %v2173, 64
      %v6956 = vpop.permute.xlu0 %6955
      %6957 = vrot.lane.b32.xlu0 %v3223, 64
      %v6958 = vpop.permute.xlu0 %6957
      %6959 = vrot.lane.b32.xlu0 %v5308, 64
      %v6960 = vpop.permute.xlu0 %6959
      %6961 = vrot.lane.b32.xlu0 %v3226, 64
      %v6962 = vpop.permute.xlu0 %6961
      %6963 = vrot.lane.b32.xlu0 %v5310, 64
      %v6964 = vpop.permute.xlu0 %6963
      %6965 = vrot.lane.b32.xlu0 %v3921, 64
      %v6966 = vpop.permute.xlu0 %6965
      %6967 = vrot.lane.b32.xlu0 %v5312, 64
      %v6968 = vpop.permute.xlu0 %6967
      %6969 = vrot.lane.b32.xlu0 %v5315, 64
      %v6970 = vpop.permute.xlu0 %6969
      %6971 = vrot.lane.b32.xlu0 %v5317, 64
      %v6972 = vpop.permute.xlu0 %6971
      %6973 = vrot.lane.b32.xlu0 %v5766, 64
      %v6974 = vpop.permute.xlu0 %6973
      %6975 = vrot.lane.b32.xlu0 %v5768, 64
      %v6976 = vpop.permute.xlu0 %6975
      %vm7009 = vcmask 523264
      %v7010 = vsel %vm7009, %v2932, %v6658
      %v7011 = vsel %vm7009, %v2933, %v6660
      %v7012 = vsel %vm7009, %v2934, %v6662
      %v7013 = vsel %vm7009, %v2935, %v6664
      %v7014 = vsel %vm7009, %v2936, %v6666
      %v7015 = vsel %vm7009, %v2937, %v6668
      %v7016 = vsel %vm7009, %v2938, %v6670
      %v7017 = vsel %vm7009, %v2939, %v6672
      %v7018 = vsel %vm7009, %v2940, %v6674
      %v7019 = vsel %vm7009, %v2941, %v6676
      %v7020 = vsel %vm7009, %v2942, %v6678
      %v7021 = vsel %vm7009, %v2943, %v6680
      %v7022 = vsel %vm7009, %v2944, %v6682
      %v7023 = vsel %vm7009, %v2945, %v6684
      %v7024 = vsel %vm7009, %v2946, %v6686
      %v7025 = vsel %vm7009, %v2947, %v6688
      %v7026 = vsel %vm7009, %v2948, %v6690
      %v7027 = vsel %vm7009, %v2949, %v6692
      %v7028 = vsel %vm7009, %v2950, %v6694
      %v7029 = vsel %vm7009, %v2951, %v6696
      %v7030 = vsel %vm7009, %v2952, %v6698
      %v7031 = vsel %vm7009, %v2953, %v6700
      %v7032 = vsel %vm7009, %v2954, %v6702
      %v7033 = vsel %vm7009, %v2955, %v6704
      %v7034 = vsel %vm7009, %v2956, %v6706
      %v7035 = vsel %vm7009, %v2957, %v6708
      %v7036 = vsel %vm7009, %v2958, %v6710
      %v7037 = vsel %vm7009, %v2959, %v6712
      %v7038 = vsel %vm7009, %v2960, %v6714
      %v7039 = vsel %vm7009, %v2961, %v6716
      %v7040 = vsel %vm7009, %v2962, %v6718
      %v7041 = vsel %vm7009, %v2963, %v6720
      %v7042 = vsel %vm7009, %v6803, %v6914
      %v7043 = vsel %vm7009, %v6805, %v6916
      %v7044 = vsel %vm7009, %v6808, %v6918
      %v7045 = vsel %vm7009, %v6810, %v6920
      %v7046 = vsel %vm7009, %v6813, %v6922
      %v7047 = vsel %vm7009, %v6815, %v6924
      %v7048 = vsel %vm7009, %v6818, %v6926
      %v7049 = vsel %vm7009, %v6820, %v6928
      %v7050 = vsel %vm7009, %v6823, %v6930
      %v7051 = vsel %vm7009, %v6825, %v6932
      %v7052 = vsel %vm7009, %v6828, %v6934
      %v7053 = vsel %vm7009, %v6830, %v6936
      %v7054 = vsel %vm7009, %v6833, %v6938
      %v7055 = vsel %vm7009, %v6835, %v6940
      %v7056 = vsel %vm7009, %v6838, %v6942
      %v7057 = vsel %vm7009, %v6840, %v6944
      %v7058 = vsel %vm7009, %v6843, %v6946
      %v7059 = vsel %vm7009, %v6845, %v6948
      %v7060 = vsel %vm7009, %v6848, %v6950
      %v7061 = vsel %vm7009, %v6850, %v6952
      %v7062 = vsel %vm7009, %v6853, %v6954
      %v7063 = vsel %vm7009, %v6855, %v6956
      %v7064 = vsel %vm7009, %v6858, %v6958
      %v7065 = vsel %vm7009, %v6860, %v6960
      %v7066 = vsel %vm7009, %v6863, %v6962
      %v7067 = vsel %vm7009, %v6865, %v6964
      %v7068 = vsel %vm7009, %v6868, %v6966
      %v7069 = vsel %vm7009, %v6870, %v6968
      %v7070 = vsel %vm7009, %v6873, %v6970
      %v7071 = vsel %vm7009, %v6875, %v6972
      %v7072 = vsel %vm7009, %v6878, %v6974
      %v7073 = vsel %vm7009, %v6880, %v6976
      %v7074 = vld [vmem:[%s1] sm:$0xff]
      %v7075 = vld [vmem:[%s1 + $0x8] sm:$0xff]
      %v7076 = vld [vmem:[%s1 + $0x10] sm:$0xff]
      %v7077 = vld [vmem:[%s1 + $0x18] sm:$0xff]
      %v7078 = vld [vmem:[%s1 + $0x20] sm:$0xff]
      %v7079 = vld [vmem:[%s1 + $0x28] sm:$0xff]
      %v7080 = vld [vmem:[%s1 + $0x30] sm:$0xff]
      %v7081 = vld [vmem:[%s1 + $0x38] sm:$0xff]
      %v7082 = vld [vmem:[%s1 + $0x40] sm:$0xff]
      %v7083 = vld [vmem:[%s1 + $0x48] sm:$0xff]
      %v7084 = vld [vmem:[%s1 + $0x50] sm:$0xff]
      %v7085 = vld [vmem:[%s1 + $0x58] sm:$0xff]
      %v7086 = vld [vmem:[%s1 + $0x60] sm:$0xff]
      %v7087 = vld [vmem:[%s1 + $0x68] sm:$0xff]
      %v7088 = vld [vmem:[%s1 + $0x70] sm:$0xff]
      %v7089 = vld [vmem:[%s1 + $0x78] sm:$0xff]
      %v7090 = vld [vmem:[%s1 + $0x80] sm:$0xff]
      %v7091 = vld [vmem:[%s1 + $0x88] sm:$0xff]
      %v7092 = vld [vmem:[%s1 + $0x90] sm:$0xff]
      %v7093 = vld [vmem:[%s1 + $0x98] sm:$0xff]
      %v7094 = vld [vmem:[%s1 + $0xa0] sm:$0xff]
      %v7095 = vld [vmem:[%s1 + $0xa8] sm:$0xff]
      %v7096 = vld [vmem:[%s1 + $0xb0] sm:$0xff]
      %v7097 = vld [vmem:[%s1 + $0xb8] sm:$0xff]
      %v7098 = vld [vmem:[%s1 + $0xc0] sm:$0xf]
      %v7099 = vld [vmem:[%s2] sm:$0x1]
      %v7101 = vlaneseq
      %v7102 = vshrl.u32 %v7101, 7
      %v7103 = vsub.s32 0, %v7102
      %v7104 = vrot.slane %v7099, %v7103
      %vm7106 = vcmask 556032
      %v7108 = vsel %vm7106, %v7042, 0
      %v7111 = vsel %vm7106, %v7043, 0
      %v7114 = vsel %vm7106, %v7044, 0
      %v7117 = vsel %vm7106, %v7045, 0
      %v7120 = vsel %vm7106, %v7046, 0
      %v7123 = vsel %vm7106, %v7047, 0
      %v7126 = vsel %vm7106, %v7048, 0
      %v7129 = vsel %vm7106, %v7049, 0
      %v7132 = vsel %vm7106, %v7050, 0
      %v7135 = vsel %vm7106, %v7051, 0
      %v7138 = vsel %vm7106, %v7052, 0
      %v7141 = vsel %vm7106, %v7053, 0
      %v7144 = vsel %vm7106, %v7054, 0
      %v7147 = vsel %vm7106, %v7055, 0
      %v7150 = vsel %vm7106, %v7056, 0
      %v7153 = vsel %vm7106, %v7057, 0
      %v7156 = vsel %vm7106, %v7058, 0
      %v7159 = vsel %vm7106, %v7059, 0
      %v7162 = vsel %vm7106, %v7060, 0
      %v7165 = vsel %vm7106, %v7061, 0
      %v7168 = vsel %vm7106, %v7062, 0
      %v7171 = vsel %vm7106, %v7063, 0
      %v7174 = vsel %vm7106, %v7064, 0
      %v7177 = vsel %vm7106, %v7065, 0
      %v7180 = vsel %vm7106, %v7066, 0
      %v7183 = vsel %vm7106, %v7067, 0
      %v7186 = vsel %vm7106, %v7068, 0
      %v7189 = vsel %vm7106, %v7069, 0
      %v7192 = vsel %vm7106, %v7070, 0
      %v7195 = vsel %vm7106, %v7071, 0
      %v7198 = vsel %vm7106, %v7072, 0
      %v7201 = vsel %vm7106, %v7073, 0
      %v7204 = vsel %vm1034, %v7098, 0
      %7206 = vmatprep.subr.mxu0 0.0
      %7207 = vmatpush1.msra.mxu0 %v7074
      %7208 = vmatprep.subr.mxu0 0.0
      %7209 = vmatpush1.msra.mxu0 %v7075
      %7210 = vmatprep.subr.mxu0 0.0
      %7211 = vmatpush1.msra.mxu0 %v7076
      %7212 = vmatprep.subr.mxu0 0.0
      %7213 = vmatpush1.msra.mxu0 %v7077
      %7214 = vmatprep.subr.mxu0 0.0
      %7215 = vmatpush1.msra.mxu0 %v7078
      %7216 = vmatprep.subr.mxu0 0.0
      %7217 = vmatpush1.msra.mxu0 %v7079
      %7218 = vmatprep.subr.mxu0 0.0
      %7219 = vmatpush1.msra.mxu0 %v7080
      %7220 = vmatprep.subr.mxu0 0.0
      %7221 = vmatpush1.msra.mxu0 %v7081
      %7222 = vmatprep.subr.mxu0 0.0
      %7223 = vmatpush1.msra.mxu0 %v7082
      %7224 = vmatprep.subr.mxu0 0.0
      %7225 = vmatpush1.msra.mxu0 %v7083
      %7226 = vmatprep.subr.mxu0 0.0
      %7227 = vmatpush1.msra.mxu0 %v7084
      %7228 = vmatprep.subr.mxu0 0.0
      %7229 = vmatpush1.msra.mxu0 %v7085
      %7230 = vmatprep.subr.mxu0 0.0
      %7231 = vmatpush1.msra.mxu0 %v7086
      %7232 = vmatprep.subr.mxu0 0.0
      %7233 = vmatpush1.msra.mxu0 %v7087
      %7234 = vmatprep.subr.mxu0 0.0
      %7235 = vmatpush1.msra.mxu0 %v7088
      %7236 = vmatprep.subr.mxu0 0.0
      %7237 = vmatpush1.msra.mxu0 %v7089
      %7238 = vmatprep.subr.mxu0 0.0
      %7239 = vmatpush1.msra.mxu0 %v7090
      %7240 = vmatprep.subr.mxu0 0.0
      %7241 = vmatpush1.msra.mxu0 %v7091
      %7242 = vmatprep.subr.mxu0 0.0
      %7243 = vmatpush1.msra.mxu0 %v7092
      %7244 = vmatprep.subr.mxu0 0.0
      %7245 = vmatpush1.msra.mxu0 %v7093
      %7246 = vmatprep.subr.mxu0 0.0
      %7247 = vmatpush1.msra.mxu0 %v7094
      %7248 = vmatprep.subr.mxu0 0.0
      %7249 = vmatpush1.msra.mxu0 %v7095
      %7250 = vmatprep.subr.mxu0 0.0
      %7251 = vmatpush1.msra.mxu0 %v7096
      %7252 = vmatprep.subr.mxu0 0.0
      %7253 = vmatpush1.msra.mxu0 %v7097
      %7254 = vmatprep.subr.mxu0 0.0
      %7255 = vmatpush1.msra.mxu0 %v7204
      %7256 = vmatprep.subr.mxu0 0.0
      %7257 = vmatpush1.msra.mxu0 0.0
      %7258 = vmatprep.subr.mxu0 0.0
      %7259 = vmatpush1.msra.mxu0 0.0
      %7260 = vmatprep.subr.mxu0 0.0
      %7261 = vmatpush1.msra.mxu0 0.0
      %7262 = vmatprep.subr.mxu0 0.0
      %7263 = vmatpush1.msra.mxu0 0.0
      %7264 = vmatprep.subr.mxu0 0.0
      %7265 = vmatpush1.msra.mxu0 0.0
      %7266 = vmatprep.subr.mxu0 0.0
      %7267 = vmatpush1.msra.mxu0 0.0
      %7268 = vmatprep.subr.mxu0 0.0
      %7269 = vmatpush1.msra.mxu0 0.0
      %7270 = vmatprep.mubr.f32.mxu0 %v7108
      %7271 = vmatmul.mubr.f32.gmra.mrb[0].mxu0 %v7010
      %v7272 = vpop.f32.mrb[0].mxu0
      %v7273 = vadd.f32 %v7104, %v7272
      %v7274 = vpop.f32.mrb[0].mxu0
      %7275 = vmatprep.mubr.f32.mxu0 %v7111
      %7276 = vmatmul.mubr.f32.gmra.mrb[0].mxu0 %v7011
      %v7277 = vpop.f32.mrb[0].mxu0
      %v7278 = vadd.f32 %v7104, %v7277
      %v7279 = vpop.f32.mrb[0].mxu0
      %7280 = vmatprep.mubr.f32.mxu0 %v7114
      %7281 = vmatmul.mubr.f32.gmra.mrb[0].mxu0 %v7012
      %v7282 = vpop.f32.mrb[0].mxu0
      %v7283 = vadd.f32 %v7104, %v7282
      %v7284 = vpop.f32.mrb[0].mxu0
      %7285 = vmatprep.mubr.f32.mxu0 %v7117
      %7286 = vmatmul.mubr.f32.gmra.mrb[0].mxu0 %v7013
      %v7287 = vpop.f32.mrb[0].mxu0
      %v7288 = vadd.f32 %v7104, %v7287
      %v7289 = vpop.f32.mrb[0].mxu0
      %7290 = vmatprep.mubr.f32.mxu0 %v7120
      %7291 = vmatmul.mubr.f32.gmra.mrb[0].mxu0 %v7014
      %v7292 = vpop.f32.mrb[0].mxu0
      %v7293 = vadd.f32 %v7104, %v7292
      %v7294 = vpop.f32.mrb[0].mxu0
      %7295 = vmatprep.mubr.f32.mxu0 %v7123
      %7296 = vmatmul.mubr.f32.gmra.mrb[0].mxu0 %v7015
      %v7297 = vpop.f32.mrb[0].mxu0
      %v7298 = vadd.f32 %v7104, %v7297
      %v7299 = vpop.f32.mrb[0].mxu0
      %7300 = vmatprep.mubr.f32.mxu0 %v7126
      %7301 = vmatmul.mubr.f32.gmra.mrb[0].mxu0 %v7016
      %v7302 = vpop.f32.mrb[0].mxu0
      %v7303 = vadd.f32 %v7104, %v7302
      %v7304 = vpop.f32.mrb[0].mxu0
      %7305 = vmatprep.mubr.f32.mxu0 %v7129
      %7306 = vmatmul.mubr.f32.gmra.mrb[0].mxu0 %v7017
      %v7307 = vpop.f32.mrb[0].mxu0
      %v7308 = vadd.f32 %v7104, %v7307
      %v7309 = vpop.f32.mrb[0].mxu0
      %7310 = vmatprep.mubr.f32.mxu0 %v7132
      %7311 = vmatmul.mubr.f32.gmra.mrb[0].mxu0 %v7018
      %v7312 = vpop.f32.mrb[0].mxu0
      %v7313 = vadd.f32 %v7104, %v7312
      %v7314 = vpop.f32.mrb[0].mxu0
      %7315 = vmatprep.mubr.f32.mxu0 %v7135
      %7316 = vmatmul.mubr.f32.gmra.mrb[0].mxu0 %v7019
      %v7317 = vpop.f32.mrb[0].mxu0
      %v7318 = vadd.f32 %v7104, %v7317
      %v7319 = vpop.f32.mrb[0].mxu0
      %7320 = vmatprep.mubr.f32.mxu0 %v7138
      %7321 = vmatmul.mubr.f32.gmra.mrb[0].mxu0 %v7020
      %v7322 = vpop.f32.mrb[0].mxu0
      %v7323 = vadd.f32 %v7104, %v7322
      %v7324 = vpop.f32.mrb[0].mxu0
      %7325 = vmatprep.mubr.f32.mxu0 %v7141
      %7326 = vmatmul.mubr.f32.gmra.mrb[0].mxu0 %v7021
      %v7327 = vpop.f32.mrb[0].mxu0
      %v7328 = vadd.f32 %v7104, %v7327
      %v7329 = vpop.f32.mrb[0].mxu0
      %7330 = vmatprep.mubr.f32.mxu0 %v7144
      %7331 = vmatmul.mubr.f32.gmra.mrb[0].mxu0 %v7022
      %v7332 = vpop.f32.mrb[0].mxu0
      %v7333 = vadd.f32 %v7104, %v7332
      %v7334 = vpop.f32.mrb[0].mxu0
      %7335 = vmatprep.mubr.f32.mxu0 %v7147
      %7336 = vmatmul.mubr.f32.gmra.mrb[0].mxu0 %v7023
      %v7337 = vpop.f32.mrb[0].mxu0
      %v7338 = vadd.f32 %v7104, %v7337
      %v7339 = vpop.f32.mrb[0].mxu0
      %7340 = vmatprep.mubr.f32.mxu0 %v7150
      %7341 = vmatmul.mubr.f32.gmra.mrb[0].mxu0 %v7024
      %v7342 = vpop.f32.mrb[0].mxu0
      %v7343 = vadd.f32 %v7104, %v7342
      %v7344 = vpop.f32.mrb[0].mxu0
      %7345 = vmatprep.mubr.f32.mxu0 %v7153
      %7346 = vmatmul.mubr.f32.gmra.mrb[0].mxu0 %v7025
      %v7347 = vpop.f32.mrb[0].mxu0
      %v7348 = vadd.f32 %v7104, %v7347
      %v7349 = vpop.f32.mrb[0].mxu0
      %7350 = vmatprep.mubr.f32.mxu0 %v7156
      %7351 = vmatmul.mubr.f32.gmra.mrb[0].mxu0 %v7026
      %v7352 = vpop.f32.mrb[0].mxu0
      %v7353 = vadd.f32 %v7104, %v7352
      %v7354 = vpop.f32.mrb[0].mxu0
      %7355 = vmatprep.mubr.f32.mxu0 %v7159
      %7356 = vmatmul.mubr.f32.gmra.mrb[0].mxu0 %v7027
      %v7357 = vpop.f32.mrb[0].mxu0
      %v7358 = vadd.f32 %v7104, %v7357
      %v7359 = vpop.f32.mrb[0].mxu0
      %7360 = vmatprep.mubr.f32.mxu0 %v7162
      %7361 = vmatmul.mubr.f32.gmra.mrb[0].mxu0 %v7028
      %v7362 = vpop.f32.mrb[0].mxu0
      %v7363 = vadd.f32 %v7104, %v7362
      %v7364 = vpop.f32.mrb[0].mxu0
      %7365 = vmatprep.mubr.f32.mxu0 %v7165
      %7366 = vmatmul.mubr.f32.gmra.mrb[0].mxu0 %v7029
      %v7367 = vpop.f32.mrb[0].mxu0
      %v7368 = vadd.f32 %v7104, %v7367
      %v7369 = vpop.f32.mrb[0].mxu0
      %7370 = vmatprep.mubr.f32.mxu0 %v7168
      %7371 = vmatmul.mubr.f32.gmra.mrb[0].mxu0 %v7030
      %v7372 = vpop.f32.mrb[0].mxu0
      %v7373 = vadd.f32 %v7104, %v7372
      %v7374 = vpop.f32.mrb[0].mxu0
      %7375 = vmatprep.mubr.f32.mxu0 %v7171
      %7376 = vmatmul.mubr.f32.gmra.mrb[0].mxu0 %v7031
      %v7377 = vpop.f32.mrb[0].mxu0
      %v7378 = vadd.f32 %v7104, %v7377
      %v7379 = vpop.f32.mrb[0].mxu0
      %7380 = vmatprep.mubr.f32.mxu0 %v7174
      %7381 = vmatmul.mubr.f32.gmra.mrb[0].mxu0 %v7032
      %v7382 = vpop.f32.mrb[0].mxu0
      %v7383 = vadd.f32 %v7104, %v7382
      %v7384 = vpop.f32.mrb[0].mxu0
      %7385 = vmatprep.mubr.f32.mxu0 %v7177
      %7386 = vmatmul.mubr.f32.gmra.mrb[0].mxu0 %v7033
      %v7387 = vpop.f32.mrb[0].mxu0
      %v7388 = vadd.f32 %v7104, %v7387
      %v7389 = vpop.f32.mrb[0].mxu0
      %7390 = vmatprep.mubr.f32.mxu0 %v7180
      %7391 = vmatmul.mubr.f32.gmra.mrb[0].mxu0 %v7034
      %v7392 = vpop.f32.mrb[0].mxu0
      %v7393 = vadd.f32 %v7104, %v7392
      %v7394 = vpop.f32.mrb[0].mxu0
      %7395 = vmatprep.mubr.f32.mxu0 %v7183
      %7396 = vmatmul.mubr.f32.gmra.mrb[0].mxu0 %v7035
      %v7397 = vpop.f32.mrb[0].mxu0
      %v7398 = vadd.f32 %v7104, %v7397
      %v7399 = vpop.f32.mrb[0].mxu0
      %7400 = vmatprep.mubr.f32.mxu0 %v7186
      %7401 = vmatmul.mubr.f32.gmra.mrb[0].mxu0 %v7036
      %v7402 = vpop.f32.mrb[0].mxu0
      %v7403 = vadd.f32 %v7104, %v7402
      %v7404 = vpop.f32.mrb[0].mxu0
      %7405 = vmatprep.mubr.f32.mxu0 %v7189
      %7406 = vmatmul.mubr.f32.gmra.mrb[0].mxu0 %v7037
      %v7407 = vpop.f32.mrb[0].mxu0
      %v7408 = vadd.f32 %v7104, %v7407
      %v7409 = vpop.f32.mrb[0].mxu0
      %7410 = vmatprep.mubr.f32.mxu0 %v7192
      %7411 = vmatmul.mubr.f32.gmra.mrb[0].mxu0 %v7038
      %v7412 = vpop.f32.mrb[0].mxu0
      %v7413 = vadd.f32 %v7104, %v7412
      %v7414 = vpop.f32.mrb[0].mxu0
      %7415 = vmatprep.mubr.f32.mxu0 %v7195
      %7416 = vmatmul.mubr.f32.gmra.mrb[0].mxu0 %v7039
      %v7417 = vpop.f32.mrb[0].mxu0
      %v7418 = vadd.f32 %v7104, %v7417
      %v7419 = vpop.f32.mrb[0].mxu0
      %7420 = vmatprep.mubr.f32.mxu0 %v7198
      %7421 = vmatmul.mubr.f32.gmra.mrb[0].mxu0 %v7040
      %v7422 = vpop.f32.mrb[0].mxu0
      %v7423 = vadd.f32 %v7104, %v7422
      %v7424 = vpop.f32.mrb[0].mxu0
      %7425 = vmatprep.mubr.f32.mxu0 %v7201
      %7426 = vmatmul.mubr.f32.gmra.mrb[0].mxu0 %v7041
      %v7427 = vpop.f32.mrb[0].mxu0
      %v7428 = vadd.f32 %v7104, %v7427
      %v7429 = vpop.f32.mrb[0].mxu0
      %7430 = vdwg.mxu0
      %v7431 = vmax.f32 %v7273, 0.0
      %v7432 = vmax.f32 %v7278, 0.0
      %v7433 = vmax.f32 %v7283, 0.0
      %v7434 = vmax.f32 %v7288, 0.0
      %v7435 = vmax.f32 %v7293, 0.0
      %v7436 = vmax.f32 %v7298, 0.0
      %v7437 = vmax.f32 %v7303, 0.0
      %v7438 = vmax.f32 %v7308, 0.0
      %v7439 = vmax.f32 %v7313, 0.0
      %v7440 = vmax.f32 %v7318, 0.0
      %v7441 = vmax.f32 %v7323, 0.0
      %v7442 = vmax.f32 %v7328, 0.0
      %v7443 = vmax.f32 %v7333, 0.0
      %v7444 = vmax.f32 %v7338, 0.0
      %v7445 = vmax.f32 %v7343, 0.0
      %v7446 = vmax.f32 %v7348, 0.0
      %v7447 = vmax.f32 %v7353, 0.0
      %v7448 = vmax.f32 %v7358, 0.0
      %v7449 = vmax.f32 %v7363, 0.0
      %v7450 = vmax.f32 %v7368, 0.0
      %v7451 = vmax.f32 %v7373, 0.0
      %v7452 = vmax.f32 %v7378, 0.0
      %v7453 = vmax.f32 %v7383, 0.0
      %v7454 = vmax.f32 %v7388, 0.0
      %v7455 = vmax.f32 %v7393, 0.0
      %v7456 = vmax.f32 %v7398, 0.0
      %v7457 = vmax.f32 %v7403, 0.0
      %v7458 = vmax.f32 %v7408, 0.0
      %v7459 = vmax.f32 %v7413, 0.0
      %v7460 = vmax.f32 %v7418, 0.0
      %v7461 = vmax.f32 %v7423, 0.0
      %v7462 = vmax.f32 %v7428, 0.0
      %s7463 = scalar_lea.vmem [#allocation2], 24
      %7464 = vst.msk [vmem:[%s7463 + $0x1] sm:$0xff] %vm333, %v7431
      %7465 = vst.msk [vmem:[%s7463 + $0x9] sm:$0xff] %vm333, %v7432
      %7466 = vst.msk [vmem:[%s7463 + $0x19] sm:$0xff] %vm333, %v7433
      %7467 = vst.msk [vmem:[%s7463 + $0x21] sm:$0xff] %vm333, %v7434
      %7468 = vst.msk [vmem:[%s7463 + $0x31] sm:$0xff] %vm333, %v7435
      %7469 = vst.msk [vmem:[%s7463 + $0x39] sm:$0xff] %vm333, %v7436
      %7470 = vst.msk [vmem:[%s7463 + $0x49] sm:$0xff] %vm333, %v7437
      %7471 = vst.msk [vmem:[%s7463 + $0x51] sm:$0xff] %vm333, %v7438
      %7472 = vst.msk [vmem:[%s7463 + $0x61] sm:$0xff] %vm333, %v7439
      %7473 = vst.msk [vmem:[%s7463 + $0x69] sm:$0xff] %vm333, %v7440
      %7474 = vst.msk [vmem:[%s7463 + $0x79] sm:$0xff] %vm333, %v7441
      %7475 = vst.msk [vmem:[%s7463 + $0x81] sm:$0xff] %vm333, %v7442
      %7476 = vst.msk [vmem:[%s7463 + $0x91] sm:$0xff] %vm333, %v7443
      %7477 = vst.msk [vmem:[%s7463 + $0x99] sm:$0xff] %vm333, %v7444
      %7478 = vst.msk [vmem:[%s7463 + $0xa9] sm:$0xff] %vm333, %v7445
      %7479 = vst.msk [vmem:[%s7463 + $0xb1] sm:$0xff] %vm333, %v7446
      %7480 = vst.msk [vmem:[%s7463 + $0xc1] sm:$0xff] %vm333, %v7447
      %7481 = vst.msk [vmem:[%s7463 + $0xc9] sm:$0xff] %vm333, %v7448
      %7482 = vst.msk [vmem:[%s7463 + $0xd9] sm:$0xff] %vm333, %v7449
      %7483 = vst.msk [vmem:[%s7463 + $0xe1] sm:$0xff] %vm333, %v7450
      %7484 = vst.msk [vmem:[%s7463 + $0xf1] sm:$0xff] %vm333, %v7451
      %7485 = vst.msk [vmem:[%s7463 + $0xf9] sm:$0xff] %vm333, %v7452
      %7486 = vst.msk [vmem:[%s7463 + $0x109] sm:$0xff] %vm333, %v7453
      %7487 = vst.msk [vmem:[%s7463 + $0x111] sm:$0xff] %vm333, %v7454
      %7488 = vst.msk [vmem:[%s7463 + $0x121] sm:$0xff] %vm333, %v7455
      %7489 = vst.msk [vmem:[%s7463 + $0x129] sm:$0xff] %vm333, %v7456
      %7490 = vst.msk [vmem:[%s7463 + $0x139] sm:$0xff] %vm333, %v7457
      %7491 = vst.msk [vmem:[%s7463 + $0x141] sm:$0xff] %vm333, %v7458
      %7492 = vst.msk [vmem:[%s7463 + $0x151] sm:$0xff] %vm333, %v7459
      %7493 = vst.msk [vmem:[%s7463 + $0x159] sm:$0xff] %vm333, %v7460
      %7494 = vst.msk [vmem:[%s7463 + $0x169] sm:$0xff] %vm333, %v7461
      %7495 = vst.msk [vmem:[%s7463 + $0x171] sm:$0xff] %vm333, %v7462
      %v7496 = vld [vmem:[#allocation2] sm:$0xff]
      %v7497 = vld [vmem:[#allocation2 + $0x8] sm:$0xff]
      %v7498 = vld [vmem:[#allocation2 + $0x10] sm:$0x3]
      %v7499 = vld [vmem:[#allocation2 + $0x18] sm:$0xff]
      %v7500 = vld [vmem:[#allocation2 + $0x20] sm:$0xff]
      %v7501 = vld [vmem:[#allocation2 + $0x28] sm:$0x3]
      %v7502 = vld [vmem:[#allocation2 + $0x30] sm:$0xff]
      %v7503 = vld [vmem:[#allocation2 + $0x38] sm:$0xff]
      %v7504 = vld [vmem:[#allocation2 + $0x40] sm:$0x3]
      %v7505 = vld [vmem:[#allocation2 + $0x48] sm:$0xff]
      %v7506 = vld [vmem:[#allocation2 + $0x50] sm:$0xff]
      %v7507 = vld [vmem:[#allocation2 + $0x58] sm:$0x3]
      %v7508 = vld [vmem:[#allocation2 + $0x60] sm:$0xff]
      %v7509 = vld [vmem:[#allocation2 + $0x68] sm:$0xff]
      %v7510 = vld [vmem:[#allocation2 + $0x70] sm:$0x3]
      %v7511 = vld [vmem:[#allocation2 + $0x78] sm:$0xff]
      %v7512 = vld [vmem:[#allocation2 + $0x80] sm:$0xff]
      %v7513 = vld [vmem:[#allocation2 + $0x88] sm:$0x3]
      %v7514 = vld [vmem:[#allocation2 + $0x90] sm:$0xff]
      %v7515 = vld [vmem:[#allocation2 + $0x98] sm:$0xff]
      %v7516 = vld [vmem:[#allocation2 + $0xa0] sm:$0x3]
      %v7517 = vld [vmem:[#allocation2 + $0xa8] sm:$0xff]
      %v7518 = vld [vmem:[#allocation2 + $0xb0] sm:$0xff]
      %v7519 = vld [vmem:[#allocation2 + $0xb8] sm:$0x3]
      %v7520 = vld [vmem:[#allocation2 + $0xc0] sm:$0xff]
      %v7521 = vld [vmem:[#allocation2 + $0xc8] sm:$0xff]
      %v7522 = vld [vmem:[#allocation2 + $0xd0] sm:$0x3]
      %v7523 = vld [vmem:[#allocation2 + $0xd8] sm:$0xff]
      %v7524 = vld [vmem:[#allocation2 + $0xe0] sm:$0xff]
      %v7525 = vld [vmem:[#allocation2 + $0xe8] sm:$0x3]
      %v7526 = vld [vmem:[#allocation2 + $0xf0] sm:$0xff]
      %v7527 = vld [vmem:[#allocation2 + $0xf8] sm:$0xff]
      %v7528 = vld [vmem:[#allocation2 + $0x100] sm:$0x3]
      %v7529 = vld [vmem:[#allocation2 + $0x108] sm:$0xff]
      %v7530 = vld [vmem:[#allocation2 + $0x110] sm:$0xff]
      %v7531 = vld [vmem:[#allocation2 + $0x118] sm:$0x3]
      %v7532 = vld [vmem:[#allocation2 + $0x120] sm:$0xff]
      %v7533 = vld [vmem:[#allocation2 + $0x128] sm:$0xff]
      %v7534 = vld [vmem:[#allocation2 + $0x130] sm:$0x3]
      %v7535 = vld [vmem:[#allocation2 + $0x138] sm:$0xff]
      %v7536 = vld [vmem:[#allocation2 + $0x140] sm:$0xff]
      %v7537 = vld [vmem:[#allocation2 + $0x148] sm:$0x3]
      %v7538 = vld [vmem:[#allocation2 + $0x150] sm:$0xff]
      %v7539 = vld [vmem:[#allocation2 + $0x158] sm:$0xff]
      %v7540 = vld [vmem:[#allocation2 + $0x160] sm:$0x3]
      %v7541 = vld [vmem:[#allocation2 + $0x168] sm:$0xff]
      %v7542 = vld [vmem:[#allocation2 + $0x170] sm:$0xff]
      %v7543 = vld [vmem:[#allocation2 + $0x178] sm:$0x3]
      %v7544 = vld [vmem:[#allocation2 + $0x180] sm:$0xff]
      %v7545 = vld [vmem:[#allocation2 + $0x188] sm:$0xff]
      %v7546 = vld [vmem:[#allocation2 + $0x190] sm:$0x3]
      %v7547 = vld [vmem:[#allocation2 + $0x198] sm:$0xff]
      %v7548 = vld [vmem:[#allocation2 + $0x1a0] sm:$0xff]
      %v7549 = vld [vmem:[#allocation2 + $0x1a8] sm:$0x3]
      %v7598 = vrot.slane %v7496, 1
      %v7599 = vrot.slane %v7497, 1
      %v7600 = vsel %vm503, %v7598, %v7599
      %v7601 = vrot.slane %v7498, 1
      %v7602 = vsel %vm503, %v7599, %v7601
      %v7603 = vrot.slane %v7499, 1
      %v7604 = vrot.slane %v7500, 1
      %v7605 = vsel %vm503, %v7603, %v7604
      %v7606 = vrot.slane %v7501, 1
      %v7607 = vsel %vm503, %v7604, %v7606
      %v7608 = vrot.slane %v7502, 1
      %v7609 = vrot.slane %v7503, 1
      %v7610 = vsel %vm503, %v7608, %v7609
      %v7611 = vrot.slane %v7504, 1
      %v7612 = vsel %vm503, %v7609, %v7611
      %v7613 = vrot.slane %v7505, 1
      %v7614 = vrot.slane %v7506, 1
      %v7615 = vsel %vm503, %v7613, %v7614
      %v7616 = vrot.slane %v7507, 1
      %v7617 = vsel %vm503, %v7614, %v7616
      %v7618 = vrot.slane %v7508, 1
      %v7619 = vrot.slane %v7509, 1
      %v7620 = vsel %vm503, %v7618, %v7619
      %v7621 = vrot.slane %v7510, 1
      %v7622 = vsel %vm503, %v7619, %v7621
      %v7623 = vrot.slane %v7511, 1
      %v7624 = vrot.slane %v7512, 1
      %v7625 = vsel %vm503, %v7623, %v7624
      %v7626 = vrot.slane %v7513, 1
      %v7627 = vsel %vm503, %v7624, %v7626
      %v7628 = vrot.slane %v7514, 1
      %v7629 = vrot.slane %v7515, 1
      %v7630 = vsel %vm503, %v7628, %v7629
      %v7631 = vrot.slane %v7516, 1
      %v7632 = vsel %vm503, %v7629, %v7631
      %v7633 = vrot.slane %v7517, 1
      %v7634 = vrot.slane %v7518, 1
      %v7635 = vsel %vm503, %v7633, %v7634
      %v7636 = vrot.slane %v7519, 1
      %v7637 = vsel %vm503, %v7634, %v7636
      %v7638 = vrot.slane %v7520, 1
      %v7639 = vrot.slane %v7521, 1
      %v7640 = vsel %vm503, %v7638, %v7639
      %v7641 = vrot.slane %v7522, 1
      %v7642 = vsel %vm503, %v7639, %v7641
      %v7643 = vrot.slane %v7523, 1
      %v7644 = vrot.slane %v7524, 1
      %v7645 = vsel %vm503, %v7643, %v7644
      %v7646 = vrot.slane %v7525, 1
      %v7647 = vsel %vm503, %v7644, %v7646
      %v7648 = vrot.slane %v7526, 1
      %v7649 = vrot.slane %v7527, 1
      %v7650 = vsel %vm503, %v7648, %v7649
      %v7651 = vrot.slane %v7528, 1
      %v7652 = vsel %vm503, %v7649, %v7651
      %v7653 = vrot.slane %v7529, 1
      %v7654 = vrot.slane %v7530, 1
      %v7655 = vsel %vm503, %v7653, %v7654
      %v7656 = vrot.slane %v7531, 1
      %v7657 = vsel %vm503, %v7654, %v7656
      %v7658 = vrot.slane %v7532, 1
      %v7659 = vrot.slane %v7533, 1
      %v7660 = vsel %vm503, %v7658, %v7659
      %v7661 = vrot.slane %v7534, 1
      %v7662 = vsel %vm503, %v7659, %v7661
      %v7663 = vrot.slane %v7535, 1
      %v7664 = vrot.slane %v7536, 1
      %v7665 = vsel %vm503, %v7663, %v7664
      %v7666 = vrot.slane %v7537, 1
      %v7667 = vsel %vm503, %v7664, %v7666
      %v7668 = vrot.slane %v7538, 1
      %v7669 = vrot.slane %v7539, 1
      %v7670 = vsel %vm503, %v7668, %v7669
      %v7671 = vrot.slane %v7540, 1
      %v7672 = vsel %vm503, %v7669, %v7671
      %v7673 = vrot.slane %v7541, 1
      %v7674 = vrot.slane %v7542, 1
      %v7675 = vsel %vm503, %v7673, %v7674
      %v7676 = vrot.slane %v7543, 1
      %v7677 = vsel %vm503, %v7674, %v7676
      %7678 = vrot.lane.b32.xlu0 %v7600, 32
      %v7679 = vpop.permute.xlu0 %7678
      %7680 = vrot.lane.b32.xlu0 %v7602, 32
      %v7681 = vpop.permute.xlu0 %7680
      %7682 = vrot.lane.b32.xlu0 %v7605, 32
      %v7683 = vpop.permute.xlu0 %7682
      %7684 = vrot.lane.b32.xlu0 %v7607, 32
      %v7685 = vpop.permute.xlu0 %7684
      %7686 = vrot.lane.b32.xlu0 %v7610, 32
      %v7687 = vpop.permute.xlu0 %7686
      %7688 = vrot.lane.b32.xlu0 %v7612, 32
      %v7689 = vpop.permute.xlu0 %7688
      %7690 = vrot.lane.b32.xlu0 %v7615, 32
      %v7691 = vpop.permute.xlu0 %7690
      %7692 = vrot.lane.b32.xlu0 %v7617, 32
      %v7693 = vpop.permute.xlu0 %7692
      %7694 = vrot.lane.b32.xlu0 %v7620, 32
      %v7695 = vpop.permute.xlu0 %7694
      %7696 = vrot.lane.b32.xlu0 %v7622, 32
      %v7697 = vpop.permute.xlu0 %7696
      %7698 = vrot.lane.b32.xlu0 %v7625, 32
      %v7699 = vpop.permute.xlu0 %7698
      %7700 = vrot.lane.b32.xlu0 %v7627, 32
      %v7701 = vpop.permute.xlu0 %7700
      %7702 = vrot.lane.b32.xlu0 %v7630, 32
      %v7703 = vpop.permute.xlu0 %7702
      %7704 = vrot.lane.b32.xlu0 %v7632, 32
      %v7705 = vpop.permute.xlu0 %7704
      %7706 = vrot.lane.b32.xlu0 %v7635, 32
      %v7707 = vpop.permute.xlu0 %7706
      %7708 = vrot.lane.b32.xlu0 %v7637, 32
      %v7709 = vpop.permute.xlu0 %7708
      %7710 = vrot.lane.b32.xlu0 %v7640, 32
      %v7711 = vpop.permute.xlu0 %7710
      %7712 = vrot.lane.b32.xlu0 %v7642, 32
      %v7713 = vpop.permute.xlu0 %7712
      %7714 = vrot.lane.b32.xlu0 %v7645, 32
      %v7715 = vpop.permute.xlu0 %7714
      %7716 = vrot.lane.b32.xlu0 %v7647, 32
      %v7717 = vpop.permute.xlu0 %7716
      %7718 = vrot.lane.b32.xlu0 %v7650, 32
      %v7719 = vpop.permute.xlu0 %7718
      %7720 = vrot.lane.b32.xlu0 %v7652, 32
      %v7721 = vpop.permute.xlu0 %7720
      %7722 = vrot.lane.b32.xlu0 %v7655, 32
      %v7723 = vpop.permute.xlu0 %7722
      %7724 = vrot.lane.b32.xlu0 %v7657, 32
      %v7725 = vpop.permute.xlu0 %7724
      %7726 = vrot.lane.b32.xlu0 %v7660, 32
      %v7727 = vpop.permute.xlu0 %7726
      %7728 = vrot.lane.b32.xlu0 %v7662, 32
      %v7729 = vpop.permute.xlu0 %7728
      %7730 = vrot.lane.b32.xlu0 %v7665, 32
      %v7731 = vpop.permute.xlu0 %7730
      %7732 = vrot.lane.b32.xlu0 %v7667, 32
      %v7733 = vpop.permute.xlu0 %7732
      %7734 = vrot.lane.b32.xlu0 %v7670, 32
      %v7735 = vpop.permute.xlu0 %7734
      %7736 = vrot.lane.b32.xlu0 %v7672, 32
      %v7737 = vpop.permute.xlu0 %7736
      %7738 = vrot.lane.b32.xlu0 %v7675, 32
      %v7739 = vpop.permute.xlu0 %7738
      %7740 = vrot.lane.b32.xlu0 %v7677, 32
      %v7741 = vpop.permute.xlu0 %7740
      %v7774 = vrot.slane %v7496, 2
      %v7775 = vrot.slane %v7497, 2
      %v7776 = vsel %vm680, %v7774, %v7775
      %v7777 = vrot.slane %v7498, 2
      %v7778 = vsel %vm680, %v7775, %v7777
      %v7779 = vrot.slane %v7499, 2
      %v7780 = vrot.slane %v7500, 2
      %v7781 = vsel %vm680, %v7779, %v7780
      %v7782 = vrot.slane %v7501, 2
      %v7783 = vsel %vm680, %v7780, %v7782
      %v7784 = vrot.slane %v7502, 2
      %v7785 = vrot.slane %v7503, 2
      %v7786 = vsel %vm680, %v7784, %v7785
      %v7787 = vrot.slane %v7504, 2
      %v7788 = vsel %vm680, %v7785, %v7787
      %v7789 = vrot.slane %v7505, 2
      %v7790 = vrot.slane %v7506, 2
      %v7791 = vsel %vm680, %v7789, %v7790
      %v7792 = vrot.slane %v7507, 2
      %v7793 = vsel %vm680, %v7790, %v7792
      %v7794 = vrot.slane %v7508, 2
      %v7795 = vrot.slane %v7509, 2
      %v7796 = vsel %vm680, %v7794, %v7795
      %v7797 = vrot.slane %v7510, 2
      %v7798 = vsel %vm680, %v7795, %v7797
      %v7799 = vrot.slane %v7511, 2
      %v7800 = vrot.slane %v7512, 2
      %v7801 = vsel %vm680, %v7799, %v7800
      %v7802 = vrot.slane %v7513, 2
      %v7803 = vsel %vm680, %v7800, %v7802
      %v7804 = vrot.slane %v7514, 2
      %v7805 = vrot.slane %v7515, 2
      %v7806 = vsel %vm680, %v7804, %v7805
      %v7807 = vrot.slane %v7516, 2
      %v7808 = vsel %vm680, %v7805, %v7807
      %v7809 = vrot.slane %v7517, 2
      %v7810 = vrot.slane %v7518, 2
      %v7811 = vsel %vm680, %v7809, %v7810
      %v7812 = vrot.slane %v7519, 2
      %v7813 = vsel %vm680, %v7810, %v7812
      %v7814 = vrot.slane %v7520, 2
      %v7815 = vrot.slane %v7521, 2
      %v7816 = vsel %vm680, %v7814, %v7815
      %v7817 = vrot.slane %v7522, 2
      %v7818 = vsel %vm680, %v7815, %v7817
      %v7819 = vrot.slane %v7523, 2
      %v7820 = vrot.slane %v7524, 2
      %v7821 = vsel %vm680, %v7819, %v7820
      %v7822 = vrot.slane %v7525, 2
      %v7823 = vsel %vm680, %v7820, %v7822
      %v7824 = vrot.slane %v7526, 2
      %v7825 = vrot.slane %v7527, 2
      %v7826 = vsel %vm680, %v7824, %v7825
      %v7827 = vrot.slane %v7528, 2
      %v7828 = vsel %vm680, %v7825, %v7827
      %v7829 = vrot.slane %v7529, 2
      %v7830 = vrot.slane %v7530, 2
      %v7831 = vsel %vm680, %v7829, %v7830
      %v7832 = vrot.slane %v7531, 2
      %v7833 = vsel %vm680, %v7830, %v7832
      %v7834 = vrot.slane %v7532, 2
      %v7835 = vrot.slane %v7533, 2
      %v7836 = vsel %vm680, %v7834, %v7835
      %v7837 = vrot.slane %v7534, 2
      %v7838 = vsel %vm680, %v7835, %v7837
      %v7839 = vrot.slane %v7535, 2
      %v7840 = vrot.slane %v7536, 2
      %v7841 = vsel %vm680, %v7839, %v7840
      %v7842 = vrot.slane %v7537, 2
      %v7843 = vsel %vm680, %v7840, %v7842
      %v7844 = vrot.slane %v7538, 2
      %v7845 = vrot.slane %v7539, 2
      %v7846 = vsel %vm680, %v7844, %v7845
      %v7847 = vrot.slane %v7540, 2
      %v7848 = vsel %vm680, %v7845, %v7847
      %v7849 = vrot.slane %v7541, 2
      %v7850 = vrot.slane %v7542, 2
      %v7851 = vsel %vm680, %v7849, %v7850
      %v7852 = vrot.slane %v7543, 2
      %v7853 = vsel %vm680, %v7850, %v7852
      %7854 = vrot.lane.b32.xlu0 %v7776, 64
      %v7855 = vpop.permute.xlu0 %7854
      %7856 = vrot.lane.b32.xlu0 %v7778, 64
      %v7857 = vpop.permute.xlu0 %7856
      %7858 = vrot.lane.b32.xlu0 %v7781, 64
      %v7859 = vpop.permute.xlu0 %7858
      %7860 = vrot.lane.b32.xlu0 %v7783, 64
      %v7861 = vpop.permute.xlu0 %7860
      %7862 = vrot.lane.b32.xlu0 %v7786, 64
      %v7863 = vpop.permute.xlu0 %7862
      %7864 = vrot.lane.b32.xlu0 %v7788, 64
      %v7865 = vpop.permute.xlu0 %7864
      %7866 = vrot.lane.b32.xlu0 %v7791, 64
      %v7867 = vpop.permute.xlu0 %7866
      %7868 = vrot.lane.b32.xlu0 %v7793, 64
      %v7869 = vpop.permute.xlu0 %7868
      %7870 = vrot.lane.b32.xlu0 %v7796, 64
      %v7871 = vpop.permute.xlu0 %7870
      %7872 = vrot.lane.b32.xlu0 %v7798, 64
      %v7873 = vpop.permute.xlu0 %7872
      %7874 = vrot.lane.b32.xlu0 %v7801, 64
      %v7875 = vpop.permute.xlu0 %7874
      %7876 = vrot.lane.b32.xlu0 %v7803, 64
      %v7877 = vpop.permute.xlu0 %7876
      %7878 = vrot.lane.b32.xlu0 %v7806, 64
      %v7879 = vpop.permute.xlu0 %7878
      %7880 = vrot.lane.b32.xlu0 %v7808, 64
      %v7881 = vpop.permute.xlu0 %7880
      %7882 = vrot.lane.b32.xlu0 %v7811, 64
      %v7883 = vpop.permute.xlu0 %7882
      %7884 = vrot.lane.b32.xlu0 %v7813, 64
      %v7885 = vpop.permute.xlu0 %7884
      %7886 = vrot.lane.b32.xlu0 %v7816, 64
      %v7887 = vpop.permute.xlu0 %7886
      %7888 = vrot.lane.b32.xlu0 %v7818, 64
      %v7889 = vpop.permute.xlu0 %7888
      %7890 = vrot.lane.b32.xlu0 %v7821, 64
      %v7891 = vpop.permute.xlu0 %7890
      %7892 = vrot.lane.b32.xlu0 %v7823, 64
      %v7893 = vpop.permute.xlu0 %7892
      %7894 = vrot.lane.b32.xlu0 %v7826, 64
      %v7895 = vpop.permute.xlu0 %7894
      %7896 = vrot.lane.b32.xlu0 %v7828, 64
      %v7897 = vpop.permute.xlu0 %7896
      %7898 = vrot.lane.b32.xlu0 %v7831, 64
      %v7899 = vpop.permute.xlu0 %7898
      %7900 = vrot.lane.b32.xlu0 %v7833, 64
      %v7901 = vpop.permute.xlu0 %7900
      %7902 = vrot.lane.b32.xlu0 %v7836, 64
      %v7903 = vpop.permute.xlu0 %7902
      %7904 = vrot.lane.b32.xlu0 %v7838, 64
      %v7905 = vpop.permute.xlu0 %7904
      %7906 = vrot.lane.b32.xlu0 %v7841, 64
      %v7907 = vpop.permute.xlu0 %7906
      %7908 = vrot.lane.b32.xlu0 %v7843, 64
      %v7909 = vpop.permute.xlu0 %7908
      %7910 = vrot.lane.b32.xlu0 %v7846, 64
      %v7911 = vpop.permute.xlu0 %7910
      %7912 = vrot.lane.b32.xlu0 %v7848, 64
      %v7913 = vpop.permute.xlu0 %7912
      %7914 = vrot.lane.b32.xlu0 %v7851, 64
      %v7915 = vpop.permute.xlu0 %7914
      %7916 = vrot.lane.b32.xlu0 %v7853, 64
      %v7917 = vpop.permute.xlu0 %7916
      %7952 = vrot.lane.b32.xlu0 %v7499, 96
      %v7953 = vpop.permute.xlu0 %7952
      %7954 = vrot.lane.b32.xlu0 %v7500, 96
      %v7955 = vpop.permute.xlu0 %7954
      %7956 = vrot.lane.b32.xlu0 %v7502, 96
      %v7957 = vpop.permute.xlu0 %7956
      %7958 = vrot.lane.b32.xlu0 %v7503, 96
      %v7959 = vpop.permute.xlu0 %7958
      %7960 = vrot.lane.b32.xlu0 %v7505, 96
      %v7961 = vpop.permute.xlu0 %7960
      %7962 = vrot.lane.b32.xlu0 %v7506, 96
      %v7963 = vpop.permute.xlu0 %7962
      %7964 = vrot.lane.b32.xlu0 %v7508, 96
      %v7965 = vpop.permute.xlu0 %7964
      %7966 = vrot.lane.b32.xlu0 %v7509, 96
      %v7967 = vpop.permute.xlu0 %7966
      %7968 = vrot.lane.b32.xlu0 %v7511, 96
      %v7969 = vpop.permute.xlu0 %7968
      %7970 = vrot.lane.b32.xlu0 %v7512, 96
      %v7971 = vpop.permute.xlu0 %7970
      %7972 = vrot.lane.b32.xlu0 %v7514, 96
      %v7973 = vpop.permute.xlu0 %7972
      %7974 = vrot.lane.b32.xlu0 %v7515, 96
      %v7975 = vpop.permute.xlu0 %7974
      %7976 = vrot.lane.b32.xlu0 %v7517, 96
      %v7977 = vpop.permute.xlu0 %7976
      %7978 = vrot.lane.b32.xlu0 %v7518, 96
      %v7979 = vpop.permute.xlu0 %7978
      %7980 = vrot.lane.b32.xlu0 %v7520, 96
      %v7981 = vpop.permute.xlu0 %7980
      %7982 = vrot.lane.b32.xlu0 %v7521, 96
      %v7983 = vpop.permute.xlu0 %7982
      %7984 = vrot.lane.b32.xlu0 %v7523, 96
      %v7985 = vpop.permute.xlu0 %7984
      %7986 = vrot.lane.b32.xlu0 %v7524, 96
      %v7987 = vpop.permute.xlu0 %7986
      %7988 = vrot.lane.b32.xlu0 %v7526, 96
      %v7989 = vpop.permute.xlu0 %7988
      %7990 = vrot.lane.b32.xlu0 %v7527, 96
      %v7991 = vpop.permute.xlu0 %7990
      %7992 = vrot.lane.b32.xlu0 %v7529, 96
      %v7993 = vpop.permute.xlu0 %7992
      %7994 = vrot.lane.b32.xlu0 %v7530, 96
      %v7995 = vpop.permute.xlu0 %7994
      %7996 = vrot.lane.b32.xlu0 %v7532, 96
      %v7997 = vpop.permute.xlu0 %7996
      %7998 = vrot.lane.b32.xlu0 %v7533, 96
      %v7999 = vpop.permute.xlu0 %7998
      %8000 = vrot.lane.b32.xlu0 %v7535, 96
      %v8001 = vpop.permute.xlu0 %8000
      %8002 = vrot.lane.b32.xlu0 %v7536, 96
      %v8003 = vpop.permute.xlu0 %8002
      %8004 = vrot.lane.b32.xlu0 %v7538, 96
      %v8005 = vpop.permute.xlu0 %8004
      %8006 = vrot.lane.b32.xlu0 %v7539, 96
      %v8007 = vpop.permute.xlu0 %8006
      %8008 = vrot.lane.b32.xlu0 %v7541, 96
      %v8009 = vpop.permute.xlu0 %8008
      %8010 = vrot.lane.b32.xlu0 %v7542, 96
      %v8011 = vpop.permute.xlu0 %8010
      %8012 = vrot.lane.b32.xlu0 %v7544, 96
      %v8013 = vpop.permute.xlu0 %8012
      %8014 = vrot.lane.b32.xlu0 %v7545, 96
      %v8015 = vpop.permute.xlu0 %8014
      %v8049 = vrot.slane %v7544, 1
      %v8050 = vrot.slane %v7545, 1
      %v8051 = vsel %vm503, %v8049, %v8050
      %v8052 = vrot.slane %v7546, 1
      %v8053 = vsel %vm503, %v8050, %v8052
      %v8086 = vrot.slane %v7544, 2
      %v8087 = vrot.slane %v7545, 2
      %v8088 = vsel %vm680, %v8086, %v8087
      %v8089 = vrot.slane %v7546, 2
      %v8090 = vsel %vm680, %v8087, %v8089
      %8091 = vrot.lane.b32.xlu0 %v7781, 32
      %v8092 = vpop.permute.xlu0 %8091
      %8093 = vrot.lane.b32.xlu0 %v7783, 32
      %v8094 = vpop.permute.xlu0 %8093
      %8095 = vrot.lane.b32.xlu0 %v7786, 32
      %v8096 = vpop.permute.xlu0 %8095
      %8097 = vrot.lane.b32.xlu0 %v7788, 32
      %v8098 = vpop.permute.xlu0 %8097
      %8099 = vrot.lane.b32.xlu0 %v7791, 32
      %v8100 = vpop.permute.xlu0 %8099
      %8101 = vrot.lane.b32.xlu0 %v7793, 32
      %v8102 = vpop.permute.xlu0 %8101
      %8103 = vrot.lane.b32.xlu0 %v7796, 32
      %v8104 = vpop.permute.xlu0 %8103
      %8105 = vrot.lane.b32.xlu0 %v7798, 32
      %v8106 = vpop.permute.xlu0 %8105
      %8107 = vrot.lane.b32.xlu0 %v7801, 32
      %v8108 = vpop.permute.xlu0 %8107
      %8109 = vrot.lane.b32.xlu0 %v7803, 32
      %v8110 = vpop.permute.xlu0 %8109
      %8111 = vrot.lane.b32.xlu0 %v7806, 32
      %v8112 = vpop.permute.xlu0 %8111
      %8113 = vrot.lane.b32.xlu0 %v7808, 32
      %v8114 = vpop.permute.xlu0 %8113
      %8115 = vrot.lane.b32.xlu0 %v7811, 32
      %v8116 = vpop.permute.xlu0 %8115
      %8117 = vrot.lane.b32.xlu0 %v7813, 32
      %v8118 = vpop.permute.xlu0 %8117
      %8119 = vrot.lane.b32.xlu0 %v7816, 32
      %v8120 = vpop.permute.xlu0 %8119
      %8121 = vrot.lane.b32.xlu0 %v7818, 32
      %v8122 = vpop.permute.xlu0 %8121
      %8123 = vrot.lane.b32.xlu0 %v7821, 32
      %v8124 = vpop.permute.xlu0 %8123
      %8125 = vrot.lane.b32.xlu0 %v7823, 32
      %v8126 = vpop.permute.xlu0 %8125
      %8127 = vrot.lane.b32.xlu0 %v7826, 32
      %v8128 = vpop.permute.xlu0 %8127
      %8129 = vrot.lane.b32.xlu0 %v7828, 32
      %v8130 = vpop.permute.xlu0 %8129
      %8131 = vrot.lane.b32.xlu0 %v7831, 32
      %v8132 = vpop.permute.xlu0 %8131
      %8133 = vrot.lane.b32.xlu0 %v7833, 32
      %v8134 = vpop.permute.xlu0 %8133
      %8135 = vrot.lane.b32.xlu0 %v7836, 32
      %v8136 = vpop.permute.xlu0 %8135
      %8137 = vrot.lane.b32.xlu0 %v7838, 32
      %v8138 = vpop.permute.xlu0 %8137
      %8139 = vrot.lane.b32.xlu0 %v7841, 32
      %v8140 = vpop.permute.xlu0 %8139
      %8141 = vrot.lane.b32.xlu0 %v7843, 32
      %v8142 = vpop.permute.xlu0 %8141
      %8143 = vrot.lane.b32.xlu0 %v7846, 32
      %v8144 = vpop.permute.xlu0 %8143
      %8145 = vrot.lane.b32.xlu0 %v7848, 32
      %v8146 = vpop.permute.xlu0 %8145
      %8147 = vrot.lane.b32.xlu0 %v7851, 32
      %v8148 = vpop.permute.xlu0 %8147
      %8149 = vrot.lane.b32.xlu0 %v7853, 32
      %v8150 = vpop.permute.xlu0 %8149
      %8151 = vrot.lane.b32.xlu0 %v8088, 32
      %v8152 = vpop.permute.xlu0 %8151
      %8153 = vrot.lane.b32.xlu0 %v8090, 32
      %v8154 = vpop.permute.xlu0 %8153
      %8189 = vrot.lane.b32.xlu0 %v7502, 64
      %v8190 = vpop.permute.xlu0 %8189
      %8191 = vrot.lane.b32.xlu0 %v7503, 64
      %v8192 = vpop.permute.xlu0 %8191
      %8193 = vrot.lane.b32.xlu0 %v7505, 64
      %v8194 = vpop.permute.xlu0 %8193
      %8195 = vrot.lane.b32.xlu0 %v7506, 64
      %v8196 = vpop.permute.xlu0 %8195
      %8197 = vrot.lane.b32.xlu0 %v7508, 64
      %v8198 = vpop.permute.xlu0 %8197
      %8199 = vrot.lane.b32.xlu0 %v7509, 64
      %v8200 = vpop.permute.xlu0 %8199
      %8201 = vrot.lane.b32.xlu0 %v7511, 64
      %v8202 = vpop.permute.xlu0 %8201
      %8203 = vrot.lane.b32.xlu0 %v7512, 64
      %v8204 = vpop.permute.xlu0 %8203
      %8205 = vrot.lane.b32.xlu0 %v7514, 64
      %v8206 = vpop.permute.xlu0 %8205
      %8207 = vrot.lane.b32.xlu0 %v7515, 64
      %v8208 = vpop.permute.xlu0 %8207
      %8209 = vrot.lane.b32.xlu0 %v7517, 64
      %v8210 = vpop.permute.xlu0 %8209
      %8211 = vrot.lane.b32.xlu0 %v7518, 64
      %v8212 = vpop.permute.xlu0 %8211
      %8213 = vrot.lane.b32.xlu0 %v7520, 64
      %v8214 = vpop.permute.xlu0 %8213
      %8215 = vrot.lane.b32.xlu0 %v7521, 64
      %v8216 = vpop.permute.xlu0 %8215
      %8217 = vrot.lane.b32.xlu0 %v7523, 64
      %v8218 = vpop.permute.xlu0 %8217
      %8219 = vrot.lane.b32.xlu0 %v7524, 64
      %v8220 = vpop.permute.xlu0 %8219
      %8221 = vrot.lane.b32.xlu0 %v7526, 64
      %v8222 = vpop.permute.xlu0 %8221
      %8223 = vrot.lane.b32.xlu0 %v7527, 64
      %v8224 = vpop.permute.xlu0 %8223
      %8225 = vrot.lane.b32.xlu0 %v7529, 64
      %v8226 = vpop.permute.xlu0 %8225
      %8227 = vrot.lane.b32.xlu0 %v7530, 64
      %v8228 = vpop.permute.xlu0 %8227
      %8229 = vrot.lane.b32.xlu0 %v7532, 64
      %v8230 = vpop.permute.xlu0 %8229
      %8231 = vrot.lane.b32.xlu0 %v7533, 64
      %v8232 = vpop.permute.xlu0 %8231
      %8233 = vrot.lane.b32.xlu0 %v7535, 64
      %v8234 = vpop.permute.xlu0 %8233
      %8235 = vrot.lane.b32.xlu0 %v7536, 64
      %v8236 = vpop.permute.xlu0 %8235
      %8237 = vrot.lane.b32.xlu0 %v7538, 64
      %v8238 = vpop.permute.xlu0 %8237
      %8239 = vrot.lane.b32.xlu0 %v7539, 64
      %v8240 = vpop.permute.xlu0 %8239
      %8241 = vrot.lane.b32.xlu0 %v7541, 64
      %v8242 = vpop.permute.xlu0 %8241
      %8243 = vrot.lane.b32.xlu0 %v7542, 64
      %v8244 = vpop.permute.xlu0 %8243
      %8245 = vrot.lane.b32.xlu0 %v7544, 64
      %v8246 = vpop.permute.xlu0 %8245
      %8247 = vrot.lane.b32.xlu0 %v7545, 64
      %v8248 = vpop.permute.xlu0 %8247
      %8249 = vrot.lane.b32.xlu0 %v7547, 64
      %v8250 = vpop.permute.xlu0 %8249
      %8251 = vrot.lane.b32.xlu0 %v7548, 64
      %v8252 = vpop.permute.xlu0 %8251
      %v8286 = vrot.slane %v7547, 1
      %v8287 = vrot.slane %v7548, 1
      %v8288 = vsel %vm503, %v8286, %v8287
      %v8289 = vrot.slane %v7549, 1
      %v8290 = vsel %vm503, %v8287, %v8289
      %8291 = vrot.lane.b32.xlu0 %v7610, 96
      %v8292 = vpop.permute.xlu0 %8291
      %8293 = vrot.lane.b32.xlu0 %v7612, 96
      %v8294 = vpop.permute.xlu0 %8293
      %8295 = vrot.lane.b32.xlu0 %v7615, 96
      %v8296 = vpop.permute.xlu0 %8295
      %8297 = vrot.lane.b32.xlu0 %v7617, 96
      %v8298 = vpop.permute.xlu0 %8297
      %8299 = vrot.lane.b32.xlu0 %v7620, 96
      %v8300 = vpop.permute.xlu0 %8299
      %8301 = vrot.lane.b32.xlu0 %v7622, 96
      %v8302 = vpop.permute.xlu0 %8301
      %8303 = vrot.lane.b32.xlu0 %v7625, 96
      %v8304 = vpop.permute.xlu0 %8303
      %8305 = vrot.lane.b32.xlu0 %v7627, 96
      %v8306 = vpop.permute.xlu0 %8305
      %8307 = vrot.lane.b32.xlu0 %v7630, 96
      %v8308 = vpop.permute.xlu0 %8307
      %8309 = vrot.lane.b32.xlu0 %v7632, 96
      %v8310 = vpop.permute.xlu0 %8309
      %8311 = vrot.lane.b32.xlu0 %v7635, 96
      %v8312 = vpop.permute.xlu0 %8311
      %8313 = vrot.lane.b32.xlu0 %v7637, 96
      %v8314 = vpop.permute.xlu0 %8313
      %8315 = vrot.lane.b32.xlu0 %v7640, 96
      %v8316 = vpop.permute.xlu0 %8315
      %8317 = vrot.lane.b32.xlu0 %v7642, 96
      %v8318 = vpop.permute.xlu0 %8317
      %8319 = vrot.lane.b32.xlu0 %v7645, 96
      %v8320 = vpop.permute.xlu0 %8319
      %8321 = vrot.lane.b32.xlu0 %v7647, 96
      %v8322 = vpop.permute.xlu0 %8321
      %8323 = vrot.lane.b32.xlu0 %v7650, 96
      %v8324 = vpop.permute.xlu0 %8323
      %8325 = vrot.lane.b32.xlu0 %v7652, 96
      %v8326 = vpop.permute.xlu0 %8325
      %8327 = vrot.lane.b32.xlu0 %v7655, 96
      %v8328 = vpop.permute.xlu0 %8327
      %8329 = vrot.lane.b32.xlu0 %v7657, 96
      %v8330 = vpop.permute.xlu0 %8329
      %8331 = vrot.lane.b32.xlu0 %v7660, 96
      %v8332 = vpop.permute.xlu0 %8331
      %8333 = vrot.lane.b32.xlu0 %v7662, 96
      %v8334 = vpop.permute.xlu0 %8333
      %8335 = vrot.lane.b32.xlu0 %v7665, 96
      %v8336 = vpop.permute.xlu0 %8335
      %8337 = vrot.lane.b32.xlu0 %v7667, 96
      %v8338 = vpop.permute.xlu0 %8337
      %8339 = vrot.lane.b32.xlu0 %v7670, 96
      %v8340 = vpop.permute.xlu0 %8339
      %8341 = vrot.lane.b32.xlu0 %v7672, 96
      %v8342 = vpop.permute.xlu0 %8341
      %8343 = vrot.lane.b32.xlu0 %v7675, 96
      %v8344 = vpop.permute.xlu0 %8343
      %8345 = vrot.lane.b32.xlu0 %v7677, 96
      %v8346 = vpop.permute.xlu0 %8345
      %8347 = vrot.lane.b32.xlu0 %v8051, 96
      %v8348 = vpop.permute.xlu0 %8347
      %8349 = vrot.lane.b32.xlu0 %v8053, 96
      %v8350 = vpop.permute.xlu0 %8349
      %8351 = vrot.lane.b32.xlu0 %v8288, 96
      %v8352 = vpop.permute.xlu0 %8351
      %8353 = vrot.lane.b32.xlu0 %v8290, 96
      %v8354 = vpop.permute.xlu0 %8353
      %v8387 = vrot.slane %v7547, 2
      %v8388 = vrot.slane %v7548, 2
      %v8389 = vsel %vm680, %v8387, %v8388
      %v8390 = vrot.slane %v7549, 2
      %v8391 = vsel %vm680, %v8388, %v8390
      %v8392 = vsel %vm333, %v7496, %v7679
      %v8393 = vsel %vm333, %v7497, %v7681
      %v8394 = vsel %vm333, %v7499, %v7683
      %v8395 = vsel %vm333, %v7500, %v7685
      %v8396 = vsel %vm333, %v7502, %v7687
      %v8397 = vsel %vm333, %v7503, %v7689
      %v8398 = vsel %vm333, %v7505, %v7691
      %v8399 = vsel %vm333, %v7506, %v7693
      %v8400 = vsel %vm333, %v7508, %v7695
      %v8401 = vsel %vm333, %v7509, %v7697
      %v8402 = vsel %vm333, %v7511, %v7699
      %v8403 = vsel %vm333, %v7512, %v7701
      %v8404 = vsel %vm333, %v7514, %v7703
      %v8405 = vsel %vm333, %v7515, %v7705
      %v8406 = vsel %vm333, %v7517, %v7707
      %v8407 = vsel %vm333, %v7518, %v7709
      %v8408 = vsel %vm333, %v7520, %v7711
      %v8409 = vsel %vm333, %v7521, %v7713
      %v8410 = vsel %vm333, %v7523, %v7715
      %v8411 = vsel %vm333, %v7524, %v7717
      %v8412 = vsel %vm333, %v7526, %v7719
      %v8413 = vsel %vm333, %v7527, %v7721
      %v8414 = vsel %vm333, %v7529, %v7723
      %v8415 = vsel %vm333, %v7530, %v7725
      %v8416 = vsel %vm333, %v7532, %v7727
      %v8417 = vsel %vm333, %v7533, %v7729
      %v8418 = vsel %vm333, %v7535, %v7731
      %v8419 = vsel %vm333, %v7536, %v7733
      %v8420 = vsel %vm333, %v7538, %v7735
      %v8421 = vsel %vm333, %v7539, %v7737
      %v8422 = vsel %vm333, %v7541, %v7739
      %v8423 = vsel %vm333, %v7542, %v7741
      %v8424 = vsel %vm7009, %v8392, %v7855
      %v8425 = vsel %vm7009, %v8393, %v7857
      %v8426 = vsel %vm7009, %v8394, %v7859
      %v8427 = vsel %vm7009, %v8395, %v7861
      %v8428 = vsel %vm7009, %v8396, %v7863
      %v8429 = vsel %vm7009, %v8397, %v7865
      %v8430 = vsel %vm7009, %v8398, %v7867
      %v8431 = vsel %vm7009, %v8399, %v7869
      %v8432 = vsel %vm7009, %v8400, %v7871
      %v8433 = vsel %vm7009, %v8401, %v7873
      %v8434 = vsel %vm7009, %v8402, %v7875
      %v8435 = vsel %vm7009, %v8403, %v7877
      %v8436 = vsel %vm7009, %v8404, %v7879
      %v8437 = vsel %vm7009, %v8405, %v7881
      %v8438 = vsel %vm7009, %v8406, %v7883
      %v8439 = vsel %vm7009, %v8407, %v7885
      %v8440 = vsel %vm7009, %v8408, %v7887
      %v8441 = vsel %vm7009, %v8409, %v7889
      %v8442 = vsel %vm7009, %v8410, %v7891
      %v8443 = vsel %vm7009, %v8411, %v7893
      %v8444 = vsel %vm7009, %v8412, %v7895
      %v8445 = vsel %vm7009, %v8413, %v7897
      %v8446 = vsel %vm7009, %v8414, %v7899
      %v8447 = vsel %vm7009, %v8415, %v7901
      %v8448 = vsel %vm7009, %v8416, %v7903
      %v8449 = vsel %vm7009, %v8417, %v7905
      %v8450 = vsel %vm7009, %v8418, %v7907
      %v8451 = vsel %vm7009, %v8419, %v7909
      %v8452 = vsel %vm7009, %v8420, %v7911
      %v8453 = vsel %vm7009, %v8421, %v7913
      %v8454 = vsel %vm7009, %v8422, %v7915
      %v8455 = vsel %vm7009, %v8423, %v7917
      %vm8456 = vcmask 785408
      %v8457 = vsel %vm8456, %v8424, %v7953
      %v8458 = vsel %vm8456, %v8425, %v7955
      %v8459 = vsel %vm8456, %v8426, %v7957
      %v8460 = vsel %vm8456, %v8427, %v7959
      %v8461 = vsel %vm8456, %v8428, %v7961
      %v8462 = vsel %vm8456, %v8429, %v7963
      %v8463 = vsel %vm8456, %v8430, %v7965
      %v8464 = vsel %vm8456, %v8431, %v7967
      %v8465 = vsel %vm8456, %v8432, %v7969
      %v8466 = vsel %vm8456, %v8433, %v7971
      %v8467 = vsel %vm8456, %v8434, %v7973
      %v8468 = vsel %vm8456, %v8435, %v7975
      %v8469 = vsel %vm8456, %v8436, %v7977
      %v8470 = vsel %vm8456, %v8437, %v7979
      %v8471 = vsel %vm8456, %v8438, %v7981
      %v8472 = vsel %vm8456, %v8439, %v7983
      %v8473 = vsel %vm8456, %v8440, %v7985
      %v8474 = vsel %vm8456, %v8441, %v7987
      %v8475 = vsel %vm8456, %v8442, %v7989
      %v8476 = vsel %vm8456, %v8443, %v7991
      %v8477 = vsel %vm8456, %v8444, %v7993
      %v8478 = vsel %vm8456, %v8445, %v7995
      %v8479 = vsel %vm8456, %v8446, %v7997
      %v8480 = vsel %vm8456, %v8447, %v7999
      %v8481 = vsel %vm8456, %v8448, %v8001
      %v8482 = vsel %vm8456, %v8449, %v8003
      %v8483 = vsel %vm8456, %v8450, %v8005
      %v8484 = vsel %vm8456, %v8451, %v8007
      %v8485 = vsel %vm8456, %v8452, %v8009
      %v8486 = vsel %vm8456, %v8453, %v8011
      %v8487 = vsel %vm8456, %v8454, %v8013
      %v8488 = vsel %vm8456, %v8455, %v8015
      %v8489 = vsel %vm333, %v7605, %v8092
      %v8490 = vsel %vm333, %v7607, %v8094
      %v8491 = vsel %vm333, %v7610, %v8096
      %v8492 = vsel %vm333, %v7612, %v8098
      %v8493 = vsel %vm333, %v7615, %v8100
      %v8494 = vsel %vm333, %v7617, %v8102
      %v8495 = vsel %vm333, %v7620, %v8104
      %v8496 = vsel %vm333, %v7622, %v8106
      %v8497 = vsel %vm333, %v7625, %v8108
      %v8498 = vsel %vm333, %v7627, %v8110
      %v8499 = vsel %vm333, %v7630, %v8112
      %v8500 = vsel %vm333, %v7632, %v8114
      %v8501 = vsel %vm333, %v7635, %v8116
      %v8502 = vsel %vm333, %v7637, %v8118
      %v8503 = vsel %vm333, %v7640, %v8120
      %v8504 = vsel %vm333, %v7642, %v8122
      %v8505 = vsel %vm333, %v7645, %v8124
      %v8506 = vsel %vm333, %v7647, %v8126
      %v8507 = vsel %vm333, %v7650, %v8128
      %v8508 = vsel %vm333, %v7652, %v8130
      %v8509 = vsel %vm333, %v7655, %v8132
      %v8510 = vsel %vm333, %v7657, %v8134
      %v8511 = vsel %vm333, %v7660, %v8136
      %v8512 = vsel %vm333, %v7662, %v8138
      %v8513 = vsel %vm333, %v7665, %v8140
      %v8514 = vsel %vm333, %v7667, %v8142
      %v8515 = vsel %vm333, %v7670, %v8144
      %v8516 = vsel %vm333, %v7672, %v8146
      %v8517 = vsel %vm333, %v7675, %v8148
      %v8518 = vsel %vm333, %v7677, %v8150
      %v8519 = vsel %vm333, %v8051, %v8152
      %v8520 = vsel %vm333, %v8053, %v8154
      %v8521 = vsel %vm7009, %v8489, %v8190
      %v8522 = vsel %vm7009, %v8490, %v8192
      %v8523 = vsel %vm7009, %v8491, %v8194
      %v8524 = vsel %vm7009, %v8492, %v8196
      %v8525 = vsel %vm7009, %v8493, %v8198
      %v8526 = vsel %vm7009, %v8494, %v8200
      %v8527 = vsel %vm7009, %v8495, %v8202
      %v8528 = vsel %vm7009, %v8496, %v8204
      %v8529 = vsel %vm7009, %v8497, %v8206
      %v8530 = vsel %vm7009, %v8498, %v8208
      %v8531 = vsel %vm7009, %v8499, %v8210
      %v8532 = vsel %vm7009, %v8500, %v8212
      %v8533 = vsel %vm7009, %v8501, %v8214
      %v8534 = vsel %vm7009, %v8502, %v8216
      %v8535 = vsel %vm7009, %v8503, %v8218
      %v8536 = vsel %vm7009, %v8504, %v8220
      %v8537 = vsel %vm7009, %v8505, %v8222
      %v8538 = vsel %vm7009, %v8506, %v8224
      %v8539 = vsel %vm7009, %v8507, %v8226
      %v8540 = vsel %vm7009, %v8508, %v8228
      %v8541 = vsel %vm7009, %v8509, %v8230
      %v8542 = vsel %vm7009, %v8510, %v8232
      %v8543 = vsel %vm7009, %v8511, %v8234
      %v8544 = vsel %vm7009, %v8512, %v8236
      %v8545 = vsel %vm7009, %v8513, %v8238
      %v8546 = vsel %vm7009, %v8514, %v8240
      %v8547 = vsel %vm7009, %v8515, %v8242
      %v8548 = vsel %vm7009, %v8516, %v8244
      %v8549 = vsel %vm7009, %v8517, %v8246
      %v8550 = vsel %vm7009, %v8518, %v8248
      %v8551 = vsel %vm7009, %v8519, %v8250
      %v8552 = vsel %vm7009, %v8520, %v8252
      %v8553 = vsel %vm8456, %v8521, %v8292
      %v8554 = vsel %vm8456, %v8522, %v8294
      %v8555 = vsel %vm8456, %v8523, %v8296
      %v8556 = vsel %vm8456, %v8524, %v8298
      %v8557 = vsel %vm8456, %v8525, %v8300
      %v8558 = vsel %vm8456, %v8526, %v8302
      %v8559 = vsel %vm8456, %v8527, %v8304
      %v8560 = vsel %vm8456, %v8528, %v8306
      %v8561 = vsel %vm8456, %v8529, %v8308
      %v8562 = vsel %vm8456, %v8530, %v8310
      %v8563 = vsel %vm8456, %v8531, %v8312
      %v8564 = vsel %vm8456, %v8532, %v8314
      %v8565 = vsel %vm8456, %v8533, %v8316
      %v8566 = vsel %vm8456, %v8534, %v8318
      %v8567 = vsel %vm8456, %v8535, %v8320
      %v8568 = vsel %vm8456, %v8536, %v8322
      %v8569 = vsel %vm8456, %v8537, %v8324
      %v8570 = vsel %vm8456, %v8538, %v8326
      %v8571 = vsel %vm8456, %v8539, %v8328
      %v8572 = vsel %vm8456, %v8540, %v8330
      %v8573 = vsel %vm8456, %v8541, %v8332
      %v8574 = vsel %vm8456, %v8542, %v8334
      %v8575 = vsel %vm8456, %v8543, %v8336
      %v8576 = vsel %vm8456, %v8544, %v8338
      %v8577 = vsel %vm8456, %v8545, %v8340
      %v8578 = vsel %vm8456, %v8546, %v8342
      %v8579 = vsel %vm8456, %v8547, %v8344
      %v8580 = vsel %vm8456, %v8548, %v8346
      %v8581 = vsel %vm8456, %v8549, %v8348
      %v8582 = vsel %vm8456, %v8550, %v8350
      %v8583 = vsel %vm8456, %v8551, %v8352
      %v8584 = vsel %vm8456, %v8552, %v8354
      %v8585 = vld [vmem:[%s3] sm:$0xff]
      %v8586 = vld [vmem:[%s3 + $0x8] sm:$0xff]
      %v8587 = vld [vmem:[%s3 + $0x10] sm:$0xff]
      %v8588 = vld [vmem:[%s3 + $0x18] sm:$0xff]
      %v8589 = vld [vmem:[%s3 + $0x20] sm:$0xff]
      %v8590 = vld [vmem:[%s3 + $0x28] sm:$0xff]
      %v8591 = vld [vmem:[%s3 + $0x30] sm:$0xff]
      %v8592 = vld [vmem:[%s3 + $0x38] sm:$0xff]
      %v8593 = vld [vmem:[%s3 + $0x40] sm:$0xff]
      %v8594 = vld [vmem:[%s3 + $0x48] sm:$0xff]
      %v8595 = vld [vmem:[%s3 + $0x50] sm:$0xff]
      %v8596 = vld [vmem:[%s3 + $0x58] sm:$0xff]
      %v8597 = vld [vmem:[%s3 + $0x60] sm:$0xff]
      %v8598 = vld [vmem:[%s3 + $0x68] sm:$0xff]
      %v8599 = vld [vmem:[%s3 + $0x70] sm:$0xff]
      %v8600 = vld [vmem:[%s3 + $0x78] sm:$0xff]
      %v8601 = vld [vmem:[%s3 + $0x80] sm:$0xff]
      %v8602 = vld [vmem:[%s3 + $0x88] sm:$0xff]
      %v8603 = vld [vmem:[%s3 + $0x90] sm:$0xff]
      %v8604 = vld [vmem:[%s3 + $0x98] sm:$0xff]
      %v8605 = vld [vmem:[%s3 + $0xa0] sm:$0xff]
      %v8606 = vld [vmem:[%s3 + $0xa8] sm:$0xff]
      %v8607 = vld [vmem:[%s3 + $0xb0] sm:$0xff]
      %v8608 = vld [vmem:[%s3 + $0xb8] sm:$0xff]
      %v8609 = vld [vmem:[%s3 + $0xc0] sm:$0xff]
      %v8610 = vld [vmem:[%s3 + $0xc8] sm:$0xff]
      %v8611 = vld [vmem:[%s3 + $0xd0] sm:$0xff]
      %v8612 = vld [vmem:[%s3 + $0xd8] sm:$0xff]
      %v8613 = vld [vmem:[%s3 + $0xe0] sm:$0xff]
      %v8614 = vld [vmem:[%s3 + $0xe8] sm:$0xff]
      %v8615 = vld [vmem:[%s3 + $0xf0] sm:$0xff]
      %v8616 = vld [vmem:[%s3 + $0xf8] sm:$0xff]
      %v8617 = vld [vmem:[%s3 + $0x100] sm:$0xff]
      %v8618 = vld [vmem:[%s3 + $0x108] sm:$0xff]
      %v8619 = vld [vmem:[%s3 + $0x110] sm:$0xff]
      %v8620 = vld [vmem:[%s3 + $0x118] sm:$0xff]
      %v8621 = vld [vmem:[%s4] sm:$0x1]
      %v8623 = vlaneseq
      %v8624 = vshrl.u32 %v8623, 7
      %v8625 = vsub.s32 0, %v8624
      %v8626 = vrot.slane %v8621, %v8625
      %v8628 = vsel %vm333, %v7786, 0
      %v8630 = vsel %vm333, %v7788, 0
      %v8632 = vsel %vm333, %v7791, 0
      %v8634 = vsel %vm333, %v7793, 0
      %v8636 = vsel %vm333, %v7796, 0
      %v8638 = vsel %vm333, %v7798, 0
      %v8640 = vsel %vm333, %v7801, 0
      %v8642 = vsel %vm333, %v7803, 0
      %v8644 = vsel %vm333, %v7806, 0
      %v8646 = vsel %vm333, %v7808, 0
      %v8648 = vsel %vm333, %v7811, 0
      %v8650 = vsel %vm333, %v7813, 0
      %v8652 = vsel %vm333, %v7816, 0
      %v8654 = vsel %vm333, %v7818, 0
      %v8656 = vsel %vm333, %v7821, 0
      %v8658 = vsel %vm333, %v7823, 0
      %v8660 = vsel %vm333, %v7826, 0
      %v8662 = vsel %vm333, %v7828, 0
      %v8664 = vsel %vm333, %v7831, 0
      %v8666 = vsel %vm333, %v7833, 0
      %v8668 = vsel %vm333, %v7836, 0
      %v8670 = vsel %vm333, %v7838, 0
      %v8672 = vsel %vm333, %v7841, 0
      %v8674 = vsel %vm333, %v7843, 0
      %v8676 = vsel %vm333, %v7846, 0
      %v8678 = vsel %vm333, %v7848, 0
      %v8680 = vsel %vm333, %v7851, 0
      %v8682 = vsel %vm333, %v7853, 0
      %v8684 = vsel %vm333, %v8088, 0
      %v8686 = vsel %vm333, %v8090, 0
      %v8688 = vsel %vm333, %v8389, 0
      %v8690 = vsel %vm333, %v8391, 0
      %8692 = vmatprep.subr.mxu0 0.0
      %8693 = vmatpush1.msra.mxu0 %v8585
      %8694 = vmatprep.subr.mxu0 0.0
      %8695 = vmatpush1.msra.mxu0 %v8586
      %8696 = vmatprep.subr.mxu0 0.0
      %8697 = vmatpush1.msra.mxu0 %v8587
      %8698 = vmatprep.subr.mxu0 0.0
      %8699 = vmatpush1.msra.mxu0 %v8588
      %8700 = vmatprep.subr.mxu0 0.0
      %8701 = vmatpush1.msra.mxu0 %v8589
      %8702 = vmatprep.subr.mxu0 0.0
      %8703 = vmatpush1.msra.mxu0 %v8590
      %8704 = vmatprep.subr.mxu0 0.0
      %8705 = vmatpush1.msra.mxu0 %v8591
      %8706 = vmatprep.subr.mxu0 0.0
      %8707 = vmatpush1.msra.mxu0 %v8592
      %8708 = vmatprep.subr.mxu0 0.0
      %8709 = vmatpush1.msra.mxu0 %v8593
      %8710 = vmatprep.subr.mxu0 0.0
      %8711 = vmatpush1.msra.mxu0 %v8594
      %8712 = vmatprep.subr.mxu0 0.0
      %8713 = vmatpush1.msra.mxu0 %v8595
      %8714 = vmatprep.subr.mxu0 0.0
      %8715 = vmatpush1.msra.mxu0 %v8596
      %8716 = vmatprep.subr.mxu0 0.0
      %8717 = vmatpush1.msra.mxu0 %v8597
      %8718 = vmatprep.subr.mxu0 0.0
      %8719 = vmatpush1.msra.mxu0 %v8598
      %8720 = vmatprep.subr.mxu0 0.0
      %8721 = vmatpush1.msra.mxu0 %v8599
      %8722 = vmatprep.subr.mxu0 0.0
      %8723 = vmatpush1.msra.mxu0 %v8600
      %8724 = vmatprep.subr.mxu0 0.0
      %8725 = vmatpush1.msra.mxu0 %v8601
      %8726 = vmatprep.subr.mxu0 0.0
      %8727 = vmatpush1.msra.mxu0 %v8602
      %8728 = vmatprep.subr.mxu0 0.0
      %8729 = vmatpush1.msra.mxu0 %v8603
      %8730 = vmatprep.subr.mxu0 0.0
      %8731 = vmatpush1.msra.mxu0 %v8604
      %8732 = vmatprep.subr.mxu0 0.0
      %8733 = vmatpush1.msra.mxu0 %v8605
      %8734 = vmatprep.subr.mxu0 0.0
      %8735 = vmatpush1.msra.mxu0 %v8606
      %8736 = vmatprep.subr.mxu0 0.0
      %8737 = vmatpush1.msra.mxu0 %v8607
      %8738 = vmatprep.subr.mxu0 0.0
      %8739 = vmatpush1.msra.mxu0 %v8608
      %8740 = vmatprep.subr.mxu0 0.0
      %8741 = vmatpush1.msra.mxu0 %v8609
      %8742 = vmatprep.subr.mxu0 0.0
      %8743 = vmatpush1.msra.mxu0 %v8610
      %8744 = vmatprep.subr.mxu0 0.0
      %8745 = vmatpush1.msra.mxu0 %v8611
      %8746 = vmatprep.subr.mxu0 0.0
      %8747 = vmatpush1.msra.mxu0 %v8612
      %8748 = vmatprep.subr.mxu0 0.0
      %8749 = vmatpush1.msra.mxu0 %v8613
      %8750 = vmatprep.subr.mxu0 0.0
      %8751 = vmatpush1.msra.mxu0 %v8614
      %8752 = vmatprep.subr.mxu0 0.0
      %8753 = vmatpush1.msra.mxu0 %v8615
      %8754 = vmatprep.subr.mxu0 0.0
      %8755 = vmatpush1.msra.mxu0 %v8616
      %8756 = vmatprep.mubr.f32.mxu0 %v8553
      %8757 = vmatmul.mubr.f32.gmra.mrb[0].mxu0 %v8457
      %v8758 = vpop.f32.mrb[0].mxu0
      %v8759 = vadd.f32 %v8626, %v8758
      %v8760 = vpop.f32.mrb[0].mxu0
      %8761 = vmatprep.mubr.f32.mxu0 %v8554
      %8762 = vmatmul.mubr.f32.gmra.mrb[0].mxu0 %v8458
      %v8763 = vpop.f32.mrb[0].mxu0
      %v8764 = vadd.f32 %v8626, %v8763
      %v8765 = vpop.f32.mrb[0].mxu0
      %8766 = vmatprep.mubr.f32.mxu0 %v8555
      %8767 = vmatmul.mubr.f32.gmra.mrb[0].mxu0 %v8459
      %v8768 = vpop.f32.mrb[0].mxu0
      %v8769 = vadd.f32 %v8626, %v8768
      %v8770 = vpop.f32.mrb[0].mxu0
      %8771 = vmatprep.mubr.f32.mxu0 %v8556
      %8772 = vmatmul.mubr.f32.gmra.mrb[0].mxu0 %v8460
      %v8773 = vpop.f32.mrb[0].mxu0
      %v8774 = vadd.f32 %v8626, %v8773
      %v8775 = vpop.f32.mrb[0].mxu0
      %8776 = vmatprep.mubr.f32.mxu0 %v8557
      %8777 = vmatmul.mubr.f32.gmra.mrb[0].mxu0 %v8461
      %v8778 = vpop.f32.mrb[0].mxu0
      %v8779 = vadd.f32 %v8626, %v8778
      %v8780 = vpop.f32.mrb[0].mxu0
      %8781 = vmatprep.mubr.f32.mxu0 %v8558
      %8782 = vmatmul.mubr.f32.gmra.mrb[0].mxu0 %v8462
      %v8783 = vpop.f32.mrb[0].mxu0
      %v8784 = vadd.f32 %v8626, %v8783
      %v8785 = vpop.f32.mrb[0].mxu0
      %8786 = vmatprep.mubr.f32.mxu0 %v8559
      %8787 = vmatmul.mubr.f32.gmra.mrb[0].mxu0 %v8463
      %v8788 = vpop.f32.mrb[0].mxu0
      %v8789 = vadd.f32 %v8626, %v8788
      %v8790 = vpop.f32.mrb[0].mxu0
      %8791 = vmatprep.mubr.f32.mxu0 %v8560
      %8792 = vmatmul.mubr.f32.gmra.mrb[0].mxu0 %v8464
      %v8793 = vpop.f32.mrb[0].mxu0
      %v8794 = vadd.f32 %v8626, %v8793
      %v8795 = vpop.f32.mrb[0].mxu0
      %8796 = vmatprep.mubr.f32.mxu0 %v8561
      %8797 = vmatmul.mubr.f32.gmra.mrb[0].mxu0 %v8465
      %v8798 = vpop.f32.mrb[0].mxu0
      %v8799 = vadd.f32 %v8626, %v8798
      %v8800 = vpop.f32.mrb[0].mxu0
      %8801 = vmatprep.mubr.f32.mxu0 %v8562
      %8802 = vmatmul.mubr.f32.gmra.mrb[0].mxu0 %v8466
      %v8803 = vpop.f32.mrb[0].mxu0
      %v8804 = vadd.f32 %v8626, %v8803
      %v8805 = vpop.f32.mrb[0].mxu0
      %8806 = vmatprep.mubr.f32.mxu0 %v8563
      %8807 = vmatmul.mubr.f32.gmra.mrb[0].mxu0 %v8467
      %v8808 = vpop.f32.mrb[0].mxu0
      %v8809 = vadd.f32 %v8626, %v8808
      %v8810 = vpop.f32.mrb[0].mxu0
      %8811 = vmatprep.mubr.f32.mxu0 %v8564
      %8812 = vmatmul.mubr.f32.gmra.mrb[0].mxu0 %v8468
      %v8813 = vpop.f32.mrb[0].mxu0
      %v8814 = vadd.f32 %v8626, %v8813
      %v8815 = vpop.f32.mrb[0].mxu0
      %8816 = vmatprep.mubr.f32.mxu0 %v8565
      %8817 = vmatmul.mubr.f32.gmra.mrb[0].mxu0 %v8469
      %v8818 = vpop.f32.mrb[0].mxu0
      %v8819 = vadd.f32 %v8626, %v8818
      %v8820 = vpop.f32.mrb[0].mxu0
      %8821 = vmatprep.mubr.f32.mxu0 %v8566
      %8822 = vmatmul.mubr.f32.gmra.mrb[0].mxu0 %v8470
      %v8823 = vpop.f32.mrb[0].mxu0
      %v8824 = vadd.f32 %v8626, %v8823
      %v8825 = vpop.f32.mrb[0].mxu0
      %8826 = vmatprep.mubr.f32.mxu0 %v8567
      %8827 = vmatmul.mubr.f32.gmra.mrb[0].mxu0 %v8471
      %v8828 = vpop.f32.mrb[0].mxu0
      %v8829 = vadd.f32 %v8626, %v8828
      %v8830 = vpop.f32.mrb[0].mxu0
      %8831 = vmatprep.mubr.f32.mxu0 %v8568
      %8832 = vmatmul.mubr.f32.gmra.mrb[0].mxu0 %v8472
      %v8833 = vpop.f32.mrb[0].mxu0
      %v8834 = vadd.f32 %v8626, %v8833
      %v8835 = vpop.f32.mrb[0].mxu0
      %8836 = vmatprep.mubr.f32.mxu0 %v8569
      %8837 = vmatmul.mubr.f32.gmra.mrb[0].mxu0 %v8473
      %v8838 = vpop.f32.mrb[0].mxu0
      %v8839 = vadd.f32 %v8626, %v8838
      %v8840 = vpop.f32.mrb[0].mxu0
      %8841 = vmatprep.mubr.f32.mxu0 %v8570
      %8842 = vmatmul.mubr.f32.gmra.mrb[0].mxu0 %v8474
      %v8843 = vpop.f32.mrb[0].mxu0
      %v8844 = vadd.f32 %v8626, %v8843
      %v8845 = vpop.f32.mrb[0].mxu0
      %8846 = vmatprep.mubr.f32.mxu0 %v8571
      %8847 = vmatmul.mubr.f32.gmra.mrb[0].mxu0 %v8475
      %v8848 = vpop.f32.mrb[0].mxu0
      %v8849 = vadd.f32 %v8626, %v8848
      %v8850 = vpop.f32.mrb[0].mxu0
      %8851 = vmatprep.mubr.f32.mxu0 %v8572
      %8852 = vmatmul.mubr.f32.gmra.mrb[0].mxu0 %v8476
      %v8853 = vpop.f32.mrb[0].mxu0
      %v8854 = vadd.f32 %v8626, %v8853
      %v8855 = vpop.f32.mrb[0].mxu0
      %8856 = vmatprep.mubr.f32.mxu0 %v8573
      %8857 = vmatmul.mubr.f32.gmra.mrb[0].mxu0 %v8477
      %v8858 = vpop.f32.mrb[0].mxu0
      %v8859 = vadd.f32 %v8626, %v8858
      %v8860 = vpop.f32.mrb[0].mxu0
      %8861 = vmatprep.mubr.f32.mxu0 %v8574
      %8862 = vmatmul.mubr.f32.gmra.mrb[0].mxu0 %v8478
      %v8863 = vpop.f32.mrb[0].mxu0
      %v8864 = vadd.f32 %v8626, %v8863
      %v8865 = vpop.f32.mrb[0].mxu0
      %8866 = vmatprep.mubr.f32.mxu0 %v8575
      %8867 = vmatmul.mubr.f32.gmra.mrb[0].mxu0 %v8479
      %v8868 = vpop.f32.mrb[0].mxu0
      %v8869 = vadd.f32 %v8626, %v8868
      %v8870 = vpop.f32.mrb[0].mxu0
      %8871 = vmatprep.mubr.f32.mxu0 %v8576
      %8872 = vmatmul.mubr.f32.gmra.mrb[0].mxu0 %v8480
      %v8873 = vpop.f32.mrb[0].mxu0
      %v8874 = vadd.f32 %v8626, %v8873
      %v8875 = vpop.f32.mrb[0].mxu0
      %8876 = vmatprep.mubr.f32.mxu0 %v8577
      %8877 = vmatmul.mubr.f32.gmra.mrb[0].mxu0 %v8481
      %v8878 = vpop.f32.mrb[0].mxu0
      %v8879 = vadd.f32 %v8626, %v8878
      %v8880 = vpop.f32.mrb[0].mxu0
      %8881 = vmatprep.mubr.f32.mxu0 %v8578
      %8882 = vmatmul.mubr.f32.gmra.mrb[0].mxu0 %v8482
      %v8883 = vpop.f32.mrb[0].mxu0
      %v8884 = vadd.f32 %v8626, %v8883
      %v8885 = vpop.f32.mrb[0].mxu0
      %8886 = vmatprep.mubr.f32.mxu0 %v8579
      %8887 = vmatmul.mubr.f32.gmra.mrb[0].mxu0 %v8483
      %v8888 = vpop.f32.mrb[0].mxu0
      %v8889 = vadd.f32 %v8626, %v8888
      %v8890 = vpop.f32.mrb[0].mxu0
      %8891 = vmatprep.mubr.f32.mxu0 %v8580
      %8892 = vmatmul.mubr.f32.gmra.mrb[0].mxu0 %v8484
      %v8893 = vpop.f32.mrb[0].mxu0
      %v8894 = vadd.f32 %v8626, %v8893
      %v8895 = vpop.f32.mrb[0].mxu0
      %8896 = vmatprep.mubr.f32.mxu0 %v8581
      %8897 = vmatmul.mubr.f32.gmra.mrb[0].mxu0 %v8485
      %v8898 = vpop.f32.mrb[0].mxu0
      %v8899 = vadd.f32 %v8626, %v8898
      %v8900 = vpop.f32.mrb[0].mxu0
      %8901 = vmatprep.mubr.f32.mxu0 %v8582
      %8902 = vmatmul.mubr.f32.gmra.mrb[0].mxu0 %v8486
      %v8903 = vpop.f32.mrb[0].mxu0
      %v8904 = vadd.f32 %v8626, %v8903
      %v8905 = vpop.f32.mrb[0].mxu0
      %8906 = vmatprep.mubr.f32.mxu0 %v8583
      %8907 = vmatmul.mubr.f32.gmra.mrb[0].mxu0 %v8487
      %v8908 = vpop.f32.mrb[0].mxu0
      %v8909 = vadd.f32 %v8626, %v8908
      %v8910 = vpop.f32.mrb[0].mxu0
      %8911 = vmatprep.mubr.f32.mxu0 %v8584
      %8912 = vmatmul.mubr.f32.gmra.mrb[0].mxu0 %v8488
      %v8913 = vpop.f32.mrb[0].mxu0
      %v8914 = vadd.f32 %v8626, %v8913
      %v8915 = vpop.f32.mrb[0].mxu0
      %8916 = vdwg.mxu0
      %8917 = vmatprep.subr.mxu0 0.0
      %8918 = vmatpush1.msra.mxu0 %v8617
      %8919 = vmatprep.subr.mxu0 0.0
      %8920 = vmatpush1.msra.mxu0 %v8618
      %8921 = vmatprep.subr.mxu0 0.0
      %8922 = vmatpush1.msra.mxu0 %v8619
      %8923 = vmatprep.subr.mxu0 0.0
      %8924 = vmatpush1.msra.mxu0 %v8620
      %8925 = vmatprep.subr.mxu0 0.0
      %8926 = vmatpush1.msra.mxu0 0.0
      %8927 = vmatprep.subr.mxu0 0.0
      %8928 = vmatpush1.msra.mxu0 0.0
      %8929 = vmatprep.subr.mxu0 0.0
      %8930 = vmatpush1.msra.mxu0 0.0
      %8931 = vmatprep.subr.mxu0 0.0
      %8932 = vmatpush1.msra.mxu0 0.0
      %8933 = vmatprep.subr.mxu0 0.0
      %8934 = vmatpush1.msra.mxu0 0.0
      %8935 = vmatprep.subr.mxu0 0.0
      %8936 = vmatpush1.msra.mxu0 0.0
      %8937 = vmatprep.subr.mxu0 0.0
      %8938 = vmatpush1.msra.mxu0 0.0
      %8939 = vmatprep.subr.mxu0 0.0
      %8940 = vmatpush1.msra.mxu0 0.0
      %8941 = vmatprep.subr.mxu0 0.0
      %8942 = vmatpush1.msra.mxu0 0.0
      %8943 = vmatprep.subr.mxu0 0.0
      %8944 = vmatpush1.msra.mxu0 0.0
      %8945 = vmatprep.subr.mxu0 0.0
      %8946 = vmatpush1.msra.mxu0 0.0
      %8947 = vmatprep.subr.mxu0 0.0
      %8948 = vmatpush1.msra.mxu0 0.0
      %8949 = vmatprep.subr.mxu0 0.0
      %8950 = vmatpush1.msra.mxu0 0.0
      %8951 = vmatprep.subr.mxu0 0.0
      %8952 = vmatpush1.msra.mxu0 0.0
      %8953 = vmatprep.subr.mxu0 0.0
      %8954 = vmatpush1.msra.mxu0 0.0
      %8955 = vmatprep.subr.mxu0 0.0
      %8956 = vmatpush1.msra.mxu0 0.0
      %8957 = vmatprep.subr.mxu0 0.0
      %8958 = vmatpush1.msra.mxu0 0.0
      %8959 = vmatprep.subr.mxu0 0.0
      %8960 = vmatpush1.msra.mxu0 0.0
      %8961 = vmatprep.subr.mxu0 0.0
      %8962 = vmatpush1.msra.mxu0 0.0
      %8963 = vmatprep.subr.mxu0 0.0
      %8964 = vmatpush1.msra.mxu0 0.0
      %8965 = vmatprep.subr.mxu0 0.0
      %8966 = vmatpush1.msra.mxu0 0.0
      %8967 = vmatprep.subr.mxu0 0.0
      %8968 = vmatpush1.msra.mxu0 0.0
      %8969 = vmatprep.subr.mxu0 0.0
      %8970 = vmatpush1.msra.mxu0 0.0
      %8971 = vmatprep.subr.mxu0 0.0
      %8972 = vmatpush1.msra.mxu0 0.0
      %8973 = vmatprep.subr.mxu0 0.0
      %8974 = vmatpush1.msra.mxu0 0.0
      %8975 = vmatprep.subr.mxu0 0.0
      %8976 = vmatpush1.msra.mxu0 0.0
      %8977 = vmatprep.subr.mxu0 0.0
      %8978 = vmatpush1.msra.mxu0 0.0
      %8979 = vmatprep.subr.mxu0 0.0
      %8980 = vmatpush1.msra.mxu0 0.0
      %8981 = vmatprep.mubr.f32.mxu0 0.0
      %8982 = vmatmul.mubr.f32.gmra.mrb[0].mxu0 %v8628
      %v8983 = vpop.f32.mrb[0].mxu0
      %v8984 = vadd.f32 %v8759, %v8983
      %v8985 = vpop.f32.mrb[0].mxu0
      %8986 = vmatprep.mubr.f32.mxu0 0.0
      %8987 = vmatmul.mubr.f32.gmra.mrb[0].mxu0 %v8630
      %v8988 = vpop.f32.mrb[0].mxu0
      %v8989 = vadd.f32 %v8764, %v8988
      %v8990 = vpop.f32.mrb[0].mxu0
      %8991 = vmatprep.mubr.f32.mxu0 0.0
      %8992 = vmatmul.mubr.f32.gmra.mrb[0].mxu0 %v8632
      %v8993 = vpop.f32.mrb[0].mxu0
      %v8994 = vadd.f32 %v8769, %v8993
      %v8995 = vpop.f32.mrb[0].mxu0
      %8996 = vmatprep.mubr.f32.mxu0 0.0
      %8997 = vmatmul.mubr.f32.gmra.mrb[0].mxu0 %v8634
      %v8998 = vpop.f32.mrb[0].mxu0
      %v8999 = vadd.f32 %v8774, %v8998
      %v9000 = vpop.f32.mrb[0].mxu0
      %9001 = vmatprep.mubr.f32.mxu0 0.0
      %9002 = vmatmul.mubr.f32.gmra.mrb[0].mxu0 %v8636
      %v9003 = vpop.f32.mrb[0].mxu0
      %v9004 = vadd.f32 %v8779, %v9003
      %v9005 = vpop.f32.mrb[0].mxu0
      %9006 = vmatprep.mubr.f32.mxu0 0.0
      %9007 = vmatmul.mubr.f32.gmra.mrb[0].mxu0 %v8638
      %v9008 = vpop.f32.mrb[0].mxu0
      %v9009 = vadd.f32 %v8784, %v9008
      %v9010 = vpop.f32.mrb[0].mxu0
      %9011 = vmatprep.mubr.f32.mxu0 0.0
      %9012 = vmatmul.mubr.f32.gmra.mrb[0].mxu0 %v8640
      %v9013 = vpop.f32.mrb[0].mxu0
      %v9014 = vadd.f32 %v8789, %v9013
      %v9015 = vpop.f32.mrb[0].mxu0
      %9016 = vmatprep.mubr.f32.mxu0 0.0
      %9017 = vmatmul.mubr.f32.gmra.mrb[0].mxu0 %v8642
      %v9018 = vpop.f32.mrb[0].mxu0
      %v9019 = vadd.f32 %v8794, %v9018
      %v9020 = vpop.f32.mrb[0].mxu0
      %9021 = vmatprep.mubr.f32.mxu0 0.0
      %9022 = vmatmul.mubr.f32.gmra.mrb[0].mxu0 %v8644
      %v9023 = vpop.f32.mrb[0].mxu0
      %v9024 = vadd.f32 %v8799, %v9023
      %v9025 = vpop.f32.mrb[0].mxu0
      %9026 = vmatprep.mubr.f32.mxu0 0.0
      %9027 = vmatmul.mubr.f32.gmra.mrb[0].mxu0 %v8646
      %v9028 = vpop.f32.mrb[0].mxu0
      %v9029 = vadd.f32 %v8804, %v9028
      %v9030 = vpop.f32.mrb[0].mxu0
      %9031 = vmatprep.mubr.f32.mxu0 0.0
      %9032 = vmatmul.mubr.f32.gmra.mrb[0].mxu0 %v8648
      %v9033 = vpop.f32.mrb[0].mxu0
      %v9034 = vadd.f32 %v8809, %v9033
      %v9035 = vpop.f32.mrb[0].mxu0
      %9036 = vmatprep.mubr.f32.mxu0 0.0
      %9037 = vmatmul.mubr.f32.gmra.mrb[0].mxu0 %v8650
      %v9038 = vpop.f32.mrb[0].mxu0
      %v9039 = vadd.f32 %v8814, %v9038
      %v9040 = vpop.f32.mrb[0].mxu0
      %9041 = vmatprep.mubr.f32.mxu0 0.0
      %9042 = vmatmul.mubr.f32.gmra.mrb[0].mxu0 %v8652
      %v9043 = vpop.f32.mrb[0].mxu0
      %v9044 = vadd.f32 %v8819, %v9043
      %v9045 = vpop.f32.mrb[0].mxu0
      %9046 = vmatprep.mubr.f32.mxu0 0.0
      %9047 = vmatmul.mubr.f32.gmra.mrb[0].mxu0 %v8654
      %v9048 = vpop.f32.mrb[0].mxu0
      %v9049 = vadd.f32 %v8824, %v9048
      %v9050 = vpop.f32.mrb[0].mxu0
      %9051 = vmatprep.mubr.f32.mxu0 0.0
      %9052 = vmatmul.mubr.f32.gmra.mrb[0].mxu0 %v8656
      %v9053 = vpop.f32.mrb[0].mxu0
      %v9054 = vadd.f32 %v8829, %v9053
      %v9055 = vpop.f32.mrb[0].mxu0
      %9056 = vmatprep.mubr.f32.mxu0 0.0
      %9057 = vmatmul.mubr.f32.gmra.mrb[0].mxu0 %v8658
      %v9058 = vpop.f32.mrb[0].mxu0
      %v9059 = vadd.f32 %v8834, %v9058
      %v9060 = vpop.f32.mrb[0].mxu0
      %9061 = vmatprep.mubr.f32.mxu0 0.0
      %9062 = vmatmul.mubr.f32.gmra.mrb[0].mxu0 %v8660
      %v9063 = vpop.f32.mrb[0].mxu0
      %v9064 = vadd.f32 %v8839, %v9063
      %v9065 = vpop.f32.mrb[0].mxu0
      %9066 = vmatprep.mubr.f32.mxu0 0.0
      %9067 = vmatmul.mubr.f32.gmra.mrb[0].mxu0 %v8662
      %v9068 = vpop.f32.mrb[0].mxu0
      %v9069 = vadd.f32 %v8844, %v9068
      %v9070 = vpop.f32.mrb[0].mxu0
      %9071 = vmatprep.mubr.f32.mxu0 0.0
      %9072 = vmatmul.mubr.f32.gmra.mrb[0].mxu0 %v8664
      %v9073 = vpop.f32.mrb[0].mxu0
      %v9074 = vadd.f32 %v8849, %v9073
      %v9075 = vpop.f32.mrb[0].mxu0
      %9076 = vmatprep.mubr.f32.mxu0 0.0
      %9077 = vmatmul.mubr.f32.gmra.mrb[0].mxu0 %v8666
      %v9078 = vpop.f32.mrb[0].mxu0
      %v9079 = vadd.f32 %v8854, %v9078
      %v9080 = vpop.f32.mrb[0].mxu0
      %9081 = vmatprep.mubr.f32.mxu0 0.0
      %9082 = vmatmul.mubr.f32.gmra.mrb[0].mxu0 %v8668
      %v9083 = vpop.f32.mrb[0].mxu0
      %v9084 = vadd.f32 %v8859, %v9083
      %v9085 = vpop.f32.mrb[0].mxu0
      %9086 = vmatprep.mubr.f32.mxu0 0.0
      %9087 = vmatmul.mubr.f32.gmra.mrb[0].mxu0 %v8670
      %v9088 = vpop.f32.mrb[0].mxu0
      %v9089 = vadd.f32 %v8864, %v9088
      %v9090 = vpop.f32.mrb[0].mxu0
      %9091 = vmatprep.mubr.f32.mxu0 0.0
      %9092 = vmatmul.mubr.f32.gmra.mrb[0].mxu0 %v8672
      %v9093 = vpop.f32.mrb[0].mxu0
      %v9094 = vadd.f32 %v8869, %v9093
      %v9095 = vpop.f32.mrb[0].mxu0
      %9096 = vmatprep.mubr.f32.mxu0 0.0
      %9097 = vmatmul.mubr.f32.gmra.mrb[0].mxu0 %v8674
      %v9098 = vpop.f32.mrb[0].mxu0
      %v9099 = vadd.f32 %v8874, %v9098
      %v9100 = vpop.f32.mrb[0].mxu0
      %9101 = vmatprep.mubr.f32.mxu0 0.0
      %9102 = vmatmul.mubr.f32.gmra.mrb[0].mxu0 %v8676
      %v9103 = vpop.f32.mrb[0].mxu0
      %v9104 = vadd.f32 %v8879, %v9103
      %v9105 = vpop.f32.mrb[0].mxu0
      %9106 = vmatprep.mubr.f32.mxu0 0.0
      %9107 = vmatmul.mubr.f32.gmra.mrb[0].mxu0 %v8678
      %v9108 = vpop.f32.mrb[0].mxu0
      %v9109 = vadd.f32 %v8884, %v9108
      %v9110 = vpop.f32.mrb[0].mxu0
      %9111 = vmatprep.mubr.f32.mxu0 0.0
      %9112 = vmatmul.mubr.f32.gmra.mrb[0].mxu0 %v8680
      %v9113 = vpop.f32.mrb[0].mxu0
      %v9114 = vadd.f32 %v8889, %v9113
      %v9115 = vpop.f32.mrb[0].mxu0
      %9116 = vmatprep.mubr.f32.mxu0 0.0
      %9117 = vmatmul.mubr.f32.gmra.mrb[0].mxu0 %v8682
      %v9118 = vpop.f32.mrb[0].mxu0
      %v9119 = vadd.f32 %v8894, %v9118
      %v9120 = vpop.f32.mrb[0].mxu0
      %9121 = vmatprep.mubr.f32.mxu0 0.0
      %9122 = vmatmul.mubr.f32.gmra.mrb[0].mxu0 %v8684
      %v9123 = vpop.f32.mrb[0].mxu0
      %v9124 = vadd.f32 %v8899, %v9123
      %v9125 = vpop.f32.mrb[0].mxu0
      %9126 = vmatprep.mubr.f32.mxu0 0.0
      %9127 = vmatmul.mubr.f32.gmra.mrb[0].mxu0 %v8686
      %v9128 = vpop.f32.mrb[0].mxu0
      %v9129 = vadd.f32 %v8904, %v9128
      %v9130 = vpop.f32.mrb[0].mxu0
      %9131 = vmatprep.mubr.f32.mxu0 0.0
      %9132 = vmatmul.mubr.f32.gmra.mrb[0].mxu0 %v8688
      %v9133 = vpop.f32.mrb[0].mxu0
      %v9134 = vadd.f32 %v8909, %v9133
      %v9135 = vpop.f32.mrb[0].mxu0
      %9136 = vmatprep.mubr.f32.mxu0 0.0
      %9137 = vmatmul.mubr.f32.gmra.mrb[0].mxu0 %v8690
      %v9138 = vpop.f32.mrb[0].mxu0
      %v9139 = vadd.f32 %v8914, %v9138
      %v9140 = vpop.f32.mrb[0].mxu0
      %9141 = vdwg.mxu0
      %v9142 = vmax.f32 %v8984, 0.0
      %v9143 = vmax.f32 %v8989, 0.0
      %v9144 = vmax.f32 %v8994, 0.0
      %v9145 = vmax.f32 %v8999, 0.0
      %v9146 = vmax.f32 %v9004, 0.0
      %v9147 = vmax.f32 %v9009, 0.0
      %v9148 = vmax.f32 %v9014, 0.0
      %v9149 = vmax.f32 %v9019, 0.0
      %v9150 = vmax.f32 %v9024, 0.0
      %v9151 = vmax.f32 %v9029, 0.0
      %v9152 = vmax.f32 %v9034, 0.0
      %v9153 = vmax.f32 %v9039, 0.0
      %v9154 = vmax.f32 %v9044, 0.0
      %v9155 = vmax.f32 %v9049, 0.0
      %v9156 = vmax.f32 %v9054, 0.0
      %v9157 = vmax.f32 %v9059, 0.0
      %v9158 = vmax.f32 %v9064, 0.0
      %v9159 = vmax.f32 %v9069, 0.0
      %v9160 = vmax.f32 %v9074, 0.0
      %v9161 = vmax.f32 %v9079, 0.0
      %v9162 = vmax.f32 %v9084, 0.0
      %v9163 = vmax.f32 %v9089, 0.0
      %v9164 = vmax.f32 %v9094, 0.0
      %v9165 = vmax.f32 %v9099, 0.0
      %v9166 = vmax.f32 %v9104, 0.0
      %v9167 = vmax.f32 %v9109, 0.0
      %v9168 = vmax.f32 %v9114, 0.0
      %v9169 = vmax.f32 %v9119, 0.0
      %v9170 = vmax.f32 %v9124, 0.0
      %v9171 = vmax.f32 %v9129, 0.0
      %v9172 = vmax.f32 %v9134, 0.0
      %v9173 = vmax.f32 %v9139, 0.0
      %9174 = vst.msk [vmem:[%s7463 + $0x1] sm:$0xff] %vm333, %v9142
      %9175 = vst.msk [vmem:[%s7463 + $0x9] sm:$0xff] %vm333, %v9143
      %9176 = vst.msk [vmem:[%s7463 + $0x19] sm:$0xff] %vm333, %v9144
      %9177 = vst.msk [vmem:[%s7463 + $0x21] sm:$0xff] %vm333, %v9145
      %9178 = vst.msk [vmem:[%s7463 + $0x31] sm:$0xff] %vm333, %v9146
      %9179 = vst.msk [vmem:[%s7463 + $0x39] sm:$0xff] %vm333, %v9147
      %9180 = vst.msk [vmem:[%s7463 + $0x49] sm:$0xff] %vm333, %v9148
      %9181 = vst.msk [vmem:[%s7463 + $0x51] sm:$0xff] %vm333, %v9149
      %9182 = vst.msk [vmem:[%s7463 + $0x61] sm:$0xff] %vm333, %v9150
      %9183 = vst.msk [vmem:[%s7463 + $0x69] sm:$0xff] %vm333, %v9151
      %9184 = vst.msk [vmem:[%s7463 + $0x79] sm:$0xff] %vm333, %v9152
      %9185 = vst.msk [vmem:[%s7463 + $0x81] sm:$0xff] %vm333, %v9153
      %9186 = vst.msk [vmem:[%s7463 + $0x91] sm:$0xff] %vm333, %v9154
      %9187 = vst.msk [vmem:[%s7463 + $0x99] sm:$0xff] %vm333, %v9155
      %9188 = vst.msk [vmem:[%s7463 + $0xa9] sm:$0xff] %vm333, %v9156
      %9189 = vst.msk [vmem:[%s7463 + $0xb1] sm:$0xff] %vm333, %v9157
      %9190 = vst.msk [vmem:[%s7463 + $0xc1] sm:$0xff] %vm333, %v9158
      %9191 = vst.msk [vmem:[%s7463 + $0xc9] sm:$0xff] %vm333, %v9159
      %9192 = vst.msk [vmem:[%s7463 + $0xd9] sm:$0xff] %vm333, %v9160
      %9193 = vst.msk [vmem:[%s7463 + $0xe1] sm:$0xff] %vm333, %v9161
      %9194 = vst.msk [vmem:[%s7463 + $0xf1] sm:$0xff] %vm333, %v9162
      %9195 = vst.msk [vmem:[%s7463 + $0xf9] sm:$0xff] %vm333, %v9163
      %9196 = vst.msk [vmem:[%s7463 + $0x109] sm:$0xff] %vm333, %v9164
      %9197 = vst.msk [vmem:[%s7463 + $0x111] sm:$0xff] %vm333, %v9165
      %9198 = vst.msk [vmem:[%s7463 + $0x121] sm:$0xff] %vm333, %v9166
      %9199 = vst.msk [vmem:[%s7463 + $0x129] sm:$0xff] %vm333, %v9167
      %9200 = vst.msk [vmem:[%s7463 + $0x139] sm:$0xff] %vm333, %v9168
      %9201 = vst.msk [vmem:[%s7463 + $0x141] sm:$0xff] %vm333, %v9169
      %9202 = vst.msk [vmem:[%s7463 + $0x151] sm:$0xff] %vm333, %v9170
      %9203 = vst.msk [vmem:[%s7463 + $0x159] sm:$0xff] %vm333, %v9171
      %9204 = vst.msk [vmem:[%s7463 + $0x169] sm:$0xff] %vm333, %v9172
      %9205 = vst.msk [vmem:[%s7463 + $0x171] sm:$0xff] %vm333, %v9173
      %v9206 = vld [vmem:[#allocation2] sm:$0xff]
      %v9207 = vld [vmem:[#allocation2 + $0x8] sm:$0xff]
      %v9208 = vld [vmem:[#allocation2 + $0x10] sm:$0x3]
      %v9209 = vld [vmem:[#allocation2 + $0x18] sm:$0xff]
      %v9210 = vld [vmem:[#allocation2 + $0x20] sm:$0xff]
      %v9211 = vld [vmem:[#allocation2 + $0x28] sm:$0x3]
      %v9212 = vld [vmem:[#allocation2 + $0x30] sm:$0xff]
      %v9213 = vld [vmem:[#allocation2 + $0x38] sm:$0xff]
      %v9214 = vld [vmem:[#allocation2 + $0x40] sm:$0x3]
      %v9215 = vld [vmem:[#allocation2 + $0x48] sm:$0xff]
      %v9216 = vld [vmem:[#allocation2 + $0x50] sm:$0xff]
      %v9217 = vld [vmem:[#allocation2 + $0x58] sm:$0x3]
      %v9218 = vld [vmem:[#allocation2 + $0x60] sm:$0xff]
      %v9219 = vld [vmem:[#allocation2 + $0x68] sm:$0xff]
      %v9220 = vld [vmem:[#allocation2 + $0x70] sm:$0x3]
      %v9221 = vld [vmem:[#allocation2 + $0x78] sm:$0xff]
      %v9222 = vld [vmem:[#allocation2 + $0x80] sm:$0xff]
      %v9223 = vld [vmem:[#allocation2 + $0x88] sm:$0x3]
      %v9224 = vld [vmem:[#allocation2 + $0x90] sm:$0xff]
      %v9225 = vld [vmem:[#allocation2 + $0x98] sm:$0xff]
      %v9226 = vld [vmem:[#allocation2 + $0xa0] sm:$0x3]
      %v9227 = vld [vmem:[#allocation2 + $0xa8] sm:$0xff]
      %v9228 = vld [vmem:[#allocation2 + $0xb0] sm:$0xff]
      %v9229 = vld [vmem:[#allocation2 + $0xb8] sm:$0x3]
      %v9230 = vld [vmem:[#allocation2 + $0xc0] sm:$0xff]
      %v9231 = vld [vmem:[#allocation2 + $0xc8] sm:$0xff]
      %v9232 = vld [vmem:[#allocation2 + $0xd0] sm:$0x3]
      %v9233 = vld [vmem:[#allocation2 + $0xd8] sm:$0xff]
      %v9234 = vld [vmem:[#allocation2 + $0xe0] sm:$0xff]
      %v9235 = vld [vmem:[#allocation2 + $0xe8] sm:$0x3]
      %v9236 = vld [vmem:[#allocation2 + $0xf0] sm:$0xff]
      %v9237 = vld [vmem:[#allocation2 + $0xf8] sm:$0xff]
      %v9238 = vld [vmem:[#allocation2 + $0x100] sm:$0x3]
      %v9239 = vld [vmem:[#allocation2 + $0x108] sm:$0xff]
      %v9240 = vld [vmem:[#allocation2 + $0x110] sm:$0xff]
      %v9241 = vld [vmem:[#allocation2 + $0x118] sm:$0x3]
      %v9242 = vld [vmem:[#allocation2 + $0x120] sm:$0xff]
      %v9243 = vld [vmem:[#allocation2 + $0x128] sm:$0xff]
      %v9244 = vld [vmem:[#allocation2 + $0x130] sm:$0x3]
      %v9245 = vld [vmem:[#allocation2 + $0x138] sm:$0xff]
      %v9246 = vld [vmem:[#allocation2 + $0x140] sm:$0xff]
      %v9247 = vld [vmem:[#allocation2 + $0x148] sm:$0x3]
      %v9248 = vld [vmem:[#allocation2 + $0x150] sm:$0xff]
      %v9249 = vld [vmem:[#allocation2 + $0x158] sm:$0xff]
      %v9250 = vld [vmem:[#allocation2 + $0x160] sm:$0x3]
      %v9251 = vld [vmem:[#allocation2 + $0x168] sm:$0xff]
      %v9252 = vld [vmem:[#allocation2 + $0x170] sm:$0xff]
      %v9253 = vld [vmem:[#allocation2 + $0x178] sm:$0x3]
      %v9254 = vld [vmem:[#allocation2 + $0x180] sm:$0xff]
      %v9255 = vld [vmem:[#allocation2 + $0x188] sm:$0xff]
      %v9256 = vld [vmem:[#allocation2 + $0x190] sm:$0x3]
      %v9257 = vld [vmem:[#allocation2 + $0x198] sm:$0xff]
      %v9258 = vld [vmem:[#allocation2 + $0x1a0] sm:$0xff]
      %v9259 = vld [vmem:[#allocation2 + $0x1a8] sm:$0x3]
      %v9308 = vrot.slane %v9206, 1
      %v9309 = vrot.slane %v9207, 1
      %v9310 = vsel %vm503, %v9308, %v9309
      %v9311 = vrot.slane %v9208, 1
      %v9312 = vsel %vm503, %v9309, %v9311
      %v9313 = vrot.slane %v9209, 1
      %v9314 = vrot.slane %v9210, 1
      %v9315 = vsel %vm503, %v9313, %v9314
      %v9316 = vrot.slane %v9211, 1
      %v9317 = vsel %vm503, %v9314, %v9316
      %v9318 = vrot.slane %v9212, 1
      %v9319 = vrot.slane %v9213, 1
      %v9320 = vsel %vm503, %v9318, %v9319
      %v9321 = vrot.slane %v9214, 1
      %v9322 = vsel %vm503, %v9319, %v9321
      %v9323 = vrot.slane %v9215, 1
      %v9324 = vrot.slane %v9216, 1
      %v9325 = vsel %vm503, %v9323, %v9324
      %v9326 = vrot.slane %v9217, 1
      %v9327 = vsel %vm503, %v9324, %v9326
      %v9328 = vrot.slane %v9218, 1
      %v9329 = vrot.slane %v9219, 1
      %v9330 = vsel %vm503, %v9328, %v9329
      %v9331 = vrot.slane %v9220, 1
      %v9332 = vsel %vm503, %v9329, %v9331
      %v9333 = vrot.slane %v9221, 1
      %v9334 = vrot.slane %v9222, 1
      %v9335 = vsel %vm503, %v9333, %v9334
      %v9336 = vrot.slane %v9223, 1
      %v9337 = vsel %vm503, %v9334, %v9336
      %v9338 = vrot.slane %v9224, 1
      %v9339 = vrot.slane %v9225, 1
      %v9340 = vsel %vm503, %v9338, %v9339
      %v9341 = vrot.slane %v9226, 1
      %v9342 = vsel %vm503, %v9339, %v9341
      %v9343 = vrot.slane %v9227, 1
      %v9344 = vrot.slane %v9228, 1
      %v9345 = vsel %vm503, %v9343, %v9344
      %v9346 = vrot.slane %v9229, 1
      %v9347 = vsel %vm503, %v9344, %v9346
      %v9348 = vrot.slane %v9230, 1
      %v9349 = vrot.slane %v9231, 1
      %v9350 = vsel %vm503, %v9348, %v9349
      %v9351 = vrot.slane %v9232, 1
      %v9352 = vsel %vm503, %v9349, %v9351
      %v9353 = vrot.slane %v9233, 1
      %v9354 = vrot.slane %v9234, 1
      %v9355 = vsel %vm503, %v9353, %v9354
      %v9356 = vrot.slane %v9235, 1
      %v9357 = vsel %vm503, %v9354, %v9356
      %v9358 = vrot.slane %v9236, 1
      %v9359 = vrot.slane %v9237, 1
      %v9360 = vsel %vm503, %v9358, %v9359
      %v9361 = vrot.slane %v9238, 1
      %v9362 = vsel %vm503, %v9359, %v9361
      %v9363 = vrot.slane %v9239, 1
      %v9364 = vrot.slane %v9240, 1
      %v9365 = vsel %vm503, %v9363, %v9364
      %v9366 = vrot.slane %v9241, 1
      %v9367 = vsel %vm503, %v9364, %v9366
      %v9368 = vrot.slane %v9242, 1
      %v9369 = vrot.slane %v9243, 1
      %v9370 = vsel %vm503, %v9368, %v9369
      %v9371 = vrot.slane %v9244, 1
      %v9372 = vsel %vm503, %v9369, %v9371
      %v9373 = vrot.slane %v9245, 1
      %v9374 = vrot.slane %v9246, 1
      %v9375 = vsel %vm503, %v9373, %v9374
      %v9376 = vrot.slane %v9247, 1
      %v9377 = vsel %vm503, %v9374, %v9376
      %v9378 = vrot.slane %v9248, 1
      %v9379 = vrot.slane %v9249, 1
      %v9380 = vsel %vm503, %v9378, %v9379
      %v9381 = vrot.slane %v9250, 1
      %v9382 = vsel %vm503, %v9379, %v9381
      %v9383 = vrot.slane %v9251, 1
      %v9384 = vrot.slane %v9252, 1
      %v9385 = vsel %vm503, %v9383, %v9384
      %v9386 = vrot.slane %v9253, 1
      %v9387 = vsel %vm503, %v9384, %v9386
      %9388 = vrot.lane.b32.xlu0 %v9310, 32
      %v9389 = vpop.permute.xlu0 %9388
      %9390 = vrot.lane.b32.xlu0 %v9312, 32
      %v9391 = vpop.permute.xlu0 %9390
      %9392 = vrot.lane.b32.xlu0 %v9315, 32
      %v9393 = vpop.permute.xlu0 %9392
      %9394 = vrot.lane.b32.xlu0 %v9317, 32
      %v9395 = vpop.permute.xlu0 %9394
      %9396 = vrot.lane.b32.xlu0 %v9320, 32
      %v9397 = vpop.permute.xlu0 %9396
      %9398 = vrot.lane.b32.xlu0 %v9322, 32
      %v9399 = vpop.permute.xlu0 %9398
      %9400 = vrot.lane.b32.xlu0 %v9325, 32
      %v9401 = vpop.permute.xlu0 %9400
      %9402 = vrot.lane.b32.xlu0 %v9327, 32
      %v9403 = vpop.permute.xlu0 %9402
      %9404 = vrot.lane.b32.xlu0 %v9330, 32
      %v9405 = vpop.permute.xlu0 %9404
      %9406 = vrot.lane.b32.xlu0 %v9332, 32
      %v9407 = vpop.permute.xlu0 %9406
      %9408 = vrot.lane.b32.xlu0 %v9335, 32
      %v9409 = vpop.permute.xlu0 %9408
      %9410 = vrot.lane.b32.xlu0 %v9337, 32
      %v9411 = vpop.permute.xlu0 %9410
      %9412 = vrot.lane.b32.xlu0 %v9340, 32
      %v9413 = vpop.permute.xlu0 %9412
      %9414 = vrot.lane.b32.xlu0 %v9342, 32
      %v9415 = vpop.permute.xlu0 %9414
      %9416 = vrot.lane.b32.xlu0 %v9345, 32
      %v9417 = vpop.permute.xlu0 %9416
      %9418 = vrot.lane.b32.xlu0 %v9347, 32
      %v9419 = vpop.permute.xlu0 %9418
      %9420 = vrot.lane.b32.xlu0 %v9350, 32
      %v9421 = vpop.permute.xlu0 %9420
      %9422 = vrot.lane.b32.xlu0 %v9352, 32
      %v9423 = vpop.permute.xlu0 %9422
      %9424 = vrot.lane.b32.xlu0 %v9355, 32
      %v9425 = vpop.permute.xlu0 %9424
      %9426 = vrot.lane.b32.xlu0 %v9357, 32
      %v9427 = vpop.permute.xlu0 %9426
      %9428 = vrot.lane.b32.xlu0 %v9360, 32
      %v9429 = vpop.permute.xlu0 %9428
      %9430 = vrot.lane.b32.xlu0 %v9362, 32
      %v9431 = vpop.permute.xlu0 %9430
      %9432 = vrot.lane.b32.xlu0 %v9365, 32
      %v9433 = vpop.permute.xlu0 %9432
      %9434 = vrot.lane.b32.xlu0 %v9367, 32
      %v9435 = vpop.permute.xlu0 %9434
      %9436 = vrot.lane.b32.xlu0 %v9370, 32
      %v9437 = vpop.permute.xlu0 %9436
      %9438 = vrot.lane.b32.xlu0 %v9372, 32
      %v9439 = vpop.permute.xlu0 %9438
      %9440 = vrot.lane.b32.xlu0 %v9375, 32
      %v9441 = vpop.permute.xlu0 %9440
      %9442 = vrot.lane.b32.xlu0 %v9377, 32
      %v9443 = vpop.permute.xlu0 %9442
      %9444 = vrot.lane.b32.xlu0 %v9380, 32
      %v9445 = vpop.permute.xlu0 %9444
      %9446 = vrot.lane.b32.xlu0 %v9382, 32
      %v9447 = vpop.permute.xlu0 %9446
      %9448 = vrot.lane.b32.xlu0 %v9385, 32
      %v9449 = vpop.permute.xlu0 %9448
      %9450 = vrot.lane.b32.xlu0 %v9387, 32
      %v9451 = vpop.permute.xlu0 %9450
      %v9484 = vrot.slane %v9206, 2
      %v9485 = vrot.slane %v9207, 2
      %v9486 = vsel %vm680, %v9484, %v9485
      %v9487 = vrot.slane %v9208, 2
      %v9488 = vsel %vm680, %v9485, %v9487
      %v9489 = vrot.slane %v9209, 2
      %v9490 = vrot.slane %v9210, 2
      %v9491 = vsel %vm680, %v9489, %v9490
      %v9492 = vrot.slane %v9211, 2
      %v9493 = vsel %vm680, %v9490, %v9492
      %v9494 = vrot.slane %v9212, 2
      %v9495 = vrot.slane %v9213, 2
      %v9496 = vsel %vm680, %v9494, %v9495
      %v9497 = vrot.slane %v9214, 2
      %v9498 = vsel %vm680, %v9495, %v9497
      %v9499 = vrot.slane %v9215, 2
      %v9500 = vrot.slane %v9216, 2
      %v9501 = vsel %vm680, %v9499, %v9500
      %v9502 = vrot.slane %v9217, 2
      %v9503 = vsel %vm680, %v9500, %v9502
      %v9504 = vrot.slane %v9218, 2
      %v9505 = vrot.slane %v9219, 2
      %v9506 = vsel %vm680, %v9504, %v9505
      %v9507 = vrot.slane %v9220, 2
      %v9508 = vsel %vm680, %v9505, %v9507
      %v9509 = vrot.slane %v9221, 2
      %v9510 = vrot.slane %v9222, 2
      %v9511 = vsel %vm680, %v9509, %v9510
      %v9512 = vrot.slane %v9223, 2
      %v9513 = vsel %vm680, %v9510, %v9512
      %v9514 = vrot.slane %v9224, 2
      %v9515 = vrot.slane %v9225, 2
      %v9516 = vsel %vm680, %v9514, %v9515
      %v9517 = vrot.slane %v9226, 2
      %v9518 = vsel %vm680, %v9515, %v9517
      %v9519 = vrot.slane %v9227, 2
      %v9520 = vrot.slane %v9228, 2
      %v9521 = vsel %vm680, %v9519, %v9520
      %v9522 = vrot.slane %v9229, 2
      %v9523 = vsel %vm680, %v9520, %v9522
      %v9524 = vrot.slane %v9230, 2
      %v9525 = vrot.slane %v9231, 2
      %v9526 = vsel %vm680, %v9524, %v9525
      %v9527 = vrot.slane %v9232, 2
      %v9528 = vsel %vm680, %v9525, %v9527
      %v9529 = vrot.slane %v9233, 2
      %v9530 = vrot.slane %v9234, 2
      %v9531 = vsel %vm680, %v9529, %v9530
      %v9532 = vrot.slane %v9235, 2
      %v9533 = vsel %vm680, %v9530, %v9532
      %v9534 = vrot.slane %v9236, 2
      %v9535 = vrot.slane %v9237, 2
      %v9536 = vsel %vm680, %v9534, %v9535
      %v9537 = vrot.slane %v9238, 2
      %v9538 = vsel %vm680, %v9535, %v9537
      %v9539 = vrot.slane %v9239, 2
      %v9540 = vrot.slane %v9240, 2
      %v9541 = vsel %vm680, %v9539, %v9540
      %v9542 = vrot.slane %v9241, 2
      %v9543 = vsel %vm680, %v9540, %v9542
      %v9544 = vrot.slane %v9242, 2
      %v9545 = vrot.slane %v9243, 2
      %v9546 = vsel %vm680, %v9544, %v9545
      %v9547 = vrot.slane %v9244, 2
      %v9548 = vsel %vm680, %v9545, %v9547
      %v9549 = vrot.slane %v9245, 2
      %v9550 = vrot.slane %v9246, 2
      %v9551 = vsel %vm680, %v9549, %v9550
      %v9552 = vrot.slane %v9247, 2
      %v9553 = vsel %vm680, %v9550, %v9552
      %v9554 = vrot.slane %v9248, 2
      %v9555 = vrot.slane %v9249, 2
      %v9556 = vsel %vm680, %v9554, %v9555
      %v9557 = vrot.slane %v9250, 2
      %v9558 = vsel %vm680, %v9555, %v9557
      %v9559 = vrot.slane %v9251, 2
      %v9560 = vrot.slane %v9252, 2
      %v9561 = vsel %vm680, %v9559, %v9560
      %v9562 = vrot.slane %v9253, 2
      %v9563 = vsel %vm680, %v9560, %v9562
      %9564 = vrot.lane.b32.xlu0 %v9486, 64
      %v9565 = vpop.permute.xlu0 %9564
      %9566 = vrot.lane.b32.xlu0 %v9488, 64
      %v9567 = vpop.permute.xlu0 %9566
      %9568 = vrot.lane.b32.xlu0 %v9491, 64
      %v9569 = vpop.permute.xlu0 %9568
      %9570 = vrot.lane.b32.xlu0 %v9493, 64
      %v9571 = vpop.permute.xlu0 %9570
      %9572 = vrot.lane.b32.xlu0 %v9496, 64
      %v9573 = vpop.permute.xlu0 %9572
      %9574 = vrot.lane.b32.xlu0 %v9498, 64
      %v9575 = vpop.permute.xlu0 %9574
      %9576 = vrot.lane.b32.xlu0 %v9501, 64
      %v9577 = vpop.permute.xlu0 %9576
      %9578 = vrot.lane.b32.xlu0 %v9503, 64
      %v9579 = vpop.permute.xlu0 %9578
      %9580 = vrot.lane.b32.xlu0 %v9506, 64
      %v9581 = vpop.permute.xlu0 %9580
      %9582 = vrot.lane.b32.xlu0 %v9508, 64
      %v9583 = vpop.permute.xlu0 %9582
      %9584 = vrot.lane.b32.xlu0 %v9511, 64
      %v9585 = vpop.permute.xlu0 %9584
      %9586 = vrot.lane.b32.xlu0 %v9513, 64
      %v9587 = vpop.permute.xlu0 %9586
      %9588 = vrot.lane.b32.xlu0 %v9516, 64
      %v9589 = vpop.permute.xlu0 %9588
      %9590 = vrot.lane.b32.xlu0 %v9518, 64
      %v9591 = vpop.permute.xlu0 %9590
      %9592 = vrot.lane.b32.xlu0 %v9521, 64
      %v9593 = vpop.permute.xlu0 %9592
      %9594 = vrot.lane.b32.xlu0 %v9523, 64
      %v9595 = vpop.permute.xlu0 %9594
      %9596 = vrot.lane.b32.xlu0 %v9526, 64
      %v9597 = vpop.permute.xlu0 %9596
      %9598 = vrot.lane.b32.xlu0 %v9528, 64
      %v9599 = vpop.permute.xlu0 %9598
      %9600 = vrot.lane.b32.xlu0 %v9531, 64
      %v9601 = vpop.permute.xlu0 %9600
      %9602 = vrot.lane.b32.xlu0 %v9533, 64
      %v9603 = vpop.permute.xlu0 %9602
      %9604 = vrot.lane.b32.xlu0 %v9536, 64
      %v9605 = vpop.permute.xlu0 %9604
      %9606 = vrot.lane.b32.xlu0 %v9538, 64
      %v9607 = vpop.permute.xlu0 %9606
      %9608 = vrot.lane.b32.xlu0 %v9541, 64
      %v9609 = vpop.permute.xlu0 %9608
      %9610 = vrot.lane.b32.xlu0 %v9543, 64
      %v9611 = vpop.permute.xlu0 %9610
      %9612 = vrot.lane.b32.xlu0 %v9546, 64
      %v9613 = vpop.permute.xlu0 %9612
      %9614 = vrot.lane.b32.xlu0 %v9548, 64
      %v9615 = vpop.permute.xlu0 %9614
      %9616 = vrot.lane.b32.xlu0 %v9551, 64
      %v9617 = vpop.permute.xlu0 %9616
      %9618 = vrot.lane.b32.xlu0 %v9553, 64
      %v9619 = vpop.permute.xlu0 %9618
      %9620 = vrot.lane.b32.xlu0 %v9556, 64
      %v9621 = vpop.permute.xlu0 %9620
      %9622 = vrot.lane.b32.xlu0 %v9558, 64
      %v9623 = vpop.permute.xlu0 %9622
      %9624 = vrot.lane.b32.xlu0 %v9561, 64
      %v9625 = vpop.permute.xlu0 %9624
      %9626 = vrot.lane.b32.xlu0 %v9563, 64
      %v9627 = vpop.permute.xlu0 %9626
      %9662 = vrot.lane.b32.xlu0 %v9209, 96
      %v9663 = vpop.permute.xlu0 %9662
      %9664 = vrot.lane.b32.xlu0 %v9210, 96
      %v9665 = vpop.permute.xlu0 %9664
      %9666 = vrot.lane.b32.xlu0 %v9212, 96
      %v9667 = vpop.permute.xlu0 %9666
      %9668 = vrot.lane.b32.xlu0 %v9213, 96
      %v9669 = vpop.permute.xlu0 %9668
      %9670 = vrot.lane.b32.xlu0 %v9215, 96
      %v9671 = vpop.permute.xlu0 %9670
      %9672 = vrot.lane.b32.xlu0 %v9216, 96
      %v9673 = vpop.permute.xlu0 %9672
      %9674 = vrot.lane.b32.xlu0 %v9218, 96
      %v9675 = vpop.permute.xlu0 %9674
      %9676 = vrot.lane.b32.xlu0 %v9219, 96
      %v9677 = vpop.permute.xlu0 %9676
      %9678 = vrot.lane.b32.xlu0 %v9221, 96
      %v9679 = vpop.permute.xlu0 %9678
      %9680 = vrot.lane.b32.xlu0 %v9222, 96
      %v9681 = vpop.permute.xlu0 %9680
      %9682 = vrot.lane.b32.xlu0 %v9224, 96
      %v9683 = vpop.permute.xlu0 %9682
      %9684 = vrot.lane.b32.xlu0 %v9225, 96
      %v9685 = vpop.permute.xlu0 %9684
      %9686 = vrot.lane.b32.xlu0 %v9227, 96
      %v9687 = vpop.permute.xlu0 %9686
      %9688 = vrot.lane.b32.xlu0 %v9228, 96
      %v9689 = vpop.permute.xlu0 %9688
      %9690 = vrot.lane.b32.xlu0 %v9230, 96
      %v9691 = vpop.permute.xlu0 %9690
      %9692 = vrot.lane.b32.xlu0 %v9231, 96
      %v9693 = vpop.permute.xlu0 %9692
      %9694 = vrot.lane.b32.xlu0 %v9233, 96
      %v9695 = vpop.permute.xlu0 %9694
      %9696 = vrot.lane.b32.xlu0 %v9234, 96
      %v9697 = vpop.permute.xlu0 %9696
      %9698 = vrot.lane.b32.xlu0 %v9236, 96
      %v9699 = vpop.permute.xlu0 %9698
      %9700 = vrot.lane.b32.xlu0 %v9237, 96
      %v9701 = vpop.permute.xlu0 %9700
      %9702 = vrot.lane.b32.xlu0 %v9239, 96
      %v9703 = vpop.permute.xlu0 %9702
      %9704 = vrot.lane.b32.xlu0 %v9240, 96
      %v9705 = vpop.permute.xlu0 %9704
      %9706 = vrot.lane.b32.xlu0 %v9242, 96
      %v9707 = vpop.permute.xlu0 %9706
      %9708 = vrot.lane.b32.xlu0 %v9243, 96
      %v9709 = vpop.permute.xlu0 %9708
      %9710 = vrot.lane.b32.xlu0 %v9245, 96
      %v9711 = vpop.permute.xlu0 %9710
      %9712 = vrot.lane.b32.xlu0 %v9246, 96
      %v9713 = vpop.permute.xlu0 %9712
      %9714 = vrot.lane.b32.xlu0 %v9248, 96
      %v9715 = vpop.permute.xlu0 %9714
      %9716 = vrot.lane.b32.xlu0 %v9249, 96
      %v9717 = vpop.permute.xlu0 %9716
      %9718 = vrot.lane.b32.xlu0 %v9251, 96
      %v9719 = vpop.permute.xlu0 %9718
      %9720 = vrot.lane.b32.xlu0 %v9252, 96
      %v9721 = vpop.permute.xlu0 %9720
      %9722 = vrot.lane.b32.xlu0 %v9254, 96
      %v9723 = vpop.permute.xlu0 %9722
      %9724 = vrot.lane.b32.xlu0 %v9255, 96
      %v9725 = vpop.permute.xlu0 %9724
      %v9759 = vrot.slane %v9254, 1
      %v9760 = vrot.slane %v9255, 1
      %v9761 = vsel %vm503, %v9759, %v9760
      %v9762 = vrot.slane %v9256, 1
      %v9763 = vsel %vm503, %v9760, %v9762
      %v9796 = vrot.slane %v9254, 2
      %v9797 = vrot.slane %v9255, 2
      %v9798 = vsel %vm680, %v9796, %v9797
      %v9799 = vrot.slane %v9256, 2
      %v9800 = vsel %vm680, %v9797, %v9799
      %9801 = vrot.lane.b32.xlu0 %v9491, 32
      %v9802 = vpop.permute.xlu0 %9801
      %9803 = vrot.lane.b32.xlu0 %v9493, 32
      %v9804 = vpop.permute.xlu0 %9803
      %9805 = vrot.lane.b32.xlu0 %v9496, 32
      %v9806 = vpop.permute.xlu0 %9805
      %9807 = vrot.lane.b32.xlu0 %v9498, 32
      %v9808 = vpop.permute.xlu0 %9807
      %9809 = vrot.lane.b32.xlu0 %v9501, 32
      %v9810 = vpop.permute.xlu0 %9809
      %9811 = vrot.lane.b32.xlu0 %v9503, 32
      %v9812 = vpop.permute.xlu0 %9811
      %9813 = vrot.lane.b32.xlu0 %v9506, 32
      %v9814 = vpop.permute.xlu0 %9813
      %9815 = vrot.lane.b32.xlu0 %v9508, 32
      %v9816 = vpop.permute.xlu0 %9815
      %9817 = vrot.lane.b32.xlu0 %v9511, 32
      %v9818 = vpop.permute.xlu0 %9817
      %9819 = vrot.lane.b32.xlu0 %v9513, 32
      %v9820 = vpop.permute.xlu0 %9819
      %9821 = vrot.lane.b32.xlu0 %v9516, 32
      %v9822 = vpop.permute.xlu0 %9821
      %9823 = vrot.lane.b32.xlu0 %v9518, 32
      %v9824 = vpop.permute.xlu0 %9823
      %9825 = vrot.lane.b32.xlu0 %v9521, 32
      %v9826 = vpop.permute.xlu0 %9825
      %9827 = vrot.lane.b32.xlu0 %v9523, 32
      %v9828 = vpop.permute.xlu0 %9827
      %9829 = vrot.lane.b32.xlu0 %v9526, 32
      %v9830 = vpop.permute.xlu0 %9829
      %9831 = vrot.lane.b32.xlu0 %v9528, 32
      %v9832 = vpop.permute.xlu0 %9831
      %9833 = vrot.lane.b32.xlu0 %v9531, 32
      %v9834 = vpop.permute.xlu0 %9833
      %9835 = vrot.lane.b32.xlu0 %v9533, 32
      %v9836 = vpop.permute.xlu0 %9835
      %9837 = vrot.lane.b32.xlu0 %v9536, 32
      %v9838 = vpop.permute.xlu0 %9837
      %9839 = vrot.lane.b32.xlu0 %v9538, 32
      %v9840 = vpop.permute.xlu0 %9839
      %9841 = vrot.lane.b32.xlu0 %v9541, 32
      %v9842 = vpop.permute.xlu0 %9841
      %9843 = vrot.lane.b32.xlu0 %v9543, 32
      %v9844 = vpop.permute.xlu0 %9843
      %9845 = vrot.lane.b32.xlu0 %v9546, 32
      %v9846 = vpop.permute.xlu0 %9845
      %9847 = vrot.lane.b32.xlu0 %v9548, 32
      %v9848 = vpop.permute.xlu0 %9847
      %9849 = vrot.lane.b32.xlu0 %v9551, 32
      %v9850 = vpop.permute.xlu0 %9849
      %9851 = vrot.lane.b32.xlu0 %v9553, 32
      %v9852 = vpop.permute.xlu0 %9851
      %9853 = vrot.lane.b32.xlu0 %v9556, 32
      %v9854 = vpop.permute.xlu0 %9853
      %9855 = vrot.lane.b32.xlu0 %v9558, 32
      %v9856 = vpop.permute.xlu0 %9855
      %9857 = vrot.lane.b32.xlu0 %v9561, 32
      %v9858 = vpop.permute.xlu0 %9857
      %9859 = vrot.lane.b32.xlu0 %v9563, 32
      %v9860 = vpop.permute.xlu0 %9859
      %9861 = vrot.lane.b32.xlu0 %v9798, 32
      %v9862 = vpop.permute.xlu0 %9861
      %9863 = vrot.lane.b32.xlu0 %v9800, 32
      %v9864 = vpop.permute.xlu0 %9863
      %9899 = vrot.lane.b32.xlu0 %v9212, 64
      %v9900 = vpop.permute.xlu0 %9899
      %9901 = vrot.lane.b32.xlu0 %v9213, 64
      %v9902 = vpop.permute.xlu0 %9901
      %9903 = vrot.lane.b32.xlu0 %v9215, 64
      %v9904 = vpop.permute.xlu0 %9903
      %9905 = vrot.lane.b32.xlu0 %v9216, 64
      %v9906 = vpop.permute.xlu0 %9905
      %9907 = vrot.lane.b32.xlu0 %v9218, 64
      %v9908 = vpop.permute.xlu0 %9907
      %9909 = vrot.lane.b32.xlu0 %v9219, 64
      %v9910 = vpop.permute.xlu0 %9909
      %9911 = vrot.lane.b32.xlu0 %v9221, 64
      %v9912 = vpop.permute.xlu0 %9911
      %9913 = vrot.lane.b32.xlu0 %v9222, 64
      %v9914 = vpop.permute.xlu0 %9913
      %9915 = vrot.lane.b32.xlu0 %v9224, 64
      %v9916 = vpop.permute.xlu0 %9915
      %9917 = vrot.lane.b32.xlu0 %v9225, 64
      %v9918 = vpop.permute.xlu0 %9917
      %9919 = vrot.lane.b32.xlu0 %v9227, 64
      %v9920 = vpop.permute.xlu0 %9919
      %9921 = vrot.lane.b32.xlu0 %v9228, 64
      %v9922 = vpop.permute.xlu0 %9921
      %9923 = vrot.lane.b32.xlu0 %v9230, 64
      %v9924 = vpop.permute.xlu0 %9923
      %9925 = vrot.lane.b32.xlu0 %v9231, 64
      %v9926 = vpop.permute.xlu0 %9925
      %9927 = vrot.lane.b32.xlu0 %v9233, 64
      %v9928 = vpop.permute.xlu0 %9927
      %9929 = vrot.lane.b32.xlu0 %v9234, 64
      %v9930 = vpop.permute.xlu0 %9929
      %9931 = vrot.lane.b32.xlu0 %v9236, 64
      %v9932 = vpop.permute.xlu0 %9931
      %9933 = vrot.lane.b32.xlu0 %v9237, 64
      %v9934 = vpop.permute.xlu0 %9933
      %9935 = vrot.lane.b32.xlu0 %v9239, 64
      %v9936 = vpop.permute.xlu0 %9935
      %9937 = vrot.lane.b32.xlu0 %v9240, 64
      %v9938 = vpop.permute.xlu0 %9937
      %9939 = vrot.lane.b32.xlu0 %v9242, 64
      %v9940 = vpop.permute.xlu0 %9939
      %9941 = vrot.lane.b32.xlu0 %v9243, 64
      %v9942 = vpop.permute.xlu0 %9941
      %9943 = vrot.lane.b32.xlu0 %v9245, 64
      %v9944 = vpop.permute.xlu0 %9943
      %9945 = vrot.lane.b32.xlu0 %v9246, 64
      %v9946 = vpop.permute.xlu0 %9945
      %9947 = vrot.lane.b32.xlu0 %v9248, 64
      %v9948 = vpop.permute.xlu0 %9947
      %9949 = vrot.lane.b32.xlu0 %v9249, 64
      %v9950 = vpop.permute.xlu0 %9949
      %9951 = vrot.lane.b32.xlu0 %v9251, 64
      %v9952 = vpop.permute.xlu0 %9951
      %9953 = vrot.lane.b32.xlu0 %v9252, 64
      %v9954 = vpop.permute.xlu0 %9953
      %9955 = vrot.lane.b32.xlu0 %v9254, 64
      %v9956 = vpop.permute.xlu0 %9955
      %9957 = vrot.lane.b32.xlu0 %v9255, 64
      %v9958 = vpop.permute.xlu0 %9957
      %9959 = vrot.lane.b32.xlu0 %v9257, 64
      %v9960 = vpop.permute.xlu0 %9959
      %9961 = vrot.lane.b32.xlu0 %v9258, 64
      %v9962 = vpop.permute.xlu0 %9961
      %v9996 = vrot.slane %v9257, 1
      %v9997 = vrot.slane %v9258, 1
      %v9998 = vsel %vm503, %v9996, %v9997
      %v9999 = vrot.slane %v9259, 1
      %v10000 = vsel %vm503, %v9997, %v9999
      %10001 = vrot.lane.b32.xlu0 %v9320, 96
      %v10002 = vpop.permute.xlu0 %10001
      %10003 = vrot.lane.b32.xlu0 %v9322, 96
      %v10004 = vpop.permute.xlu0 %10003
      %10005 = vrot.lane.b32.xlu0 %v9325, 96
      %v10006 = vpop.permute.xlu0 %10005
      %10007 = vrot.lane.b32.xlu0 %v9327, 96
      %v10008 = vpop.permute.xlu0 %10007
      %10009 = vrot.lane.b32.xlu0 %v9330, 96
      %v10010 = vpop.permute.xlu0 %10009
      %10011 = vrot.lane.b32.xlu0 %v9332, 96
      %v10012 = vpop.permute.xlu0 %10011
      %10013 = vrot.lane.b32.xlu0 %v9335, 96
      %v10014 = vpop.permute.xlu0 %10013
      %10015 = vrot.lane.b32.xlu0 %v9337, 96
      %v10016 = vpop.permute.xlu0 %10015
      %10017 = vrot.lane.b32.xlu0 %v9340, 96
      %v10018 = vpop.permute.xlu0 %10017
      %10019 = vrot.lane.b32.xlu0 %v9342, 96
      %v10020 = vpop.permute.xlu0 %10019
      %10021 = vrot.lane.b32.xlu0 %v9345, 96
      %v10022 = vpop.permute.xlu0 %10021
      %10023 = vrot.lane.b32.xlu0 %v9347, 96
      %v10024 = vpop.permute.xlu0 %10023
      %10025 = vrot.lane.b32.xlu0 %v9350, 96
      %v10026 = vpop.permute.xlu0 %10025
      %10027 = vrot.lane.b32.xlu0 %v9352, 96
      %v10028 = vpop.permute.xlu0 %10027
      %10029 = vrot.lane.b32.xlu0 %v9355, 96
      %v10030 = vpop.permute.xlu0 %10029
      %10031 = vrot.lane.b32.xlu0 %v9357, 96
      %v10032 = vpop.permute.xlu0 %10031
      %10033 = vrot.lane.b32.xlu0 %v9360, 96
      %v10034 = vpop.permute.xlu0 %10033
      %10035 = vrot.lane.b32.xlu0 %v9362, 96
      %v10036 = vpop.permute.xlu0 %10035
      %10037 = vrot.lane.b32.xlu0 %v9365, 96
      %v10038 = vpop.permute.xlu0 %10037
      %10039 = vrot.lane.b32.xlu0 %v9367, 96
      %v10040 = vpop.permute.xlu0 %10039
      %10041 = vrot.lane.b32.xlu0 %v9370, 96
      %v10042 = vpop.permute.xlu0 %10041
      %10043 = vrot.lane.b32.xlu0 %v9372, 96
      %v10044 = vpop.permute.xlu0 %10043
      %10045 = vrot.lane.b32.xlu0 %v9375, 96
      %v10046 = vpop.permute.xlu0 %10045
      %10047 = vrot.lane.b32.xlu0 %v9377, 96
      %v10048 = vpop.permute.xlu0 %10047
      %10049 = vrot.lane.b32.xlu0 %v9380, 96
      %v10050 = vpop.permute.xlu0 %10049
      %10051 = vrot.lane.b32.xlu0 %v9382, 96
      %v10052 = vpop.permute.xlu0 %10051
      %10053 = vrot.lane.b32.xlu0 %v9385, 96
      %v10054 = vpop.permute.xlu0 %10053
      %10055 = vrot.lane.b32.xlu0 %v9387, 96
      %v10056 = vpop.permute.xlu0 %10055
      %10057 = vrot.lane.b32.xlu0 %v9761, 96
      %v10058 = vpop.permute.xlu0 %10057
      %10059 = vrot.lane.b32.xlu0 %v9763, 96
      %v10060 = vpop.permute.xlu0 %10059
      %10061 = vrot.lane.b32.xlu0 %v9998, 96
      %v10062 = vpop.permute.xlu0 %10061
      %10063 = vrot.lane.b32.xlu0 %v10000, 96
      %v10064 = vpop.permute.xlu0 %10063
      %v10097 = vrot.slane %v9257, 2
      %v10098 = vrot.slane %v9258, 2
      %v10099 = vsel %vm680, %v10097, %v10098
      %v10100 = vrot.slane %v9259, 2
      %v10101 = vsel %vm680, %v10098, %v10100
      %v10102 = vsel %vm333, %v9206, %v9389
      %v10103 = vsel %vm333, %v9207, %v9391
      %v10104 = vsel %vm333, %v9209, %v9393
      %v10105 = vsel %vm333, %v9210, %v9395
      %v10106 = vsel %vm333, %v9212, %v9397
      %v10107 = vsel %vm333, %v9213, %v9399
      %v10108 = vsel %vm333, %v9215, %v9401
      %v10109 = vsel %vm333, %v9216, %v9403
      %v10110 = vsel %vm333, %v9218, %v9405
      %v10111 = vsel %vm333, %v9219, %v9407
      %v10112 = vsel %vm333, %v9221, %v9409
      %v10113 = vsel %vm333, %v9222, %v9411
      %v10114 = vsel %vm333, %v9224, %v9413
      %v10115 = vsel %vm333, %v9225, %v9415
      %v10116 = vsel %vm333, %v9227, %v9417
      %v10117 = vsel %vm333, %v9228, %v9419
      %v10118 = vsel %vm333, %v9230, %v9421
      %v10119 = vsel %vm333, %v9231, %v9423
      %v10120 = vsel %vm333, %v9233, %v9425
      %v10121 = vsel %vm333, %v9234, %v9427
      %v10122 = vsel %vm333, %v9236, %v9429
      %v10123 = vsel %vm333, %v9237, %v9431
      %v10124 = vsel %vm333, %v9239, %v9433
      %v10125 = vsel %vm333, %v9240, %v9435
      %v10126 = vsel %vm333, %v9242, %v9437
      %v10127 = vsel %vm333, %v9243, %v9439
      %v10128 = vsel %vm333, %v9245, %v9441
      %v10129 = vsel %vm333, %v9246, %v9443
      %v10130 = vsel %vm333, %v9248, %v9445
      %v10131 = vsel %vm333, %v9249, %v9447
      %v10132 = vsel %vm333, %v9251, %v9449
      %v10133 = vsel %vm333, %v9252, %v9451
      %v10134 = vsel %vm7009, %v10102, %v9565
      %v10135 = vsel %vm7009, %v10103, %v9567
      %v10136 = vsel %vm7009, %v10104, %v9569
      %v10137 = vsel %vm7009, %v10105, %v9571
      %v10138 = vsel %vm7009, %v10106, %v9573
      %v10139 = vsel %vm7009, %v10107, %v9575
      %v10140 = vsel %vm7009, %v10108, %v9577
      %v10141 = vsel %vm7009, %v10109, %v9579
      %v10142 = vsel %vm7009, %v10110, %v9581
      %v10143 = vsel %vm7009, %v10111, %v9583
      %v10144 = vsel %vm7009, %v10112, %v9585
      %v10145 = vsel %vm7009, %v10113, %v9587
      %v10146 = vsel %vm7009, %v10114, %v9589
      %v10147 = vsel %vm7009, %v10115, %v9591
      %v10148 = vsel %vm7009, %v10116, %v9593
      %v10149 = vsel %vm7009, %v10117, %v9595
      %v10150 = vsel %vm7009, %v10118, %v9597
      %v10151 = vsel %vm7009, %v10119, %v9599
      %v10152 = vsel %vm7009, %v10120, %v9601
      %v10153 = vsel %vm7009, %v10121, %v9603
      %v10154 = vsel %vm7009, %v10122, %v9605
      %v10155 = vsel %vm7009, %v10123, %v9607
      %v10156 = vsel %vm7009, %v10124, %v9609
      %v10157 = vsel %vm7009, %v10125, %v9611
      %v10158 = vsel %vm7009, %v10126, %v9613
      %v10159 = vsel %vm7009, %v10127, %v9615
      %v10160 = vsel %vm7009, %v10128, %v9617
      %v10161 = vsel %vm7009, %v10129, %v9619
      %v10162 = vsel %vm7009, %v10130, %v9621
      %v10163 = vsel %vm7009, %v10131, %v9623
      %v10164 = vsel %vm7009, %v10132, %v9625
      %v10165 = vsel %vm7009, %v10133, %v9627
      %v10166 = vsel %vm8456, %v10134, %v9663
      %v10167 = vsel %vm8456, %v10135, %v9665
      %v10168 = vsel %vm8456, %v10136, %v9667
      %v10169 = vsel %vm8456, %v10137, %v9669
      %v10170 = vsel %vm8456, %v10138, %v9671
      %v10171 = vsel %vm8456, %v10139, %v9673
      %v10172 = vsel %vm8456, %v10140, %v9675
      %v10173 = vsel %vm8456, %v10141, %v9677
      %v10174 = vsel %vm8456, %v10142, %v9679
      %v10175 = vsel %vm8456, %v10143, %v9681
      %v10176 = vsel %vm8456, %v10144, %v9683
      %v10177 = vsel %vm8456, %v10145, %v9685
      %v10178 = vsel %vm8456, %v10146, %v9687
      %v10179 = vsel %vm8456, %v10147, %v9689
      %v10180 = vsel %vm8456, %v10148, %v9691
      %v10181 = vsel %vm8456, %v10149, %v9693
      %v10182 = vsel %vm8456, %v10150, %v9695
      %v10183 = vsel %vm8456, %v10151, %v9697
      %v10184 = vsel %vm8456, %v10152, %v9699
      %v10185 = vsel %vm8456, %v10153, %v9701
      %v10186 = vsel %vm8456, %v10154, %v9703
      %v10187 = vsel %vm8456, %v10155, %v9705
      %v10188 = vsel %vm8456, %v10156, %v9707
      %v10189 = vsel %vm8456, %v10157, %v9709
      %v10190 = vsel %vm8456, %v10158, %v9711
      %v10191 = vsel %vm8456, %v10159, %v9713
      %v10192 = vsel %vm8456, %v10160, %v9715
      %v10193 = vsel %vm8456, %v10161, %v9717
      %v10194 = vsel %vm8456, %v10162, %v9719
      %v10195 = vsel %vm8456, %v10163, %v9721
      %v10196 = vsel %vm8456, %v10164, %v9723
      %v10197 = vsel %vm8456, %v10165, %v9725
      %v10198 = vsel %vm333, %v9315, %v9802
      %v10199 = vsel %vm333, %v9317, %v9804
      %v10200 = vsel %vm333, %v9320, %v9806
      %v10201 = vsel %vm333, %v9322, %v9808
      %v10202 = vsel %vm333, %v9325, %v9810
      %v10203 = vsel %vm333, %v9327, %v9812
      %v10204 = vsel %vm333, %v9330, %v9814
      %v10205 = vsel %vm333, %v9332, %v9816
      %v10206 = vsel %vm333, %v9335, %v9818
      %v10207 = vsel %vm333, %v9337, %v9820
      %v10208 = vsel %vm333, %v9340, %v9822
      %v10209 = vsel %vm333, %v9342, %v9824
      %v10210 = vsel %vm333, %v9345, %v9826
      %v10211 = vsel %vm333, %v9347, %v9828
      %v10212 = vsel %vm333, %v9350, %v9830
      %v10213 = vsel %vm333, %v9352, %v9832
      %v10214 = vsel %vm333, %v9355, %v9834
      %v10215 = vsel %vm333, %v9357, %v9836
      %v10216 = vsel %vm333, %v9360, %v9838
      %v10217 = vsel %vm333, %v9362, %v9840
      %v10218 = vsel %vm333, %v9365, %v9842
      %v10219 = vsel %vm333, %v9367, %v9844
      %v10220 = vsel %vm333, %v9370, %v9846
      %v10221 = vsel %vm333, %v9372, %v9848
      %v10222 = vsel %vm333, %v9375, %v9850
      %v10223 = vsel %vm333, %v9377, %v9852
      %v10224 = vsel %vm333, %v9380, %v9854
      %v10225 = vsel %vm333, %v9382, %v9856
      %v10226 = vsel %vm333, %v9385, %v9858
      %v10227 = vsel %vm333, %v9387, %v9860
      %v10228 = vsel %vm333, %v9761, %v9862
      %v10229 = vsel %vm333, %v9763, %v9864
      %v10230 = vsel %vm7009, %v10198, %v9900
      %v10231 = vsel %vm7009, %v10199, %v9902
      %v10232 = vsel %vm7009, %v10200, %v9904
      %v10233 = vsel %vm7009, %v10201, %v9906
      %v10234 = vsel %vm7009, %v10202, %v9908
      %v10235 = vsel %vm7009, %v10203, %v9910
      %v10236 = vsel %vm7009, %v10204, %v9912
      %v10237 = vsel %vm7009, %v10205, %v9914
      %v10238 = vsel %vm7009, %v10206, %v9916
      %v10239 = vsel %vm7009, %v10207, %v9918
      %v10240 = vsel %vm7009, %v10208, %v9920
      %v10241 = vsel %vm7009, %v10209, %v9922
      %v10242 = vsel %vm7009, %v10210, %v9924
      %v10243 = vsel %vm7009, %v10211, %v9926
      %v10244 = vsel %vm7009, %v10212, %v9928
      %v10245 = vsel %vm7009, %v10213, %v9930
      %v10246 = vsel %vm7009, %v10214, %v9932
      %v10247 = vsel %vm7009, %v10215, %v9934
      %v10248 = vsel %vm7009, %v10216, %v9936
      %v10249 = vsel %vm7009, %v10217, %v9938
      %v10250 = vsel %vm7009, %v10218, %v9940
      %v10251 = vsel %vm7009, %v10219, %v9942
      %v10252 = vsel %vm7009, %v10220, %v9944
      %v10253 = vsel %vm7009, %v10221, %v9946
      %v10254 = vsel %vm7009, %v10222, %v9948
      %v10255 = vsel %vm7009, %v10223, %v9950
      %v10256 = vsel %vm7009, %v10224, %v9952
      %v10257 = vsel %vm7009, %v10225, %v9954
      %v10258 = vsel %vm7009, %v10226, %v9956
      %v10259 = vsel %vm7009, %v10227, %v9958
      %v10260 = vsel %vm7009, %v10228, %v9960
      %v10261 = vsel %vm7009, %v10229, %v9962
      %v10262 = vsel %vm8456, %v10230, %v10002
      %v10263 = vsel %vm8456, %v10231, %v10004
      %v10264 = vsel %vm8456, %v10232, %v10006
      %v10265 = vsel %vm8456, %v10233, %v10008
      %v10266 = vsel %vm8456, %v10234, %v10010
      %v10267 = vsel %vm8456, %v10235, %v10012
      %v10268 = vsel %vm8456, %v10236, %v10014
      %v10269 = vsel %vm8456, %v10237, %v10016
      %v10270 = vsel %vm8456, %v10238, %v10018
      %v10271 = vsel %vm8456, %v10239, %v10020
      %v10272 = vsel %vm8456, %v10240, %v10022
      %v10273 = vsel %vm8456, %v10241, %v10024
      %v10274 = vsel %vm8456, %v10242, %v10026
      %v10275 = vsel %vm8456, %v10243, %v10028
      %v10276 = vsel %vm8456, %v10244, %v10030
      %v10277 = vsel %vm8456, %v10245, %v10032
      %v10278 = vsel %vm8456, %v10246, %v10034
      %v10279 = vsel %vm8456, %v10247, %v10036
      %v10280 = vsel %vm8456, %v10248, %v10038
      %v10281 = vsel %vm8456, %v10249, %v10040
      %v10282 = vsel %vm8456, %v10250, %v10042
      %v10283 = vsel %vm8456, %v10251, %v10044
      %v10284 = vsel %vm8456, %v10252, %v10046
      %v10285 = vsel %vm8456, %v10253, %v10048
      %v10286 = vsel %vm8456, %v10254, %v10050
      %v10287 = vsel %vm8456, %v10255, %v10052
      %v10288 = vsel %vm8456, %v10256, %v10054
      %v10289 = vsel %vm8456, %v10257, %v10056
      %v10290 = vsel %vm8456, %v10258, %v10058
      %v10291 = vsel %vm8456, %v10259, %v10060
      %v10292 = vsel %vm8456, %v10260, %v10062
      %v10293 = vsel %vm8456, %v10261, %v10064
      %v10294 = vld [vmem:[%s5] sm:$0xff]
      %v10295 = vld [vmem:[%s5 + $0x8] sm:$0xff]
      %v10296 = vld [vmem:[%s5 + $0x10] sm:$0xff]
      %v10297 = vld [vmem:[%s5 + $0x18] sm:$0xff]
      %v10298 = vld [vmem:[%s5 + $0x20] sm:$0xff]
      %v10299 = vld [vmem:[%s5 + $0x28] sm:$0xff]
      %v10300 = vld [vmem:[%s5 + $0x30] sm:$0xff]
      %v10301 = vld [vmem:[%s5 + $0x38] sm:$0xff]
      %v10302 = vld [vmem:[%s5 + $0x40] sm:$0xff]
      %v10303 = vld [vmem:[%s5 + $0x48] sm:$0xff]
      %v10304 = vld [vmem:[%s5 + $0x50] sm:$0xff]
      %v10305 = vld [vmem:[%s5 + $0x58] sm:$0xff]
      %v10306 = vld [vmem:[%s5 + $0x60] sm:$0xff]
      %v10307 = vld [vmem:[%s5 + $0x68] sm:$0xff]
      %v10308 = vld [vmem:[%s5 + $0x70] sm:$0xff]
      %v10309 = vld [vmem:[%s5 + $0x78] sm:$0xff]
      %v10310 = vld [vmem:[%s5 + $0x80] sm:$0xff]
      %v10311 = vld [vmem:[%s5 + $0x88] sm:$0xff]
      %v10312 = vld [vmem:[%s5 + $0x90] sm:$0xff]
      %v10313 = vld [vmem:[%s5 + $0x98] sm:$0xff]
      %v10314 = vld [vmem:[%s5 + $0xa0] sm:$0xff]
      %v10315 = vld [vmem:[%s5 + $0xa8] sm:$0xff]
      %v10316 = vld [vmem:[%s5 + $0xb0] sm:$0xff]
      %v10317 = vld [vmem:[%s5 + $0xb8] sm:$0xff]
      %v10318 = vld [vmem:[%s5 + $0xc0] sm:$0xff]
      %v10319 = vld [vmem:[%s5 + $0xc8] sm:$0xff]
      %v10320 = vld [vmem:[%s5 + $0xd0] sm:$0xff]
      %v10321 = vld [vmem:[%s5 + $0xd8] sm:$0xff]
      %v10322 = vld [vmem:[%s5 + $0xe0] sm:$0xff]
      %v10323 = vld [vmem:[%s5 + $0xe8] sm:$0xff]
      %v10324 = vld [vmem:[%s5 + $0xf0] sm:$0xff]
      %v10325 = vld [vmem:[%s5 + $0xf8] sm:$0xff]
      %v10326 = vld [vmem:[%s5 + $0x100] sm:$0xff]
      %v10327 = vld [vmem:[%s5 + $0x108] sm:$0xff]
      %v10328 = vld [vmem:[%s5 + $0x110] sm:$0xff]
      %v10329 = vld [vmem:[%s5 + $0x118] sm:$0xff]
      %v10330 = vld [vmem:[%s6] sm:$0x1]
      %v10332 = vlaneseq
      %v10333 = vshrl.u32 %v10332, 7
      %v10334 = vsub.s32 0, %v10333
      %v10335 = vrot.slane %v10330, %v10334
      %v10337 = vsel %vm333, %v9496, 0
      %v10339 = vsel %vm333, %v9498, 0
      %v10341 = vsel %vm333, %v9501, 0
      %v10343 = vsel %vm333, %v9503, 0
      %v10345 = vsel %vm333, %v9506, 0
      %v10347 = vsel %vm333, %v9508, 0
      %v10349 = vsel %vm333, %v9511, 0
      %v10351 = vsel %vm333, %v9513, 0
      %v10353 = vsel %vm333, %v9516, 0
      %v10355 = vsel %vm333, %v9518, 0
      %v10357 = vsel %vm333, %v9521, 0
      %v10359 = vsel %vm333, %v9523, 0
      %v10361 = vsel %vm333, %v9526, 0
      %v10363 = vsel %vm333, %v9528, 0
      %v10365 = vsel %vm333, %v9531, 0
      %v10367 = vsel %vm333, %v9533, 0
      %v10369 = vsel %vm333, %v9536, 0
      %v10371 = vsel %vm333, %v9538, 0
      %v10373 = vsel %vm333, %v9541, 0
      %v10375 = vsel %vm333, %v9543, 0
      %v10377 = vsel %vm333, %v9546, 0
      %v10379 = vsel %vm333, %v9548, 0
      %v10381 = vsel %vm333, %v9551, 0
      %v10383 = vsel %vm333, %v9553, 0
      %v10385 = vsel %vm333, %v9556, 0
      %v10387 = vsel %vm333, %v9558, 0
      %v10389 = vsel %vm333, %v9561, 0
      %v10391 = vsel %vm333, %v9563, 0
      %v10393 = vsel %vm333, %v9798, 0
      %v10395 = vsel %vm333, %v9800, 0
      %v10397 = vsel %vm333, %v10099, 0
      %v10399 = vsel %vm333, %v10101, 0
      %10401 = vmatprep.subr.mxu0 0.0
      %10402 = vmatpush1.msra.mxu0 %v10294
      %10403 = vmatprep.subr.mxu0 0.0
      %10404 = vmatpush1.msra.mxu0 %v10295
      %10405 = vmatprep.subr.mxu0 0.0
      %10406 = vmatpush1.msra.mxu0 %v10296
      %10407 = vmatprep.subr.mxu0 0.0
      %10408 = vmatpush1.msra.mxu0 %v10297
      %10409 = vmatprep.subr.mxu0 0.0
      %10410 = vmatpush1.msra.mxu0 %v10298
      %10411 = vmatprep.subr.mxu0 0.0
      %10412 = vmatpush1.msra.mxu0 %v10299
      %10413 = vmatprep.subr.mxu0 0.0
      %10414 = vmatpush1.msra.mxu0 %v10300
      %10415 = vmatprep.subr.mxu0 0.0
      %10416 = vmatpush1.msra.mxu0 %v10301
      %10417 = vmatprep.subr.mxu0 0.0
      %10418 = vmatpush1.msra.mxu0 %v10302
      %10419 = vmatprep.subr.mxu0 0.0
      %10420 = vmatpush1.msra.mxu0 %v10303
      %10421 = vmatprep.subr.mxu0 0.0
      %10422 = vmatpush1.msra.mxu0 %v10304
      %10423 = vmatprep.subr.mxu0 0.0
      %10424 = vmatpush1.msra.mxu0 %v10305
      %10425 = vmatprep.subr.mxu0 0.0
      %10426 = vmatpush1.msra.mxu0 %v10306
      %10427 = vmatprep.subr.mxu0 0.0
      %10428 = vmatpush1.msra.mxu0 %v10307
      %10429 = vmatprep.subr.mxu0 0.0
      %10430 = vmatpush1.msra.mxu0 %v10308
      %10431 = vmatprep.subr.mxu0 0.0
      %10432 = vmatpush1.msra.mxu0 %v10309
      %10433 = vmatprep.subr.mxu0 0.0
      %10434 = vmatpush1.msra.mxu0 %v10310
      %10435 = vmatprep.subr.mxu0 0.0
      %10436 = vmatpush1.msra.mxu0 %v10311
      %10437 = vmatprep.subr.mxu0 0.0
      %10438 = vmatpush1.msra.mxu0 %v10312
      %10439 = vmatprep.subr.mxu0 0.0
      %10440 = vmatpush1.msra.mxu0 %v10313
      %10441 = vmatprep.subr.mxu0 0.0
      %10442 = vmatpush1.msra.mxu0 %v10314
      %10443 = vmatprep.subr.mxu0 0.0
      %10444 = vmatpush1.msra.mxu0 %v10315
      %10445 = vmatprep.subr.mxu0 0.0
      %10446 = vmatpush1.msra.mxu0 %v10316
      %10447 = vmatprep.subr.mxu0 0.0
      %10448 = vmatpush1.msra.mxu0 %v10317
      %10449 = vmatprep.subr.mxu0 0.0
      %10450 = vmatpush1.msra.mxu0 %v10318
      %10451 = vmatprep.subr.mxu0 0.0
      %10452 = vmatpush1.msra.mxu0 %v10319
      %10453 = vmatprep.subr.mxu0 0.0
      %10454 = vmatpush1.msra.mxu0 %v10320
      %10455 = vmatprep.subr.mxu0 0.0
      %10456 = vmatpush1.msra.mxu0 %v10321
      %10457 = vmatprep.subr.mxu0 0.0
      %10458 = vmatpush1.msra.mxu0 %v10322
      %10459 = vmatprep.subr.mxu0 0.0
      %10460 = vmatpush1.msra.mxu0 %v10323
      %10461 = vmatprep.subr.mxu0 0.0
      %10462 = vmatpush1.msra.mxu0 %v10324
      %10463 = vmatprep.subr.mxu0 0.0
      %10464 = vmatpush1.msra.mxu0 %v10325
      %10465 = vmatprep.mubr.f32.mxu0 %v10262
      %10466 = vmatmul.mubr.f32.gmra.mrb[0].mxu0 %v10166
      %v10467 = vpop.f32.mrb[0].mxu0
      %v10468 = vadd.f32 %v10335, %v10467
      %v10469 = vpop.f32.mrb[0].mxu0
      %10470 = vmatprep.mubr.f32.mxu0 %v10263
      %10471 = vmatmul.mubr.f32.gmra.mrb[0].mxu0 %v10167
      %v10472 = vpop.f32.mrb[0].mxu0
      %v10473 = vadd.f32 %v10335, %v10472
      %v10474 = vpop.f32.mrb[0].mxu0
      %10475 = vmatprep.mubr.f32.mxu0 %v10264
      %10476 = vmatmul.mubr.f32.gmra.mrb[0].mxu0 %v10168
      %v10477 = vpop.f32.mrb[0].mxu0
      %v10478 = vadd.f32 %v10335, %v10477
      %v10479 = vpop.f32.mrb[0].mxu0
      %10480 = vmatprep.mubr.f32.mxu0 %v10265
      %10481 = vmatmul.mubr.f32.gmra.mrb[0].mxu0 %v10169
      %v10482 = vpop.f32.mrb[0].mxu0
      %v10483 = vadd.f32 %v10335, %v10482
      %v10484 = vpop.f32.mrb[0].mxu0
      %10485 = vmatprep.mubr.f32.mxu0 %v10266
      %10486 = vmatmul.mubr.f32.gmra.mrb[0].mxu0 %v10170
      %v10487 = vpop.f32.mrb[0].mxu0
      %v10488 = vadd.f32 %v10335, %v10487
      %v10489 = vpop.f32.mrb[0].mxu0
      %10490 = vmatprep.mubr.f32.mxu0 %v10267
      %10491 = vmatmul.mubr.f32.gmra.mrb[0].mxu0 %v10171
      %v10492 = vpop.f32.mrb[0].mxu0
      %v10493 = vadd.f32 %v10335, %v10492
      %v10494 = vpop.f32.mrb[0].mxu0
      %10495 = vmatprep.mubr.f32.mxu0 %v10268
      %10496 = vmatmul.mubr.f32.gmra.mrb[0].mxu0 %v10172
      %v10497 = vpop.f32.mrb[0].mxu0
      %v10498 = vadd.f32 %v10335, %v10497
      %v10499 = vpop.f32.mrb[0].mxu0
      %10500 = vmatprep.mubr.f32.mxu0 %v10269
      %10501 = vmatmul.mubr.f32.gmra.mrb[0].mxu0 %v10173
      %v10502 = vpop.f32.mrb[0].mxu0
      %v10503 = vadd.f32 %v10335, %v10502
      %v10504 = vpop.f32.mrb[0].mxu0
      %10505 = vmatprep.mubr.f32.mxu0 %v10270
      %10506 = vmatmul.mubr.f32.gmra.mrb[0].mxu0 %v10174
      %v10507 = vpop.f32.mrb[0].mxu0
      %v10508 = vadd.f32 %v10335, %v10507
      %v10509 = vpop.f32.mrb[0].mxu0
      %10510 = vmatprep.mubr.f32.mxu0 %v10271
      %10511 = vmatmul.mubr.f32.gmra.mrb[0].mxu0 %v10175
      %v10512 = vpop.f32.mrb[0].mxu0
      %v10513 = vadd.f32 %v10335, %v10512
      %v10514 = vpop.f32.mrb[0].mxu0
      %10515 = vmatprep.mubr.f32.mxu0 %v10272
      %10516 = vmatmul.mubr.f32.gmra.mrb[0].mxu0 %v10176
      %v10517 = vpop.f32.mrb[0].mxu0
      %v10518 = vadd.f32 %v10335, %v10517
      %v10519 = vpop.f32.mrb[0].mxu0
      %10520 = vmatprep.mubr.f32.mxu0 %v10273
      %10521 = vmatmul.mubr.f32.gmra.mrb[0].mxu0 %v10177
      %v10522 = vpop.f32.mrb[0].mxu0
      %v10523 = vadd.f32 %v10335, %v10522
      %v10524 = vpop.f32.mrb[0].mxu0
      %10525 = vmatprep.mubr.f32.mxu0 %v10274
      %10526 = vmatmul.mubr.f32.gmra.mrb[0].mxu0 %v10178
      %v10527 = vpop.f32.mrb[0].mxu0
      %v10528 = vadd.f32 %v10335, %v10527
      %v10529 = vpop.f32.mrb[0].mxu0
      %10530 = vmatprep.mubr.f32.mxu0 %v10275
      %10531 = vmatmul.mubr.f32.gmra.mrb[0].mxu0 %v10179
      %v10532 = vpop.f32.mrb[0].mxu0
      %v10533 = vadd.f32 %v10335, %v10532
      %v10534 = vpop.f32.mrb[0].mxu0
      %10535 = vmatprep.mubr.f32.mxu0 %v10276
      %10536 = vmatmul.mubr.f32.gmra.mrb[0].mxu0 %v10180
      %v10537 = vpop.f32.mrb[0].mxu0
      %v10538 = vadd.f32 %v10335, %v10537
      %v10539 = vpop.f32.mrb[0].mxu0
      %10540 = vmatprep.mubr.f32.mxu0 %v10277
      %10541 = vmatmul.mubr.f32.gmra.mrb[0].mxu0 %v10181
      %v10542 = vpop.f32.mrb[0].mxu0
      %v10543 = vadd.f32 %v10335, %v10542
      %v10544 = vpop.f32.mrb[0].mxu0
      %10545 = vmatprep.mubr.f32.mxu0 %v10278
      %10546 = vmatmul.mubr.f32.gmra.mrb[0].mxu0 %v10182
      %v10547 = vpop.f32.mrb[0].mxu0
      %v10548 = vadd.f32 %v10335, %v10547
      %v10549 = vpop.f32.mrb[0].mxu0
      %10550 = vmatprep.mubr.f32.mxu0 %v10279
      %10551 = vmatmul.mubr.f32.gmra.mrb[0].mxu0 %v10183
      %v10552 = vpop.f32.mrb[0].mxu0
      %v10553 = vadd.f32 %v10335, %v10552
      %v10554 = vpop.f32.mrb[0].mxu0
      %10555 = vmatprep.mubr.f32.mxu0 %v10280
      %10556 = vmatmul.mubr.f32.gmra.mrb[0].mxu0 %v10184
      %v10557 = vpop.f32.mrb[0].mxu0
      %v10558 = vadd.f32 %v10335, %v10557
      %v10559 = vpop.f32.mrb[0].mxu0
      %10560 = vmatprep.mubr.f32.mxu0 %v10281
      %10561 = vmatmul.mubr.f32.gmra.mrb[0].mxu0 %v10185
      %v10562 = vpop.f32.mrb[0].mxu0
      %v10563 = vadd.f32 %v10335, %v10562
      %v10564 = vpop.f32.mrb[0].mxu0
      %10565 = vmatprep.mubr.f32.mxu0 %v10282
      %10566 = vmatmul.mubr.f32.gmra.mrb[0].mxu0 %v10186
      %v10567 = vpop.f32.mrb[0].mxu0
      %v10568 = vadd.f32 %v10335, %v10567
      %v10569 = vpop.f32.mrb[0].mxu0
      %10570 = vmatprep.mubr.f32.mxu0 %v10283
      %10571 = vmatmul.mubr.f32.gmra.mrb[0].mxu0 %v10187
      %v10572 = vpop.f32.mrb[0].mxu0
      %v10573 = vadd.f32 %v10335, %v10572
      %v10574 = vpop.f32.mrb[0].mxu0
      %10575 = vmatprep.mubr.f32.mxu0 %v10284
      %10576 = vmatmul.mubr.f32.gmra.mrb[0].mxu0 %v10188
      %v10577 = vpop.f32.mrb[0].mxu0
      %v10578 = vadd.f32 %v10335, %v10577
      %v10579 = vpop.f32.mrb[0].mxu0
      %10580 = vmatprep.mubr.f32.mxu0 %v10285
      %10581 = vmatmul.mubr.f32.gmra.mrb[0].mxu0 %v10189
      %v10582 = vpop.f32.mrb[0].mxu0
      %v10583 = vadd.f32 %v10335, %v10582
      %v10584 = vpop.f32.mrb[0].mxu0
      %10585 = vmatprep.mubr.f32.mxu0 %v10286
      %10586 = vmatmul.mubr.f32.gmra.mrb[0].mxu0 %v10190
      %v10587 = vpop.f32.mrb[0].mxu0
      %v10588 = vadd.f32 %v10335, %v10587
      %v10589 = vpop.f32.mrb[0].mxu0
      %10590 = vmatprep.mubr.f32.mxu0 %v10287
      %10591 = vmatmul.mubr.f32.gmra.mrb[0].mxu0 %v10191
      %v10592 = vpop.f32.mrb[0].mxu0
      %v10593 = vadd.f32 %v10335, %v10592
      %v10594 = vpop.f32.mrb[0].mxu0
      %10595 = vmatprep.mubr.f32.mxu0 %v10288
      %10596 = vmatmul.mubr.f32.gmra.mrb[0].mxu0 %v10192
      %v10597 = vpop.f32.mrb[0].mxu0
      %v10598 = vadd.f32 %v10335, %v10597
      %v10599 = vpop.f32.mrb[0].mxu0
      %10600 = vmatprep.mubr.f32.mxu0 %v10289
      %10601 = vmatmul.mubr.f32.gmra.mrb[0].mxu0 %v10193
      %v10602 = vpop.f32.mrb[0].mxu0
      %v10603 = vadd.f32 %v10335, %v10602
      %v10604 = vpop.f32.mrb[0].mxu0
      %10605 = vmatprep.mubr.f32.mxu0 %v10290
      %10606 = vmatmul.mubr.f32.gmra.mrb[0].mxu0 %v10194
      %v10607 = vpop.f32.mrb[0].mxu0
      %v10608 = vadd.f32 %v10335, %v10607
      %v10609 = vpop.f32.mrb[0].mxu0
      %10610 = vmatprep.mubr.f32.mxu0 %v10291
      %10611 = vmatmul.mubr.f32.gmra.mrb[0].mxu0 %v10195
      %v10612 = vpop.f32.mrb[0].mxu0
      %v10613 = vadd.f32 %v10335, %v10612
      %v10614 = vpop.f32.mrb[0].mxu0
      %10615 = vmatprep.mubr.f32.mxu0 %v10292
      %10616 = vmatmul.mubr.f32.gmra.mrb[0].mxu0 %v10196
      %v10617 = vpop.f32.mrb[0].mxu0
      %v10618 = vadd.f32 %v10335, %v10617
      %v10619 = vpop.f32.mrb[0].mxu0
      %10620 = vmatprep.mubr.f32.mxu0 %v10293
      %10621 = vmatmul.mubr.f32.gmra.mrb[0].mxu0 %v10197
      %v10622 = vpop.f32.mrb[0].mxu0
      %v10623 = vadd.f32 %v10335, %v10622
      %v10624 = vpop.f32.mrb[0].mxu0
      %10625 = vdwg.mxu0
      %10626 = vmatprep.subr.mxu0 0.0
      %10627 = vmatpush1.msra.mxu0 %v10326
      %10628 = vmatprep.subr.mxu0 0.0
      %10629 = vmatpush1.msra.mxu0 %v10327
      %10630 = vmatprep.subr.mxu0 0.0
      %10631 = vmatpush1.msra.mxu0 %v10328
      %10632 = vmatprep.subr.mxu0 0.0
      %10633 = vmatpush1.msra.mxu0 %v10329
      %10634 = vmatprep.subr.mxu0 0.0
      %10635 = vmatpush1.msra.mxu0 0.0
      %10636 = vmatprep.subr.mxu0 0.0
      %10637 = vmatpush1.msra.mxu0 0.0
      %10638 = vmatprep.subr.mxu0 0.0
      %10639 = vmatpush1.msra.mxu0 0.0
      %10640 = vmatprep.subr.mxu0 0.0
      %10641 = vmatpush1.msra.mxu0 0.0
      %10642 = vmatprep.subr.mxu0 0.0
      %10643 = vmatpush1.msra.mxu0 0.0
      %10644 = vmatprep.subr.mxu0 0.0
      %10645 = vmatpush1.msra.mxu0 0.0
      %10646 = vmatprep.subr.mxu0 0.0
      %10647 = vmatpush1.msra.mxu0 0.0
      %10648 = vmatprep.subr.mxu0 0.0
      %10649 = vmatpush1.msra.mxu0 0.0
      %10650 = vmatprep.subr.mxu0 0.0
      %10651 = vmatpush1.msra.mxu0 0.0
      %10652 = vmatprep.subr.mxu0 0.0
      %10653 = vmatpush1.msra.mxu0 0.0
      %10654 = vmatprep.subr.mxu0 0.0
      %10655 = vmatpush1.msra.mxu0 0.0
      %10656 = vmatprep.subr.mxu0 0.0
      %10657 = vmatpush1.msra.mxu0 0.0
      %10658 = vmatprep.subr.mxu0 0.0
      %10659 = vmatpush1.msra.mxu0 0.0
      %10660 = vmatprep.subr.mxu0 0.0
      %10661 = vmatpush1.msra.mxu0 0.0
      %10662 = vmatprep.subr.mxu0 0.0
      %10663 = vmatpush1.msra.mxu0 0.0
      %10664 = vmatprep.subr.mxu0 0.0
      %10665 = vmatpush1.msra.mxu0 0.0
      %10666 = vmatprep.subr.mxu0 0.0
      %10667 = vmatpush1.msra.mxu0 0.0
      %10668 = vmatprep.subr.mxu0 0.0
      %10669 = vmatpush1.msra.mxu0 0.0
      %10670 = vmatprep.subr.mxu0 0.0
      %10671 = vmatpush1.msra.mxu0 0.0
      %10672 = vmatprep.subr.mxu0 0.0
      %10673 = vmatpush1.msra.mxu0 0.0
      %10674 = vmatprep.subr.mxu0 0.0
      %10675 = vmatpush1.msra.mxu0 0.0
      %10676 = vmatprep.subr.mxu0 0.0
      %10677 = vmatpush1.msra.mxu0 0.0
      %10678 = vmatprep.subr.mxu0 0.0
      %10679 = vmatpush1.msra.mxu0 0.0
      %10680 = vmatprep.subr.mxu0 0.0
      %10681 = vmatpush1.msra.mxu0 0.0
      %10682 = vmatprep.subr.mxu0 0.0
      %10683 = vmatpush1.msra.mxu0 0.0
      %10684 = vmatprep.subr.mxu0 0.0
      %10685 = vmatpush1.msra.mxu0 0.0
      %10686 = vmatprep.subr.mxu0 0.0
      %10687 = vmatpush1.msra.mxu0 0.0
      %10688 = vmatprep.subr.mxu0 0.0
      %10689 = vmatpush1.msra.mxu0 0.0
      %10690 = vmatprep.mubr.f32.mxu0 0.0
      %10691 = vmatmul.mubr.f32.gmra.mrb[0].mxu0 %v10337
      %v10692 = vpop.f32.mrb[0].mxu0
      %v10693 = vadd.f32 %v10468, %v10692
      %v10694 = vpop.f32.mrb[0].mxu0
      %10695 = vmatprep.mubr.f32.mxu0 0.0
      %10696 = vmatmul.mubr.f32.gmra.mrb[0].mxu0 %v10339
      %v10697 = vpop.f32.mrb[0].mxu0
      %v10698 = vadd.f32 %v10473, %v10697
      %v10699 = vpop.f32.mrb[0].mxu0
      %10700 = vmatprep.mubr.f32.mxu0 0.0
      %10701 = vmatmul.mubr.f32.gmra.mrb[0].mxu0 %v10341
      %v10702 = vpop.f32.mrb[0].mxu0
      %v10703 = vadd.f32 %v10478, %v10702
      %v10704 = vpop.f32.mrb[0].mxu0
      %10705 = vmatprep.mubr.f32.mxu0 0.0
      %10706 = vmatmul.mubr.f32.gmra.mrb[0].mxu0 %v10343
      %v10707 = vpop.f32.mrb[0].mxu0
      %v10708 = vadd.f32 %v10483, %v10707
      %v10709 = vpop.f32.mrb[0].mxu0
      %10710 = vmatprep.mubr.f32.mxu0 0.0
      %10711 = vmatmul.mubr.f32.gmra.mrb[0].mxu0 %v10345
      %v10712 = vpop.f32.mrb[0].mxu0
      %v10713 = vadd.f32 %v10488, %v10712
      %v10714 = vpop.f32.mrb[0].mxu0
      %10715 = vmatprep.mubr.f32.mxu0 0.0
      %10716 = vmatmul.mubr.f32.gmra.mrb[0].mxu0 %v10347
      %v10717 = vpop.f32.mrb[0].mxu0
      %v10718 = vadd.f32 %v10493, %v10717
      %v10719 = vpop.f32.mrb[0].mxu0
      %10720 = vmatprep.mubr.f32.mxu0 0.0
      %10721 = vmatmul.mubr.f32.gmra.mrb[0].mxu0 %v10349
      %v10722 = vpop.f32.mrb[0].mxu0
      %v10723 = vadd.f32 %v10498, %v10722
      %v10724 = vpop.f32.mrb[0].mxu0
      %10725 = vmatprep.mubr.f32.mxu0 0.0
      %10726 = vmatmul.mubr.f32.gmra.mrb[0].mxu0 %v10351
      %v10727 = vpop.f32.mrb[0].mxu0
      %v10728 = vadd.f32 %v10503, %v10727
      %v10729 = vpop.f32.mrb[0].mxu0
      %10730 = vmatprep.mubr.f32.mxu0 0.0
      %10731 = vmatmul.mubr.f32.gmra.mrb[0].mxu0 %v10353
      %v10732 = vpop.f32.mrb[0].mxu0
      %v10733 = vadd.f32 %v10508, %v10732
      %v10734 = vpop.f32.mrb[0].mxu0
      %10735 = vmatprep.mubr.f32.mxu0 0.0
      %10736 = vmatmul.mubr.f32.gmra.mrb[0].mxu0 %v10355
      %v10737 = vpop.f32.mrb[0].mxu0
      %v10738 = vadd.f32 %v10513, %v10737
      %v10739 = vpop.f32.mrb[0].mxu0
      %10740 = vmatprep.mubr.f32.mxu0 0.0
      %10741 = vmatmul.mubr.f32.gmra.mrb[0].mxu0 %v10357
      %v10742 = vpop.f32.mrb[0].mxu0
      %v10743 = vadd.f32 %v10518, %v10742
      %v10744 = vpop.f32.mrb[0].mxu0
      %10745 = vmatprep.mubr.f32.mxu0 0.0
      %10746 = vmatmul.mubr.f32.gmra.mrb[0].mxu0 %v10359
      %v10747 = vpop.f32.mrb[0].mxu0
      %v10748 = vadd.f32 %v10523, %v10747
      %v10749 = vpop.f32.mrb[0].mxu0
      %10750 = vmatprep.mubr.f32.mxu0 0.0
      %10751 = vmatmul.mubr.f32.gmra.mrb[0].mxu0 %v10361
      %v10752 = vpop.f32.mrb[0].mxu0
      %v10753 = vadd.f32 %v10528, %v10752
      %v10754 = vpop.f32.mrb[0].mxu0
      %10755 = vmatprep.mubr.f32.mxu0 0.0
      %10756 = vmatmul.mubr.f32.gmra.mrb[0].mxu0 %v10363
      %v10757 = vpop.f32.mrb[0].mxu0
      %v10758 = vadd.f32 %v10533, %v10757
      %v10759 = vpop.f32.mrb[0].mxu0
      %10760 = vmatprep.mubr.f32.mxu0 0.0
      %10761 = vmatmul.mubr.f32.gmra.mrb[0].mxu0 %v10365
      %v10762 = vpop.f32.mrb[0].mxu0
      %v10763 = vadd.f32 %v10538, %v10762
      %v10764 = vpop.f32.mrb[0].mxu0
      %10765 = vmatprep.mubr.f32.mxu0 0.0
      %10766 = vmatmul.mubr.f32.gmra.mrb[0].mxu0 %v10367
      %v10767 = vpop.f32.mrb[0].mxu0
      %v10768 = vadd.f32 %v10543, %v10767
      %v10769 = vpop.f32.mrb[0].mxu0
      %10770 = vmatprep.mubr.f32.mxu0 0.0
      %10771 = vmatmul.mubr.f32.gmra.mrb[0].mxu0 %v10369
      %v10772 = vpop.f32.mrb[0].mxu0
      %v10773 = vadd.f32 %v10548, %v10772
      %v10774 = vpop.f32.mrb[0].mxu0
      %10775 = vmatprep.mubr.f32.mxu0 0.0
      %10776 = vmatmul.mubr.f32.gmra.mrb[0].mxu0 %v10371
      %v10777 = vpop.f32.mrb[0].mxu0
      %v10778 = vadd.f32 %v10553, %v10777
      %v10779 = vpop.f32.mrb[0].mxu0
      %10780 = vmatprep.mubr.f32.mxu0 0.0
      %10781 = vmatmul.mubr.f32.gmra.mrb[0].mxu0 %v10373
      %v10782 = vpop.f32.mrb[0].mxu0
      %v10783 = vadd.f32 %v10558, %v10782
      %v10784 = vpop.f32.mrb[0].mxu0
      %10785 = vmatprep.mubr.f32.mxu0 0.0
      %10786 = vmatmul.mubr.f32.gmra.mrb[0].mxu0 %v10375
      %v10787 = vpop.f32.mrb[0].mxu0
      %v10788 = vadd.f32 %v10563, %v10787
      %v10789 = vpop.f32.mrb[0].mxu0
      %10790 = vmatprep.mubr.f32.mxu0 0.0
      %10791 = vmatmul.mubr.f32.gmra.mrb[0].mxu0 %v10377
      %v10792 = vpop.f32.mrb[0].mxu0
      %v10793 = vadd.f32 %v10568, %v10792
      %v10794 = vpop.f32.mrb[0].mxu0
      %10795 = vmatprep.mubr.f32.mxu0 0.0
      %10796 = vmatmul.mubr.f32.gmra.mrb[0].mxu0 %v10379
      %v10797 = vpop.f32.mrb[0].mxu0
      %v10798 = vadd.f32 %v10573, %v10797
      %v10799 = vpop.f32.mrb[0].mxu0
      %10800 = vmatprep.mubr.f32.mxu0 0.0
      %10801 = vmatmul.mubr.f32.gmra.mrb[0].mxu0 %v10381
      %v10802 = vpop.f32.mrb[0].mxu0
      %v10803 = vadd.f32 %v10578, %v10802
      %v10804 = vpop.f32.mrb[0].mxu0
      %10805 = vmatprep.mubr.f32.mxu0 0.0
      %10806 = vmatmul.mubr.f32.gmra.mrb[0].mxu0 %v10383
      %v10807 = vpop.f32.mrb[0].mxu0
      %v10808 = vadd.f32 %v10583, %v10807
      %v10809 = vpop.f32.mrb[0].mxu0
      %10810 = vmatprep.mubr.f32.mxu0 0.0
      %10811 = vmatmul.mubr.f32.gmra.mrb[0].mxu0 %v10385
      %v10812 = vpop.f32.mrb[0].mxu0
      %v10813 = vadd.f32 %v10588, %v10812
      %v10814 = vpop.f32.mrb[0].mxu0
      %10815 = vmatprep.mubr.f32.mxu0 0.0
      %10816 = vmatmul.mubr.f32.gmra.mrb[0].mxu0 %v10387
      %v10817 = vpop.f32.mrb[0].mxu0
      %v10818 = vadd.f32 %v10593, %v10817
      %v10819 = vpop.f32.mrb[0].mxu0
      %10820 = vmatprep.mubr.f32.mxu0 0.0
      %10821 = vmatmul.mubr.f32.gmra.mrb[0].mxu0 %v10389
      %v10822 = vpop.f32.mrb[0].mxu0
      %v10823 = vadd.f32 %v10598, %v10822
      %v10824 = vpop.f32.mrb[0].mxu0
      %10825 = vmatprep.mubr.f32.mxu0 0.0
      %10826 = vmatmul.mubr.f32.gmra.mrb[0].mxu0 %v10391
      %v10827 = vpop.f32.mrb[0].mxu0
      %v10828 = vadd.f32 %v10603, %v10827
      %v10829 = vpop.f32.mrb[0].mxu0
      %10830 = vmatprep.mubr.f32.mxu0 0.0
      %10831 = vmatmul.mubr.f32.gmra.mrb[0].mxu0 %v10393
      %v10832 = vpop.f32.mrb[0].mxu0
      %v10833 = vadd.f32 %v10608, %v10832
      %v10834 = vpop.f32.mrb[0].mxu0
      %10835 = vmatprep.mubr.f32.mxu0 0.0
      %10836 = vmatmul.mubr.f32.gmra.mrb[0].mxu0 %v10395
      %v10837 = vpop.f32.mrb[0].mxu0
      %v10838 = vadd.f32 %v10613, %v10837
      %v10839 = vpop.f32.mrb[0].mxu0
      %10840 = vmatprep.mubr.f32.mxu0 0.0
      %10841 = vmatmul.mubr.f32.gmra.mrb[0].mxu0 %v10397
      %v10842 = vpop.f32.mrb[0].mxu0
      %v10843 = vadd.f32 %v10618, %v10842
      %v10844 = vpop.f32.mrb[0].mxu0
      %10845 = vmatprep.mubr.f32.mxu0 0.0
      %10846 = vmatmul.mubr.f32.gmra.mrb[0].mxu0 %v10399
      %v10847 = vpop.f32.mrb[0].mxu0
      %v10848 = vadd.f32 %v10623, %v10847
      %v10849 = vpop.f32.mrb[0].mxu0
      %10850 = vdwg.mxu0
      %v10851 = vmax.f32 %v10693, 0.0
      %v10852 = vmax.f32 %v10698, 0.0
      %v10853 = vmax.f32 %v10703, 0.0
      %v10854 = vmax.f32 %v10708, 0.0
      %v10855 = vmax.f32 %v10713, 0.0
      %v10856 = vmax.f32 %v10718, 0.0
      %v10857 = vmax.f32 %v10723, 0.0
      %v10858 = vmax.f32 %v10728, 0.0
      %v10859 = vmax.f32 %v10733, 0.0
      %v10860 = vmax.f32 %v10738, 0.0
      %v10861 = vmax.f32 %v10743, 0.0
      %v10862 = vmax.f32 %v10748, 0.0
      %v10863 = vmax.f32 %v10753, 0.0
      %v10864 = vmax.f32 %v10758, 0.0
      %v10865 = vmax.f32 %v10763, 0.0
      %v10866 = vmax.f32 %v10768, 0.0
      %v10867 = vmax.f32 %v10773, 0.0
      %v10868 = vmax.f32 %v10778, 0.0
      %v10869 = vmax.f32 %v10783, 0.0
      %v10870 = vmax.f32 %v10788, 0.0
      %v10871 = vmax.f32 %v10793, 0.0
      %v10872 = vmax.f32 %v10798, 0.0
      %v10873 = vmax.f32 %v10803, 0.0
      %v10874 = vmax.f32 %v10808, 0.0
      %v10875 = vmax.f32 %v10813, 0.0
      %v10876 = vmax.f32 %v10818, 0.0
      %v10877 = vmax.f32 %v10823, 0.0
      %v10878 = vmax.f32 %v10828, 0.0
      %v10879 = vmax.f32 %v10833, 0.0
      %v10880 = vmax.f32 %v10838, 0.0
      %v10881 = vmax.f32 %v10843, 0.0
      %v10882 = vmax.f32 %v10848, 0.0
      %10883 = vst.msk [vmem:[%s7463 + $0x1] sm:$0xff] %vm333, %v10851
      %10884 = vst.msk [vmem:[%s7463 + $0x9] sm:$0xff] %vm333, %v10852
      %10885 = vst.msk [vmem:[%s7463 + $0x19] sm:$0xff] %vm333, %v10853
      %10886 = vst.msk [vmem:[%s7463 + $0x21] sm:$0xff] %vm333, %v10854
      %10887 = vst.msk [vmem:[%s7463 + $0x31] sm:$0xff] %vm333, %v10855
      %10888 = vst.msk [vmem:[%s7463 + $0x39] sm:$0xff] %vm333, %v10856
      %10889 = vst.msk [vmem:[%s7463 + $0x49] sm:$0xff] %vm333, %v10857
      %10890 = vst.msk [vmem:[%s7463 + $0x51] sm:$0xff] %vm333, %v10858
      %10891 = vst.msk [vmem:[%s7463 + $0x61] sm:$0xff] %vm333, %v10859
      %10892 = vst.msk [vmem:[%s7463 + $0x69] sm:$0xff] %vm333, %v10860
      %10893 = vst.msk [vmem:[%s7463 + $0x79] sm:$0xff] %vm333, %v10861
      %10894 = vst.msk [vmem:[%s7463 + $0x81] sm:$0xff] %vm333, %v10862
      %10895 = vst.msk [vmem:[%s7463 + $0x91] sm:$0xff] %vm333, %v10863
      %10896 = vst.msk [vmem:[%s7463 + $0x99] sm:$0xff] %vm333, %v10864
      %10897 = vst.msk [vmem:[%s7463 + $0xa9] sm:$0xff] %vm333, %v10865
      %10898 = vst.msk [vmem:[%s7463 + $0xb1] sm:$0xff] %vm333, %v10866
      %10899 = vst.msk [vmem:[%s7463 + $0xc1] sm:$0xff] %vm333, %v10867
      %10900 = vst.msk [vmem:[%s7463 + $0xc9] sm:$0xff] %vm333, %v10868
      %10901 = vst.msk [vmem:[%s7463 + $0xd9] sm:$0xff] %vm333, %v10869
      %10902 = vst.msk [vmem:[%s7463 + $0xe1] sm:$0xff] %vm333, %v10870
      %10903 = vst.msk [vmem:[%s7463 + $0xf1] sm:$0xff] %vm333, %v10871
      %10904 = vst.msk [vmem:[%s7463 + $0xf9] sm:$0xff] %vm333, %v10872
      %10905 = vst.msk [vmem:[%s7463 + $0x109] sm:$0xff] %vm333, %v10873
      %10906 = vst.msk [vmem:[%s7463 + $0x111] sm:$0xff] %vm333, %v10874
      %10907 = vst.msk [vmem:[%s7463 + $0x121] sm:$0xff] %vm333, %v10875
      %10908 = vst.msk [vmem:[%s7463 + $0x129] sm:$0xff] %vm333, %v10876
      %10909 = vst.msk [vmem:[%s7463 + $0x139] sm:$0xff] %vm333, %v10877
      %10910 = vst.msk [vmem:[%s7463 + $0x141] sm:$0xff] %vm333, %v10878
      %10911 = vst.msk [vmem:[%s7463 + $0x151] sm:$0xff] %vm333, %v10879
      %10912 = vst.msk [vmem:[%s7463 + $0x159] sm:$0xff] %vm333, %v10880
      %10913 = vst.msk [vmem:[%s7463 + $0x169] sm:$0xff] %vm333, %v10881
      %10914 = vst.msk [vmem:[%s7463 + $0x171] sm:$0xff] %vm333, %v10882
      %v10915 = vld [vmem:[#allocation2] sm:$0xff]
      %v10916 = vld [vmem:[#allocation2 + $0x8] sm:$0xff]
      %v10917 = vld [vmem:[#allocation2 + $0x10] sm:$0x3]
      %v10918 = vld [vmem:[#allocation2 + $0x18] sm:$0xff]
      %v10919 = vld [vmem:[#allocation2 + $0x20] sm:$0xff]
      %v10920 = vld [vmem:[#allocation2 + $0x28] sm:$0x3]
      %v10921 = vld [vmem:[#allocation2 + $0x30] sm:$0xff]
      %v10922 = vld [vmem:[#allocation2 + $0x38] sm:$0xff]
      %v10923 = vld [vmem:[#allocation2 + $0x40] sm:$0x3]
      %v10924 = vld [vmem:[#allocation2 + $0x48] sm:$0xff]
      %v10925 = vld [vmem:[#allocation2 + $0x50] sm:$0xff]
      %v10926 = vld [vmem:[#allocation2 + $0x58] sm:$0x3]
      %v10927 = vld [vmem:[#allocation2 + $0x60] sm:$0xff]
      %v10928 = vld [vmem:[#allocation2 + $0x68] sm:$0xff]
      %v10929 = vld [vmem:[#allocation2 + $0x70] sm:$0x3]
      %v10930 = vld [vmem:[#allocation2 + $0x78] sm:$0xff]
      %v10931 = vld [vmem:[#allocation2 + $0x80] sm:$0xff]
      %v10932 = vld [vmem:[#allocation2 + $0x88] sm:$0x3]
      %v10933 = vld [vmem:[#allocation2 + $0x90] sm:$0xff]
      %v10934 = vld [vmem:[#allocation2 + $0x98] sm:$0xff]
      %v10935 = vld [vmem:[#allocation2 + $0xa0] sm:$0x3]
      %v10936 = vld [vmem:[#allocation2 + $0xa8] sm:$0xff]
      %v10937 = vld [vmem:[#allocation2 + $0xb0] sm:$0xff]
      %v10938 = vld [vmem:[#allocation2 + $0xb8] sm:$0x3]
      %v10939 = vld [vmem:[#allocation2 + $0xc0] sm:$0xff]
      %v10940 = vld [vmem:[#allocation2 + $0xc8] sm:$0xff]
      %v10941 = vld [vmem:[#allocation2 + $0xd0] sm:$0x3]
      %v10942 = vld [vmem:[#allocation2 + $0xd8] sm:$0xff]
      %v10943 = vld [vmem:[#allocation2 + $0xe0] sm:$0xff]
      %v10944 = vld [vmem:[#allocation2 + $0xe8] sm:$0x3]
      %v10945 = vld [vmem:[#allocation2 + $0xf0] sm:$0xff]
      %v10946 = vld [vmem:[#allocation2 + $0xf8] sm:$0xff]
      %v10947 = vld [vmem:[#allocation2 + $0x100] sm:$0x3]
      %v10948 = vld [vmem:[#allocation2 + $0x108] sm:$0xff]
      %v10949 = vld [vmem:[#allocation2 + $0x110] sm:$0xff]
      %v10950 = vld [vmem:[#allocation2 + $0x118] sm:$0x3]
      %v10951 = vld [vmem:[#allocation2 + $0x120] sm:$0xff]
      %v10952 = vld [vmem:[#allocation2 + $0x128] sm:$0xff]
      %v10953 = vld [vmem:[#allocation2 + $0x130] sm:$0x3]
      %v10954 = vld [vmem:[#allocation2 + $0x138] sm:$0xff]
      %v10955 = vld [vmem:[#allocation2 + $0x140] sm:$0xff]
      %v10956 = vld [vmem:[#allocation2 + $0x148] sm:$0x3]
      %v10957 = vld [vmem:[#allocation2 + $0x150] sm:$0xff]
      %v10958 = vld [vmem:[#allocation2 + $0x158] sm:$0xff]
      %v10959 = vld [vmem:[#allocation2 + $0x160] sm:$0x3]
      %v10960 = vld [vmem:[#allocation2 + $0x168] sm:$0xff]
      %v10961 = vld [vmem:[#allocation2 + $0x170] sm:$0xff]
      %v10962 = vld [vmem:[#allocation2 + $0x178] sm:$0x3]
      %v10963 = vld [vmem:[#allocation2 + $0x180] sm:$0xff]
      %v10964 = vld [vmem:[#allocation2 + $0x188] sm:$0xff]
      %v10965 = vld [vmem:[#allocation2 + $0x190] sm:$0x3]
      %v10966 = vld [vmem:[#allocation2 + $0x198] sm:$0xff]
      %v10967 = vld [vmem:[#allocation2 + $0x1a0] sm:$0xff]
      %v10968 = vld [vmem:[#allocation2 + $0x1a8] sm:$0x3]
      %v11017 = vrot.slane %v10915, 1
      %v11018 = vrot.slane %v10916, 1
      %v11019 = vsel %vm503, %v11017, %v11018
      %v11020 = vrot.slane %v10917, 1
      %v11021 = vsel %vm503, %v11018, %v11020
      %v11022 = vrot.slane %v10918, 1
      %v11023 = vrot.slane %v10919, 1
      %v11024 = vsel %vm503, %v11022, %v11023
      %v11025 = vrot.slane %v10920, 1
      %v11026 = vsel %vm503, %v11023, %v11025
      %v11027 = vrot.slane %v10921, 1
      %v11028 = vrot.slane %v10922, 1
      %v11029 = vsel %vm503, %v11027, %v11028
      %v11030 = vrot.slane %v10923, 1
      %v11031 = vsel %vm503, %v11028, %v11030
      %v11032 = vrot.slane %v10924, 1
      %v11033 = vrot.slane %v10925, 1
      %v11034 = vsel %vm503, %v11032, %v11033
      %v11035 = vrot.slane %v10926, 1
      %v11036 = vsel %vm503, %v11033, %v11035
      %v11037 = vrot.slane %v10927, 1
      %v11038 = vrot.slane %v10928, 1
      %v11039 = vsel %vm503, %v11037, %v11038
      %v11040 = vrot.slane %v10929, 1
      %v11041 = vsel %vm503, %v11038, %v11040
      %v11042 = vrot.slane %v10930, 1
      %v11043 = vrot.slane %v10931, 1
      %v11044 = vsel %vm503, %v11042, %v11043
      %v11045 = vrot.slane %v10932, 1
      %v11046 = vsel %vm503, %v11043, %v11045
      %v11047 = vrot.slane %v10933, 1
      %v11048 = vrot.slane %v10934, 1
      %v11049 = vsel %vm503, %v11047, %v11048
      %v11050 = vrot.slane %v10935, 1
      %v11051 = vsel %vm503, %v11048, %v11050
      %v11052 = vrot.slane %v10936, 1
      %v11053 = vrot.slane %v10937, 1
      %v11054 = vsel %vm503, %v11052, %v11053
      %v11055 = vrot.slane %v10938, 1
      %v11056 = vsel %vm503, %v11053, %v11055
      %v11057 = vrot.slane %v10939, 1
      %v11058 = vrot.slane %v10940, 1
      %v11059 = vsel %vm503, %v11057, %v11058
      %v11060 = vrot.slane %v10941, 1
      %v11061 = vsel %vm503, %v11058, %v11060
      %v11062 = vrot.slane %v10942, 1
      %v11063 = vrot.slane %v10943, 1
      %v11064 = vsel %vm503, %v11062, %v11063
      %v11065 = vrot.slane %v10944, 1
      %v11066 = vsel %vm503, %v11063, %v11065
      %v11067 = vrot.slane %v10945, 1
      %v11068 = vrot.slane %v10946, 1
      %v11069 = vsel %vm503, %v11067, %v11068
      %v11070 = vrot.slane %v10947, 1
      %v11071 = vsel %vm503, %v11068, %v11070
      %v11072 = vrot.slane %v10948, 1
      %v11073 = vrot.slane %v10949, 1
      %v11074 = vsel %vm503, %v11072, %v11073
      %v11075 = vrot.slane %v10950, 1
      %v11076 = vsel %vm503, %v11073, %v11075
      %v11077 = vrot.slane %v10951, 1
      %v11078 = vrot.slane %v10952, 1
      %v11079 = vsel %vm503, %v11077, %v11078
      %v11080 = vrot.slane %v10953, 1
      %v11081 = vsel %vm503, %v11078, %v11080
      %v11082 = vrot.slane %v10954, 1
      %v11083 = vrot.slane %v10955, 1
      %v11084 = vsel %vm503, %v11082, %v11083
      %v11085 = vrot.slane %v10956, 1
      %v11086 = vsel %vm503, %v11083, %v11085
      %v11087 = vrot.slane %v10957, 1
      %v11088 = vrot.slane %v10958, 1
      %v11089 = vsel %vm503, %v11087, %v11088
      %v11090 = vrot.slane %v10959, 1
      %v11091 = vsel %vm503, %v11088, %v11090
      %v11092 = vrot.slane %v10960, 1
      %v11093 = vrot.slane %v10961, 1
      %v11094 = vsel %vm503, %v11092, %v11093
      %v11095 = vrot.slane %v10962, 1
      %v11096 = vsel %vm503, %v11093, %v11095
      %11097 = vrot.lane.b32.xlu0 %v11019, 32
      %v11098 = vpop.permute.xlu0 %11097
      %11099 = vrot.lane.b32.xlu0 %v11021, 32
      %v11100 = vpop.permute.xlu0 %11099
      %11101 = vrot.lane.b32.xlu0 %v11024, 32
      %v11102 = vpop.permute.xlu0 %11101
      %11103 = vrot.lane.b32.xlu0 %v11026, 32
      %v11104 = vpop.permute.xlu0 %11103
      %11105 = vrot.lane.b32.xlu0 %v11029, 32
      %v11106 = vpop.permute.xlu0 %11105
      %11107 = vrot.lane.b32.xlu0 %v11031, 32
      %v11108 = vpop.permute.xlu0 %11107
      %11109 = vrot.lane.b32.xlu0 %v11034, 32
      %v11110 = vpop.permute.xlu0 %11109
      %11111 = vrot.lane.b32.xlu0 %v11036, 32
      %v11112 = vpop.permute.xlu0 %11111
      %11113 = vrot.lane.b32.xlu0 %v11039, 32
      %v11114 = vpop.permute.xlu0 %11113
      %11115 = vrot.lane.b32.xlu0 %v11041, 32
      %v11116 = vpop.permute.xlu0 %11115
      %11117 = vrot.lane.b32.xlu0 %v11044, 32
      %v11118 = vpop.permute.xlu0 %11117
      %11119 = vrot.lane.b32.xlu0 %v11046, 32
      %v11120 = vpop.permute.xlu0 %11119
      %11121 = vrot.lane.b32.xlu0 %v11049, 32
      %v11122 = vpop.permute.xlu0 %11121
      %11123 = vrot.lane.b32.xlu0 %v11051, 32
      %v11124 = vpop.permute.xlu0 %11123
      %11125 = vrot.lane.b32.xlu0 %v11054, 32
      %v11126 = vpop.permute.xlu0 %11125
      %11127 = vrot.lane.b32.xlu0 %v11056, 32
      %v11128 = vpop.permute.xlu0 %11127
      %11129 = vrot.lane.b32.xlu0 %v11059, 32
      %v11130 = vpop.permute.xlu0 %11129
      %11131 = vrot.lane.b32.xlu0 %v11061, 32
      %v11132 = vpop.permute.xlu0 %11131
      %11133 = vrot.lane.b32.xlu0 %v11064, 32
      %v11134 = vpop.permute.xlu0 %11133
      %11135 = vrot.lane.b32.xlu0 %v11066, 32
      %v11136 = vpop.permute.xlu0 %11135
      %11137 = vrot.lane.b32.xlu0 %v11069, 32
      %v11138 = vpop.permute.xlu0 %11137
      %11139 = vrot.lane.b32.xlu0 %v11071, 32
      %v11140 = vpop.permute.xlu0 %11139
      %11141 = vrot.lane.b32.xlu0 %v11074, 32
      %v11142 = vpop.permute.xlu0 %11141
      %11143 = vrot.lane.b32.xlu0 %v11076, 32
      %v11144 = vpop.permute.xlu0 %11143
      %11145 = vrot.lane.b32.xlu0 %v11079, 32
      %v11146 = vpop.permute.xlu0 %11145
      %11147 = vrot.lane.b32.xlu0 %v11081, 32
      %v11148 = vpop.permute.xlu0 %11147
      %11149 = vrot.lane.b32.xlu0 %v11084, 32
      %v11150 = vpop.permute.xlu0 %11149
      %11151 = vrot.lane.b32.xlu0 %v11086, 32
      %v11152 = vpop.permute.xlu0 %11151
      %11153 = vrot.lane.b32.xlu0 %v11089, 32
      %v11154 = vpop.permute.xlu0 %11153
      %11155 = vrot.lane.b32.xlu0 %v11091, 32
      %v11156 = vpop.permute.xlu0 %11155
      %11157 = vrot.lane.b32.xlu0 %v11094, 32
      %v11158 = vpop.permute.xlu0 %11157
      %11159 = vrot.lane.b32.xlu0 %v11096, 32
      %v11160 = vpop.permute.xlu0 %11159
      %v11193 = vrot.slane %v10915, 2
      %v11194 = vrot.slane %v10916, 2
      %v11195 = vsel %vm680, %v11193, %v11194
      %v11196 = vrot.slane %v10917, 2
      %v11197 = vsel %vm680, %v11194, %v11196
      %v11198 = vrot.slane %v10918, 2
      %v11199 = vrot.slane %v10919, 2
      %v11200 = vsel %vm680, %v11198, %v11199
      %v11201 = vrot.slane %v10920, 2
      %v11202 = vsel %vm680, %v11199, %v11201
      %v11203 = vrot.slane %v10921, 2
      %v11204 = vrot.slane %v10922, 2
      %v11205 = vsel %vm680, %v11203, %v11204
      %v11206 = vrot.slane %v10923, 2
      %v11207 = vsel %vm680, %v11204, %v11206
      %v11208 = vrot.slane %v10924, 2
      %v11209 = vrot.slane %v10925, 2
      %v11210 = vsel %vm680, %v11208, %v11209
      %v11211 = vrot.slane %v10926, 2
      %v11212 = vsel %vm680, %v11209, %v11211
      %v11213 = vrot.slane %v10927, 2
      %v11214 = vrot.slane %v10928, 2
      %v11215 = vsel %vm680, %v11213, %v11214
      %v11216 = vrot.slane %v10929, 2
      %v11217 = vsel %vm680, %v11214, %v11216
      %v11218 = vrot.slane %v10930, 2
      %v11219 = vrot.slane %v10931, 2
      %v11220 = vsel %vm680, %v11218, %v11219
      %v11221 = vrot.slane %v10932, 2
      %v11222 = vsel %vm680, %v11219, %v11221
      %v11223 = vrot.slane %v10933, 2
      %v11224 = vrot.slane %v10934, 2
      %v11225 = vsel %vm680, %v11223, %v11224
      %v11226 = vrot.slane %v10935, 2
      %v11227 = vsel %vm680, %v11224, %v11226
      %v11228 = vrot.slane %v10936, 2
      %v11229 = vrot.slane %v10937, 2
      %v11230 = vsel %vm680, %v11228, %v11229
      %v11231 = vrot.slane %v10938, 2
      %v11232 = vsel %vm680, %v11229, %v11231
      %v11233 = vrot.slane %v10939, 2
      %v11234 = vrot.slane %v10940, 2
      %v11235 = vsel %vm680, %v11233, %v11234
      %v11236 = vrot.slane %v10941, 2
      %v11237 = vsel %vm680, %v11234, %v11236
      %v11238 = vrot.slane %v10942, 2
      %v11239 = vrot.slane %v10943, 2
      %v11240 = vsel %vm680, %v11238, %v11239
      %v11241 = vrot.slane %v10944, 2
      %v11242 = vsel %vm680, %v11239, %v11241
      %v11243 = vrot.slane %v10945, 2
      %v11244 = vrot.slane %v10946, 2
      %v11245 = vsel %vm680, %v11243, %v11244
      %v11246 = vrot.slane %v10947, 2
      %v11247 = vsel %vm680, %v11244, %v11246
      %v11248 = vrot.slane %v10948, 2
      %v11249 = vrot.slane %v10949, 2
      %v11250 = vsel %vm680, %v11248, %v11249
      %v11251 = vrot.slane %v10950, 2
      %v11252 = vsel %vm680, %v11249, %v11251
      %v11253 = vrot.slane %v10951, 2
      %v11254 = vrot.slane %v10952, 2
      %v11255 = vsel %vm680, %v11253, %v11254
      %v11256 = vrot.slane %v10953, 2
      %v11257 = vsel %vm680, %v11254, %v11256
      %v11258 = vrot.slane %v10954, 2
      %v11259 = vrot.slane %v10955, 2
      %v11260 = vsel %vm680, %v11258, %v11259
      %v11261 = vrot.slane %v10956, 2
      %v11262 = vsel %vm680, %v11259, %v11261
      %v11263 = vrot.slane %v10957, 2
      %v11264 = vrot.slane %v10958, 2
      %v11265 = vsel %vm680, %v11263, %v11264
      %v11266 = vrot.slane %v10959, 2
      %v11267 = vsel %vm680, %v11264, %v11266
      %v11268 = vrot.slane %v10960, 2
      %v11269 = vrot.slane %v10961, 2
      %v11270 = vsel %vm680, %v11268, %v11269
      %v11271 = vrot.slane %v10962, 2
      %v11272 = vsel %vm680, %v11269, %v11271
      %11273 = vrot.lane.b32.xlu0 %v11195, 64
      %v11274 = vpop.permute.xlu0 %11273
      %11275 = vrot.lane.b32.xlu0 %v11197, 64
      %v11276 = vpop.permute.xlu0 %11275
      %11277 = vrot.lane.b32.xlu0 %v11200, 64
      %v11278 = vpop.permute.xlu0 %11277
      %11279 = vrot.lane.b32.xlu0 %v11202, 64
      %v11280 = vpop.permute.xlu0 %11279
      %11281 = vrot.lane.b32.xlu0 %v11205, 64
      %v11282 = vpop.permute.xlu0 %11281
      %11283 = vrot.lane.b32.xlu0 %v11207, 64
      %v11284 = vpop.permute.xlu0 %11283
      %11285 = vrot.lane.b32.xlu0 %v11210, 64
      %v11286 = vpop.permute.xlu0 %11285
      %11287 = vrot.lane.b32.xlu0 %v11212, 64
      %v11288 = vpop.permute.xlu0 %11287
      %11289 = vrot.lane.b32.xlu0 %v11215, 64
      %v11290 = vpop.permute.xlu0 %11289
      %11291 = vrot.lane.b32.xlu0 %v11217, 64
      %v11292 = vpop.permute.xlu0 %11291
      %11293 = vrot.lane.b32.xlu0 %v11220, 64
      %v11294 = vpop.permute.xlu0 %11293
      %11295 = vrot.lane.b32.xlu0 %v11222, 64
      %v11296 = vpop.permute.xlu0 %11295
      %11297 = vrot.lane.b32.xlu0 %v11225, 64
      %v11298 = vpop.permute.xlu0 %11297
      %11299 = vrot.lane.b32.xlu0 %v11227, 64
      %v11300 = vpop.permute.xlu0 %11299
      %11301 = vrot.lane.b32.xlu0 %v11230, 64
      %v11302 = vpop.permute.xlu0 %11301
      %11303 = vrot.lane.b32.xlu0 %v11232, 64
      %v11304 = vpop.permute.xlu0 %11303
      %11305 = vrot.lane.b32.xlu0 %v11235, 64
      %v11306 = vpop.permute.xlu0 %11305
      %11307 = vrot.lane.b32.xlu0 %v11237, 64
      %v11308 = vpop.permute.xlu0 %11307
      %11309 = vrot.lane.b32.xlu0 %v11240, 64
      %v11310 = vpop.permute.xlu0 %11309
      %11311 = vrot.lane.b32.xlu0 %v11242, 64
      %v11312 = vpop.permute.xlu0 %11311
      %11313 = vrot.lane.b32.xlu0 %v11245, 64
      %v11314 = vpop.permute.xlu0 %11313
      %11315 = vrot.lane.b32.xlu0 %v11247, 64
      %v11316 = vpop.permute.xlu0 %11315
      %11317 = vrot.lane.b32.xlu0 %v11250, 64
      %v11318 = vpop.permute.xlu0 %11317
      %11319 = vrot.lane.b32.xlu0 %v11252, 64
      %v11320 = vpop.permute.xlu0 %11319
      %11321 = vrot.lane.b32.xlu0 %v11255, 64
      %v11322 = vpop.permute.xlu0 %11321
      %11323 = vrot.lane.b32.xlu0 %v11257, 64
      %v11324 = vpop.permute.xlu0 %11323
      %11325 = vrot.lane.b32.xlu0 %v11260, 64
      %v11326 = vpop.permute.xlu0 %11325
      %11327 = vrot.lane.b32.xlu0 %v11262, 64
      %v11328 = vpop.permute.xlu0 %11327
      %11329 = vrot.lane.b32.xlu0 %v11265, 64
      %v11330 = vpop.permute.xlu0 %11329
      %11331 = vrot.lane.b32.xlu0 %v11267, 64
      %v11332 = vpop.permute.xlu0 %11331
      %11333 = vrot.lane.b32.xlu0 %v11270, 64
      %v11334 = vpop.permute.xlu0 %11333
      %11335 = vrot.lane.b32.xlu0 %v11272, 64
      %v11336 = vpop.permute.xlu0 %11335
      %11371 = vrot.lane.b32.xlu0 %v10918, 96
      %v11372 = vpop.permute.xlu0 %11371
      %11373 = vrot.lane.b32.xlu0 %v10919, 96
      %v11374 = vpop.permute.xlu0 %11373
      %11375 = vrot.lane.b32.xlu0 %v10921, 96
      %v11376 = vpop.permute.xlu0 %11375
      %11377 = vrot.lane.b32.xlu0 %v10922, 96
      %v11378 = vpop.permute.xlu0 %11377
      %11379 = vrot.lane.b32.xlu0 %v10924, 96
      %v11380 = vpop.permute.xlu0 %11379
      %11381 = vrot.lane.b32.xlu0 %v10925, 96
      %v11382 = vpop.permute.xlu0 %11381
      %11383 = vrot.lane.b32.xlu0 %v10927, 96
      %v11384 = vpop.permute.xlu0 %11383
      %11385 = vrot.lane.b32.xlu0 %v10928, 96
      %v11386 = vpop.permute.xlu0 %11385
      %11387 = vrot.lane.b32.xlu0 %v10930, 96
      %v11388 = vpop.permute.xlu0 %11387
      %11389 = vrot.lane.b32.xlu0 %v10931, 96
      %v11390 = vpop.permute.xlu0 %11389
      %11391 = vrot.lane.b32.xlu0 %v10933, 96
      %v11392 = vpop.permute.xlu0 %11391
      %11393 = vrot.lane.b32.xlu0 %v10934, 96
      %v11394 = vpop.permute.xlu0 %11393
      %11395 = vrot.lane.b32.xlu0 %v10936, 96
      %v11396 = vpop.permute.xlu0 %11395
      %11397 = vrot.lane.b32.xlu0 %v10937, 96
      %v11398 = vpop.permute.xlu0 %11397
      %11399 = vrot.lane.b32.xlu0 %v10939, 96
      %v11400 = vpop.permute.xlu0 %11399
      %11401 = vrot.lane.b32.xlu0 %v10940, 96
      %v11402 = vpop.permute.xlu0 %11401
      %11403 = vrot.lane.b32.xlu0 %v10942, 96
      %v11404 = vpop.permute.xlu0 %11403
      %11405 = vrot.lane.b32.xlu0 %v10943, 96
      %v11406 = vpop.permute.xlu0 %11405
      %11407 = vrot.lane.b32.xlu0 %v10945, 96
      %v11408 = vpop.permute.xlu0 %11407
      %11409 = vrot.lane.b32.xlu0 %v10946, 96
      %v11410 = vpop.permute.xlu0 %11409
      %11411 = vrot.lane.b32.xlu0 %v10948, 96
      %v11412 = vpop.permute.xlu0 %11411
      %11413 = vrot.lane.b32.xlu0 %v10949, 96
      %v11414 = vpop.permute.xlu0 %11413
      %11415 = vrot.lane.b32.xlu0 %v10951, 96
      %v11416 = vpop.permute.xlu0 %11415
      %11417 = vrot.lane.b32.xlu0 %v10952, 96
      %v11418 = vpop.permute.xlu0 %11417
      %11419 = vrot.lane.b32.xlu0 %v10954, 96
      %v11420 = vpop.permute.xlu0 %11419
      %11421 = vrot.lane.b32.xlu0 %v10955, 96
      %v11422 = vpop.permute.xlu0 %11421
      %11423 = vrot.lane.b32.xlu0 %v10957, 96
      %v11424 = vpop.permute.xlu0 %11423
      %11425 = vrot.lane.b32.xlu0 %v10958, 96
      %v11426 = vpop.permute.xlu0 %11425
      %11427 = vrot.lane.b32.xlu0 %v10960, 96
      %v11428 = vpop.permute.xlu0 %11427
      %11429 = vrot.lane.b32.xlu0 %v10961, 96
      %v11430 = vpop.permute.xlu0 %11429
      %11431 = vrot.lane.b32.xlu0 %v10963, 96
      %v11432 = vpop.permute.xlu0 %11431
      %11433 = vrot.lane.b32.xlu0 %v10964, 96
      %v11434 = vpop.permute.xlu0 %11433
      %v11468 = vrot.slane %v10963, 1
      %v11469 = vrot.slane %v10964, 1
      %v11470 = vsel %vm503, %v11468, %v11469
      %v11471 = vrot.slane %v10965, 1
      %v11472 = vsel %vm503, %v11469, %v11471
      %v11505 = vrot.slane %v10963, 2
      %v11506 = vrot.slane %v10964, 2
      %v11507 = vsel %vm680, %v11505, %v11506
      %v11508 = vrot.slane %v10965, 2
      %v11509 = vsel %vm680, %v11506, %v11508
      %11510 = vrot.lane.b32.xlu0 %v11200, 32
      %v11511 = vpop.permute.xlu0 %11510
      %11512 = vrot.lane.b32.xlu0 %v11202, 32
      %v11513 = vpop.permute.xlu0 %11512
      %11514 = vrot.lane.b32.xlu0 %v11205, 32
      %v11515 = vpop.permute.xlu0 %11514
      %11516 = vrot.lane.b32.xlu0 %v11207, 32
      %v11517 = vpop.permute.xlu0 %11516
      %11518 = vrot.lane.b32.xlu0 %v11210, 32
      %v11519 = vpop.permute.xlu0 %11518
      %11520 = vrot.lane.b32.xlu0 %v11212, 32
      %v11521 = vpop.permute.xlu0 %11520
      %11522 = vrot.lane.b32.xlu0 %v11215, 32
      %v11523 = vpop.permute.xlu0 %11522
      %11524 = vrot.lane.b32.xlu0 %v11217, 32
      %v11525 = vpop.permute.xlu0 %11524
      %11526 = vrot.lane.b32.xlu0 %v11220, 32
      %v11527 = vpop.permute.xlu0 %11526
      %11528 = vrot.lane.b32.xlu0 %v11222, 32
      %v11529 = vpop.permute.xlu0 %11528
      %11530 = vrot.lane.b32.xlu0 %v11225, 32
      %v11531 = vpop.permute.xlu0 %11530
      %11532 = vrot.lane.b32.xlu0 %v11227, 32
      %v11533 = vpop.permute.xlu0 %11532
      %11534 = vrot.lane.b32.xlu0 %v11230, 32
      %v11535 = vpop.permute.xlu0 %11534
      %11536 = vrot.lane.b32.xlu0 %v11232, 32
      %v11537 = vpop.permute.xlu0 %11536
      %11538 = vrot.lane.b32.xlu0 %v11235, 32
      %v11539 = vpop.permute.xlu0 %11538
      %11540 = vrot.lane.b32.xlu0 %v11237, 32
      %v11541 = vpop.permute.xlu0 %11540
      %11542 = vrot.lane.b32.xlu0 %v11240, 32
      %v11543 = vpop.permute.xlu0 %11542
      %11544 = vrot.lane.b32.xlu0 %v11242, 32
      %v11545 = vpop.permute.xlu0 %11544
      %11546 = vrot.lane.b32.xlu0 %v11245, 32
      %v11547 = vpop.permute.xlu0 %11546
      %11548 = vrot.lane.b32.xlu0 %v11247, 32
      %v11549 = vpop.permute.xlu0 %11548
      %11550 = vrot.lane.b32.xlu0 %v11250, 32
      %v11551 = vpop.permute.xlu0 %11550
      %11552 = vrot.lane.b32.xlu0 %v11252, 32
      %v11553 = vpop.permute.xlu0 %11552
      %11554 = vrot.lane.b32.xlu0 %v11255, 32
      %v11555 = vpop.permute.xlu0 %11554
      %11556 = vrot.lane.b32.xlu0 %v11257, 32
      %v11557 = vpop.permute.xlu0 %11556
      %11558 = vrot.lane.b32.xlu0 %v11260, 32
      %v11559 = vpop.permute.xlu0 %11558
      %11560 = vrot.lane.b32.xlu0 %v11262, 32
      %v11561 = vpop.permute.xlu0 %11560
      %11562 = vrot.lane.b32.xlu0 %v11265, 32
      %v11563 = vpop.permute.xlu0 %11562
      %11564 = vrot.lane.b32.xlu0 %v11267, 32
      %v11565 = vpop.permute.xlu0 %11564
      %11566 = vrot.lane.b32.xlu0 %v11270, 32
      %v11567 = vpop.permute.xlu0 %11566
      %11568 = vrot.lane.b32.xlu0 %v11272, 32
      %v11569 = vpop.permute.xlu0 %11568
      %11570 = vrot.lane.b32.xlu0 %v11507, 32
      %v11571 = vpop.permute.xlu0 %11570
      %11572 = vrot.lane.b32.xlu0 %v11509, 32
      %v11573 = vpop.permute.xlu0 %11572
      %11608 = vrot.lane.b32.xlu0 %v10921, 64
      %v11609 = vpop.permute.xlu0 %11608
      %11610 = vrot.lane.b32.xlu0 %v10922, 64
      %v11611 = vpop.permute.xlu0 %11610
      %11612 = vrot.lane.b32.xlu0 %v10924, 64
      %v11613 = vpop.permute.xlu0 %11612
      %11614 = vrot.lane.b32.xlu0 %v10925, 64
      %v11615 = vpop.permute.xlu0 %11614
      %11616 = vrot.lane.b32.xlu0 %v10927, 64
      %v11617 = vpop.permute.xlu0 %11616
      %11618 = vrot.lane.b32.xlu0 %v10928, 64
      %v11619 = vpop.permute.xlu0 %11618
      %11620 = vrot.lane.b32.xlu0 %v10930, 64
      %v11621 = vpop.permute.xlu0 %11620
      %11622 = vrot.lane.b32.xlu0 %v10931, 64
      %v11623 = vpop.permute.xlu0 %11622
      %11624 = vrot.lane.b32.xlu0 %v10933, 64
      %v11625 = vpop.permute.xlu0 %11624
      %11626 = vrot.lane.b32.xlu0 %v10934, 64
      %v11627 = vpop.permute.xlu0 %11626
      %11628 = vrot.lane.b32.xlu0 %v10936, 64
      %v11629 = vpop.permute.xlu0 %11628
      %11630 = vrot.lane.b32.xlu0 %v10937, 64
      %v11631 = vpop.permute.xlu0 %11630
      %11632 = vrot.lane.b32.xlu0 %v10939, 64
      %v11633 = vpop.permute.xlu0 %11632
      %11634 = vrot.lane.b32.xlu0 %v10940, 64
      %v11635 = vpop.permute.xlu0 %11634
      %11636 = vrot.lane.b32.xlu0 %v10942, 64
      %v11637 = vpop.permute.xlu0 %11636
      %11638 = vrot.lane.b32.xlu0 %v10943, 64
      %v11639 = vpop.permute.xlu0 %11638
      %11640 = vrot.lane.b32.xlu0 %v10945, 64
      %v11641 = vpop.permute.xlu0 %11640
      %11642 = vrot.lane.b32.xlu0 %v10946, 64
      %v11643 = vpop.permute.xlu0 %11642
      %11644 = vrot.lane.b32.xlu0 %v10948, 64
      %v11645 = vpop.permute.xlu0 %11644
      %11646 = vrot.lane.b32.xlu0 %v10949, 64
      %v11647 = vpop.permute.xlu0 %11646
      %11648 = vrot.lane.b32.xlu0 %v10951, 64
      %v11649 = vpop.permute.xlu0 %11648
      %11650 = vrot.lane.b32.xlu0 %v10952, 64
      %v11651 = vpop.permute.xlu0 %11650
      %11652 = vrot.lane.b32.xlu0 %v10954, 64
      %v11653 = vpop.permute.xlu0 %11652
      %11654 = vrot.lane.b32.xlu0 %v10955, 64
      %v11655 = vpop.permute.xlu0 %11654
      %11656 = vrot.lane.b32.xlu0 %v10957, 64
      %v11657 = vpop.permute.xlu0 %11656
      %11658 = vrot.lane.b32.xlu0 %v10958, 64
      %v11659 = vpop.permute.xlu0 %11658
      %11660 = vrot.lane.b32.xlu0 %v10960, 64
      %v11661 = vpop.permute.xlu0 %11660
      %11662 = vrot.lane.b32.xlu0 %v10961, 64
      %v11663 = vpop.permute.xlu0 %11662
      %11664 = vrot.lane.b32.xlu0 %v10963, 64
      %v11665 = vpop.permute.xlu0 %11664
      %11666 = vrot.lane.b32.xlu0 %v10964, 64
      %v11667 = vpop.permute.xlu0 %11666
      %11668 = vrot.lane.b32.xlu0 %v10966, 64
      %v11669 = vpop.permute.xlu0 %11668
      %11670 = vrot.lane.b32.xlu0 %v10967, 64
      %v11671 = vpop.permute.xlu0 %11670
      %v11705 = vrot.slane %v10966, 1
      %v11706 = vrot.slane %v10967, 1
      %v11707 = vsel %vm503, %v11705, %v11706
      %v11708 = vrot.slane %v10968, 1
      %v11709 = vsel %vm503, %v11706, %v11708
      %11710 = vrot.lane.b32.xlu0 %v11029, 96
      %v11711 = vpop.permute.xlu0 %11710
      %11712 = vrot.lane.b32.xlu0 %v11031, 96
      %v11713 = vpop.permute.xlu0 %11712
      %11714 = vrot.lane.b32.xlu0 %v11034, 96
      %v11715 = vpop.permute.xlu0 %11714
      %11716 = vrot.lane.b32.xlu0 %v11036, 96
      %v11717 = vpop.permute.xlu0 %11716
      %11718 = vrot.lane.b32.xlu0 %v11039, 96
      %v11719 = vpop.permute.xlu0 %11718
      %11720 = vrot.lane.b32.xlu0 %v11041, 96
      %v11721 = vpop.permute.xlu0 %11720
      %11722 = vrot.lane.b32.xlu0 %v11044, 96
      %v11723 = vpop.permute.xlu0 %11722
      %11724 = vrot.lane.b32.xlu0 %v11046, 96
      %v11725 = vpop.permute.xlu0 %11724
      %11726 = vrot.lane.b32.xlu0 %v11049, 96
      %v11727 = vpop.permute.xlu0 %11726
      %11728 = vrot.lane.b32.xlu0 %v11051, 96
      %v11729 = vpop.permute.xlu0 %11728
      %11730 = vrot.lane.b32.xlu0 %v11054, 96
      %v11731 = vpop.permute.xlu0 %11730
      %11732 = vrot.lane.b32.xlu0 %v11056, 96
      %v11733 = vpop.permute.xlu0 %11732
      %11734 = vrot.lane.b32.xlu0 %v11059, 96
      %v11735 = vpop.permute.xlu0 %11734
      %11736 = vrot.lane.b32.xlu0 %v11061, 96
      %v11737 = vpop.permute.xlu0 %11736
      %11738 = vrot.lane.b32.xlu0 %v11064, 96
      %v11739 = vpop.permute.xlu0 %11738
      %11740 = vrot.lane.b32.xlu0 %v11066, 96
      %v11741 = vpop.permute.xlu0 %11740
      %11742 = vrot.lane.b32.xlu0 %v11069, 96
      %v11743 = vpop.permute.xlu0 %11742
      %11744 = vrot.lane.b32.xlu0 %v11071, 96
      %v11745 = vpop.permute.xlu0 %11744
      %11746 = vrot.lane.b32.xlu0 %v11074, 96
      %v11747 = vpop.permute.xlu0 %11746
      %11748 = vrot.lane.b32.xlu0 %v11076, 96
      %v11749 = vpop.permute.xlu0 %11748
      %11750 = vrot.lane.b32.xlu0 %v11079, 96
      %v11751 = vpop.permute.xlu0 %11750
      %11752 = vrot.lane.b32.xlu0 %v11081, 96
      %v11753 = vpop.permute.xlu0 %11752
      %11754 = vrot.lane.b32.xlu0 %v11084, 96
      %v11755 = vpop.permute.xlu0 %11754
      %11756 = vrot.lane.b32.xlu0 %v11086, 96
      %v11757 = vpop.permute.xlu0 %11756
      %11758 = vrot.lane.b32.xlu0 %v11089, 96
      %v11759 = vpop.permute.xlu0 %11758
      %11760 = vrot.lane.b32.xlu0 %v11091, 96
      %v11761 = vpop.permute.xlu0 %11760
      %11762 = vrot.lane.b32.xlu0 %v11094, 96
      %v11763 = vpop.permute.xlu0 %11762
      %11764 = vrot.lane.b32.xlu0 %v11096, 96
      %v11765 = vpop.permute.xlu0 %11764
      %11766 = vrot.lane.b32.xlu0 %v11470, 96
      %v11767 = vpop.permute.xlu0 %11766
      %11768 = vrot.lane.b32.xlu0 %v11472, 96
      %v11769 = vpop.permute.xlu0 %11768
      %11770 = vrot.lane.b32.xlu0 %v11707, 96
      %v11771 = vpop.permute.xlu0 %11770
      %11772 = vrot.lane.b32.xlu0 %v11709, 96
      %v11773 = vpop.permute.xlu0 %11772
      %v11806 = vrot.slane %v10966, 2
      %v11807 = vrot.slane %v10967, 2
      %v11808 = vsel %vm680, %v11806, %v11807
      %v11809 = vrot.slane %v10968, 2
      %v11810 = vsel %vm680, %v11807, %v11809
      %v11811 = vsel %vm333, %v10915, %v11098
      %v11812 = vsel %vm333, %v10916, %v11100
      %v11813 = vsel %vm333, %v10918, %v11102
      %v11814 = vsel %vm333, %v10919, %v11104
      %v11815 = vsel %vm333, %v10921, %v11106
      %v11816 = vsel %vm333, %v10922, %v11108
      %v11817 = vsel %vm333, %v10924, %v11110
      %v11818 = vsel %vm333, %v10925, %v11112
      %v11819 = vsel %vm333, %v10927, %v11114
      %v11820 = vsel %vm333, %v10928, %v11116
      %v11821 = vsel %vm333, %v10930, %v11118
      %v11822 = vsel %vm333, %v10931, %v11120
      %v11823 = vsel %vm333, %v10933, %v11122
      %v11824 = vsel %vm333, %v10934, %v11124
      %v11825 = vsel %vm333, %v10936, %v11126
      %v11826 = vsel %vm333, %v10937, %v11128
      %v11827 = vsel %vm333, %v10939, %v11130
      %v11828 = vsel %vm333, %v10940, %v11132
      %v11829 = vsel %vm333, %v10942, %v11134
      %v11830 = vsel %vm333, %v10943, %v11136
      %v11831 = vsel %vm333, %v10945, %v11138
      %v11832 = vsel %vm333, %v10946, %v11140
      %v11833 = vsel %vm333, %v10948, %v11142
      %v11834 = vsel %vm333, %v10949, %v11144
      %v11835 = vsel %vm333, %v10951, %v11146
      %v11836 = vsel %vm333, %v10952, %v11148
      %v11837 = vsel %vm333, %v10954, %v11150
      %v11838 = vsel %vm333, %v10955, %v11152
      %v11839 = vsel %vm333, %v10957, %v11154
      %v11840 = vsel %vm333, %v10958, %v11156
      %v11841 = vsel %vm333, %v10960, %v11158
      %v11842 = vsel %vm333, %v10961, %v11160
      %v11843 = vsel %vm7009, %v11811, %v11274
      %v11844 = vsel %vm7009, %v11812, %v11276
      %v11845 = vsel %vm7009, %v11813, %v11278
      %v11846 = vsel %vm7009, %v11814, %v11280
      %v11847 = vsel %vm7009, %v11815, %v11282
      %v11848 = vsel %vm7009, %v11816, %v11284
      %v11849 = vsel %vm7009, %v11817, %v11286
      %v11850 = vsel %vm7009, %v11818, %v11288
      %v11851 = vsel %vm7009, %v11819, %v11290
      %v11852 = vsel %vm7009, %v11820, %v11292
      %v11853 = vsel %vm7009, %v11821, %v11294
      %v11854 = vsel %vm7009, %v11822, %v11296
      %v11855 = vsel %vm7009, %v11823, %v11298
      %v11856 = vsel %vm7009, %v11824, %v11300
      %v11857 = vsel %vm7009, %v11825, %v11302
      %v11858 = vsel %vm7009, %v11826, %v11304
      %v11859 = vsel %vm7009, %v11827, %v11306
      %v11860 = vsel %vm7009, %v11828, %v11308
      %v11861 = vsel %vm7009, %v11829, %v11310
      %v11862 = vsel %vm7009, %v11830, %v11312
      %v11863 = vsel %vm7009, %v11831, %v11314
      %v11864 = vsel %vm7009, %v11832, %v11316
      %v11865 = vsel %vm7009, %v11833, %v11318
      %v11866 = vsel %vm7009, %v11834, %v11320
      %v11867 = vsel %vm7009, %v11835, %v11322
      %v11868 = vsel %vm7009, %v11836, %v11324
      %v11869 = vsel %vm7009, %v11837, %v11326
      %v11870 = vsel %vm7009, %v11838, %v11328
      %v11871 = vsel %vm7009, %v11839, %v11330
      %v11872 = vsel %vm7009, %v11840, %v11332
      %v11873 = vsel %vm7009, %v11841, %v11334
      %v11874 = vsel %vm7009, %v11842, %v11336
      %v11875 = vsel %vm8456, %v11843, %v11372
      %v11876 = vsel %vm8456, %v11844, %v11374
      %v11877 = vsel %vm8456, %v11845, %v11376
      %v11878 = vsel %vm8456, %v11846, %v11378
      %v11879 = vsel %vm8456, %v11847, %v11380
      %v11880 = vsel %vm8456, %v11848, %v11382
      %v11881 = vsel %vm8456, %v11849, %v11384
      %v11882 = vsel %vm8456, %v11850, %v11386
      %v11883 = vsel %vm8456, %v11851, %v11388
      %v11884 = vsel %vm8456, %v11852, %v11390
      %v11885 = vsel %vm8456, %v11853, %v11392
      %v11886 = vsel %vm8456, %v11854, %v11394
      %v11887 = vsel %vm8456, %v11855, %v11396
      %v11888 = vsel %vm8456, %v11856, %v11398
      %v11889 = vsel %vm8456, %v11857, %v11400
      %v11890 = vsel %vm8456, %v11858, %v11402
      %v11891 = vsel %vm8456, %v11859, %v11404
      %v11892 = vsel %vm8456, %v11860, %v11406
      %v11893 = vsel %vm8456, %v11861, %v11408
      %v11894 = vsel %vm8456, %v11862, %v11410
      %v11895 = vsel %vm8456, %v11863, %v11412
      %v11896 = vsel %vm8456, %v11864, %v11414
      %v11897 = vsel %vm8456, %v11865, %v11416
      %v11898 = vsel %vm8456, %v11866, %v11418
      %v11899 = vsel %vm8456, %v11867, %v11420
      %v11900 = vsel %vm8456, %v11868, %v11422
      %v11901 = vsel %vm8456, %v11869, %v11424
      %v11902 = vsel %vm8456, %v11870, %v11426
      %v11903 = vsel %vm8456, %v11871, %v11428
      %v11904 = vsel %vm8456, %v11872, %v11430
      %v11905 = vsel %vm8456, %v11873, %v11432
      %v11906 = vsel %vm8456, %v11874, %v11434
      %v11907 = vsel %vm333, %v11024, %v11511
      %v11908 = vsel %vm333, %v11026, %v11513
      %v11909 = vsel %vm333, %v11029, %v11515
      %v11910 = vsel %vm333, %v11031, %v11517
      %v11911 = vsel %vm333, %v11034, %v11519
      %v11912 = vsel %vm333, %v11036, %v11521
      %v11913 = vsel %vm333, %v11039, %v11523
      %v11914 = vsel %vm333, %v11041, %v11525
      %v11915 = vsel %vm333, %v11044, %v11527
      %v11916 = vsel %vm333, %v11046, %v11529
      %v11917 = vsel %vm333, %v11049, %v11531
      %v11918 = vsel %vm333, %v11051, %v11533
      %v11919 = vsel %vm333, %v11054, %v11535
      %v11920 = vsel %vm333, %v11056, %v11537
      %v11921 = vsel %vm333, %v11059, %v11539
      %v11922 = vsel %vm333, %v11061, %v11541
      %v11923 = vsel %vm333, %v11064, %v11543
      %v11924 = vsel %vm333, %v11066, %v11545
      %v11925 = vsel %vm333, %v11069, %v11547
      %v11926 = vsel %vm333, %v11071, %v11549
      %v11927 = vsel %vm333, %v11074, %v11551
      %v11928 = vsel %vm333, %v11076, %v11553
      %v11929 = vsel %vm333, %v11079, %v11555
      %v11930 = vsel %vm333, %v11081, %v11557
      %v11931 = vsel %vm333, %v11084, %v11559
      %v11932 = vsel %vm333, %v11086, %v11561
      %v11933 = vsel %vm333, %v11089, %v11563
      %v11934 = vsel %vm333, %v11091, %v11565
      %v11935 = vsel %vm333, %v11094, %v11567
      %v11936 = vsel %vm333, %v11096, %v11569
      %v11937 = vsel %vm333, %v11470, %v11571
      %v11938 = vsel %vm333, %v11472, %v11573
      %v11939 = vsel %vm7009, %v11907, %v11609
      %v11940 = vsel %vm7009, %v11908, %v11611
      %v11941 = vsel %vm7009, %v11909, %v11613
      %v11942 = vsel %vm7009, %v11910, %v11615
      %v11943 = vsel %vm7009, %v11911, %v11617
      %v11944 = vsel %vm7009, %v11912, %v11619
      %v11945 = vsel %vm7009, %v11913, %v11621
      %v11946 = vsel %vm7009, %v11914, %v11623
      %v11947 = vsel %vm7009, %v11915, %v11625
      %v11948 = vsel %vm7009, %v11916, %v11627
      %v11949 = vsel %vm7009, %v11917, %v11629
      %v11950 = vsel %vm7009, %v11918, %v11631
      %v11951 = vsel %vm7009, %v11919, %v11633
      %v11952 = vsel %vm7009, %v11920, %v11635
      %v11953 = vsel %vm7009, %v11921, %v11637
      %v11954 = vsel %vm7009, %v11922, %v11639
      %v11955 = vsel %vm7009, %v11923, %v11641
      %v11956 = vsel %vm7009, %v11924, %v11643
      %v11957 = vsel %vm7009, %v11925, %v11645
      %v11958 = vsel %vm7009, %v11926, %v11647
      %v11959 = vsel %vm7009, %v11927, %v11649
      %v11960 = vsel %vm7009, %v11928, %v11651
      %v11961 = vsel %vm7009, %v11929, %v11653
      %v11962 = vsel %vm7009, %v11930, %v11655
      %v11963 = vsel %vm7009, %v11931, %v11657
      %v11964 = vsel %vm7009, %v11932, %v11659
      %v11965 = vsel %vm7009, %v11933, %v11661
      %v11966 = vsel %vm7009, %v11934, %v11663
      %v11967 = vsel %vm7009, %v11935, %v11665
      %v11968 = vsel %vm7009, %v11936, %v11667
      %v11969 = vsel %vm7009, %v11937, %v11669
      %v11970 = vsel %vm7009, %v11938, %v11671
      %v11971 = vsel %vm8456, %v11939, %v11711
      %v11972 = vsel %vm8456, %v11940, %v11713
      %v11973 = vsel %vm8456, %v11941, %v11715
      %v11974 = vsel %vm8456, %v11942, %v11717
      %v11975 = vsel %vm8456, %v11943, %v11719
      %v11976 = vsel %vm8456, %v11944, %v11721
      %v11977 = vsel %vm8456, %v11945, %v11723
      %v11978 = vsel %vm8456, %v11946, %v11725
      %v11979 = vsel %vm8456, %v11947, %v11727
      %v11980 = vsel %vm8456, %v11948, %v11729
      %v11981 = vsel %vm8456, %v11949, %v11731
      %v11982 = vsel %vm8456, %v11950, %v11733
      %v11983 = vsel %vm8456, %v11951, %v11735
      %v11984 = vsel %vm8456, %v11952, %v11737
      %v11985 = vsel %vm8456, %v11953, %v11739
      %v11986 = vsel %vm8456, %v11954, %v11741
      %v11987 = vsel %vm8456, %v11955, %v11743
      %v11988 = vsel %vm8456, %v11956, %v11745
      %v11989 = vsel %vm8456, %v11957, %v11747
      %v11990 = vsel %vm8456, %v11958, %v11749
      %v11991 = vsel %vm8456, %v11959, %v11751
      %v11992 = vsel %vm8456, %v11960, %v11753
      %v11993 = vsel %vm8456, %v11961, %v11755
      %v11994 = vsel %vm8456, %v11962, %v11757
      %v11995 = vsel %vm8456, %v11963, %v11759
      %v11996 = vsel %vm8456, %v11964, %v11761
      %v11997 = vsel %vm8456, %v11965, %v11763
      %v11998 = vsel %vm8456, %v11966, %v11765
      %v11999 = vsel %vm8456, %v11967, %v11767
      %v12000 = vsel %vm8456, %v11968, %v11769
      %v12001 = vsel %vm8456, %v11969, %v11771
      %v12002 = vsel %vm8456, %v11970, %v11773
      %v12003 = vld [vmem:[%s7] sm:$0xff]
      %v12004 = vld [vmem:[%s7 + $0x8] sm:$0xff]
      %v12005 = vld [vmem:[%s7 + $0x10] sm:$0xff]
      %v12006 = vld [vmem:[%s7 + $0x18] sm:$0xff]
      %v12007 = vld [vmem:[%s7 + $0x20] sm:$0xff]
      %v12008 = vld [vmem:[%s7 + $0x28] sm:$0xff]
      %v12009 = vld [vmem:[%s7 + $0x30] sm:$0xff]
      %v12010 = vld [vmem:[%s7 + $0x38] sm:$0xff]
      %v12011 = vld [vmem:[%s7 + $0x40] sm:$0xff]
      %v12012 = vld [vmem:[%s7 + $0x48] sm:$0xff]
      %v12013 = vld [vmem:[%s7 + $0x50] sm:$0xff]
      %v12014 = vld [vmem:[%s7 + $0x58] sm:$0xff]
      %v12015 = vld [vmem:[%s7 + $0x60] sm:$0xff]
      %v12016 = vld [vmem:[%s7 + $0x68] sm:$0xff]
      %v12017 = vld [vmem:[%s7 + $0x70] sm:$0xff]
      %v12018 = vld [vmem:[%s7 + $0x78] sm:$0xff]
      %v12019 = vld [vmem:[%s7 + $0x80] sm:$0xff]
      %v12020 = vld [vmem:[%s7 + $0x88] sm:$0xff]
      %v12021 = vld [vmem:[%s7 + $0x90] sm:$0xff]
      %v12022 = vld [vmem:[%s7 + $0x98] sm:$0xff]
      %v12023 = vld [vmem:[%s7 + $0xa0] sm:$0xff]
      %v12024 = vld [vmem:[%s7 + $0xa8] sm:$0xff]
      %v12025 = vld [vmem:[%s7 + $0xb0] sm:$0xff]
      %v12026 = vld [vmem:[%s7 + $0xb8] sm:$0xff]
      %v12027 = vld [vmem:[%s7 + $0xc0] sm:$0xff]
      %v12028 = vld [vmem:[%s7 + $0xc8] sm:$0xff]
      %v12029 = vld [vmem:[%s7 + $0xd0] sm:$0xff]
      %v12030 = vld [vmem:[%s7 + $0xd8] sm:$0xff]
      %v12031 = vld [vmem:[%s7 + $0xe0] sm:$0xff]
      %v12032 = vld [vmem:[%s7 + $0xe8] sm:$0xff]
      %v12033 = vld [vmem:[%s7 + $0xf0] sm:$0xff]
      %v12034 = vld [vmem:[%s7 + $0xf8] sm:$0xff]
      %v12035 = vld [vmem:[%s7 + $0x100] sm:$0xff]
      %v12036 = vld [vmem:[%s7 + $0x108] sm:$0xff]
      %v12037 = vld [vmem:[%s7 + $0x110] sm:$0xff]
      %v12038 = vld [vmem:[%s7 + $0x118] sm:$0xff]
      %v12039 = vld [vmem:[%s8] sm:$0x1]
      %v12041 = vlaneseq
      %v12042 = vshrl.u32 %v12041, 7
      %v12043 = vsub.s32 0, %v12042
      %v12044 = vrot.slane %v12039, %v12043
      %v12046 = vsel %vm333, %v11205, 0
      %v12048 = vsel %vm333, %v11207, 0
      %v12050 = vsel %vm333, %v11210, 0
      %v12052 = vsel %vm333, %v11212, 0
      %v12054 = vsel %vm333, %v11215, 0
      %v12056 = vsel %vm333, %v11217, 0
      %v12058 = vsel %vm333, %v11220, 0
      %v12060 = vsel %vm333, %v11222, 0
      %v12062 = vsel %vm333, %v11225, 0
      %v12064 = vsel %vm333, %v11227, 0
      %v12066 = vsel %vm333, %v11230, 0
      %v12068 = vsel %vm333, %v11232, 0
      %v12070 = vsel %vm333, %v11235, 0
      %v12072 = vsel %vm333, %v11237, 0
      %v12074 = vsel %vm333, %v11240, 0
      %v12076 = vsel %vm333, %v11242, 0
      %v12078 = vsel %vm333, %v11245, 0
      %v12080 = vsel %vm333, %v11247, 0
      %v12082 = vsel %vm333, %v11250, 0
      %v12084 = vsel %vm333, %v11252, 0
      %v12086 = vsel %vm333, %v11255, 0
      %v12088 = vsel %vm333, %v11257, 0
      %v12090 = vsel %vm333, %v11260, 0
      %v12092 = vsel %vm333, %v11262, 0
      %v12094 = vsel %vm333, %v11265, 0
      %v12096 = vsel %vm333, %v11267, 0
      %v12098 = vsel %vm333, %v11270, 0
      %v12100 = vsel %vm333, %v11272, 0
      %v12102 = vsel %vm333, %v11507, 0
      %v12104 = vsel %vm333, %v11509, 0
      %v12106 = vsel %vm333, %v11808, 0
      %v12108 = vsel %vm333, %v11810, 0
      %12110 = vmatprep.subr.mxu0 0.0
      %12111 = vmatpush1.msra.mxu0 %v12003
      %12112 = vmatprep.subr.mxu0 0.0
      %12113 = vmatpush1.msra.mxu0 %v12004
      %12114 = vmatprep.subr.mxu0 0.0
      %12115 = vmatpush1.msra.mxu0 %v12005
      %12116 = vmatprep.subr.mxu0 0.0
      %12117 = vmatpush1.msra.mxu0 %v12006
      %12118 = vmatprep.subr.mxu0 0.0
      %12119 = vmatpush1.msra.mxu0 %v12007
      %12120 = vmatprep.subr.mxu0 0.0
      %12121 = vmatpush1.msra.mxu0 %v12008
      %12122 = vmatprep.subr.mxu0 0.0
      %12123 = vmatpush1.msra.mxu0 %v12009
      %12124 = vmatprep.subr.mxu0 0.0
      %12125 = vmatpush1.msra.mxu0 %v12010
      %12126 = vmatprep.subr.mxu0 0.0
      %12127 = vmatpush1.msra.mxu0 %v12011
      %12128 = vmatprep.subr.mxu0 0.0
      %12129 = vmatpush1.msra.mxu0 %v12012
      %12130 = vmatprep.subr.mxu0 0.0
      %12131 = vmatpush1.msra.mxu0 %v12013
      %12132 = vmatprep.subr.mxu0 0.0
      %12133 = vmatpush1.msra.mxu0 %v12014
      %12134 = vmatprep.subr.mxu0 0.0
      %12135 = vmatpush1.msra.mxu0 %v12015
      %12136 = vmatprep.subr.mxu0 0.0
      %12137 = vmatpush1.msra.mxu0 %v12016
      %12138 = vmatprep.subr.mxu0 0.0
      %12139 = vmatpush1.msra.mxu0 %v12017
      %12140 = vmatprep.subr.mxu0 0.0
      %12141 = vmatpush1.msra.mxu0 %v12018
      %12142 = vmatprep.subr.mxu0 0.0
      %12143 = vmatpush1.msra.mxu0 %v12019
      %12144 = vmatprep.subr.mxu0 0.0
      %12145 = vmatpush1.msra.mxu0 %v12020
      %12146 = vmatprep.subr.mxu0 0.0
      %12147 = vmatpush1.msra.mxu0 %v12021
      %12148 = vmatprep.subr.mxu0 0.0
      %12149 = vmatpush1.msra.mxu0 %v12022
      %12150 = vmatprep.subr.mxu0 0.0
      %12151 = vmatpush1.msra.mxu0 %v12023
      %12152 = vmatprep.subr.mxu0 0.0
      %12153 = vmatpush1.msra.mxu0 %v12024
      %12154 = vmatprep.subr.mxu0 0.0
      %12155 = vmatpush1.msra.mxu0 %v12025
      %12156 = vmatprep.subr.mxu0 0.0
      %12157 = vmatpush1.msra.mxu0 %v12026
      %12158 = vmatprep.subr.mxu0 0.0
      %12159 = vmatpush1.msra.mxu0 %v12027
      %12160 = vmatprep.subr.mxu0 0.0
      %12161 = vmatpush1.msra.mxu0 %v12028
      %12162 = vmatprep.subr.mxu0 0.0
      %12163 = vmatpush1.msra.mxu0 %v12029
      %12164 = vmatprep.subr.mxu0 0.0
      %12165 = vmatpush1.msra.mxu0 %v12030
      %12166 = vmatprep.subr.mxu0 0.0
      %12167 = vmatpush1.msra.mxu0 %v12031
      %12168 = vmatprep.subr.mxu0 0.0
      %12169 = vmatpush1.msra.mxu0 %v12032
      %12170 = vmatprep.subr.mxu0 0.0
      %12171 = vmatpush1.msra.mxu0 %v12033
      %12172 = vmatprep.subr.mxu0 0.0
      %12173 = vmatpush1.msra.mxu0 %v12034
      %12174 = vmatprep.mubr.f32.mxu0 %v11971
      %12175 = vmatmul.mubr.f32.gmra.mrb[0].mxu0 %v11875
      %v12176 = vpop.f32.mrb[0].mxu0
      %v12177 = vadd.f32 %v12044, %v12176
      %v12178 = vpop.f32.mrb[0].mxu0
      %12179 = vmatprep.mubr.f32.mxu0 %v11972
      %12180 = vmatmul.mubr.f32.gmra.mrb[0].mxu0 %v11876
      %v12181 = vpop.f32.mrb[0].mxu0
      %v12182 = vadd.f32 %v12044, %v12181
      %v12183 = vpop.f32.mrb[0].mxu0
      %12184 = vmatprep.mubr.f32.mxu0 %v11973
      %12185 = vmatmul.mubr.f32.gmra.mrb[0].mxu0 %v11877
      %v12186 = vpop.f32.mrb[0].mxu0
      %v12187 = vadd.f32 %v12044, %v12186
      %v12188 = vpop.f32.mrb[0].mxu0
      %12189 = vmatprep.mubr.f32.mxu0 %v11974
      %12190 = vmatmul.mubr.f32.gmra.mrb[0].mxu0 %v11878
      %v12191 = vpop.f32.mrb[0].mxu0
      %v12192 = vadd.f32 %v12044, %v12191
      %v12193 = vpop.f32.mrb[0].mxu0
      %12194 = vmatprep.mubr.f32.mxu0 %v11975
      %12195 = vmatmul.mubr.f32.gmra.mrb[0].mxu0 %v11879
      %v12196 = vpop.f32.mrb[0].mxu0
      %v12197 = vadd.f32 %v12044, %v12196
      %v12198 = vpop.f32.mrb[0].mxu0
      %12199 = vmatprep.mubr.f32.mxu0 %v11976
      %12200 = vmatmul.mubr.f32.gmra.mrb[0].mxu0 %v11880
      %v12201 = vpop.f32.mrb[0].mxu0
      %v12202 = vadd.f32 %v12044, %v12201
      %v12203 = vpop.f32.mrb[0].mxu0
      %12204 = vmatprep.mubr.f32.mxu0 %v11977
      %12205 = vmatmul.mubr.f32.gmra.mrb[0].mxu0 %v11881
      %v12206 = vpop.f32.mrb[0].mxu0
      %v12207 = vadd.f32 %v12044, %v12206
      %v12208 = vpop.f32.mrb[0].mxu0
      %12209 = vmatprep.mubr.f32.mxu0 %v11978
      %12210 = vmatmul.mubr.f32.gmra.mrb[0].mxu0 %v11882
      %v12211 = vpop.f32.mrb[0].mxu0
      %v12212 = vadd.f32 %v12044, %v12211
      %v12213 = vpop.f32.mrb[0].mxu0
      %12214 = vmatprep.mubr.f32.mxu0 %v11979
      %12215 = vmatmul.mubr.f32.gmra.mrb[0].mxu0 %v11883
      %v12216 = vpop.f32.mrb[0].mxu0
      %v12217 = vadd.f32 %v12044, %v12216
      %v12218 = vpop.f32.mrb[0].mxu0
      %12219 = vmatprep.mubr.f32.mxu0 %v11980
      %12220 = vmatmul.mubr.f32.gmra.mrb[0].mxu0 %v11884
      %v12221 = vpop.f32.mrb[0].mxu0
      %v12222 = vadd.f32 %v12044, %v12221
      %v12223 = vpop.f32.mrb[0].mxu0
      %12224 = vmatprep.mubr.f32.mxu0 %v11981
      %12225 = vmatmul.mubr.f32.gmra.mrb[0].mxu0 %v11885
      %v12226 = vpop.f32.mrb[0].mxu0
      %v12227 = vadd.f32 %v12044, %v12226
      %v12228 = vpop.f32.mrb[0].mxu0
      %12229 = vmatprep.mubr.f32.mxu0 %v11982
      %12230 = vmatmul.mubr.f32.gmra.mrb[0].mxu0 %v11886
      %v12231 = vpop.f32.mrb[0].mxu0
      %v12232 = vadd.f32 %v12044, %v12231
      %v12233 = vpop.f32.mrb[0].mxu0
      %12234 = vmatprep.mubr.f32.mxu0 %v11983
      %12235 = vmatmul.mubr.f32.gmra.mrb[0].mxu0 %v11887
      %v12236 = vpop.f32.mrb[0].mxu0
      %v12237 = vadd.f32 %v12044, %v12236
      %v12238 = vpop.f32.mrb[0].mxu0
      %12239 = vmatprep.mubr.f32.mxu0 %v11984
      %12240 = vmatmul.mubr.f32.gmra.mrb[0].mxu0 %v11888
      %v12241 = vpop.f32.mrb[0].mxu0
      %v12242 = vadd.f32 %v12044, %v12241
      %v12243 = vpop.f32.mrb[0].mxu0
      %12244 = vmatprep.mubr.f32.mxu0 %v11985
      %12245 = vmatmul.mubr.f32.gmra.mrb[0].mxu0 %v11889
      %v12246 = vpop.f32.mrb[0].mxu0
      %v12247 = vadd.f32 %v12044, %v12246
      %v12248 = vpop.f32.mrb[0].mxu0
      %12249 = vmatprep.mubr.f32.mxu0 %v11986
      %12250 = vmatmul.mubr.f32.gmra.mrb[0].mxu0 %v11890
      %v12251 = vpop.f32.mrb[0].mxu0
      %v12252 = vadd.f32 %v12044, %v12251
      %v12253 = vpop.f32.mrb[0].mxu0
      %12254 = vmatprep.mubr.f32.mxu0 %v11987
      %12255 = vmatmul.mubr.f32.gmra.mrb[0].mxu0 %v11891
      %v12256 = vpop.f32.mrb[0].mxu0
      %v12257 = vadd.f32 %v12044, %v12256
      %v12258 = vpop.f32.mrb[0].mxu0
      %12259 = vmatprep.mubr.f32.mxu0 %v11988
      %12260 = vmatmul.mubr.f32.gmra.mrb[0].mxu0 %v11892
      %v12261 = vpop.f32.mrb[0].mxu0
      %v12262 = vadd.f32 %v12044, %v12261
      %v12263 = vpop.f32.mrb[0].mxu0
      %12264 = vmatprep.mubr.f32.mxu0 %v11989
      %12265 = vmatmul.mubr.f32.gmra.mrb[0].mxu0 %v11893
      %v12266 = vpop.f32.mrb[0].mxu0
      %v12267 = vadd.f32 %v12044, %v12266
      %v12268 = vpop.f32.mrb[0].mxu0
      %12269 = vmatprep.mubr.f32.mxu0 %v11990
      %12270 = vmatmul.mubr.f32.gmra.mrb[0].mxu0 %v11894
      %v12271 = vpop.f32.mrb[0].mxu0
      %v12272 = vadd.f32 %v12044, %v12271
      %v12273 = vpop.f32.mrb[0].mxu0
      %12274 = vmatprep.mubr.f32.mxu0 %v11991
      %12275 = vmatmul.mubr.f32.gmra.mrb[0].mxu0 %v11895
      %v12276 = vpop.f32.mrb[0].mxu0
      %v12277 = vadd.f32 %v12044, %v12276
      %v12278 = vpop.f32.mrb[0].mxu0
      %12279 = vmatprep.mubr.f32.mxu0 %v11992
      %12280 = vmatmul.mubr.f32.gmra.mrb[0].mxu0 %v11896
      %v12281 = vpop.f32.mrb[0].mxu0
      %v12282 = vadd.f32 %v12044, %v12281
      %v12283 = vpop.f32.mrb[0].mxu0
      %12284 = vmatprep.mubr.f32.mxu0 %v11993
      %12285 = vmatmul.mubr.f32.gmra.mrb[0].mxu0 %v11897
      %v12286 = vpop.f32.mrb[0].mxu0
      %v12287 = vadd.f32 %v12044, %v12286
      %v12288 = vpop.f32.mrb[0].mxu0
      %12289 = vmatprep.mubr.f32.mxu0 %v11994
      %12290 = vmatmul.mubr.f32.gmra.mrb[0].mxu0 %v11898
      %v12291 = vpop.f32.mrb[0].mxu0
      %v12292 = vadd.f32 %v12044, %v12291
      %v12293 = vpop.f32.mrb[0].mxu0
      %12294 = vmatprep.mubr.f32.mxu0 %v11995
      %12295 = vmatmul.mubr.f32.gmra.mrb[0].mxu0 %v11899
      %v12296 = vpop.f32.mrb[0].mxu0
      %v12297 = vadd.f32 %v12044, %v12296
      %v12298 = vpop.f32.mrb[0].mxu0
      %12299 = vmatprep.mubr.f32.mxu0 %v11996
      %12300 = vmatmul.mubr.f32.gmra.mrb[0].mxu0 %v11900
      %v12301 = vpop.f32.mrb[0].mxu0
      %v12302 = vadd.f32 %v12044, %v12301
      %v12303 = vpop.f32.mrb[0].mxu0
      %12304 = vmatprep.mubr.f32.mxu0 %v11997
      %12305 = vmatmul.mubr.f32.gmra.mrb[0].mxu0 %v11901
      %v12306 = vpop.f32.mrb[0].mxu0
      %v12307 = vadd.f32 %v12044, %v12306
      %v12308 = vpop.f32.mrb[0].mxu0
      %12309 = vmatprep.mubr.f32.mxu0 %v11998
      %12310 = vmatmul.mubr.f32.gmra.mrb[0].mxu0 %v11902
      %v12311 = vpop.f32.mrb[0].mxu0
      %v12312 = vadd.f32 %v12044, %v12311
      %v12313 = vpop.f32.mrb[0].mxu0
      %12314 = vmatprep.mubr.f32.mxu0 %v11999
      %12315 = vmatmul.mubr.f32.gmra.mrb[0].mxu0 %v11903
      %v12316 = vpop.f32.mrb[0].mxu0
      %v12317 = vadd.f32 %v12044, %v12316
      %v12318 = vpop.f32.mrb[0].mxu0
      %12319 = vmatprep.mubr.f32.mxu0 %v12000
      %12320 = vmatmul.mubr.f32.gmra.mrb[0].mxu0 %v11904
      %v12321 = vpop.f32.mrb[0].mxu0
      %v12322 = vadd.f32 %v12044, %v12321
      %v12323 = vpop.f32.mrb[0].mxu0
      %12324 = vmatprep.mubr.f32.mxu0 %v12001
      %12325 = vmatmul.mubr.f32.gmra.mrb[0].mxu0 %v11905
      %v12326 = vpop.f32.mrb[0].mxu0
      %v12327 = vadd.f32 %v12044, %v12326
      %v12328 = vpop.f32.mrb[0].mxu0
      %12329 = vmatprep.mubr.f32.mxu0 %v12002
      %12330 = vmatmul.mubr.f32.gmra.mrb[0].mxu0 %v11906
      %v12331 = vpop.f32.mrb[0].mxu0
      %v12332 = vadd.f32 %v12044, %v12331
      %v12333 = vpop.f32.mrb[0].mxu0
      %12334 = vdwg.mxu0
      %12335 = vmatprep.subr.mxu0 0.0
      %12336 = vmatpush1.msra.mxu0 %v12035
      %12337 = vmatprep.subr.mxu0 0.0
      %12338 = vmatpush1.msra.mxu0 %v12036
      %12339 = vmatprep.subr.mxu0 0.0
      %12340 = vmatpush1.msra.mxu0 %v12037
      %12341 = vmatprep.subr.mxu0 0.0
      %12342 = vmatpush1.msra.mxu0 %v12038
      %12343 = vmatprep.subr.mxu0 0.0
      %12344 = vmatpush1.msra.mxu0 0.0
      %12345 = vmatprep.subr.mxu0 0.0
      %12346 = vmatpush1.msra.mxu0 0.0
      %12347 = vmatprep.subr.mxu0 0.0
      %12348 = vmatpush1.msra.mxu0 0.0
      %12349 = vmatprep.subr.mxu0 0.0
      %12350 = vmatpush1.msra.mxu0 0.0
      %12351 = vmatprep.subr.mxu0 0.0
      %12352 = vmatpush1.msra.mxu0 0.0
      %12353 = vmatprep.subr.mxu0 0.0
      %12354 = vmatpush1.msra.mxu0 0.0
      %12355 = vmatprep.subr.mxu0 0.0
      %12356 = vmatpush1.msra.mxu0 0.0
      %12357 = vmatprep.subr.mxu0 0.0
      %12358 = vmatpush1.msra.mxu0 0.0
      %12359 = vmatprep.subr.mxu0 0.0
      %12360 = vmatpush1.msra.mxu0 0.0
      %12361 = vmatprep.subr.mxu0 0.0
      %12362 = vmatpush1.msra.mxu0 0.0
      %12363 = vmatprep.subr.mxu0 0.0
      %12364 = vmatpush1.msra.mxu0 0.0
      %12365 = vmatprep.subr.mxu0 0.0
      %12366 = vmatpush1.msra.mxu0 0.0
      %12367 = vmatprep.subr.mxu0 0.0
      %12368 = vmatpush1.msra.mxu0 0.0
      %12369 = vmatprep.subr.mxu0 0.0
      %12370 = vmatpush1.msra.mxu0 0.0
      %12371 = vmatprep.subr.mxu0 0.0
      %12372 = vmatpush1.msra.mxu0 0.0
      %12373 = vmatprep.subr.mxu0 0.0
      %12374 = vmatpush1.msra.mxu0 0.0
      %12375 = vmatprep.subr.mxu0 0.0
      %12376 = vmatpush1.msra.mxu0 0.0
      %12377 = vmatprep.subr.mxu0 0.0
      %12378 = vmatpush1.msra.mxu0 0.0
      %12379 = vmatprep.subr.mxu0 0.0
      %12380 = vmatpush1.msra.mxu0 0.0
      %12381 = vmatprep.subr.mxu0 0.0
      %12382 = vmatpush1.msra.mxu0 0.0
      %12383 = vmatprep.subr.mxu0 0.0
      %12384 = vmatpush1.msra.mxu0 0.0
      %12385 = vmatprep.subr.mxu0 0.0
      %12386 = vmatpush1.msra.mxu0 0.0
      %12387 = vmatprep.subr.mxu0 0.0
      %12388 = vmatpush1.msra.mxu0 0.0
      %12389 = vmatprep.subr.mxu0 0.0
      %12390 = vmatpush1.msra.mxu0 0.0
      %12391 = vmatprep.subr.mxu0 0.0
      %12392 = vmatpush1.msra.mxu0 0.0
      %12393 = vmatprep.subr.mxu0 0.0
      %12394 = vmatpush1.msra.mxu0 0.0
      %12395 = vmatprep.subr.mxu0 0.0
      %12396 = vmatpush1.msra.mxu0 0.0
      %12397 = vmatprep.subr.mxu0 0.0
      %12398 = vmatpush1.msra.mxu0 0.0
      %12399 = vmatprep.mubr.f32.mxu0 0.0
      %12400 = vmatmul.mubr.f32.gmra.mrb[0].mxu0 %v12046
      %v12401 = vpop.f32.mrb[0].mxu0
      %v12402 = vadd.f32 %v12177, %v12401
      %v12403 = vpop.f32.mrb[0].mxu0
      %12404 = vmatprep.mubr.f32.mxu0 0.0
      %12405 = vmatmul.mubr.f32.gmra.mrb[0].mxu0 %v12048
      %v12406 = vpop.f32.mrb[0].mxu0
      %v12407 = vadd.f32 %v12182, %v12406
      %v12408 = vpop.f32.mrb[0].mxu0
      %12409 = vmatprep.mubr.f32.mxu0 0.0
      %12410 = vmatmul.mubr.f32.gmra.mrb[0].mxu0 %v12050
      %v12411 = vpop.f32.mrb[0].mxu0
      %v12412 = vadd.f32 %v12187, %v12411
      %v12413 = vpop.f32.mrb[0].mxu0
      %12414 = vmatprep.mubr.f32.mxu0 0.0
      %12415 = vmatmul.mubr.f32.gmra.mrb[0].mxu0 %v12052
      %v12416 = vpop.f32.mrb[0].mxu0
      %v12417 = vadd.f32 %v12192, %v12416
      %v12418 = vpop.f32.mrb[0].mxu0
      %12419 = vmatprep.mubr.f32.mxu0 0.0
      %12420 = vmatmul.mubr.f32.gmra.mrb[0].mxu0 %v12054
      %v12421 = vpop.f32.mrb[0].mxu0
      %v12422 = vadd.f32 %v12197, %v12421
      %v12423 = vpop.f32.mrb[0].mxu0
      %12424 = vmatprep.mubr.f32.mxu0 0.0
      %12425 = vmatmul.mubr.f32.gmra.mrb[0].mxu0 %v12056
      %v12426 = vpop.f32.mrb[0].mxu0
      %v12427 = vadd.f32 %v12202, %v12426
      %v12428 = vpop.f32.mrb[0].mxu0
      %12429 = vmatprep.mubr.f32.mxu0 0.0
      %12430 = vmatmul.mubr.f32.gmra.mrb[0].mxu0 %v12058
      %v12431 = vpop.f32.mrb[0].mxu0
      %v12432 = vadd.f32 %v12207, %v12431
      %v12433 = vpop.f32.mrb[0].mxu0
      %12434 = vmatprep.mubr.f32.mxu0 0.0
      %12435 = vmatmul.mubr.f32.gmra.mrb[0].mxu0 %v12060
      %v12436 = vpop.f32.mrb[0].mxu0
      %v12437 = vadd.f32 %v12212, %v12436
      %v12438 = vpop.f32.mrb[0].mxu0
      %12439 = vmatprep.mubr.f32.mxu0 0.0
      %12440 = vmatmul.mubr.f32.gmra.mrb[0].mxu0 %v12062
      %v12441 = vpop.f32.mrb[0].mxu0
      %v12442 = vadd.f32 %v12217, %v12441
      %v12443 = vpop.f32.mrb[0].mxu0
      %12444 = vmatprep.mubr.f32.mxu0 0.0
      %12445 = vmatmul.mubr.f32.gmra.mrb[0].mxu0 %v12064
      %v12446 = vpop.f32.mrb[0].mxu0
      %v12447 = vadd.f32 %v12222, %v12446
      %v12448 = vpop.f32.mrb[0].mxu0
      %12449 = vmatprep.mubr.f32.mxu0 0.0
      %12450 = vmatmul.mubr.f32.gmra.mrb[0].mxu0 %v12066
      %v12451 = vpop.f32.mrb[0].mxu0
      %v12452 = vadd.f32 %v12227, %v12451
      %v12453 = vpop.f32.mrb[0].mxu0
      %12454 = vmatprep.mubr.f32.mxu0 0.0
      %12455 = vmatmul.mubr.f32.gmra.mrb[0].mxu0 %v12068
      %v12456 = vpop.f32.mrb[0].mxu0
      %v12457 = vadd.f32 %v12232, %v12456
      %v12458 = vpop.f32.mrb[0].mxu0
      %12459 = vmatprep.mubr.f32.mxu0 0.0
      %12460 = vmatmul.mubr.f32.gmra.mrb[0].mxu0 %v12070
      %v12461 = vpop.f32.mrb[0].mxu0
      %v12462 = vadd.f32 %v12237, %v12461
      %v12463 = vpop.f32.mrb[0].mxu0
      %12464 = vmatprep.mubr.f32.mxu0 0.0
      %12465 = vmatmul.mubr.f32.gmra.mrb[0].mxu0 %v12072
      %v12466 = vpop.f32.mrb[0].mxu0
      %v12467 = vadd.f32 %v12242, %v12466
      %v12468 = vpop.f32.mrb[0].mxu0
      %12469 = vmatprep.mubr.f32.mxu0 0.0
      %12470 = vmatmul.mubr.f32.gmra.mrb[0].mxu0 %v12074
      %v12471 = vpop.f32.mrb[0].mxu0
      %v12472 = vadd.f32 %v12247, %v12471
      %v12473 = vpop.f32.mrb[0].mxu0
      %12474 = vmatprep.mubr.f32.mxu0 0.0
      %12475 = vmatmul.mubr.f32.gmra.mrb[0].mxu0 %v12076
      %v12476 = vpop.f32.mrb[0].mxu0
      %v12477 = vadd.f32 %v12252, %v12476
      %v12478 = vpop.f32.mrb[0].mxu0
      %12479 = vmatprep.mubr.f32.mxu0 0.0
      %12480 = vmatmul.mubr.f32.gmra.mrb[0].mxu0 %v12078
      %v12481 = vpop.f32.mrb[0].mxu0
      %v12482 = vadd.f32 %v12257, %v12481
      %v12483 = vpop.f32.mrb[0].mxu0
      %12484 = vmatprep.mubr.f32.mxu0 0.0
      %12485 = vmatmul.mubr.f32.gmra.mrb[0].mxu0 %v12080
      %v12486 = vpop.f32.mrb[0].mxu0
      %v12487 = vadd.f32 %v12262, %v12486
      %v12488 = vpop.f32.mrb[0].mxu0
      %12489 = vmatprep.mubr.f32.mxu0 0.0
      %12490 = vmatmul.mubr.f32.gmra.mrb[0].mxu0 %v12082
      %v12491 = vpop.f32.mrb[0].mxu0
      %v12492 = vadd.f32 %v12267, %v12491
      %v12493 = vpop.f32.mrb[0].mxu0
      %12494 = vmatprep.mubr.f32.mxu0 0.0
      %12495 = vmatmul.mubr.f32.gmra.mrb[0].mxu0 %v12084
      %v12496 = vpop.f32.mrb[0].mxu0
      %v12497 = vadd.f32 %v12272, %v12496
      %v12498 = vpop.f32.mrb[0].mxu0
      %12499 = vmatprep.mubr.f32.mxu0 0.0
      %12500 = vmatmul.mubr.f32.gmra.mrb[0].mxu0 %v12086
      %v12501 = vpop.f32.mrb[0].mxu0
      %v12502 = vadd.f32 %v12277, %v12501
      %v12503 = vpop.f32.mrb[0].mxu0
      %12504 = vmatprep.mubr.f32.mxu0 0.0
      %12505 = vmatmul.mubr.f32.gmra.mrb[0].mxu0 %v12088
      %v12506 = vpop.f32.mrb[0].mxu0
      %v12507 = vadd.f32 %v12282, %v12506
      %v12508 = vpop.f32.mrb[0].mxu0
      %12509 = vmatprep.mubr.f32.mxu0 0.0
      %12510 = vmatmul.mubr.f32.gmra.mrb[0].mxu0 %v12090
      %v12511 = vpop.f32.mrb[0].mxu0
      %v12512 = vadd.f32 %v12287, %v12511
      %v12513 = vpop.f32.mrb[0].mxu0
      %12514 = vmatprep.mubr.f32.mxu0 0.0
      %12515 = vmatmul.mubr.f32.gmra.mrb[0].mxu0 %v12092
      %v12516 = vpop.f32.mrb[0].mxu0
      %v12517 = vadd.f32 %v12292, %v12516
      %v12518 = vpop.f32.mrb[0].mxu0
      %12519 = vmatprep.mubr.f32.mxu0 0.0
      %12520 = vmatmul.mubr.f32.gmra.mrb[0].mxu0 %v12094
      %v12521 = vpop.f32.mrb[0].mxu0
      %v12522 = vadd.f32 %v12297, %v12521
      %v12523 = vpop.f32.mrb[0].mxu0
      %12524 = vmatprep.mubr.f32.mxu0 0.0
      %12525 = vmatmul.mubr.f32.gmra.mrb[0].mxu0 %v12096
      %v12526 = vpop.f32.mrb[0].mxu0
      %v12527 = vadd.f32 %v12302, %v12526
      %v12528 = vpop.f32.mrb[0].mxu0
      %12529 = vmatprep.mubr.f32.mxu0 0.0
      %12530 = vmatmul.mubr.f32.gmra.mrb[0].mxu0 %v12098
      %v12531 = vpop.f32.mrb[0].mxu0
      %v12532 = vadd.f32 %v12307, %v12531
      %v12533 = vpop.f32.mrb[0].mxu0
      %12534 = vmatprep.mubr.f32.mxu0 0.0
      %12535 = vmatmul.mubr.f32.gmra.mrb[0].mxu0 %v12100
      %v12536 = vpop.f32.mrb[0].mxu0
      %v12537 = vadd.f32 %v12312, %v12536
      %v12538 = vpop.f32.mrb[0].mxu0
      %12539 = vmatprep.mubr.f32.mxu0 0.0
      %12540 = vmatmul.mubr.f32.gmra.mrb[0].mxu0 %v12102
      %v12541 = vpop.f32.mrb[0].mxu0
      %v12542 = vadd.f32 %v12317, %v12541
      %v12543 = vpop.f32.mrb[0].mxu0
      %12544 = vmatprep.mubr.f32.mxu0 0.0
      %12545 = vmatmul.mubr.f32.gmra.mrb[0].mxu0 %v12104
      %v12546 = vpop.f32.mrb[0].mxu0
      %v12547 = vadd.f32 %v12322, %v12546
      %v12548 = vpop.f32.mrb[0].mxu0
      %12549 = vmatprep.mubr.f32.mxu0 0.0
      %12550 = vmatmul.mubr.f32.gmra.mrb[0].mxu0 %v12106
      %v12551 = vpop.f32.mrb[0].mxu0
      %v12552 = vadd.f32 %v12327, %v12551
      %v12553 = vpop.f32.mrb[0].mxu0
      %12554 = vmatprep.mubr.f32.mxu0 0.0
      %12555 = vmatmul.mubr.f32.gmra.mrb[0].mxu0 %v12108
      %v12556 = vpop.f32.mrb[0].mxu0
      %v12557 = vadd.f32 %v12332, %v12556
      %v12558 = vpop.f32.mrb[0].mxu0
      %12559 = vdwg.mxu0
      %v12560 = vmax.f32 %v12402, 0.0
      %v12561 = vmax.f32 %v12407, 0.0
      %v12562 = vmax.f32 %v12412, 0.0
      %v12563 = vmax.f32 %v12417, 0.0
      %v12564 = vmax.f32 %v12422, 0.0
      %v12565 = vmax.f32 %v12427, 0.0
      %v12566 = vmax.f32 %v12432, 0.0
      %v12567 = vmax.f32 %v12437, 0.0
      %v12568 = vmax.f32 %v12442, 0.0
      %v12569 = vmax.f32 %v12447, 0.0
      %v12570 = vmax.f32 %v12452, 0.0
      %v12571 = vmax.f32 %v12457, 0.0
      %v12572 = vmax.f32 %v12462, 0.0
      %v12573 = vmax.f32 %v12467, 0.0
      %v12574 = vmax.f32 %v12472, 0.0
      %v12575 = vmax.f32 %v12477, 0.0
      %v12576 = vmax.f32 %v12482, 0.0
      %v12577 = vmax.f32 %v12487, 0.0
      %v12578 = vmax.f32 %v12492, 0.0
      %v12579 = vmax.f32 %v12497, 0.0
      %v12580 = vmax.f32 %v12502, 0.0
      %v12581 = vmax.f32 %v12507, 0.0
      %v12582 = vmax.f32 %v12512, 0.0
      %v12583 = vmax.f32 %v12517, 0.0
      %v12584 = vmax.f32 %v12522, 0.0
      %v12585 = vmax.f32 %v12527, 0.0
      %v12586 = vmax.f32 %v12532, 0.0
      %v12587 = vmax.f32 %v12537, 0.0
      %v12588 = vmax.f32 %v12542, 0.0
      %v12589 = vmax.f32 %v12547, 0.0
      %v12590 = vmax.f32 %v12552, 0.0
      %v12591 = vmax.f32 %v12557, 0.0
      %12592 = vst.msk [vmem:[%s332] sm:$0xff] %vm2569, %v12560
      %12593 = vst.msk [vmem:[%s332 + $0x8] sm:$0xff] %vm2569, %v12561
      %12594 = vst.msk [vmem:[%s332 + $0x10] sm:$0xff] %vm2569, %v12562
      %12595 = vst.msk [vmem:[%s332 + $0x18] sm:$0xff] %vm2569, %v12563
      %12596 = vst.msk [vmem:[%s332 + $0x20] sm:$0xff] %vm2569, %v12564
      %12597 = vst.msk [vmem:[%s332 + $0x28] sm:$0xff] %vm2569, %v12565
      %12598 = vst.msk [vmem:[%s332 + $0x30] sm:$0xff] %vm2569, %v12566
      %12599 = vst.msk [vmem:[%s332 + $0x38] sm:$0xff] %vm2569, %v12567
      %12600 = vst.msk [vmem:[%s332 + $0x40] sm:$0xff] %vm2569, %v12568
      %12601 = vst.msk [vmem:[%s332 + $0x48] sm:$0xff] %vm2569, %v12569
      %12602 = vst.msk [vmem:[%s332 + $0x50] sm:$0xff] %vm2569, %v12570
      %12603 = vst.msk [vmem:[%s332 + $0x58] sm:$0xff] %vm2569, %v12571
      %12604 = vst.msk [vmem:[%s332 + $0x60] sm:$0xff] %vm2569, %v12572
      %12605 = vst.msk [vmem:[%s332 + $0x68] sm:$0xff] %vm2569, %v12573
      %12606 = vst.msk [vmem:[%s332 + $0x70] sm:$0xff] %vm2569, %v12574
      %12607 = vst.msk [vmem:[%s332 + $0x78] sm:$0xff] %vm2569, %v12575
      %12608 = vst.msk [vmem:[%s332 + $0x80] sm:$0xff] %vm2569, %v12576
      %12609 = vst.msk [vmem:[%s332 + $0x88] sm:$0xff] %vm2569, %v12577
      %12610 = vst.msk [vmem:[%s332 + $0x90] sm:$0xff] %vm2569, %v12578
      %12611 = vst.msk [vmem:[%s332 + $0x98] sm:$0xff] %vm2569, %v12579
      %12612 = vst.msk [vmem:[%s332 + $0xa0] sm:$0xff] %vm2569, %v12580
      %12613 = vst.msk [vmem:[%s332 + $0xa8] sm:$0xff] %vm2569, %v12581
      %12614 = vst.msk [vmem:[%s332 + $0xb0] sm:$0xff] %vm2569, %v12582
      %12615 = vst.msk [vmem:[%s332 + $0xb8] sm:$0xff] %vm2569, %v12583
      %12616 = vst.msk [vmem:[%s332 + $0xc0] sm:$0xff] %vm2569, %v12584
      %12617 = vst.msk [vmem:[%s332 + $0xc8] sm:$0xff] %vm2569, %v12585
      %12618 = vst.msk [vmem:[%s332 + $0xd0] sm:$0xff] %vm2569, %v12586
      %12619 = vst.msk [vmem:[%s332 + $0xd8] sm:$0xff] %vm2569, %v12587
      %12620 = vst.msk [vmem:[%s332 + $0xe0] sm:$0xff] %vm2569, %v12588
      %12621 = vst.msk [vmem:[%s332 + $0xe8] sm:$0xff] %vm2569, %v12589
      %12622 = vst.msk [vmem:[%s332 + $0xf0] sm:$0xff] %vm2569, %v12590
      %12623 = vst.msk [vmem:[%s332 + $0xf8] sm:$0xff] %vm2569, %v12591
      %p12624 = scmp.lt.s32.totalorder %s20, 1
      %s12625 = scalar_select %p12624, %s20, 1
      %s12626 = smul.addr %s12625, 32
      %s12627 = smul.addr %s12626, 8
      %s12628 = scalar_lea.vmem %s9, %s12627
      // Predicated region
      $region57: #{projection_input_depth_forward.1} parent=55 // pred_check
        %p12629 = pneg %p232
      $region58: #{projection_input_depth_forward.1} parent=55 // pred_check_branch
        %12631 = sbr.rel (%p12629) target = $region60
      $region59: #{projection_input_depth_forward.1} parent=55 // pred_region
        _
      $region60: #{projection_input_depth_forward.1} parent=55 // pred_fallthru
        _
    $region56: #{projection_input_depth_forward.1} parent=5 // pred_fallthru
      _
    %p12632 = scmp.le.s32.totalorder 2, %s15
    // Predicated region
    $region61: #{projection_input_depth_forward.1} parent=5 // pred_check
      %p12633 = pneg %p12632
    $region62: #{projection_input_depth_forward.1} parent=5 // pred_check_branch
      %12635 = sbr.rel (%p12633) target = $region64
    $region63: #{projection_input_depth_forward.1} parent=5 // pred_region
      %s12636 = ssub.s32 %s15, 2
      // Predicated region
      $region65: #{projection_input_depth_forward.1} parent=63 // pred_check
        %p12637 = pneg %p238
      $region66: #{projection_input_depth_forward.1} parent=63 // pred_check_branch
        %12639 = sbr.rel (%p12637) target = $region68
      $region67: #{projection_input_depth_forward.1} parent=63 // pred_region
        %p12640 = scmp.lt.s32.totalorder %s21, 1
        %s12641 = scalar_select %p12640, %s21, 1
        %s12642 = smul.addr %s12641, 32
        %s12643 = smul.addr %s12642, 8
        %s12644 = scalar_lea.vmem %s9, %s12643
      $region68: #{projection_input_depth_forward.1} parent=63 // pred_fallthru
        _
    $region64: #{projection_input_depth_forward.1} parent=5 // pred_fallthru
      _
  $region6: #{projection_input_depth_forward.1} parent=0 // loop_footer
    %s19 = sadd.s32 1, %s15
  $region7: #{projection_input_depth_forward.1} parent=0 // loop_footer_branch
    %14 = sbr.rel target = $region3
  $region8: #{projection_input_depth_forward.1} parent=0 // loop_exit
    _

</llo_original>
